<compile_context>
chip_gen: v7x
topology: tpu7x:2x2x1
jax: 0.10.0
libtpu: 0.0.40
codegen_flags: <defaults>
</compile_context>

<pallas_src>
import functools

import numpy as np
import jax
import jax.numpy as jnp
from jax.experimental import pallas as pl
from jax.experimental.pallas import tpu as pltpu


# ---------------------------------------------------------------------------
# Small helpers
# ---------------------------------------------------------------------------
def _round_up(x, m):
    return ((x + m - 1) // m) * m


def _pad_axis(a, axis, new_size):
    old = a.shape[axis]
    if old == new_size:
        return a
    pad = [(0, 0)] * a.ndim
    pad[axis] = (0, new_size - old)
    return jnp.pad(a, pad)


def _device_kind():
    try:
        return jax.devices()[0].device_kind.lower()
    except Exception:
        return ""


def _physical_vmem_bytes():
    try:
        return int(getattr(pltpu.get_tpu_info(), "vmem_capacity_bytes"))
    except Exception:
        return None


def _generation_config():
    """Per-generation batch-tile target and VMEM scoped-limit cap."""
    kind = _device_kind()
    if ("v5e" in kind) or ("v5 lite" in kind) or ("v5litepod" in kind):
        tile_b, cap = 256, 96 << 20          # 128 MiB physical VMEM
    elif "v6" in kind:
        tile_b, cap = 512, 100 << 20         # 128 MiB physical VMEM
    elif "v7" in kind:
        tile_b, cap = 256, 48 << 20          # 64 MiB physical VMEM
    else:
        tile_b, cap = 256, 48 << 20          # unknown: conservative
    phys = _physical_vmem_bytes()
    if phys:
        cap = min(cap, max(phys - (16 << 20), 16 << 20))
    return {"tile_b": tile_b, "vmem_cap": int(cap)}


def _const_spec3(shape, single_buffer):
    """BlockSpec for a weight that is the same (full) block at every grid step.

    With single_buffer=True we request Buffered(1) so the pipeline does not
    double-buffer a block whose index never changes (halves resident VMEM).
    """
    if single_buffer:
        try:
            return pl.BlockSpec(shape, lambda i: (0, 0, 0),
                                pipeline_mode=pl.Buffered(1))
        except TypeError:
            pass  # older BlockSpec without pipeline_mode: fall through
    return pl.BlockSpec(shape, lambda i: (0, 0, 0))


# ---------------------------------------------------------------------------
# Kernel 1 (fast path): mask-compacted inverse, checkerboard-style masks.
# Feature axis has been permuted host-side so each layer's active / passive
# halves are contiguous, 128-aligned slices of width D/2.
# ---------------------------------------------------------------------------
def _make_compact_inverse_kernel(active_first, hidden_p, half_d):
    num_layers = len(active_first)

    def kernel(z_ref,                         # (TILE_B, D) f32, permuted
               w1_ref, b1_ref,                # (K, D/2, 2Hp) bf16, (K,1,2Hp) f32
               w2s_ref, b2s_ref,              # (K, Hp, D/2) bf16 (pre-negated), f32
               w2t_ref, b2t_ref,              # (K, Hp, D/2) bf16, (K,1,D/2) f32
               out_ref):                      # (TILE_B, D) f32, permuted
        z0 = z_ref[:, :half_d].astype(jnp.float32)
        z1 = z_ref[:, half_d:].astype(jnp.float32)
        # Inverse = layers in reverse order.  K is small -> static unroll.
        for k in range(num_layers - 1, -1, -1):
            za, zp = (z0, z1) if active_first[k] else (z1, z0)
            za_b = za.astype(jnp.bfloat16)
            # Fused D/2 -> 2Hp conditioner (s|t first layers share the LHS).
            h = jnp.tanh(
                jnp.dot(za_b, w1_ref[k], preferred_element_type=jnp.float32)
                + b1_ref[k])
            h = h.astype(jnp.bfloat16)
            s_neg = (jnp.dot(h[:, :hidden_p], w2s_ref[k],
                             preferred_element_type=jnp.float32) + b2s_ref[k])
            t = (jnp.dot(h[:, hidden_p:], w2t_ref[k],
                         preferred_element_type=jnp.float32) + b2t_ref[k])
            zp_new = (zp - t) * jnp.exp(s_neg)   # s pre-negated host-side
            if active_first[k]:
                z1 = zp_new
            else:
                z0 = zp_new
        out_ref[:, :half_d] = z0.astype(out_ref.dtype)
        out_ref[:, half_d:] = z1.astype(out_ref.dtype)

    return kernel


# ---------------------------------------------------------------------------
# Kernel 2 (fallback): full-D inverse for arbitrary coupling masks.
# ---------------------------------------------------------------------------
def _full_inverse_kernel(feats_ref,              # (TILE_B, D) f32
                         mask_ref,               # (K, 1, D)   f32
                         w1_ref, b1_ref,         # (K, D, 2Hp) bf16, (K,1,2Hp) f32
                         w2s_ref, b2s_ref,       # (K, Hp, D) bf16 (pre-negated), f32
                         w2t_ref, b2t_ref,       # (K, Hp, D) bf16, (K,1,D) f32
                         out_ref):               # (TILE_B, D) f32
    z = feats_ref[...].astype(jnp.float32)
    num_layers = mask_ref.shape[0]
    hidden_p = w2s_ref.shape[1]
    for k in range(num_layers - 1, -1, -1):
        b = mask_ref[k]                          # (1, D)
        zb = (z * b).astype(jnp.bfloat16)
        h = jnp.tanh(
            jnp.dot(zb, w1_ref[k], preferred_element_type=jnp.float32)
            + b1_ref[k])
        h = h.astype(jnp.bfloat16)
        s_neg = (jnp.dot(h[:, :hidden_p], w2s_ref[k],
                         preferred_element_type=jnp.float32) + b2s_ref[k])
        t = (jnp.dot(h[:, hidden_p:], w2t_ref[k],
                     preferred_element_type=jnp.float32) + b2t_ref[k])
        # select form: saves VPU ops and the one_minus_mask buffer.
        z = jnp.where(b != 0.0, z, (z - t) * jnp.exp(s_neg))
    out_ref[...] = z.astype(out_ref.dtype)


# ---------------------------------------------------------------------------
# Host-side parameter packing.
# ---------------------------------------------------------------------------
def pack_flow_params(params):
    """Fuses s/t first layers, pads hidden to 128, pre-negates w2s/b2s,
    casts weights to bf16 and (if the masks allow it) builds mask-compacted
    weights plus the feature permutation."""
    mask_np = np.asarray(params['mask'], dtype=np.float32)   # (K, 1, D)
    K, _, D = mask_np.shape
    H = params['w1s'].shape[-1]
    Hp = _round_up(H, 128)                                   # lane-aligned split

    w1 = jnp.concatenate([_pad_axis(params['w1s'], -1, Hp),
                          _pad_axis(params['w1t'], -1, Hp)],
                         axis=-1).astype(jnp.bfloat16)       # (K, D, 2Hp)
    b1 = jnp.concatenate([_pad_axis(params['b1s'], -1, Hp),
                          _pad_axis(params['b1t'], -1, Hp)],
                         axis=-1).astype(jnp.float32)        # (K, 1, 2Hp)
    w2s_neg = (-_pad_axis(params['w2s'], 1, Hp)).astype(jnp.bfloat16)  # (K,Hp,D)
    b2s_neg = (-params['b2s']).astype(jnp.float32)                      # (K,1,D)
    w2t = _pad_axis(params['w2t'], 1, Hp).astype(jnp.bfloat16)
    b2t = params['b2t'].astype(jnp.float32)

    packed = dict(mask=jnp.asarray(mask_np), w1=w1, b1=b1,
                  w2s_neg=w2s_neg, b2s_neg=b2s_neg, w2t=w2t, b2t=b2t,
                  hidden_p=Hp, compact=False)

    # ---- mask-compaction analysis ------------------------------------------
    m2 = mask_np[:, 0, :]
    half = D // 2
    ok = (D % 2 == 0) and (half % 128 == 0)
    if ok:
        active_sets = [np.flatnonzero(m2[k] > 0.5) for k in range(K)]
        a_set = active_sets[0]
        c_set = np.flatnonzero(m2[0] <= 0.5)
        ok = len(a_set) == half
        active_first = []
        if ok:
            for k in range(K):
                ak = active_sets[k]
                if len(ak) == half and np.array_equal(ak, a_set):
                    active_first.append(True)
                elif len(ak) == half and np.array_equal(ak, c_set):
                    active_first.append(False)
                else:
                    ok = False
                    break
    if ok:
        perm = np.concatenate([a_set, c_set])
        inv_perm = np.empty(D, np.int64)
        inv_perm[perm] = np.arange(D)
        c_w1, c_w2s, c_b2s, c_w2t, c_b2t = [], [], [], [], []
        for k in range(K):
            a_idx = perm[:half] if active_first[k] else perm[half:]
            p_idx = perm[half:] if active_first[k] else perm[:half]
            c_w1.append(w1[k][a_idx, :])          # (D/2, 2Hp)
            c_w2s.append(w2s_neg[k][:, p_idx])    # (Hp, D/2)
            c_b2s.append(b2s_neg[k][:, p_idx])    # (1, D/2)
            c_w2t.append(w2t[k][:, p_idx])
            c_b2t.append(b2t[k][:, p_idx])
        packed.update(
            compact=True,
            active_first=tuple(bool(a) for a in active_first),
            perm=jnp.asarray(perm, jnp.int32),
            inv_perm=jnp.asarray(inv_perm, jnp.int32),
            c_w1=jnp.stack(c_w1), c_b1=b1,
            c_w2s_neg=jnp.stack(c_w2s), c_b2s_neg=jnp.stack(c_b2s),
            c_w2t=jnp.stack(c_w2t), c_b2t=jnp.stack(c_b2t))
    return packed


# ---------------------------------------------------------------------------
# Jitted runners (static tiling / buffering config; device query stays outside)
# ---------------------------------------------------------------------------
def _vmem_limit(weight_arrays, tile_b, d, hidden_p, single_buffer, vmem_cap):
    weight_bytes = sum(int(a.size) * a.dtype.itemsize for a in weight_arrays)
    buf = 1 if single_buffer else 2
    need = (buf * weight_bytes + 4 * tile_b * d * 4
            + 6 * tile_b * max(d, 2 * hidden_p) * 4 + (8 << 20))
    return int(min(max(need, 32 << 20), vmem_cap)), weight_bytes


@functools.partial(jax.jit, static_argnames=(
    "tile_b", "bp", "vmem_cap", "active_first", "hidden_p", "single_buffer"))
def _run_compact(feats, perm, inv_perm, c_w1, c_b1, c_w2s, c_b2s, c_w2t, c_b2t,
                 *, tile_b, bp, vmem_cap, active_first, hidden_p, single_buffer):
    B, D = feats.shape
    half_d = D // 2
    K = c_w1.shape[0]
    feats_perm = jnp.take(feats, perm, axis=1)
    if bp == B:                       # avoid materializing a padded copy
        feats_p = feats_perm
    else:
        feats_p = jnp.zeros((bp, D), feats.dtype).at[:B].set(feats_perm)

    weights = (c_w1, c_b1, c_w2s, c_b2s, c_w2t, c_b2t)
    vmem_limit, weight_bytes = _vmem_limit(weights, tile_b, D, hidden_p,
                                           single_buffer, vmem_cap)
    flops = int(8 * bp * hidden_p * half_d * K)
    trans = int(bp * K * (2 * hidden_p + half_d))
    bytes_accessed = int(2 * bp * D * 4 + weight_bytes)

    kernel = _make_compact_inverse_kernel(active_first, hidden_p, half_d)
    out_p = pl.pallas_call(
        kernel,
        out_shape=jax.ShapeDtypeStruct((bp, D), jnp.float32),
        grid_spec=pltpu.PrefetchScalarGridSpec(
            num_scalar_prefetch=0,
            grid=(bp // tile_b,),
            in_specs=[
                pl.BlockSpec((tile_b, D), lambda i: (i, 0)),
                _const_spec3(c_w1.shape, single_buffer),
                _const_spec3(c_b1.shape, single_buffer),
                _const_spec3(c_w2s.shape, single_buffer),
                _const_spec3(c_b2s.shape, single_buffer),
                _const_spec3(c_w2t.shape, single_buffer),
                _const_spec3(c_b2t.shape, single_buffer),
            ],
            out_specs=pl.BlockSpec((tile_b, D), lambda i: (i, 0)),
        ),
        compiler_params=pltpu.CompilerParams(
            dimension_semantics=("parallel",),
            vmem_limit_bytes=vmem_limit),
        cost_estimate=pl.CostEstimate(
            flops=flops, transcendentals=trans, bytes_accessed=bytes_accessed),
    )(feats_p, c_w1, c_b1, c_w2s, c_b2s, c_w2t, c_b2t)

    return jnp.take(out_p[:B], inv_perm, axis=1)


@functools.partial(jax.jit, static_argnames=(
    "tile_b", "bp", "vmem_cap", "hidden_p", "single_buffer"))
def _run_full(feats, mask, w1, b1, w2s_neg, b2s_neg, w2t, b2t,
              *, tile_b, bp, vmem_cap, hidden_p, single_buffer):
    B, D = feats.shape
    K = mask.shape[0]
    if bp == B:
        feats_p = feats
    else:
        feats_p = jnp.zeros((bp, D), feats.dtype).at[:B].set(feats)

    weights = (mask, w1, b1, w2s_neg, b2s_neg, w2t, b2t)
    vmem_limit, weight_bytes = _vmem_limit(weights, tile_b, D, hidden_p,
                                           single_buffer, vmem_cap)
    flops = int(8 * bp * D * hidden_p * K)
    trans = int(bp * K * (2 * hidden_p + D))
    bytes_accessed = int(2 * bp * D * 4 + weight_bytes)

    out_p = pl.pallas_call(
        _full_inverse_kernel,
        out_shape=jax.ShapeDtypeStruct((bp, D), jnp.float32),
        grid_spec=pltpu.PrefetchScalarGridSpec(
            num_scalar_prefetch=0,
            grid=(bp // tile_b,),
            in_specs=[
                pl.BlockSpec((tile_b, D), lambda i: (i, 0)),
                _const_spec3(mask.shape, single_buffer),
                _const_spec3(w1.shape, single_buffer),
                _const_spec3(b1.shape, single_buffer),
                _const_spec3(w2s_neg.shape, single_buffer),
                _const_spec3(b2s_neg.shape, single_buffer),
                _const_spec3(w2t.shape, single_buffer),
                _const_spec3(b2t.shape, single_buffer),
            ],
            out_specs=pl.BlockSpec((tile_b, D), lambda i: (i, 0)),
        ),
        compiler_params=pltpu.CompilerParams(
            dimension_semantics=("parallel",),
            vmem_limit_bytes=vmem_limit),
        cost_estimate=pl.CostEstimate(
            flops=flops, transcendentals=trans, bytes_accessed=bytes_accessed),
    )(feats_p, mask, w1, b1, w2s_neg, b2s_neg, w2t, b2t)
    return out_p[:B]


# ---------------------------------------------------------------------------
# Wrapper: forward pass of FullNormalizingFlowNet (return_feature=True).
# ---------------------------------------------------------------------------
def full_normalizing_flow_net(x, packed):
    """Args:
      x: (B, C, H, W) float32, NCHW (PyTorch convention).
      packed: dict from pack_flow_params.
    Returns:
      (logits_cls, nflow_feats) with shapes ((B,C,H,W), (B, C*H*W)).
    """
    B = x.shape[0]
    D = int(np.prod(x.shape[1:]))

    logits_cls = jnp.ones_like(x)                 # torch.ones_like(x)
    feats = x.reshape(B, D).astype(jnp.float32)   # feat_agg = Identity; flatten(1)

    cfg = _generation_config()
    tile_b = min(cfg['tile_b'], _round_up(max(B, 8), 8))
    # Shrink the batch tile if pipelined in/out buffers would eat >half the cap.
    while tile_b > 8 and 4 * tile_b * D * 4 > cfg['vmem_cap'] // 2:
        tile_b = max(8, _round_up(tile_b // 2, 8))
    bp = _round_up(B, tile_b)
    hidden_p = packed['hidden_p']
    # NOTE: on v7x an even grid length keeps both TensorCores busy; with tiny
    # demo batches the grid is 1 and megacore split is moot.

    if packed['compact']:
        run = lambda sb: _run_compact(
            feats, packed['perm'], packed['inv_perm'],
            packed['c_w1'], packed['c_b1'],
            packed['c_w2s_neg'], packed['c_b2s_neg'],
            packed['c_w2t'], packed['c_b2t'],
            tile_b=tile_b, bp=bp, vmem_cap=cfg['vmem_cap'],
            active_first=packed['active_first'], hidden_p=hidden_p,
            single_buffer=sb)
    else:
        run = lambda sb: _run_full(
            feats, packed['mask'], packed['w1'], packed['b1'],
            packed['w2s_neg'], packed['b2s_neg'], packed['w2t'], packed['b2t'],
            tile_b=tile_b, bp=bp, vmem_cap=cfg['vmem_cap'],
            hidden_p=hidden_p, single_buffer=sb)

    try:
        nflow_feats = run(True)     # Buffered(1) resident weights
    except Exception:
        nflow_feats = run(False)    # fall back to default double buffering
    return logits_cls, nflow_feats


# ---------------------------------------------------------------------------
# Deterministic synthetic parameter init (no checkpoint loading).
# ---------------------------------------------------------------------------
def init_flow_params(key, D, H, K, mask=None):
    keys = jax.random.split(key, 4)
    scale = 0.05

    def w(k, shape):
        return (scale * jax.random.normal(k, shape)).astype(jnp.float32)

    if mask is None:
        d_idx = jnp.arange(D)
        mask = jnp.stack(
            [((d_idx % 2) == (k % 2)).astype(jnp.float32) for k in range(K)],
            axis=0).reshape(K, 1, D)

    return dict(
        mask=mask,
        w1s=w(keys[0], (K, D, H)), b1s=jnp.zeros((K, 1, H), jnp.float32),
        w2s=w(keys[1], (K, H, D)), b2s=jnp.zeros((K, 1, D), jnp.float32),
        w1t=w(keys[2], (K, D, H)), b1t=jnp.zeros((K, 1, H), jnp.float32),
        w2t=w(keys[3], (K, H, D)), b2t=jnp.zeros((K, 1, D), jnp.float32),
    )


# ---------------------------------------------------------------------------
# Pure-JAX reference mirroring the kernel's math/precision
# (bf16 weights + bf16 conditioner inputs, f32 accumulation, pre-negated s).
# ---------------------------------------------------------------------------
def _reference(x, packed):
    B = x.shape[0]
    z = x.reshape(B, -1).astype(jnp.float32)
    mask = packed['mask']
    K = mask.shape[0]
    Hp = packed['hidden_p']
    for k in range(K - 1, -1, -1):
        b = mask[k]
        zb = (z * b).astype(jnp.bfloat16)
        h = jnp.tanh(jnp.dot(zb, packed['w1'][k],
                             preferred_element_type=jnp.float32)
                     + packed['b1'][k]).astype(jnp.bfloat16)
        s_neg = (jnp.dot(h[:, :Hp], packed['w2s_neg'][k],
                         preferred_element_type=jnp.float32)
                 + packed['b2s_neg'][k])
        t = (jnp.dot(h[:, Hp:], packed['w2t'][k],
                     preferred_element_type=jnp.float32) + packed['b2t'][k])
        z = b * z + (1.0 - b) * (z - t) * jnp.exp(s_neg)
    return jnp.ones_like(x), z


if __name__ == "__main__":
    key = jax.random.PRNGKey(0)
    kx, kp, kp2 = jax.random.split(key, 3)

    # Small, module-consistent shapes: NCHW input.
    B, C, Hsp, Wsp = 2, 4, 16, 16
    D = C * Hsp * Wsp          # flow dimension = 1024
    H_hidden = 128             # coupling-MLP hidden width
    K_layers = 4               # number of coupling layers

    x = jax.random.normal(kx, (B, C, Hsp, Wsp), dtype=jnp.float32)

    # --- compact (checkerboard-mask) path -----------------------------------
    params = init_flow_params(kp, D, H_hidden, K_layers)
    packed = pack_flow_params(params)
    assert packed['compact']
    logits_cls, nflow_feats = full_normalizing_flow_net(x, packed)
    jax.block_until_ready((logits_cls, nflow_feats))
    ref_logits, ref_feats = _reference(x, packed)
    assert logits_cls.shape == x.shape and bool(jnp.all(logits_cls == 1.0))
    assert nflow_feats.shape == (B, D)
    err = float(jnp.max(jnp.abs(nflow_feats - ref_feats)))
    assert err < 5e-3, err

    # --- fallback (arbitrary-mask) path --------------------------------------
    d_idx = jnp.arange(D)
    arb_mask = jnp.stack([
        (d_idx < D // 3).astype(jnp.float32),
        (d_idx >= D // 3).astype(jnp.float32),
    ], axis=0).reshape(2, 1, D)
    params2 = init_flow_params(kp2, D, H_hidden, 2, mask=arb_mask)
    packed2 = pack_flow_params(params2)
    assert not packed2['compact']
    _, nflow_feats2 = full_normalizing_flow_net(x, packed2)
    jax.block_until_ready(nflow_feats2)
    _, ref_feats2 = _reference(x, packed2)
    err2 = float(jnp.max(jnp.abs(nflow_feats2 - ref_feats2)))
    assert err2 < 5e-3, err2

    print("KERNEL_OK")
</pallas_src>

<mosaic_0001>
module attributes {stable_mosaic.version = 11 : i64} {
  func.func @kernel(%arg0: i32, %arg1: memref<8x1024xf32, #tpu.memory_space<vmem>>, %arg2: memref<4x512x256xbf16, #tpu.memory_space<vmem>>, %arg3: memref<4x1x256xf32, #tpu.memory_space<vmem>>, %arg4: memref<4x128x512xbf16, #tpu.memory_space<vmem>>, %arg5: memref<4x1x512xf32, #tpu.memory_space<vmem>>, %arg6: memref<4x128x512xbf16, #tpu.memory_space<vmem>>, %arg7: memref<4x1x512xf32, #tpu.memory_space<vmem>>, %arg8: memref<8x1024xf32, #tpu.memory_space<vmem>>) attributes {dimension_semantics = [#tpu.dimension_semantics<parallel>], iteration_bounds = array<i64: 1>, scalar_prefetch = 0 : i64, scratch_operands = 0 : i64, tpu.core_type = #tpu.core_type<tc>, window_params = [{transform_indices = @transform_0, window_bounds = array<i64: 8, 1024>}, {pipeline_mode = #tpu.pipeline_mode<synchronous>, transform_indices = @transform_1, window_bounds = array<i64: 4, 512, 256>}, {pipeline_mode = #tpu.pipeline_mode<synchronous>, transform_indices = @transform_2, window_bounds = array<i64: 4, 1, 256>}, {pipeline_mode = #tpu.pipeline_mode<synchronous>, transform_indices = @transform_3, window_bounds = array<i64: 4, 128, 512>}, {pipeline_mode = #tpu.pipeline_mode<synchronous>, transform_indices = @transform_4, window_bounds = array<i64: 4, 1, 512>}, {pipeline_mode = #tpu.pipeline_mode<synchronous>, transform_indices = @transform_5, window_bounds = array<i64: 4, 128, 512>}, {pipeline_mode = #tpu.pipeline_mode<synchronous>, transform_indices = @transform_6, window_bounds = array<i64: 4, 1, 512>}, {transform_indices = @transform_7, window_bounds = array<i64: 8, 1024>}]} {
    %c0 = arith.constant 0 : index
    %c0_0 = arith.constant 0 : index
    %0 = vector.load %arg1[%c0, %c0_0] : memref<8x1024xf32, #tpu.memory_space<vmem>>, vector<8x512xf32>
    %c0_1 = arith.constant 0 : index
    %c512 = arith.constant 512 : index
    %1 = vector.load %arg1[%c0_1, %c512] : memref<8x1024xf32, #tpu.memory_space<vmem>>, vector<8x512xf32>
    %2 = arith.truncf %1 : vector<8x512xf32> to vector<8x512xbf16>
    %c3 = arith.constant 3 : index
    %c0_2 = arith.constant 0 : index
    %c0_3 = arith.constant 0 : index
    %3 = vector.load %arg2[%c3, %c0_2, %c0_3] : memref<4x512x256xbf16, #tpu.memory_space<vmem>>, vector<1x512x256xbf16>
    %4 = vector.shape_cast %3 : vector<1x512x256xbf16> to vector<512x256xbf16>
    %cst = arith.constant dense<0.000000e+00> : vector<8x256xf32>
    %5 = tpu.matmul %2, %4, %cst {dimension_numbers = #tpu.dot_dimension_numbers<[1], [0], [0], [1], [0, 0, 1, 1], [], []>} : vector<8x512xbf16>, vector<512x256xbf16>, vector<8x256xf32> -> vector<8x256xf32>
    %c3_4 = arith.constant 3 : index
    %c0_5 = arith.constant 0 : index
    %c0_6 = arith.constant 0 : index
    %6 = vector.load %arg3[%c3_4, %c0_5, %c0_6] : memref<4x1x256xf32, #tpu.memory_space<vmem>>, vector<1x1x256xf32>
    %7 = vector.shape_cast %6 : vector<1x1x256xf32> to vector<1x256xf32>
    %8 = vector.broadcast %7 : vector<1x256xf32> to vector<8x256xf32>
    %9 = arith.addf %5, %8 : vector<8x256xf32>
    %10 = math.tanh %9 : vector<8x256xf32>
    %11 = arith.truncf %10 : vector<8x256xf32> to vector<8x256xbf16>
    %12 = vector.extract_strided_slice %11 {offsets = [0, 0], sizes = [8, 128], strides = [1, 1]} : vector<8x256xbf16> to vector<8x128xbf16>
    %c3_7 = arith.constant 3 : index
    %c0_8 = arith.constant 0 : index
    %c0_9 = arith.constant 0 : index
    %13 = vector.load %arg4[%c3_7, %c0_8, %c0_9] : memref<4x128x512xbf16, #tpu.memory_space<vmem>>, vector<1x128x512xbf16>
    %14 = vector.shape_cast %13 : vector<1x128x512xbf16> to vector<128x512xbf16>
    %cst_10 = arith.constant dense<0.000000e+00> : vector<8x512xf32>
    %15 = tpu.matmul %12, %14, %cst_10 {dimension_numbers = #tpu.dot_dimension_numbers<[1], [0], [0], [1], [0, 0, 1, 1], [], []>} : vector<8x128xbf16>, vector<128x512xbf16>, vector<8x512xf32> -> vector<8x512xf32>
    %c3_11 = arith.constant 3 : index
    %c0_12 = arith.constant 0 : index
    %c0_13 = arith.constant 0 : index
    %16 = vector.load %arg5[%c3_11, %c0_12, %c0_13] : memref<4x1x512xf32, #tpu.memory_space<vmem>>, vector<1x1x512xf32>
    %17 = vector.shape_cast %16 : vector<1x1x512xf32> to vector<1x512xf32>
    %18 = vector.broadcast %17 : vector<1x512xf32> to vector<8x512xf32>
    %19 = arith.addf %15, %18 : vector<8x512xf32>
    %20 = vector.extract_strided_slice %11 {offsets = [0, 128], sizes = [8, 128], strides = [1, 1]} : vector<8x256xbf16> to vector<8x128xbf16>
    %c3_14 = arith.constant 3 : index
    %c0_15 = arith.constant 0 : index
    %c0_16 = arith.constant 0 : index
    %21 = vector.load %arg6[%c3_14, %c0_15, %c0_16] : memref<4x128x512xbf16, #tpu.memory_space<vmem>>, vector<1x128x512xbf16>
    %22 = vector.shape_cast %21 : vector<1x128x512xbf16> to vector<128x512xbf16>
    %cst_17 = arith.constant dense<0.000000e+00> : vector<8x512xf32>
    %23 = tpu.matmul %20, %22, %cst_17 {dimension_numbers = #tpu.dot_dimension_numbers<[1], [0], [0], [1], [0, 0, 1, 1], [], []>} : vector<8x128xbf16>, vector<128x512xbf16>, vector<8x512xf32> -> vector<8x512xf32>
    %c3_18 = arith.constant 3 : index
    %c0_19 = arith.constant 0 : index
    %c0_20 = arith.constant 0 : index
    %24 = vector.load %arg7[%c3_18, %c0_19, %c0_20] : memref<4x1x512xf32, #tpu.memory_space<vmem>>, vector<1x1x512xf32>
    %25 = vector.shape_cast %24 : vector<1x1x512xf32> to vector<1x512xf32>
    %26 = vector.broadcast %25 : vector<1x512xf32> to vector<8x512xf32>
    %27 = arith.addf %23, %26 : vector<8x512xf32>
    %28 = arith.subf %0, %27 : vector<8x512xf32>
    %29 = math.exp %19 : vector<8x512xf32>
    %30 = arith.mulf %28, %29 : vector<8x512xf32>
    %31 = arith.truncf %30 : vector<8x512xf32> to vector<8x512xbf16>
    %c2 = arith.constant 2 : index
    %c0_21 = arith.constant 0 : index
    %c0_22 = arith.constant 0 : index
    %32 = vector.load %arg2[%c2, %c0_21, %c0_22] : memref<4x512x256xbf16, #tpu.memory_space<vmem>>, vector<1x512x256xbf16>
    %33 = vector.shape_cast %32 : vector<1x512x256xbf16> to vector<512x256xbf16>
    %cst_23 = arith.constant dense<0.000000e+00> : vector<8x256xf32>
    %34 = tpu.matmul %31, %33, %cst_23 {dimension_numbers = #tpu.dot_dimension_numbers<[1], [0], [0], [1], [0, 0, 1, 1], [], []>} : vector<8x512xbf16>, vector<512x256xbf16>, vector<8x256xf32> -> vector<8x256xf32>
    %c2_24 = arith.constant 2 : index
    %c0_25 = arith.constant 0 : index
    %c0_26 = arith.constant 0 : index
    %35 = vector.load %arg3[%c2_24, %c0_25, %c0_26] : memref<4x1x256xf32, #tpu.memory_space<vmem>>, vector<1x1x256xf32>
    %36 = vector.shape_cast %35 : vector<1x1x256xf32> to vector<1x256xf32>
    %37 = vector.broadcast %36 : vector<1x256xf32> to vector<8x256xf32>
    %38 = arith.addf %34, %37 : vector<8x256xf32>
    %39 = math.tanh %38 : vector<8x256xf32>
    %40 = arith.truncf %39 : vector<8x256xf32> to vector<8x256xbf16>
    %41 = vector.extract_strided_slice %40 {offsets = [0, 0], sizes = [8, 128], strides = [1, 1]} : vector<8x256xbf16> to vector<8x128xbf16>
    %c2_27 = arith.constant 2 : index
    %c0_28 = arith.constant 0 : index
    %c0_29 = arith.constant 0 : index
    %42 = vector.load %arg4[%c2_27, %c0_28, %c0_29] : memref<4x128x512xbf16, #tpu.memory_space<vmem>>, vector<1x128x512xbf16>
    %43 = vector.shape_cast %42 : vector<1x128x512xbf16> to vector<128x512xbf16>
    %cst_30 = arith.constant dense<0.000000e+00> : vector<8x512xf32>
    %44 = tpu.matmul %41, %43, %cst_30 {dimension_numbers = #tpu.dot_dimension_numbers<[1], [0], [0], [1], [0, 0, 1, 1], [], []>} : vector<8x128xbf16>, vector<128x512xbf16>, vector<8x512xf32> -> vector<8x512xf32>
    %c2_31 = arith.constant 2 : index
    %c0_32 = arith.constant 0 : index
    %c0_33 = arith.constant 0 : index
    %45 = vector.load %arg5[%c2_31, %c0_32, %c0_33] : memref<4x1x512xf32, #tpu.memory_space<vmem>>, vector<1x1x512xf32>
    %46 = vector.shape_cast %45 : vector<1x1x512xf32> to vector<1x512xf32>
    %47 = vector.broadcast %46 : vector<1x512xf32> to vector<8x512xf32>
    %48 = arith.addf %44, %47 : vector<8x512xf32>
    %49 = vector.extract_strided_slice %40 {offsets = [0, 128], sizes = [8, 128], strides = [1, 1]} : vector<8x256xbf16> to vector<8x128xbf16>
    %c2_34 = arith.constant 2 : index
    %c0_35 = arith.constant 0 : index
    %c0_36 = arith.constant 0 : index
    %50 = vector.load %arg6[%c2_34, %c0_35, %c0_36] : memref<4x128x512xbf16, #tpu.memory_space<vmem>>, vector<1x128x512xbf16>
    %51 = vector.shape_cast %50 : vector<1x128x512xbf16> to vector<128x512xbf16>
    %cst_37 = arith.constant dense<0.000000e+00> : vector<8x512xf32>
    %52 = tpu.matmul %49, %51, %cst_37 {dimension_numbers = #tpu.dot_dimension_numbers<[1], [0], [0], [1], [0, 0, 1, 1], [], []>} : vector<8x128xbf16>, vector<128x512xbf16>, vector<8x512xf32> -> vector<8x512xf32>
    %c2_38 = arith.constant 2 : index
    %c0_39 = arith.constant 0 : index
    %c0_40 = arith.constant 0 : index
    %53 = vector.load %arg7[%c2_38, %c0_39, %c0_40] : memref<4x1x512xf32, #tpu.memory_space<vmem>>, vector<1x1x512xf32>
    %54 = vector.shape_cast %53 : vector<1x1x512xf32> to vector<1x512xf32>
    %55 = vector.broadcast %54 : vector<1x512xf32> to vector<8x512xf32>
    %56 = arith.addf %52, %55 : vector<8x512xf32>
    %57 = arith.subf %1, %56 : vector<8x512xf32>
    %58 = math.exp %48 : vector<8x512xf32>
    %59 = arith.mulf %57, %58 : vector<8x512xf32>
    %60 = arith.truncf %59 : vector<8x512xf32> to vector<8x512xbf16>
    %c1 = arith.constant 1 : index
    %c0_41 = arith.constant 0 : index
    %c0_42 = arith.constant 0 : index
    %61 = vector.load %arg2[%c1, %c0_41, %c0_42] : memref<4x512x256xbf16, #tpu.memory_space<vmem>>, vector<1x512x256xbf16>
    %62 = vector.shape_cast %61 : vector<1x512x256xbf16> to vector<512x256xbf16>
    %cst_43 = arith.constant dense<0.000000e+00> : vector<8x256xf32>
    %63 = tpu.matmul %60, %62, %cst_43 {dimension_numbers = #tpu.dot_dimension_numbers<[1], [0], [0], [1], [0, 0, 1, 1], [], []>} : vector<8x512xbf16>, vector<512x256xbf16>, vector<8x256xf32> -> vector<8x256xf32>
    %c1_44 = arith.constant 1 : index
    %c0_45 = arith.constant 0 : index
    %c0_46 = arith.constant 0 : index
    %64 = vector.load %arg3[%c1_44, %c0_45, %c0_46] : memref<4x1x256xf32, #tpu.memory_space<vmem>>, vector<1x1x256xf32>
    %65 = vector.shape_cast %64 : vector<1x1x256xf32> to vector<1x256xf32>
    %66 = vector.broadcast %65 : vector<1x256xf32> to vector<8x256xf32>
    %67 = arith.addf %63, %66 : vector<8x256xf32>
    %68 = math.tanh %67 : vector<8x256xf32>
    %69 = arith.truncf %68 : vector<8x256xf32> to vector<8x256xbf16>
    %70 = vector.extract_strided_slice %69 {offsets = [0, 0], sizes = [8, 128], strides = [1, 1]} : vector<8x256xbf16> to vector<8x128xbf16>
    %c1_47 = arith.constant 1 : index
    %c0_48 = arith.constant 0 : index
    %c0_49 = arith.constant 0 : index
    %71 = vector.load %arg4[%c1_47, %c0_48, %c0_49] : memref<4x128x512xbf16, #tpu.memory_space<vmem>>, vector<1x128x512xbf16>
    %72 = vector.shape_cast %71 : vector<1x128x512xbf16> to vector<128x512xbf16>
    %cst_50 = arith.constant dense<0.000000e+00> : vector<8x512xf32>
    %73 = tpu.matmul %70, %72, %cst_50 {dimension_numbers = #tpu.dot_dimension_numbers<[1], [0], [0], [1], [0, 0, 1, 1], [], []>} : vector<8x128xbf16>, vector<128x512xbf16>, vector<8x512xf32> -> vector<8x512xf32>
    %c1_51 = arith.constant 1 : index
    %c0_52 = arith.constant 0 : index
    %c0_53 = arith.constant 0 : index
    %74 = vector.load %arg5[%c1_51, %c0_52, %c0_53] : memref<4x1x512xf32, #tpu.memory_space<vmem>>, vector<1x1x512xf32>
    %75 = vector.shape_cast %74 : vector<1x1x512xf32> to vector<1x512xf32>
    %76 = vector.broadcast %75 : vector<1x512xf32> to vector<8x512xf32>
    %77 = arith.addf %73, %76 : vector<8x512xf32>
    %78 = vector.extract_strided_slice %69 {offsets = [0, 128], sizes = [8, 128], strides = [1, 1]} : vector<8x256xbf16> to vector<8x128xbf16>
    %c1_54 = arith.constant 1 : index
    %c0_55 = arith.constant 0 : index
    %c0_56 = arith.constant 0 : index
    %79 = vector.load %arg6[%c1_54, %c0_55, %c0_56] : memref<4x128x512xbf16, #tpu.memory_space<vmem>>, vector<1x128x512xbf16>
    %80 = vector.shape_cast %79 : vector<1x128x512xbf16> to vector<128x512xbf16>
    %cst_57 = arith.constant dense<0.000000e+00> : vector<8x512xf32>
    %81 = tpu.matmul %78, %80, %cst_57 {dimension_numbers = #tpu.dot_dimension_numbers<[1], [0], [0], [1], [0, 0, 1, 1], [], []>} : vector<8x128xbf16>, vector<128x512xbf16>, vector<8x512xf32> -> vector<8x512xf32>
    %c1_58 = arith.constant 1 : index
    %c0_59 = arith.constant 0 : index
    %c0_60 = arith.constant 0 : index
    %82 = vector.load %arg7[%c1_58, %c0_59, %c0_60] : memref<4x1x512xf32, #tpu.memory_space<vmem>>, vector<1x1x512xf32>
    %83 = vector.shape_cast %82 : vector<1x1x512xf32> to vector<1x512xf32>
    %84 = vector.broadcast %83 : vector<1x512xf32> to vector<8x512xf32>
    %85 = arith.addf %81, %84 : vector<8x512xf32>
    %86 = arith.subf %30, %85 : vector<8x512xf32>
    %87 = math.exp %77 : vector<8x512xf32>
    %88 = arith.mulf %86, %87 : vector<8x512xf32>
    %89 = arith.truncf %88 : vector<8x512xf32> to vector<8x512xbf16>
    %c0_61 = arith.constant 0 : index
    %c0_62 = arith.constant 0 : index
    %c0_63 = arith.constant 0 : index
    %90 = vector.load %arg2[%c0_61, %c0_62, %c0_63] : memref<4x512x256xbf16, #tpu.memory_space<vmem>>, vector<1x512x256xbf16>
    %91 = vector.shape_cast %90 : vector<1x512x256xbf16> to vector<512x256xbf16>
    %cst_64 = arith.constant dense<0.000000e+00> : vector<8x256xf32>
    %92 = tpu.matmul %89, %91, %cst_64 {dimension_numbers = #tpu.dot_dimension_numbers<[1], [0], [0], [1], [0, 0, 1, 1], [], []>} : vector<8x512xbf16>, vector<512x256xbf16>, vector<8x256xf32> -> vector<8x256xf32>
    %c0_65 = arith.constant 0 : index
    %c0_66 = arith.constant 0 : index
    %c0_67 = arith.constant 0 : index
    %93 = vector.load %arg3[%c0_65, %c0_66, %c0_67] : memref<4x1x256xf32, #tpu.memory_space<vmem>>, vector<1x1x256xf32>
    %94 = vector.shape_cast %93 : vector<1x1x256xf32> to vector<1x256xf32>
    %95 = vector.broadcast %94 : vector<1x256xf32> to vector<8x256xf32>
    %96 = arith.addf %92, %95 : vector<8x256xf32>
    %97 = math.tanh %96 : vector<8x256xf32>
    %98 = arith.truncf %97 : vector<8x256xf32> to vector<8x256xbf16>
    %99 = vector.extract_strided_slice %98 {offsets = [0, 0], sizes = [8, 128], strides = [1, 1]} : vector<8x256xbf16> to vector<8x128xbf16>
    %c0_68 = arith.constant 0 : index
    %c0_69 = arith.constant 0 : index
    %c0_70 = arith.constant 0 : index
    %100 = vector.load %arg4[%c0_68, %c0_69, %c0_70] : memref<4x128x512xbf16, #tpu.memory_space<vmem>>, vector<1x128x512xbf16>
    %101 = vector.shape_cast %100 : vector<1x128x512xbf16> to vector<128x512xbf16>
    %cst_71 = arith.constant dense<0.000000e+00> : vector<8x512xf32>
    %102 = tpu.matmul %99, %101, %cst_71 {dimension_numbers = #tpu.dot_dimension_numbers<[1], [0], [0], [1], [0, 0, 1, 1], [], []>} : vector<8x128xbf16>, vector<128x512xbf16>, vector<8x512xf32> -> vector<8x512xf32>
    %c0_72 = arith.constant 0 : index
    %c0_73 = arith.constant 0 : index
    %c0_74 = arith.constant 0 : index
    %103 = vector.load %arg5[%c0_72, %c0_73, %c0_74] : memref<4x1x512xf32, #tpu.memory_space<vmem>>, vector<1x1x512xf32>
    %104 = vector.shape_cast %103 : vector<1x1x512xf32> to vector<1x512xf32>
    %105 = vector.broadcast %104 : vector<1x512xf32> to vector<8x512xf32>
    %106 = arith.addf %102, %105 : vector<8x512xf32>
    %107 = vector.extract_strided_slice %98 {offsets = [0, 128], sizes = [8, 128], strides = [1, 1]} : vector<8x256xbf16> to vector<8x128xbf16>
    %c0_75 = arith.constant 0 : index
    %c0_76 = arith.constant 0 : index
    %c0_77 = arith.constant 0 : index
    %108 = vector.load %arg6[%c0_75, %c0_76, %c0_77] : memref<4x128x512xbf16, #tpu.memory_space<vmem>>, vector<1x128x512xbf16>
    %109 = vector.shape_cast %108 : vector<1x128x512xbf16> to vector<128x512xbf16>
    %cst_78 = arith.constant dense<0.000000e+00> : vector<8x512xf32>
    %110 = tpu.matmul %107, %109, %cst_78 {dimension_numbers = #tpu.dot_dimension_numbers<[1], [0], [0], [1], [0, 0, 1, 1], [], []>} : vector<8x128xbf16>, vector<128x512xbf16>, vector<8x512xf32> -> vector<8x512xf32>
    %c0_79 = arith.constant 0 : index
    %c0_80 = arith.constant 0 : index
    %c0_81 = arith.constant 0 : index
    %111 = vector.load %arg7[%c0_79, %c0_80, %c0_81] : memref<4x1x512xf32, #tpu.memory_space<vmem>>, vector<1x1x512xf32>
    %112 = vector.shape_cast %111 : vector<1x1x512xf32> to vector<1x512xf32>
    %113 = vector.broadcast %112 : vector<1x512xf32> to vector<8x512xf32>
    %114 = arith.addf %110, %113 : vector<8x512xf32>
    %115 = arith.subf %59, %114 : vector<8x512xf32>
    %116 = math.exp %106 : vector<8x512xf32>
    %117 = arith.mulf %115, %116 : vector<8x512xf32>
    %c0_82 = arith.constant 0 : index
    %c0_83 = arith.constant 0 : index
    %118 = vector.load %arg8[%c0_82, %c0_83] : memref<8x1024xf32, #tpu.memory_space<vmem>>, vector<8x512xf32>
    tpu.vector_store %arg8[%c0_82, %c0_83], %88 {strides = array<i32>} : memref<8x1024xf32, #tpu.memory_space<vmem>>, vector<8x512xf32>,
    %c0_84 = arith.constant 0 : index
    %c512_85 = arith.constant 512 : index
    %119 = vector.load %arg8[%c0_84, %c512_85] : memref<8x1024xf32, #tpu.memory_space<vmem>>, vector<8x512xf32>
    tpu.vector_store %arg8[%c0_84, %c512_85], %117 {strides = array<i32>} : memref<8x1024xf32, #tpu.memory_space<vmem>>, vector<8x512xf32>,
    return
  }
  func.func @transform_0(%arg0: i32) -> (i32, i32) {
    %c0_i32 = arith.constant 0 : i32
    %c0_i32_0 = arith.constant 0 : i32
    return %arg0, %c0_i32 : i32, i32
  }
  func.func @transform_1(%arg0: i32) -> (i32, i32, i32) {
    %c0_i32 = arith.constant 0 : i32
    %c0_i32_0 = arith.constant 0 : i32
    %c0_i32_1 = arith.constant 0 : i32
    %c0_i32_2 = arith.constant 0 : i32
    return %c0_i32, %c0_i32_0, %c0_i32_1 : i32, i32, i32
  }
  func.func @transform_2(%arg0: i32) -> (i32, i32, i32) {
    %c0_i32 = arith.constant 0 : i32
    %c0_i32_0 = arith.constant 0 : i32
    %c0_i32_1 = arith.constant 0 : i32
    %c0_i32_2 = arith.constant 0 : i32
    return %c0_i32, %c0_i32_0, %c0_i32_1 : i32, i32, i32
  }
  func.func @transform_3(%arg0: i32) -> (i32, i32, i32) {
    %c0_i32 = arith.constant 0 : i32
    %c0_i32_0 = arith.constant 0 : i32
    %c0_i32_1 = arith.constant 0 : i32
    %c0_i32_2 = arith.constant 0 : i32
    return %c0_i32, %c0_i32_0, %c0_i32_1 : i32, i32, i32
  }
  func.func @transform_4(%arg0: i32) -> (i32, i32, i32) {
    %c0_i32 = arith.constant 0 : i32
    %c0_i32_0 = arith.constant 0 : i32
    %c0_i32_1 = arith.constant 0 : i32
    %c0_i32_2 = arith.constant 0 : i32
    return %c0_i32, %c0_i32_0, %c0_i32_1 : i32, i32, i32
  }
  func.func @transform_5(%arg0: i32) -> (i32, i32, i32) {
    %c0_i32 = arith.constant 0 : i32
    %c0_i32_0 = arith.constant 0 : i32
    %c0_i32_1 = arith.constant 0 : i32
    %c0_i32_2 = arith.constant 0 : i32
    return %c0_i32, %c0_i32_0, %c0_i32_1 : i32, i32, i32
  }
  func.func @transform_6(%arg0: i32) -> (i32, i32, i32) {
    %c0_i32 = arith.constant 0 : i32
    %c0_i32_0 = arith.constant 0 : i32
    %c0_i32_1 = arith.constant 0 : i32
    %c0_i32_2 = arith.constant 0 : i32
    return %c0_i32, %c0_i32_0, %c0_i32_1 : i32, i32, i32
  }
  func.func @transform_7(%arg0: i32) -> (i32, i32) {
    %c0_i32 = arith.constant 0 : i32
    %c0_i32_0 = arith.constant 0 : i32
    return %arg0, %c0_i32 : i32, i32
  }
}

module attributes {stable_mosaic.version = 11 : i64} {
  func.func @kernel(%arg0: i32, %arg1: memref<8x1024xf32, #tpu.memory_space<vmem>>, %arg2: memref<4x512x256xbf16, #tpu.memory_space<vmem>>, %arg3: memref<4x1x256xf32, #tpu.memory_space<vmem>>, %arg4: memref<4x128x512xbf16, #tpu.memory_space<vmem>>, %arg5: memref<4x1x512xf32, #tpu.memory_space<vmem>>, %arg6: memref<4x128x512xbf16, #tpu.memory_space<vmem>>, %arg7: memref<4x1x512xf32, #tpu.memory_space<vmem>>, %arg8: memref<8x1024xf32, #tpu.memory_space<vmem>>) attributes {dimension_semantics = [#tpu.dimension_semantics<parallel>], iteration_bounds = array<i64: 1>, scalar_prefetch = 0 : i64, scratch_operands = 0 : i64, tpu.core_type = #tpu.core_type<tc>, window_params = [{transform_indices = @transform_0, window_bounds = array<i64: 8, 1024>}, {pipeline_mode = #tpu.pipeline_mode<synchronous>, transform_indices = @transform_1, window_bounds = array<i64: 4, 512, 256>}, {pipeline_mode = #tpu.pipeline_mode<synchronous>, transform_indices = @transform_2, window_bounds = array<i64: 4, 1, 256>}, {pipeline_mode = #tpu.pipeline_mode<synchronous>, transform_indices = @transform_3, window_bounds = array<i64: 4, 128, 512>}, {pipeline_mode = #tpu.pipeline_mode<synchronous>, transform_indices = @transform_4, window_bounds = array<i64: 4, 1, 512>}, {pipeline_mode = #tpu.pipeline_mode<synchronous>, transform_indices = @transform_5, window_bounds = array<i64: 4, 128, 512>}, {pipeline_mode = #tpu.pipeline_mode<synchronous>, transform_indices = @transform_6, window_bounds = array<i64: 4, 1, 512>}, {transform_indices = @transform_7, window_bounds = array<i64: 8, 1024>}]} {
    %c0 = arith.constant 0 : index
    %c0_0 = arith.constant 0 : index
    %0 = vector.load %arg1[%c0, %c0_0] : memref<8x1024xf32, #tpu.memory_space<vmem>>, vector<8x512xf32>
    %c0_1 = arith.constant 0 : index
    %c512 = arith.constant 512 : index
    %1 = vector.load %arg1[%c0_1, %c512] : memref<8x1024xf32, #tpu.memory_space<vmem>>, vector<8x512xf32>
    %2 = arith.truncf %1 : vector<8x512xf32> to vector<8x512xbf16>
    %c3 = arith.constant 3 : index
    %c0_2 = arith.constant 0 : index
    %c0_3 = arith.constant 0 : index
    %3 = vector.load %arg2[%c3, %c0_2, %c0_3] : memref<4x512x256xbf16, #tpu.memory_space<vmem>>, vector<1x512x256xbf16>
    %4 = vector.shape_cast %3 : vector<1x512x256xbf16> to vector<512x256xbf16>
    %cst = arith.constant dense<0.000000e+00> : vector<8x256xf32>
    %5 = tpu.matmul %2, %4, %cst {dimension_numbers = #tpu.dot_dimension_numbers<[1], [0], [0], [1], [0, 0, 1, 1], [], []>} : vector<8x512xbf16>, vector<512x256xbf16>, vector<8x256xf32> -> vector<8x256xf32>
    %c3_4 = arith.constant 3 : index
    %c0_5 = arith.constant 0 : index
    %c0_6 = arith.constant 0 : index
    %6 = vector.load %arg3[%c3_4, %c0_5, %c0_6] : memref<4x1x256xf32, #tpu.memory_space<vmem>>, vector<1x1x256xf32>
    %7 = vector.shape_cast %6 : vector<1x1x256xf32> to vector<1x256xf32>
    %8 = vector.broadcast %7 : vector<1x256xf32> to vector<8x256xf32>
    %9 = arith.addf %5, %8 : vector<8x256xf32>
    %10 = math.tanh %9 : vector<8x256xf32>
    %11 = arith.truncf %10 : vector<8x256xf32> to vector<8x256xbf16>
    %12 = vector.extract_strided_slice %11 {offsets = [0, 0], sizes = [8, 128], strides = [1, 1]} : vector<8x256xbf16> to vector<8x128xbf16>
    %c3_7 = arith.constant 3 : index
    %c0_8 = arith.constant 0 : index
    %c0_9 = arith.constant 0 : index
    %13 = vector.load %arg4[%c3_7, %c0_8, %c0_9] : memref<4x128x512xbf16, #tpu.memory_space<vmem>>, vector<1x128x512xbf16>
    %14 = vector.shape_cast %13 : vector<1x128x512xbf16> to vector<128x512xbf16>
    %cst_10 = arith.constant dense<0.000000e+00> : vector<8x512xf32>
    %15 = tpu.matmul %12, %14, %cst_10 {dimension_numbers = #tpu.dot_dimension_numbers<[1], [0], [0], [1], [0, 0, 1, 1], [], []>} : vector<8x128xbf16>, vector<128x512xbf16>, vector<8x512xf32> -> vector<8x512xf32>
    %c3_11 = arith.constant 3 : index
    %c0_12 = arith.constant 0 : index
    %c0_13 = arith.constant 0 : index
    %16 = vector.load %arg5[%c3_11, %c0_12, %c0_13] : memref<4x1x512xf32, #tpu.memory_space<vmem>>, vector<1x1x512xf32>
    %17 = vector.shape_cast %16 : vector<1x1x512xf32> to vector<1x512xf32>
    %18 = vector.broadcast %17 : vector<1x512xf32> to vector<8x512xf32>
    %19 = arith.addf %15, %18 : vector<8x512xf32>
    %20 = vector.extract_strided_slice %11 {offsets = [0, 128], sizes = [8, 128], strides = [1, 1]} : vector<8x256xbf16> to vector<8x128xbf16>
    %c3_14 = arith.constant 3 : index
    %c0_15 = arith.constant 0 : index
    %c0_16 = arith.constant 0 : index
    %21 = vector.load %arg6[%c3_14, %c0_15, %c0_16] : memref<4x128x512xbf16, #tpu.memory_space<vmem>>, vector<1x128x512xbf16>
    %22 = vector.shape_cast %21 : vector<1x128x512xbf16> to vector<128x512xbf16>
    %cst_17 = arith.constant dense<0.000000e+00> : vector<8x512xf32>
    %23 = tpu.matmul %20, %22, %cst_17 {dimension_numbers = #tpu.dot_dimension_numbers<[1], [0], [0], [1], [0, 0, 1, 1], [], []>} : vector<8x128xbf16>, vector<128x512xbf16>, vector<8x512xf32> -> vector<8x512xf32>
    %c3_18 = arith.constant 3 : index
    %c0_19 = arith.constant 0 : index
    %c0_20 = arith.constant 0 : index
    %24 = vector.load %arg7[%c3_18, %c0_19, %c0_20] : memref<4x1x512xf32, #tpu.memory_space<vmem>>, vector<1x1x512xf32>
    %25 = vector.shape_cast %24 : vector<1x1x512xf32> to vector<1x512xf32>
    %26 = vector.broadcast %25 : vector<1x512xf32> to vector<8x512xf32>
    %27 = arith.addf %23, %26 : vector<8x512xf32>
    %28 = arith.subf %0, %27 : vector<8x512xf32>
    %29 = math.exp %19 : vector<8x512xf32>
    %30 = arith.mulf %28, %29 : vector<8x512xf32>
    %31 = arith.truncf %30 : vector<8x512xf32> to vector<8x512xbf16>
    %c2 = arith.constant 2 : index
    %c0_21 = arith.constant 0 : index
    %c0_22 = arith.constant 0 : index
    %32 = vector.load %arg2[%c2, %c0_21, %c0_22] : memref<4x512x256xbf16, #tpu.memory_space<vmem>>, vector<1x512x256xbf16>
    %33 = vector.shape_cast %32 : vector<1x512x256xbf16> to vector<512x256xbf16>
    %cst_23 = arith.constant dense<0.000000e+00> : vector<8x256xf32>
    %34 = tpu.matmul %31, %33, %cst_23 {dimension_numbers = #tpu.dot_dimension_numbers<[1], [0], [0], [1], [0, 0, 1, 1], [], []>} : vector<8x512xbf16>, vector<512x256xbf16>, vector<8x256xf32> -> vector<8x256xf32>
    %c2_24 = arith.constant 2 : index
    %c0_25 = arith.constant 0 : index
    %c0_26 = arith.constant 0 : index
    %35 = vector.load %arg3[%c2_24, %c0_25, %c0_26] : memref<4x1x256xf32, #tpu.memory_space<vmem>>, vector<1x1x256xf32>
    %36 = vector.shape_cast %35 : vector<1x1x256xf32> to vector<1x256xf32>
    %37 = vector.broadcast %36 : vector<1x256xf32> to vector<8x256xf32>
    %38 = arith.addf %34, %37 : vector<8x256xf32>
    %39 = math.tanh %38 : vector<8x256xf32>
    %40 = arith.truncf %39 : vector<8x256xf32> to vector<8x256xbf16>
    %41 = vector.extract_strided_slice %40 {offsets = [0, 0], sizes = [8, 128], strides = [1, 1]} : vector<8x256xbf16> to vector<8x128xbf16>
    %c2_27 = arith.constant 2 : index
    %c0_28 = arith.constant 0 : index
    %c0_29 = arith.constant 0 : index
    %42 = vector.load %arg4[%c2_27, %c0_28, %c0_29] : memref<4x128x512xbf16, #tpu.memory_space<vmem>>, vector<1x128x512xbf16>
    %43 = vector.shape_cast %42 : vector<1x128x512xbf16> to vector<128x512xbf16>
    %cst_30 = arith.constant dense<0.000000e+00> : vector<8x512xf32>
    %44 = tpu.matmul %41, %43, %cst_30 {dimension_numbers = #tpu.dot_dimension_numbers<[1], [0], [0], [1], [0, 0, 1, 1], [], []>} : vector<8x128xbf16>, vector<128x512xbf16>, vector<8x512xf32> -> vector<8x512xf32>
    %c2_31 = arith.constant 2 : index
    %c0_32 = arith.constant 0 : index
    %c0_33 = arith.constant 0 : index
    %45 = vector.load %arg5[%c2_31, %c0_32, %c0_33] : memref<4x1x512xf32, #tpu.memory_space<vmem>>, vector<1x1x512xf32>
    %46 = vector.shape_cast %45 : vector<1x1x512xf32> to vector<1x512xf32>
    %47 = vector.broadcast %46 : vector<1x512xf32> to vector<8x512xf32>
    %48 = arith.addf %44, %47 : vector<8x512xf32>
    %49 = vector.extract_strided_slice %40 {offsets = [0, 128], sizes = [8, 128], strides = [1, 1]} : vector<8x256xbf16> to vector<8x128xbf16>
    %c2_34 = arith.constant 2 : index
    %c0_35 = arith.constant 0 : index
    %c0_36 = arith.constant 0 : index
    %50 = vector.load %arg6[%c2_34, %c0_35, %c0_36] : memref<4x128x512xbf16, #tpu.memory_space<vmem>>, vector<1x128x512xbf16>
    %51 = vector.shape_cast %50 : vector<1x128x512xbf16> to vector<128x512xbf16>
    %cst_37 = arith.constant dense<0.000000e+00> : vector<8x512xf32>
    %52 = tpu.matmul %49, %51, %cst_37 {dimension_numbers = #tpu.dot_dimension_numbers<[1], [0], [0], [1], [0, 0, 1, 1], [], []>} : vector<8x128xbf16>, vector<128x512xbf16>, vector<8x512xf32> -> vector<8x512xf32>
    %c2_38 = arith.constant 2 : index
    %c0_39 = arith.constant 0 : index
    %c0_40 = arith.constant 0 : index
    %53 = vector.load %arg7[%c2_38, %c0_39, %c0_40] : memref<4x1x512xf32, #tpu.memory_space<vmem>>, vector<1x1x512xf32>
    %54 = vector.shape_cast %53 : vector<1x1x512xf32> to vector<1x512xf32>
    %55 = vector.broadcast %54 : vector<1x512xf32> to vector<8x512xf32>
    %56 = arith.addf %52, %55 : vector<8x512xf32>
    %57 = arith.subf %1, %56 : vector<8x512xf32>
    %58 = math.exp %48 : vector<8x512xf32>
    %59 = arith.mulf %57, %58 : vector<8x512xf32>
    %60 = arith.truncf %59 : vector<8x512xf32> to vector<8x512xbf16>
    %c1 = arith.constant 1 : index
    %c0_41 = arith.constant 0 : index
    %c0_42 = arith.constant 0 : index
    %61 = vector.load %arg2[%c1, %c0_41, %c0_42] : memref<4x512x256xbf16, #tpu.memory_space<vmem>>, vector<1x512x256xbf16>
    %62 = vector.shape_cast %61 : vector<1x512x256xbf16> to vector<512x256xbf16>
    %cst_43 = arith.constant dense<0.000000e+00> : vector<8x256xf32>
    %63 = tpu.matmul %60, %62, %cst_43 {dimension_numbers = #tpu.dot_dimension_numbers<[1], [0], [0], [1], [0, 0, 1, 1], [], []>} : vector<8x512xbf16>, vector<512x256xbf16>, vector<8x256xf32> -> vector<8x256xf32>
    %c1_44 = arith.constant 1 : index
    %c0_45 = arith.constant 0 : index
    %c0_46 = arith.constant 0 : index
    %64 = vector.load %arg3[%c1_44, %c0_45, %c0_46] : memref<4x1x256xf32, #tpu.memory_space<vmem>>, vector<1x1x256xf32>
    %65 = vector.shape_cast %64 : vector<1x1x256xf32> to vector<1x256xf32>
    %66 = vector.broadcast %65 : vector<1x256xf32> to vector<8x256xf32>
    %67 = arith.addf %63, %66 : vector<8x256xf32>
    %68 = math.tanh %67 : vector<8x256xf32>
    %69 = arith.truncf %68 : vector<8x256xf32> to vector<8x256xbf16>
    %70 = vector.extract_strided_slice %69 {offsets = [0, 0], sizes = [8, 128], strides = [1, 1]} : vector<8x256xbf16> to vector<8x128xbf16>
    %c1_47 = arith.constant 1 : index
    %c0_48 = arith.constant 0 : index
    %c0_49 = arith.constant 0 : index
    %71 = vector.load %arg4[%c1_47, %c0_48, %c0_49] : memref<4x128x512xbf16, #tpu.memory_space<vmem>>, vector<1x128x512xbf16>
    %72 = vector.shape_cast %71 : vector<1x128x512xbf16> to vector<128x512xbf16>
    %cst_50 = arith.constant dense<0.000000e+00> : vector<8x512xf32>
    %73 = tpu.matmul %70, %72, %cst_50 {dimension_numbers = #tpu.dot_dimension_numbers<[1], [0], [0], [1], [0, 0, 1, 1], [], []>} : vector<8x128xbf16>, vector<128x512xbf16>, vector<8x512xf32> -> vector<8x512xf32>
    %c1_51 = arith.constant 1 : index
    %c0_52 = arith.constant 0 : index
    %c0_53 = arith.constant 0 : index
    %74 = vector.load %arg5[%c1_51, %c0_52, %c0_53] : memref<4x1x512xf32, #tpu.memory_space<vmem>>, vector<1x1x512xf32>
    %75 = vector.shape_cast %74 : vector<1x1x512xf32> to vector<1x512xf32>
    %76 = vector.broadcast %75 : vector<1x512xf32> to vector<8x512xf32>
    %77 = arith.addf %73, %76 : vector<8x512xf32>
    %78 = vector.extract_strided_slice %69 {offsets = [0, 128], sizes = [8, 128], strides = [1, 1]} : vector<8x256xbf16> to vector<8x128xbf16>
    %c1_54 = arith.constant 1 : index
    %c0_55 = arith.constant 0 : index
    %c0_56 = arith.constant 0 : index
    %79 = vector.load %arg6[%c1_54, %c0_55, %c0_56] : memref<4x128x512xbf16, #tpu.memory_space<vmem>>, vector<1x128x512xbf16>
    %80 = vector.shape_cast %79 : vector<1x128x512xbf16> to vector<128x512xbf16>
    %cst_57 = arith.constant dense<0.000000e+00> : vector<8x512xf32>
    %81 = tpu.matmul %78, %80, %cst_57 {dimension_numbers = #tpu.dot_dimension_numbers<[1], [0], [0], [1], [0, 0, 1, 1], [], []>} : vector<8x128xbf16>, vector<128x512xbf16>, vector<8x512xf32> -> vector<8x512xf32>
    %c1_58 = arith.constant 1 : index
    %c0_59 = arith.constant 0 : index
    %c0_60 = arith.constant 0 : index
    %82 = vector.load %arg7[%c1_58, %c0_59, %c0_60] : memref<4x1x512xf32, #tpu.memory_space<vmem>>, vector<1x1x512xf32>
    %83 = vector.shape_cast %82 : vector<1x1x512xf32> to vector<1x512xf32>
    %84 = vector.broadcast %83 : vector<1x512xf32> to vector<8x512xf32>
    %85 = arith.addf %81, %84 : vector<8x512xf32>
    %86 = arith.subf %30, %85 : vector<8x512xf32>
    %87 = math.exp %77 : vector<8x512xf32>
    %88 = arith.mulf %86, %87 : vector<8x512xf32>
    %89 = arith.truncf %88 : vector<8x512xf32> to vector<8x512xbf16>
    %c0_61 = arith.constant 0 : index
    %c0_62 = arith.constant 0 : index
    %c0_63 = arith.constant 0 : index
    %90 = vector.load %arg2[%c0_61, %c0_62, %c0_63] : memref<4x512x256xbf16, #tpu.memory_space<vmem>>, vector<1x512x256xbf16>
    %91 = vector.shape_cast %90 : vector<1x512x256xbf16> to vector<512x256xbf16>
    %cst_64 = arith.constant dense<0.000000e+00> : vector<8x256xf32>
    %92 = tpu.matmul %89, %91, %cst_64 {dimension_numbers = #tpu.dot_dimension_numbers<[1], [0], [0], [1], [0, 0, 1, 1], [], []>} : vector<8x512xbf16>, vector<512x256xbf16>, vector<8x256xf32> -> vector<8x256xf32>
    %c0_65 = arith.constant 0 : index
    %c0_66 = arith.constant 0 : index
    %c0_67 = arith.constant 0 : index
    %93 = vector.load %arg3[%c0_65, %c0_66, %c0_67] : memref<4x1x256xf32, #tpu.memory_space<vmem>>, vector<1x1x256xf32>
    %94 = vector.shape_cast %93 : vector<1x1x256xf32> to vector<1x256xf32>
    %95 = vector.broadcast %94 : vector<1x256xf32> to vector<8x256xf32>
    %96 = arith.addf %92, %95 : vector<8x256xf32>
    %97 = math.tanh %96 : vector<8x256xf32>
    %98 = arith.truncf %97 : vector<8x256xf32> to vector<8x256xbf16>
    %99 = vector.extract_strided_slice %98 {offsets = [0, 0], sizes = [8, 128], strides = [1, 1]} : vector<8x256xbf16> to vector<8x128xbf16>
    %c0_68 = arith.constant 0 : index
    %c0_69 = arith.constant 0 : index
    %c0_70 = arith.constant 0 : index
    %100 = vector.load %arg4[%c0_68, %c0_69, %c0_70] : memref<4x128x512xbf16, #tpu.memory_space<vmem>>, vector<1x128x512xbf16>
    %101 = vector.shape_cast %100 : vector<1x128x512xbf16> to vector<128x512xbf16>
    %cst_71 = arith.constant dense<0.000000e+00> : vector<8x512xf32>
    %102 = tpu.matmul %99, %101, %cst_71 {dimension_numbers = #tpu.dot_dimension_numbers<[1], [0], [0], [1], [0, 0, 1, 1], [], []>} : vector<8x128xbf16>, vector<128x512xbf16>, vector<8x512xf32> -> vector<8x512xf32>
    %c0_72 = arith.constant 0 : index
    %c0_73 = arith.constant 0 : index
    %c0_74 = arith.constant 0 : index
    %103 = vector.load %arg5[%c0_72, %c0_73, %c0_74] : memref<4x1x512xf32, #tpu.memory_space<vmem>>, vector<1x1x512xf32>
    %104 = vector.shape_cast %103 : vector<1x1x512xf32> to vector<1x512xf32>
    %105 = vector.broadcast %104 : vector<1x512xf32> to vector<8x512xf32>
    %106 = arith.addf %102, %105 : vector<8x512xf32>
    %107 = vector.extract_strided_slice %98 {offsets = [0, 128], sizes = [8, 128], strides = [1, 1]} : vector<8x256xbf16> to vector<8x128xbf16>
    %c0_75 = arith.constant 0 : index
    %c0_76 = arith.constant 0 : index
    %c0_77 = arith.constant 0 : index
    %108 = vector.load %arg6[%c0_75, %c0_76, %c0_77] : memref<4x128x512xbf16, #tpu.memory_space<vmem>>, vector<1x128x512xbf16>
    %109 = vector.shape_cast %108 : vector<1x128x512xbf16> to vector<128x512xbf16>
    %cst_78 = arith.constant dense<0.000000e+00> : vector<8x512xf32>
    %110 = tpu.matmul %107, %109, %cst_78 {dimension_numbers = #tpu.dot_dimension_numbers<[1], [0], [0], [1], [0, 0, 1, 1], [], []>} : vector<8x128xbf16>, vector<128x512xbf16>, vector<8x512xf32> -> vector<8x512xf32>
    %c0_79 = arith.constant 0 : index
    %c0_80 = arith.constant 0 : index
    %c0_81 = arith.constant 0 : index
    %111 = vector.load %arg7[%c0_79, %c0_80, %c0_81] : memref<4x1x512xf32, #tpu.memory_space<vmem>>, vector<1x1x512xf32>
    %112 = vector.shape_cast %111 : vector<1x1x512xf32> to vector<1x512xf32>
    %113 = vector.broadcast %112 : vector<1x512xf32> to vector<8x512xf32>
    %114 = arith.addf %110, %113 : vector<8x512xf32>
    %115 = arith.subf %59, %114 : vector<8x512xf32>
    %116 = math.exp %106 : vector<8x512xf32>
    %117 = arith.mulf %115, %116 : vector<8x512xf32>
    %c0_82 = arith.constant 0 : index
    %c0_83 = arith.constant 0 : index
    %118 = vector.load %arg8[%c0_82, %c0_83] : memref<8x1024xf32, #tpu.memory_space<vmem>>, vector<8x512xf32>
    tpu.vector_store %arg8[%c0_82, %c0_83], %88 {strides = array<i32>} : memref<8x1024xf32, #tpu.memory_space<vmem>>, vector<8x512xf32>,
    %c0_84 = arith.constant 0 : index
    %c512_85 = arith.constant 512 : index
    %119 = vector.load %arg8[%c0_84, %c512_85] : memref<8x1024xf32, #tpu.memory_space<vmem>>, vector<8x512xf32>
    tpu.vector_store %arg8[%c0_84, %c512_85], %117 {strides = array<i32>} : memref<8x1024xf32, #tpu.memory_space<vmem>>, vector<8x512xf32>,
    return
  }
  func.func @transform_0(%arg0: i32) -> (i32, i32) {
    %c0_i32 = arith.constant 0 : i32
    %c0_i32_0 = arith.constant 0 : i32
    return %arg0, %c0_i32 : i32, i32
  }
  func.func @transform_1(%arg0: i32) -> (i32, i32, i32) {
    %c0_i32 = arith.constant 0 : i32
    %c0_i32_0 = arith.constant 0 : i32
    %c0_i32_1 = arith.constant 0 : i32
    %c0_i32_2 = arith.constant 0 : i32
    return %c0_i32, %c0_i32_0, %c0_i32_1 : i32, i32, i32
  }
  func.func @transform_2(%arg0: i32) -> (i32, i32, i32) {
    %c0_i32 = arith.constant 0 : i32
    %c0_i32_0 = arith.constant 0 : i32
    %c0_i32_1 = arith.constant 0 : i32
    %c0_i32_2 = arith.constant 0 : i32
    return %c0_i32, %c0_i32_0, %c0_i32_1 : i32, i32, i32
  }
  func.func @transform_3(%arg0: i32) -> (i32, i32, i32) {
    %c0_i32 = arith.constant 0 : i32
    %c0_i32_0 = arith.constant 0 : i32
    %c0_i32_1 = arith.constant 0 : i32
    %c0_i32_2 = arith.constant 0 : i32
    return %c0_i32, %c0_i32_0, %c0_i32_1 : i32, i32, i32
  }
  func.func @transform_4(%arg0: i32) -> (i32, i32, i32) {
    %c0_i32 = arith.constant 0 : i32
    %c0_i32_0 = arith.constant 0 : i32
    %c0_i32_1 = arith.constant 0 : i32
    %c0_i32_2 = arith.constant 0 : i32
    return %c0_i32, %c0_i32_0, %c0_i32_1 : i32, i32, i32
  }
  func.func @transform_5(%arg0: i32) -> (i32, i32, i32) {
    %c0_i32 = arith.constant 0 : i32
    %c0_i32_0 = arith.constant 0 : i32
    %c0_i32_1 = arith.constant 0 : i32
    %c0_i32_2 = arith.constant 0 : i32
    return %c0_i32, %c0_i32_0, %c0_i32_1 : i32, i32, i32
  }
  func.func @transform_6(%arg0: i32) -> (i32, i32, i32) {
    %c0_i32 = arith.constant 0 : i32
    %c0_i32_0 = arith.constant 0 : i32
    %c0_i32_1 = arith.constant 0 : i32
    %c0_i32_2 = arith.constant 0 : i32
    return %c0_i32, %c0_i32_0, %c0_i32_1 : i32, i32, i32
  }
  func.func @transform_7(%arg0: i32) -> (i32, i32) {
    %c0_i32 = arith.constant 0 : i32
    %c0_i32_0 = arith.constant 0 : i32
    return %arg0, %c0_i32 : i32, i32
  }
}

</mosaic_0001>

<llo_original>
// kernel: _run_compact.1
$region0: #{_run_compact.1}
  #allocation0 [shape = 'u32[]', space=smem, size = 0x4, offset = 0x4, fixed_abs, tag = 'smem constant byte address 0x4 - core index']
  #allocation1 [shape = 'u32[144,128]{1,0:T(1,128)}', space=vmem, size = 0x12000, scoped, tag = 'internal scratch']
  %s0 = inlined_call_operand.vmem [shape: f32[8,1024], index: 0, kind: input, shape index: {}]
  %s1 = inlined_call_operand.vmem [shape: bf16[4,512,256], index: 1, kind: input, shape index: {}]
  %s2 = inlined_call_operand.vmem [shape: f32[4,1,256], index: 2, kind: input, shape index: {}]
  %s3 = inlined_call_operand.hbm [shape: bf16[4,128,512], index: 3, kind: input, shape index: {}]
  %s4 = inlined_call_operand.vmem [shape: f32[4,1,512], index: 4, kind: input, shape index: {}]
  %s5 = inlined_call_operand.hbm [shape: bf16[4,128,512], index: 5, kind: input, shape index: {}]
  %s6 = inlined_call_operand.vmem [shape: f32[4,1,512], index: 6, kind: input, shape index: {}]
  %s7 = inlined_call_operand.vmem [shape: f32[8,1024], index: 7, kind: output, shape index: {}]
  %s8 = sld [smem:[#allocation0]]
  $region46: #{_run_compact.1} parent=0
    _
  %s10 = ssub.s32 1, %s8
  %s11 = scalar_select 0, %s10, %s8
  $region1: #{_run_compact.1} parent=0
    #allocation2 [shape = 'u8[524288]{0}', space=vmem, size = 0x80000, scoped, tag = 'input window, operand 3, single buffered']
    #allocation3 [shape = 's32[1]{0}', space=sflag, size = 0x4, scoped, tag = 'scoped memory for _run_compact.1']
    #allocation4 [shape = 'u8[524288]{0}', space=vmem, size = 0x80000, scoped, tag = 'input window, operand 5, single buffered']
    #allocation5 [shape = 's32[1]{0}', space=sflag, size = 0x4, scoped, tag = 'scoped memory for _run_compact.1']
    %12 = vsyncpa [#allocation3], 0
    %13 = vsyncpa [#allocation5], 0
    // Predicated region
    $region2: #{_run_compact.1} parent=1 // pred_check
      _
    $region3: #{_run_compact.1} parent=1 // pred_check_branch
      %15 = sbr.rel (0) target = $region5
    $region4: #{_run_compact.1} parent=1 // pred_region
      _
    $region5: #{_run_compact.1} parent=1 // pred_fallthru
      _
    // Predicated region
    $region6: #{_run_compact.1} parent=1 // pred_check
      _
    $region7: #{_run_compact.1} parent=1 // pred_check_branch
      %17 = sbr.rel (0) target = $region9
    $region8: #{_run_compact.1} parent=1 // pred_region
      _
    $region9: #{_run_compact.1} parent=1 // pred_fallthru
      _
    // Predicated region
    $region10: #{_run_compact.1} parent=1 // pred_check
      _
    $region11: #{_run_compact.1} parent=1 // pred_check_branch
      %19 = sbr.rel (0) target = $region13
    $region12: #{_run_compact.1} parent=1 // pred_region
      _
    $region13: #{_run_compact.1} parent=1 // pred_fallthru
      _
    // Predicated region
    $region14: #{_run_compact.1} parent=1 // pred_check
      _
    $region15: #{_run_compact.1} parent=1 // pred_check_branch
      %21 = sbr.rel (0) target = $region17
    $region16: #{_run_compact.1} parent=1 // pred_region
      %s23 = ssub.s32 16384, 16384
      %24 = vsyncadd [#allocation3], %s23
      %s25 = sshll.u32 [#allocation2], 4
      %s26 = int_to_ptr.vmem [resolvable:$true] %s25
      %31 = dma.hbm_to_vmem [thread:$0]  %s3, 16384, %s26, [#allocation3], 256, 256, 16
    $region17: #{_run_compact.1} parent=1 // pred_fallthru
      _
    // Predicated region
    $region18: #{_run_compact.1} parent=1 // pred_check
      _
    $region19: #{_run_compact.1} parent=1 // pred_check_branch
      %33 = sbr.rel (0) target = $region21
    $region20: #{_run_compact.1} parent=1 // pred_region
      _
    $region21: #{_run_compact.1} parent=1 // pred_fallthru
      _
    // Predicated region
    $region22: #{_run_compact.1} parent=1 // pred_check
      _
    $region23: #{_run_compact.1} parent=1 // pred_check_branch
      %35 = sbr.rel (0) target = $region25
    $region24: #{_run_compact.1} parent=1 // pred_region
      %s37 = ssub.s32 16384, 16384
      %38 = vsyncadd [#allocation5], %s37
      %s39 = sshll.u32 [#allocation4], 4
      %s40 = int_to_ptr.vmem [resolvable:$true] %s39
      %45 = dma.hbm_to_vmem [thread:$0]  %s5, 16384, %s40, [#allocation5], 256, 256, 16
    $region25: #{_run_compact.1} parent=1 // pred_fallthru
      _
    // Predicated region
    $region26: #{_run_compact.1} parent=1 // pred_check
      _
    $region27: #{_run_compact.1} parent=1 // pred_check_branch
      %47 = sbr.rel (0) target = $region29
    $region28: #{_run_compact.1} parent=1 // pred_region
      _
    $region29: #{_run_compact.1} parent=1 // pred_fallthru
      _
    // Predicated region
    $region30: #{_run_compact.1} parent=1 // pred_check
      _
    $region31: #{_run_compact.1} parent=1 // pred_check_branch
      %49 = sbr.rel (0) target = $region33
    $region32: #{_run_compact.1} parent=1 // pred_region
      %50 = dma.done [#allocation3], 16384
    $region33: #{_run_compact.1} parent=1 // pred_fallthru
      _
    // Predicated region
    $region34: #{_run_compact.1} parent=1 // pred_check
      _
    $region35: #{_run_compact.1} parent=1 // pred_check_branch
      %52 = sbr.rel (0) target = $region37
    $region36: #{_run_compact.1} parent=1 // pred_region
      %53 = dma.done [#allocation5], 16384
    $region37: #{_run_compact.1} parent=1 // pred_fallthru
      _
    %v55 = vld [vmem:[%s0] sm:$0xff]
    %v56 = vld [vmem:[%s0 + $0x8] sm:$0xff]
    %v57 = vld [vmem:[%s0 + $0x10] sm:$0xff]
    %v58 = vld [vmem:[%s0 + $0x18] sm:$0xff]
    %v59 = vld [vmem:[%s0 + $0x20] sm:$0xff]
    %v60 = vld [vmem:[%s0 + $0x28] sm:$0xff]
    %v61 = vld [vmem:[%s0 + $0x30] sm:$0xff]
    %v62 = vld [vmem:[%s0 + $0x38] sm:$0xff]
    %v63 = vpack.c.bf16 %v59, %v59
    %v64 = vpack.c.bf16 %v60, %v60
    %v65 = vpack.c.bf16 %v61, %v61
    %v66 = vpack.c.bf16 %v62, %v62
    %s67 = scalar_lea.vmem %s1, 1536
    %v68 = vld [vmem:[%s67] sm:$0xff]
    %v69 = vld [vmem:[%s67 + $0x8] sm:$0xff]
    %v70 = vld [vmem:[%s67 + $0x10] sm:$0xff]
    %v71 = vld [vmem:[%s67 + $0x18] sm:$0xff]
    %v72 = vld [vmem:[%s67 + $0x20] sm:$0xff]
    %v73 = vld [vmem:[%s67 + $0x28] sm:$0xff]
    %v74 = vld [vmem:[%s67 + $0x30] sm:$0xff]
    %v75 = vld [vmem:[%s67 + $0x38] sm:$0xff]
    %v76 = vld [vmem:[%s67 + $0x40] sm:$0xff]
    %v77 = vld [vmem:[%s67 + $0x48] sm:$0xff]
    %v78 = vld [vmem:[%s67 + $0x50] sm:$0xff]
    %v79 = vld [vmem:[%s67 + $0x58] sm:$0xff]
    %v80 = vld [vmem:[%s67 + $0x60] sm:$0xff]
    %v81 = vld [vmem:[%s67 + $0x68] sm:$0xff]
    %v82 = vld [vmem:[%s67 + $0x70] sm:$0xff]
    %v83 = vld [vmem:[%s67 + $0x78] sm:$0xff]
    %v84 = vld [vmem:[%s67 + $0x80] sm:$0xff]
    %v85 = vld [vmem:[%s67 + $0x88] sm:$0xff]
    %v86 = vld [vmem:[%s67 + $0x90] sm:$0xff]
    %v87 = vld [vmem:[%s67 + $0x98] sm:$0xff]
    %v88 = vld [vmem:[%s67 + $0xa0] sm:$0xff]
    %v89 = vld [vmem:[%s67 + $0xa8] sm:$0xff]
    %v90 = vld [vmem:[%s67 + $0xb0] sm:$0xff]
    %v91 = vld [vmem:[%s67 + $0xb8] sm:$0xff]
    %v92 = vld [vmem:[%s67 + $0xc0] sm:$0xff]
    %v93 = vld [vmem:[%s67 + $0xc8] sm:$0xff]
    %v94 = vld [vmem:[%s67 + $0xd0] sm:$0xff]
    %v95 = vld [vmem:[%s67 + $0xd8] sm:$0xff]
    %v96 = vld [vmem:[%s67 + $0xe0] sm:$0xff]
    %v97 = vld [vmem:[%s67 + $0xe8] sm:$0xff]
    %v98 = vld [vmem:[%s67 + $0xf0] sm:$0xff]
    %v99 = vld [vmem:[%s67 + $0xf8] sm:$0xff]
    %v100 = vld [vmem:[%s67 + $0x100] sm:$0xff]
    %v101 = vld [vmem:[%s67 + $0x108] sm:$0xff]
    %v102 = vld [vmem:[%s67 + $0x110] sm:$0xff]
    %v103 = vld [vmem:[%s67 + $0x118] sm:$0xff]
    %v104 = vld [vmem:[%s67 + $0x120] sm:$0xff]
    %v105 = vld [vmem:[%s67 + $0x128] sm:$0xff]
    %v106 = vld [vmem:[%s67 + $0x130] sm:$0xff]
    %v107 = vld [vmem:[%s67 + $0x138] sm:$0xff]
    %v108 = vld [vmem:[%s67 + $0x140] sm:$0xff]
    %v109 = vld [vmem:[%s67 + $0x148] sm:$0xff]
    %v110 = vld [vmem:[%s67 + $0x150] sm:$0xff]
    %v111 = vld [vmem:[%s67 + $0x158] sm:$0xff]
    %v112 = vld [vmem:[%s67 + $0x160] sm:$0xff]
    %v113 = vld [vmem:[%s67 + $0x168] sm:$0xff]
    %v114 = vld [vmem:[%s67 + $0x170] sm:$0xff]
    %v115 = vld [vmem:[%s67 + $0x178] sm:$0xff]
    %v116 = vld [vmem:[%s67 + $0x180] sm:$0xff]
    %v117 = vld [vmem:[%s67 + $0x188] sm:$0xff]
    %v118 = vld [vmem:[%s67 + $0x190] sm:$0xff]
    %v119 = vld [vmem:[%s67 + $0x198] sm:$0xff]
    %v120 = vld [vmem:[%s67 + $0x1a0] sm:$0xff]
    %v121 = vld [vmem:[%s67 + $0x1a8] sm:$0xff]
    %v122 = vld [vmem:[%s67 + $0x1b0] sm:$0xff]
    %v123 = vld [vmem:[%s67 + $0x1b8] sm:$0xff]
    %v124 = vld [vmem:[%s67 + $0x1c0] sm:$0xff]
    %v125 = vld [vmem:[%s67 + $0x1c8] sm:$0xff]
    %v126 = vld [vmem:[%s67 + $0x1d0] sm:$0xff]
    %v127 = vld [vmem:[%s67 + $0x1d8] sm:$0xff]
    %v128 = vld [vmem:[%s67 + $0x1e0] sm:$0xff]
    %v129 = vld [vmem:[%s67 + $0x1e8] sm:$0xff]
    %v130 = vld [vmem:[%s67 + $0x1f0] sm:$0xff]
    %v131 = vld [vmem:[%s67 + $0x1f8] sm:$0xff]
    %s132 = scalar_lea.vmem %s2, 6
    %v133 = vld [vmem:[%s132] sm:$0x3]
    %v135 = vlaneseq
    %v136 = vshrl.u32 %v135, 7
    %v137 = vsub.s32 0, %v136
    %v138 = vrot.slane %v133, %v137
    %v139 = vlaneseq
    %v140 = vshrl.u32 %v139, 7
    %v141 = vsub.s32 1, %v140
    %v142 = vrot.slane %v133, %v141
    %v209 = vunpack.c.l.b16 %v68
    %v210 = vunpack.c.h.b16 %v68
    %v211 = vunpack.c.l.b16 %v69
    %v212 = vunpack.c.h.b16 %v69
    %v213 = vunpack.c.l.b16 %v70
    %v214 = vunpack.c.h.b16 %v70
    %v215 = vunpack.c.l.b16 %v71
    %v216 = vunpack.c.h.b16 %v71
    %v217 = vunpack.c.l.b16 %v72
    %v218 = vunpack.c.h.b16 %v72
    %v219 = vunpack.c.l.b16 %v73
    %v220 = vunpack.c.h.b16 %v73
    %v221 = vunpack.c.l.b16 %v74
    %v222 = vunpack.c.h.b16 %v74
    %v223 = vunpack.c.l.b16 %v75
    %v224 = vunpack.c.h.b16 %v75
    %v225 = vunpack.c.l.b16 %v76
    %v226 = vunpack.c.h.b16 %v76
    %v227 = vunpack.c.l.b16 %v77
    %v228 = vunpack.c.h.b16 %v77
    %v229 = vunpack.c.l.b16 %v78
    %v230 = vunpack.c.h.b16 %v78
    %v231 = vunpack.c.l.b16 %v79
    %v232 = vunpack.c.h.b16 %v79
    %v233 = vunpack.c.l.b16 %v80
    %v234 = vunpack.c.h.b16 %v80
    %v235 = vunpack.c.l.b16 %v81
    %v236 = vunpack.c.h.b16 %v81
    %v237 = vunpack.c.l.b16 %v82
    %v238 = vunpack.c.h.b16 %v82
    %v239 = vunpack.c.l.b16 %v83
    %v240 = vunpack.c.h.b16 %v83
    %v241 = vunpack.c.l.b16 %v84
    %v242 = vunpack.c.h.b16 %v84
    %v243 = vunpack.c.l.b16 %v85
    %v244 = vunpack.c.h.b16 %v85
    %v245 = vunpack.c.l.b16 %v86
    %v246 = vunpack.c.h.b16 %v86
    %v247 = vunpack.c.l.b16 %v87
    %v248 = vunpack.c.h.b16 %v87
    %v249 = vunpack.c.l.b16 %v88
    %v250 = vunpack.c.h.b16 %v88
    %v251 = vunpack.c.l.b16 %v89
    %v252 = vunpack.c.h.b16 %v89
    %v253 = vunpack.c.l.b16 %v90
    %v254 = vunpack.c.h.b16 %v90
    %v255 = vunpack.c.l.b16 %v91
    %v256 = vunpack.c.h.b16 %v91
    %v257 = vunpack.c.l.b16 %v92
    %v258 = vunpack.c.h.b16 %v92
    %v259 = vunpack.c.l.b16 %v93
    %v260 = vunpack.c.h.b16 %v93
    %v261 = vunpack.c.l.b16 %v94
    %v262 = vunpack.c.h.b16 %v94
    %v263 = vunpack.c.l.b16 %v95
    %v264 = vunpack.c.h.b16 %v95
    %v265 = vunpack.c.l.b16 %v96
    %v266 = vunpack.c.h.b16 %v96
    %v267 = vunpack.c.l.b16 %v97
    %v268 = vunpack.c.h.b16 %v97
    %v269 = vunpack.c.l.b16 %v98
    %v270 = vunpack.c.h.b16 %v98
    %v271 = vunpack.c.l.b16 %v99
    %v272 = vunpack.c.h.b16 %v99
    %v273 = vunpack.c.l.b16 %v100
    %v274 = vunpack.c.h.b16 %v100
    %v275 = vunpack.c.l.b16 %v101
    %v276 = vunpack.c.h.b16 %v101
    %v277 = vunpack.c.l.b16 %v102
    %v278 = vunpack.c.h.b16 %v102
    %v279 = vunpack.c.l.b16 %v103
    %v280 = vunpack.c.h.b16 %v103
    %v281 = vunpack.c.l.b16 %v104
    %v282 = vunpack.c.h.b16 %v104
    %v283 = vunpack.c.l.b16 %v105
    %v284 = vunpack.c.h.b16 %v105
    %v285 = vunpack.c.l.b16 %v106
    %v286 = vunpack.c.h.b16 %v106
    %v287 = vunpack.c.l.b16 %v107
    %v288 = vunpack.c.h.b16 %v107
    %v289 = vunpack.c.l.b16 %v108
    %v290 = vunpack.c.h.b16 %v108
    %v291 = vunpack.c.l.b16 %v109
    %v292 = vunpack.c.h.b16 %v109
    %v293 = vunpack.c.l.b16 %v110
    %v294 = vunpack.c.h.b16 %v110
    %v295 = vunpack.c.l.b16 %v111
    %v296 = vunpack.c.h.b16 %v111
    %v297 = vunpack.c.l.b16 %v112
    %v298 = vunpack.c.h.b16 %v112
    %v299 = vunpack.c.l.b16 %v113
    %v300 = vunpack.c.h.b16 %v113
    %v301 = vunpack.c.l.b16 %v114
    %v302 = vunpack.c.h.b16 %v114
    %v303 = vunpack.c.l.b16 %v115
    %v304 = vunpack.c.h.b16 %v115
    %v305 = vunpack.c.l.b16 %v116
    %v306 = vunpack.c.h.b16 %v116
    %v307 = vunpack.c.l.b16 %v117
    %v308 = vunpack.c.h.b16 %v117
    %v309 = vunpack.c.l.b16 %v118
    %v310 = vunpack.c.h.b16 %v118
    %v311 = vunpack.c.l.b16 %v119
    %v312 = vunpack.c.h.b16 %v119
    %v313 = vunpack.c.l.b16 %v120
    %v314 = vunpack.c.h.b16 %v120
    %v315 = vunpack.c.l.b16 %v121
    %v316 = vunpack.c.h.b16 %v121
    %v317 = vunpack.c.l.b16 %v122
    %v318 = vunpack.c.h.b16 %v122
    %v319 = vunpack.c.l.b16 %v123
    %v320 = vunpack.c.h.b16 %v123
    %v321 = vunpack.c.l.b16 %v124
    %v322 = vunpack.c.h.b16 %v124
    %v323 = vunpack.c.l.b16 %v125
    %v324 = vunpack.c.h.b16 %v125
    %v325 = vunpack.c.l.b16 %v126
    %v326 = vunpack.c.h.b16 %v126
    %v327 = vunpack.c.l.b16 %v127
    %v328 = vunpack.c.h.b16 %v127
    %v329 = vunpack.c.l.b16 %v128
    %v330 = vunpack.c.h.b16 %v128
    %v331 = vunpack.c.l.b16 %v129
    %v332 = vunpack.c.h.b16 %v129
    %v333 = vunpack.c.l.b16 %v130
    %v334 = vunpack.c.h.b16 %v130
    %v335 = vunpack.c.l.b16 %v131
    %v336 = vunpack.c.h.b16 %v131
    %v337 = vpack.c.b16 %v211, %v209
    %v338 = vpack.c.b16 %v212, %v210
    %v339 = vpack.c.b16 %v215, %v213
    %v340 = vpack.c.b16 %v216, %v214
    %v341 = vpack.c.b16 %v219, %v217
    %v342 = vpack.c.b16 %v220, %v218
    %v343 = vpack.c.b16 %v223, %v221
    %v344 = vpack.c.b16 %v224, %v222
    %v345 = vpack.c.b16 %v227, %v225
    %v346 = vpack.c.b16 %v228, %v226
    %v347 = vpack.c.b16 %v231, %v229
    %v348 = vpack.c.b16 %v232, %v230
    %v349 = vpack.c.b16 %v235, %v233
    %v350 = vpack.c.b16 %v236, %v234
    %v351 = vpack.c.b16 %v239, %v237
    %v352 = vpack.c.b16 %v240, %v238
    %v353 = vpack.c.b16 %v243, %v241
    %v354 = vpack.c.b16 %v244, %v242
    %v355 = vpack.c.b16 %v247, %v245
    %v356 = vpack.c.b16 %v248, %v246
    %v357 = vpack.c.b16 %v251, %v249
    %v358 = vpack.c.b16 %v252, %v250
    %v359 = vpack.c.b16 %v255, %v253
    %v360 = vpack.c.b16 %v256, %v254
    %v361 = vpack.c.b16 %v259, %v257
    %v362 = vpack.c.b16 %v260, %v258
    %v363 = vpack.c.b16 %v263, %v261
    %v364 = vpack.c.b16 %v264, %v262
    %v365 = vpack.c.b16 %v267, %v265
    %v366 = vpack.c.b16 %v268, %v266
    %v367 = vpack.c.b16 %v271, %v269
    %v368 = vpack.c.b16 %v272, %v270
    %v369 = vpack.c.b16 %v275, %v273
    %v370 = vpack.c.b16 %v276, %v274
    %v371 = vpack.c.b16 %v279, %v277
    %v372 = vpack.c.b16 %v280, %v278
    %v373 = vpack.c.b16 %v283, %v281
    %v374 = vpack.c.b16 %v284, %v282
    %v375 = vpack.c.b16 %v287, %v285
    %v376 = vpack.c.b16 %v288, %v286
    %v377 = vpack.c.b16 %v291, %v289
    %v378 = vpack.c.b16 %v292, %v290
    %v379 = vpack.c.b16 %v295, %v293
    %v380 = vpack.c.b16 %v296, %v294
    %v381 = vpack.c.b16 %v299, %v297
    %v382 = vpack.c.b16 %v300, %v298
    %v383 = vpack.c.b16 %v303, %v301
    %v384 = vpack.c.b16 %v304, %v302
    %v385 = vpack.c.b16 %v307, %v305
    %v386 = vpack.c.b16 %v308, %v306
    %v387 = vpack.c.b16 %v311, %v309
    %v388 = vpack.c.b16 %v312, %v310
    %v389 = vpack.c.b16 %v315, %v313
    %v390 = vpack.c.b16 %v316, %v314
    %v391 = vpack.c.b16 %v319, %v317
    %v392 = vpack.c.b16 %v320, %v318
    %v393 = vpack.c.b16 %v323, %v321
    %v394 = vpack.c.b16 %v324, %v322
    %v395 = vpack.c.b16 %v327, %v325
    %v396 = vpack.c.b16 %v328, %v326
    %v397 = vpack.c.b16 %v331, %v329
    %v398 = vpack.c.b16 %v332, %v330
    %v399 = vpack.c.b16 %v335, %v333
    %v400 = vpack.c.b16 %v336, %v334
    %465 = vmatprep.subr.bf16.mxu0 %v338
    %466 = vmatpush1.bf16.msra.mxu0 %v337
    %467 = vmatprep.subr.bf16.mxu0 %v340
    %468 = vmatpush1.bf16.msra.mxu0 %v339
    %469 = vmatprep.subr.bf16.mxu0 %v342
    %470 = vmatpush1.bf16.msra.mxu0 %v341
    %471 = vmatprep.subr.bf16.mxu0 %v344
    %472 = vmatpush1.bf16.msra.mxu0 %v343
    %473 = vmatprep.subr.bf16.mxu0 %v346
    %474 = vmatpush1.bf16.msra.mxu0 %v345
    %475 = vmatprep.subr.bf16.mxu0 %v348
    %476 = vmatpush1.bf16.msra.mxu0 %v347
    %477 = vmatprep.subr.bf16.mxu0 %v350
    %478 = vmatpush1.bf16.msra.mxu0 %v349
    %479 = vmatprep.subr.bf16.mxu0 %v352
    %480 = vmatpush1.bf16.msra.mxu0 %v351
    %481 = vmatprep.subr.bf16.mxu0 %v354
    %482 = vmatpush1.bf16.msra.mxu0 %v353
    %483 = vmatprep.subr.bf16.mxu0 %v356
    %484 = vmatpush1.bf16.msra.mxu0 %v355
    %485 = vmatprep.subr.bf16.mxu0 %v358
    %486 = vmatpush1.bf16.msra.mxu0 %v357
    %487 = vmatprep.subr.bf16.mxu0 %v360
    %488 = vmatpush1.bf16.msra.mxu0 %v359
    %489 = vmatprep.subr.bf16.mxu0 %v362
    %490 = vmatpush1.bf16.msra.mxu0 %v361
    %491 = vmatprep.subr.bf16.mxu0 %v364
    %492 = vmatpush1.bf16.msra.mxu0 %v363
    %493 = vmatprep.subr.bf16.mxu0 %v366
    %494 = vmatpush1.bf16.msra.mxu0 %v365
    %495 = vmatprep.subr.bf16.mxu0 %v368
    %496 = vmatpush1.bf16.msra.mxu0 %v367
    %497 = vmatprep.mubr.bf16.mxu0 %v64
    %498 = vmatmul.mubr.bf16.gmra.mrb[0].mxu0 %v63
    %v499 = vpop.f32.mrb[0].mxu0
    %v500 = vadd.f32 %v138, %v499
    %v501 = vpop.f32.mrb[0].mxu0
    %v502 = vadd.f32 %v142, %v501
    %v503 = vpop.f32.mrb[0].mxu0
    %v504 = vpop.f32.mrb[0].mxu0
    %505 = vdwg.mxu0
    %506 = vmatprep.subr.bf16.mxu0 %v370
    %507 = vmatpush1.bf16.msra.mxu0 %v369
    %508 = vmatprep.subr.bf16.mxu0 %v372
    %509 = vmatpush1.bf16.msra.mxu0 %v371
    %510 = vmatprep.subr.bf16.mxu0 %v374
    %511 = vmatpush1.bf16.msra.mxu0 %v373
    %512 = vmatprep.subr.bf16.mxu0 %v376
    %513 = vmatpush1.bf16.msra.mxu0 %v375
    %514 = vmatprep.subr.bf16.mxu0 %v378
    %515 = vmatpush1.bf16.msra.mxu0 %v377
    %516 = vmatprep.subr.bf16.mxu0 %v380
    %517 = vmatpush1.bf16.msra.mxu0 %v379
    %518 = vmatprep.subr.bf16.mxu0 %v382
    %519 = vmatpush1.bf16.msra.mxu0 %v381
    %520 = vmatprep.subr.bf16.mxu0 %v384
    %521 = vmatpush1.bf16.msra.mxu0 %v383
    %522 = vmatprep.subr.bf16.mxu0 %v386
    %523 = vmatpush1.bf16.msra.mxu0 %v385
    %524 = vmatprep.subr.bf16.mxu0 %v388
    %525 = vmatpush1.bf16.msra.mxu0 %v387
    %526 = vmatprep.subr.bf16.mxu0 %v390
    %527 = vmatpush1.bf16.msra.mxu0 %v389
    %528 = vmatprep.subr.bf16.mxu0 %v392
    %529 = vmatpush1.bf16.msra.mxu0 %v391
    %530 = vmatprep.subr.bf16.mxu0 %v394
    %531 = vmatpush1.bf16.msra.mxu0 %v393
    %532 = vmatprep.subr.bf16.mxu0 %v396
    %533 = vmatpush1.bf16.msra.mxu0 %v395
    %534 = vmatprep.subr.bf16.mxu0 %v398
    %535 = vmatpush1.bf16.msra.mxu0 %v397
    %536 = vmatprep.subr.bf16.mxu0 %v400
    %537 = vmatpush1.bf16.msra.mxu0 %v399
    %538 = vmatprep.mubr.bf16.mxu0 %v66
    %539 = vmatmul.mubr.bf16.gmra.mrb[0].mxu0 %v65
    %v540 = vpop.f32.mrb[0].mxu0
    %v541 = vadd.f32 %v500, %v540
    %v542 = vpop.f32.mrb[0].mxu0
    %v543 = vadd.f32 %v502, %v542
    %v544 = vpop.f32.mrb[0].mxu0
    %v545 = vpop.f32.mrb[0].mxu0
    %546 = vdwg.mxu0
    %v547 = vtanh.pop %v541
    %v548 = vtanh.pop %v543
    %v549 = vpack.c.bf16 %v547, %v547
    %v550 = vpack.c.bf16 %v548, %v548
    %s551 = scalar_lea.vmem [#allocation2], 768
    %v552 = vld [vmem:[%s551] sm:$0xff]
    %v553 = vld [vmem:[%s551 + $0x8] sm:$0xff]
    %v554 = vld [vmem:[%s551 + $0x10] sm:$0xff]
    %v555 = vld [vmem:[%s551 + $0x18] sm:$0xff]
    %v556 = vld [vmem:[%s551 + $0x20] sm:$0xff]
    %v557 = vld [vmem:[%s551 + $0x28] sm:$0xff]
    %v558 = vld [vmem:[%s551 + $0x30] sm:$0xff]
    %v559 = vld [vmem:[%s551 + $0x38] sm:$0xff]
    %v560 = vld [vmem:[%s551 + $0x40] sm:$0xff]
    %v561 = vld [vmem:[%s551 + $0x48] sm:$0xff]
    %v562 = vld [vmem:[%s551 + $0x50] sm:$0xff]
    %v563 = vld [vmem:[%s551 + $0x58] sm:$0xff]
    %v564 = vld [vmem:[%s551 + $0x60] sm:$0xff]
    %v565 = vld [vmem:[%s551 + $0x68] sm:$0xff]
    %v566 = vld [vmem:[%s551 + $0x70] sm:$0xff]
    %v567 = vld [vmem:[%s551 + $0x78] sm:$0xff]
    %v568 = vld [vmem:[%s551 + $0x80] sm:$0xff]
    %v569 = vld [vmem:[%s551 + $0x88] sm:$0xff]
    %v570 = vld [vmem:[%s551 + $0x90] sm:$0xff]
    %v571 = vld [vmem:[%s551 + $0x98] sm:$0xff]
    %v572 = vld [vmem:[%s551 + $0xa0] sm:$0xff]
    %v573 = vld [vmem:[%s551 + $0xa8] sm:$0xff]
    %v574 = vld [vmem:[%s551 + $0xb0] sm:$0xff]
    %v575 = vld [vmem:[%s551 + $0xb8] sm:$0xff]
    %v576 = vld [vmem:[%s551 + $0xc0] sm:$0xff]
    %v577 = vld [vmem:[%s551 + $0xc8] sm:$0xff]
    %v578 = vld [vmem:[%s551 + $0xd0] sm:$0xff]
    %v579 = vld [vmem:[%s551 + $0xd8] sm:$0xff]
    %v580 = vld [vmem:[%s551 + $0xe0] sm:$0xff]
    %v581 = vld [vmem:[%s551 + $0xe8] sm:$0xff]
    %v582 = vld [vmem:[%s551 + $0xf0] sm:$0xff]
    %v583 = vld [vmem:[%s551 + $0xf8] sm:$0xff]
    %s584 = scalar_lea.vmem %s4, 12
    %v585 = vld [vmem:[%s584] sm:$0xf]
    %v587 = vlaneseq
    %v588 = vshrl.u32 %v587, 7
    %v589 = vsub.s32 0, %v588
    %v590 = vrot.slane %v585, %v589
    %v591 = vlaneseq
    %v592 = vshrl.u32 %v591, 7
    %v593 = vsub.s32 1, %v592
    %v594 = vrot.slane %v585, %v593
    %v595 = vlaneseq
    %v596 = vshrl.u32 %v595, 7
    %v597 = vsub.s32 2, %v596
    %v598 = vrot.slane %v585, %v597
    %v599 = vlaneseq
    %v600 = vshrl.u32 %v599, 7
    %v601 = vsub.s32 3, %v600
    %v602 = vrot.slane %v585, %v601
    %v639 = vunpack.c.l.b16 %v552
    %v640 = vunpack.c.h.b16 %v552
    %v641 = vunpack.c.l.b16 %v553
    %v642 = vunpack.c.h.b16 %v553
    %v643 = vunpack.c.l.b16 %v554
    %v644 = vunpack.c.h.b16 %v554
    %v645 = vunpack.c.l.b16 %v555
    %v646 = vunpack.c.h.b16 %v555
    %v647 = vunpack.c.l.b16 %v556
    %v648 = vunpack.c.h.b16 %v556
    %v649 = vunpack.c.l.b16 %v557
    %v650 = vunpack.c.h.b16 %v557
    %v651 = vunpack.c.l.b16 %v558
    %v652 = vunpack.c.h.b16 %v558
    %v653 = vunpack.c.l.b16 %v559
    %v654 = vunpack.c.h.b16 %v559
    %v655 = vunpack.c.l.b16 %v560
    %v656 = vunpack.c.h.b16 %v560
    %v657 = vunpack.c.l.b16 %v561
    %v658 = vunpack.c.h.b16 %v561
    %v659 = vunpack.c.l.b16 %v562
    %v660 = vunpack.c.h.b16 %v562
    %v661 = vunpack.c.l.b16 %v563
    %v662 = vunpack.c.h.b16 %v563
    %v663 = vunpack.c.l.b16 %v564
    %v664 = vunpack.c.h.b16 %v564
    %v665 = vunpack.c.l.b16 %v565
    %v666 = vunpack.c.h.b16 %v565
    %v667 = vunpack.c.l.b16 %v566
    %v668 = vunpack.c.h.b16 %v566
    %v669 = vunpack.c.l.b16 %v567
    %v670 = vunpack.c.h.b16 %v567
    %v671 = vunpack.c.l.b16 %v568
    %v672 = vunpack.c.h.b16 %v568
    %v673 = vunpack.c.l.b16 %v569
    %v674 = vunpack.c.h.b16 %v569
    %v675 = vunpack.c.l.b16 %v570
    %v676 = vunpack.c.h.b16 %v570
    %v677 = vunpack.c.l.b16 %v571
    %v678 = vunpack.c.h.b16 %v571
    %v679 = vunpack.c.l.b16 %v572
    %v680 = vunpack.c.h.b16 %v572
    %v681 = vunpack.c.l.b16 %v573
    %v682 = vunpack.c.h.b16 %v573
    %v683 = vunpack.c.l.b16 %v574
    %v684 = vunpack.c.h.b16 %v574
    %v685 = vunpack.c.l.b16 %v575
    %v686 = vunpack.c.h.b16 %v575
    %v687 = vunpack.c.l.b16 %v576
    %v688 = vunpack.c.h.b16 %v576
    %v689 = vunpack.c.l.b16 %v577
    %v690 = vunpack.c.h.b16 %v577
    %v691 = vunpack.c.l.b16 %v578
    %v692 = vunpack.c.h.b16 %v578
    %v693 = vunpack.c.l.b16 %v579
    %v694 = vunpack.c.h.b16 %v579
    %v695 = vunpack.c.l.b16 %v580
    %v696 = vunpack.c.h.b16 %v580
    %v697 = vunpack.c.l.b16 %v581
    %v698 = vunpack.c.h.b16 %v581
    %v699 = vunpack.c.l.b16 %v582
    %v700 = vunpack.c.h.b16 %v582
    %v701 = vunpack.c.l.b16 %v583
    %v702 = vunpack.c.h.b16 %v583
    %v703 = vpack.c.b16 %v643, %v639
    %v704 = vpack.c.b16 %v644, %v640
    %v705 = vpack.c.b16 %v645, %v641
    %v706 = vpack.c.b16 %v646, %v642
    %v707 = vpack.c.b16 %v651, %v647
    %v708 = vpack.c.b16 %v652, %v648
    %v709 = vpack.c.b16 %v653, %v649
    %v710 = vpack.c.b16 %v654, %v650
    %v711 = vpack.c.b16 %v659, %v655
    %v712 = vpack.c.b16 %v660, %v656
    %v713 = vpack.c.b16 %v661, %v657
    %v714 = vpack.c.b16 %v662, %v658
    %v715 = vpack.c.b16 %v667, %v663
    %v716 = vpack.c.b16 %v668, %v664
    %v717 = vpack.c.b16 %v669, %v665
    %v718 = vpack.c.b16 %v670, %v666
    %v719 = vpack.c.b16 %v675, %v671
    %v720 = vpack.c.b16 %v676, %v672
    %v721 = vpack.c.b16 %v677, %v673
    %v722 = vpack.c.b16 %v678, %v674
    %v723 = vpack.c.b16 %v683, %v679
    %v724 = vpack.c.b16 %v684, %v680
    %v725 = vpack.c.b16 %v685, %v681
    %v726 = vpack.c.b16 %v686, %v682
    %v727 = vpack.c.b16 %v691, %v687
    %v728 = vpack.c.b16 %v692, %v688
    %v729 = vpack.c.b16 %v693, %v689
    %v730 = vpack.c.b16 %v694, %v690
    %v731 = vpack.c.b16 %v699, %v695
    %v732 = vpack.c.b16 %v700, %v696
    %v733 = vpack.c.b16 %v701, %v697
    %v734 = vpack.c.b16 %v702, %v698
    %767 = vmatprep.subr.bf16.mxu0 %v704
    %768 = vmatpush1.bf16.msra.mxu0 %v703
    %769 = vmatprep.subr.bf16.mxu0 %v708
    %770 = vmatpush1.bf16.msra.mxu0 %v707
    %771 = vmatprep.subr.bf16.mxu0 %v712
    %772 = vmatpush1.bf16.msra.mxu0 %v711
    %773 = vmatprep.subr.bf16.mxu0 %v716
    %774 = vmatpush1.bf16.msra.mxu0 %v715
    %775 = vmatprep.subr.bf16.mxu0 %v720
    %776 = vmatpush1.bf16.msra.mxu0 %v719
    %777 = vmatprep.subr.bf16.mxu0 %v724
    %778 = vmatpush1.bf16.msra.mxu0 %v723
    %779 = vmatprep.subr.bf16.mxu0 %v728
    %780 = vmatpush1.bf16.msra.mxu0 %v727
    %781 = vmatprep.subr.bf16.mxu0 %v732
    %782 = vmatpush1.bf16.msra.mxu0 %v731
    %783 = vmatprep.subr.bf16.mxu0 0
    %784 = vmatpush1.bf16.msra.mxu0 0
    %785 = vmatprep.subr.bf16.mxu0 0
    %786 = vmatpush1.bf16.msra.mxu0 0
    %787 = vmatprep.subr.bf16.mxu0 0
    %788 = vmatpush1.bf16.msra.mxu0 0
    %789 = vmatprep.subr.bf16.mxu0 0
    %790 = vmatpush1.bf16.msra.mxu0 0
    %791 = vmatprep.subr.bf16.mxu0 0
    %792 = vmatpush1.bf16.msra.mxu0 0
    %793 = vmatprep.subr.bf16.mxu0 0
    %794 = vmatpush1.bf16.msra.mxu0 0
    %795 = vmatprep.subr.bf16.mxu0 0
    %796 = vmatpush1.bf16.msra.mxu0 0
    %797 = vmatprep.subr.bf16.mxu0 0
    %798 = vmatpush1.bf16.msra.mxu0 0
    %799 = vmatprep.mubr.bf16.mxu0 0
    %800 = vmatmul.mubr.bf16.gmra.mrb[0].mxu0 %v549
    %v801 = vpop.f32.mrb[0].mxu0
    %v802 = vadd.f32 %v590, %v801
    %v803 = vpop.f32.mrb[0].mxu0
    %v804 = vadd.f32 %v594, %v803
    %v805 = vpop.f32.mrb[0].mxu0
    %v806 = vpop.f32.mrb[0].mxu0
    %807 = vdwg.mxu0
    %808 = vmatprep.subr.bf16.mxu0 %v706
    %809 = vmatpush1.bf16.msra.mxu0 %v705
    %810 = vmatprep.subr.bf16.mxu0 %v710
    %811 = vmatpush1.bf16.msra.mxu0 %v709
    %812 = vmatprep.subr.bf16.mxu0 %v714
    %813 = vmatpush1.bf16.msra.mxu0 %v713
    %814 = vmatprep.subr.bf16.mxu0 %v718
    %815 = vmatpush1.bf16.msra.mxu0 %v717
    %816 = vmatprep.subr.bf16.mxu0 %v722
    %817 = vmatpush1.bf16.msra.mxu0 %v721
    %818 = vmatprep.subr.bf16.mxu0 %v726
    %819 = vmatpush1.bf16.msra.mxu0 %v725
    %820 = vmatprep.subr.bf16.mxu0 %v730
    %821 = vmatpush1.bf16.msra.mxu0 %v729
    %822 = vmatprep.subr.bf16.mxu0 %v734
    %823 = vmatpush1.bf16.msra.mxu0 %v733
    %824 = vmatprep.subr.bf16.mxu0 0
    %825 = vmatpush1.bf16.msra.mxu0 0
    %826 = vmatprep.subr.bf16.mxu0 0
    %827 = vmatpush1.bf16.msra.mxu0 0
    %828 = vmatprep.subr.bf16.mxu0 0
    %829 = vmatpush1.bf16.msra.mxu0 0
    %830 = vmatprep.subr.bf16.mxu0 0
    %831 = vmatpush1.bf16.msra.mxu0 0
    %832 = vmatprep.subr.bf16.mxu0 0
    %833 = vmatpush1.bf16.msra.mxu0 0
    %834 = vmatprep.subr.bf16.mxu0 0
    %835 = vmatpush1.bf16.msra.mxu0 0
    %836 = vmatprep.subr.bf16.mxu0 0
    %837 = vmatpush1.bf16.msra.mxu0 0
    %838 = vmatprep.subr.bf16.mxu0 0
    %839 = vmatpush1.bf16.msra.mxu0 0
    %840 = vmatprep.mubr.bf16.mxu0 0
    %841 = vmatmul.mubr.bf16.gmra.mrb[0].mxu0 %v549
    %v842 = vpop.f32.mrb[0].mxu0
    %v843 = vadd.f32 %v598, %v842
    %v844 = vpop.f32.mrb[0].mxu0
    %v845 = vadd.f32 %v602, %v844
    %v846 = vpop.f32.mrb[0].mxu0
    %v847 = vpop.f32.mrb[0].mxu0
    %848 = vdwg.mxu0
    %s849 = scalar_lea.vmem [#allocation4], 768
    %v850 = vld [vmem:[%s849] sm:$0xff]
    %v851 = vld [vmem:[%s849 + $0x8] sm:$0xff]
    %v852 = vld [vmem:[%s849 + $0x10] sm:$0xff]
    %v853 = vld [vmem:[%s849 + $0x18] sm:$0xff]
    %v854 = vld [vmem:[%s849 + $0x20] sm:$0xff]
    %v855 = vld [vmem:[%s849 + $0x28] sm:$0xff]
    %v856 = vld [vmem:[%s849 + $0x30] sm:$0xff]
    %v857 = vld [vmem:[%s849 + $0x38] sm:$0xff]
    %v858 = vld [vmem:[%s849 + $0x40] sm:$0xff]
    %v859 = vld [vmem:[%s849 + $0x48] sm:$0xff]
    %v860 = vld [vmem:[%s849 + $0x50] sm:$0xff]
    %v861 = vld [vmem:[%s849 + $0x58] sm:$0xff]
    %v862 = vld [vmem:[%s849 + $0x60] sm:$0xff]
    %v863 = vld [vmem:[%s849 + $0x68] sm:$0xff]
    %v864 = vld [vmem:[%s849 + $0x70] sm:$0xff]
    %v865 = vld [vmem:[%s849 + $0x78] sm:$0xff]
    %v866 = vld [vmem:[%s849 + $0x80] sm:$0xff]
    %v867 = vld [vmem:[%s849 + $0x88] sm:$0xff]
    %v868 = vld [vmem:[%s849 + $0x90] sm:$0xff]
    %v869 = vld [vmem:[%s849 + $0x98] sm:$0xff]
    %v870 = vld [vmem:[%s849 + $0xa0] sm:$0xff]
    %v871 = vld [vmem:[%s849 + $0xa8] sm:$0xff]
    %v872 = vld [vmem:[%s849 + $0xb0] sm:$0xff]
    %v873 = vld [vmem:[%s849 + $0xb8] sm:$0xff]
    %v874 = vld [vmem:[%s849 + $0xc0] sm:$0xff]
    %v875 = vld [vmem:[%s849 + $0xc8] sm:$0xff]
    %v876 = vld [vmem:[%s849 + $0xd0] sm:$0xff]
    %v877 = vld [vmem:[%s849 + $0xd8] sm:$0xff]
    %v878 = vld [vmem:[%s849 + $0xe0] sm:$0xff]
    %v879 = vld [vmem:[%s849 + $0xe8] sm:$0xff]
    %v880 = vld [vmem:[%s849 + $0xf0] sm:$0xff]
    %v881 = vld [vmem:[%s849 + $0xf8] sm:$0xff]
    %s882 = scalar_lea.vmem %s6, 12
    %v883 = vld [vmem:[%s882] sm:$0xf]
    %v885 = vlaneseq
    %v886 = vshrl.u32 %v885, 7
    %v887 = vsub.s32 0, %v886
    %v888 = vrot.slane %v883, %v887
    %v889 = vlaneseq
    %v890 = vshrl.u32 %v889, 7
    %v891 = vsub.s32 1, %v890
    %v892 = vrot.slane %v883, %v891
    %v893 = vlaneseq
    %v894 = vshrl.u32 %v893, 7
    %v895 = vsub.s32 2, %v894
    %v896 = vrot.slane %v883, %v895
    %v897 = vlaneseq
    %v898 = vshrl.u32 %v897, 7
    %v899 = vsub.s32 3, %v898
    %v900 = vrot.slane %v883, %v899
    %v937 = vunpack.c.l.b16 %v850
    %v938 = vunpack.c.h.b16 %v850
    %v939 = vunpack.c.l.b16 %v851
    %v940 = vunpack.c.h.b16 %v851
    %v941 = vunpack.c.l.b16 %v852
    %v942 = vunpack.c.h.b16 %v852
    %v943 = vunpack.c.l.b16 %v853
    %v944 = vunpack.c.h.b16 %v853
    %v945 = vunpack.c.l.b16 %v854
    %v946 = vunpack.c.h.b16 %v854
    %v947 = vunpack.c.l.b16 %v855
    %v948 = vunpack.c.h.b16 %v855
    %v949 = vunpack.c.l.b16 %v856
    %v950 = vunpack.c.h.b16 %v856
    %v951 = vunpack.c.l.b16 %v857
    %v952 = vunpack.c.h.b16 %v857
    %v953 = vunpack.c.l.b16 %v858
    %v954 = vunpack.c.h.b16 %v858
    %v955 = vunpack.c.l.b16 %v859
    %v956 = vunpack.c.h.b16 %v859
    %v957 = vunpack.c.l.b16 %v860
    %v958 = vunpack.c.h.b16 %v860
    %v959 = vunpack.c.l.b16 %v861
    %v960 = vunpack.c.h.b16 %v861
    %v961 = vunpack.c.l.b16 %v862
    %v962 = vunpack.c.h.b16 %v862
    %v963 = vunpack.c.l.b16 %v863
    %v964 = vunpack.c.h.b16 %v863
    %v965 = vunpack.c.l.b16 %v864
    %v966 = vunpack.c.h.b16 %v864
    %v967 = vunpack.c.l.b16 %v865
    %v968 = vunpack.c.h.b16 %v865
    %v969 = vunpack.c.l.b16 %v866
    %v970 = vunpack.c.h.b16 %v866
    %v971 = vunpack.c.l.b16 %v867
    %v972 = vunpack.c.h.b16 %v867
    %v973 = vunpack.c.l.b16 %v868
    %v974 = vunpack.c.h.b16 %v868
    %v975 = vunpack.c.l.b16 %v869
    %v976 = vunpack.c.h.b16 %v869
    %v977 = vunpack.c.l.b16 %v870
    %v978 = vunpack.c.h.b16 %v870
    %v979 = vunpack.c.l.b16 %v871
    %v980 = vunpack.c.h.b16 %v871
    %v981 = vunpack.c.l.b16 %v872
    %v982 = vunpack.c.h.b16 %v872
    %v983 = vunpack.c.l.b16 %v873
    %v984 = vunpack.c.h.b16 %v873
    %v985 = vunpack.c.l.b16 %v874
    %v986 = vunpack.c.h.b16 %v874
    %v987 = vunpack.c.l.b16 %v875
    %v988 = vunpack.c.h.b16 %v875
    %v989 = vunpack.c.l.b16 %v876
    %v990 = vunpack.c.h.b16 %v876
    %v991 = vunpack.c.l.b16 %v877
    %v992 = vunpack.c.h.b16 %v877
    %v993 = vunpack.c.l.b16 %v878
    %v994 = vunpack.c.h.b16 %v878
    %v995 = vunpack.c.l.b16 %v879
    %v996 = vunpack.c.h.b16 %v879
    %v997 = vunpack.c.l.b16 %v880
    %v998 = vunpack.c.h.b16 %v880
    %v999 = vunpack.c.l.b16 %v881
    %v1000 = vunpack.c.h.b16 %v881
    %v1001 = vpack.c.b16 %v941, %v937
    %v1002 = vpack.c.b16 %v942, %v938
    %v1003 = vpack.c.b16 %v943, %v939
    %v1004 = vpack.c.b16 %v944, %v940
    %v1005 = vpack.c.b16 %v949, %v945
    %v1006 = vpack.c.b16 %v950, %v946
    %v1007 = vpack.c.b16 %v951, %v947
    %v1008 = vpack.c.b16 %v952, %v948
    %v1009 = vpack.c.b16 %v957, %v953
    %v1010 = vpack.c.b16 %v958, %v954
    %v1011 = vpack.c.b16 %v959, %v955
    %v1012 = vpack.c.b16 %v960, %v956
    %v1013 = vpack.c.b16 %v965, %v961
    %v1014 = vpack.c.b16 %v966, %v962
    %v1015 = vpack.c.b16 %v967, %v963
    %v1016 = vpack.c.b16 %v968, %v964
    %v1017 = vpack.c.b16 %v973, %v969
    %v1018 = vpack.c.b16 %v974, %v970
    %v1019 = vpack.c.b16 %v975, %v971
    %v1020 = vpack.c.b16 %v976, %v972
    %v1021 = vpack.c.b16 %v981, %v977
    %v1022 = vpack.c.b16 %v982, %v978
    %v1023 = vpack.c.b16 %v983, %v979
    %v1024 = vpack.c.b16 %v984, %v980
    %v1025 = vpack.c.b16 %v989, %v985
    %v1026 = vpack.c.b16 %v990, %v986
    %v1027 = vpack.c.b16 %v991, %v987
    %v1028 = vpack.c.b16 %v992, %v988
    %v1029 = vpack.c.b16 %v997, %v993
    %v1030 = vpack.c.b16 %v998, %v994
    %v1031 = vpack.c.b16 %v999, %v995
    %v1032 = vpack.c.b16 %v1000, %v996
    %1065 = vmatprep.subr.bf16.mxu0 %v1002
    %1066 = vmatpush1.bf16.msra.mxu0 %v1001
    %1067 = vmatprep.subr.bf16.mxu0 %v1006
    %1068 = vmatpush1.bf16.msra.mxu0 %v1005
    %1069 = vmatprep.subr.bf16.mxu0 %v1010
    %1070 = vmatpush1.bf16.msra.mxu0 %v1009
    %1071 = vmatprep.subr.bf16.mxu0 %v1014
    %1072 = vmatpush1.bf16.msra.mxu0 %v1013
    %1073 = vmatprep.subr.bf16.mxu0 %v1018
    %1074 = vmatpush1.bf16.msra.mxu0 %v1017
    %1075 = vmatprep.subr.bf16.mxu0 %v1022
    %1076 = vmatpush1.bf16.msra.mxu0 %v1021
    %1077 = vmatprep.subr.bf16.mxu0 %v1026
    %1078 = vmatpush1.bf16.msra.mxu0 %v1025
    %1079 = vmatprep.subr.bf16.mxu0 %v1030
    %1080 = vmatpush1.bf16.msra.mxu0 %v1029
    %1081 = vmatprep.subr.bf16.mxu0 0
    %1082 = vmatpush1.bf16.msra.mxu0 0
    %1083 = vmatprep.subr.bf16.mxu0 0
    %1084 = vmatpush1.bf16.msra.mxu0 0
    %1085 = vmatprep.subr.bf16.mxu0 0
    %1086 = vmatpush1.bf16.msra.mxu0 0
    %1087 = vmatprep.subr.bf16.mxu0 0
    %1088 = vmatpush1.bf16.msra.mxu0 0
    %1089 = vmatprep.subr.bf16.mxu0 0
    %1090 = vmatpush1.bf16.msra.mxu0 0
    %1091 = vmatprep.subr.bf16.mxu0 0
    %1092 = vmatpush1.bf16.msra.mxu0 0
    %1093 = vmatprep.subr.bf16.mxu0 0
    %1094 = vmatpush1.bf16.msra.mxu0 0
    %1095 = vmatprep.subr.bf16.mxu0 0
    %1096 = vmatpush1.bf16.msra.mxu0 0
    %1097 = vmatprep.mubr.bf16.mxu0 0
    %1098 = vmatmul.mubr.bf16.gmra.mrb[0].mxu0 %v550
    %v1099 = vpop.f32.mrb[0].mxu0
    %v1100 = vadd.f32 %v888, %v1099
    %v1101 = vpop.f32.mrb[0].mxu0
    %v1102 = vadd.f32 %v892, %v1101
    %v1103 = vpop.f32.mrb[0].mxu0
    %v1104 = vpop.f32.mrb[0].mxu0
    %1105 = vdwg.mxu0
    %1106 = vmatprep.subr.bf16.mxu0 %v1004
    %1107 = vmatpush1.bf16.msra.mxu0 %v1003
    %1108 = vmatprep.subr.bf16.mxu0 %v1008
    %1109 = vmatpush1.bf16.msra.mxu0 %v1007
    %1110 = vmatprep.subr.bf16.mxu0 %v1012
    %1111 = vmatpush1.bf16.msra.mxu0 %v1011
    %1112 = vmatprep.subr.bf16.mxu0 %v1016
    %1113 = vmatpush1.bf16.msra.mxu0 %v1015
    %1114 = vmatprep.subr.bf16.mxu0 %v1020
    %1115 = vmatpush1.bf16.msra.mxu0 %v1019
    %1116 = vmatprep.subr.bf16.mxu0 %v1024
    %1117 = vmatpush1.bf16.msra.mxu0 %v1023
    %1118 = vmatprep.subr.bf16.mxu0 %v1028
    %1119 = vmatpush1.bf16.msra.mxu0 %v1027
    %1120 = vmatprep.subr.bf16.mxu0 %v1032
    %1121 = vmatpush1.bf16.msra.mxu0 %v1031
    %1122 = vmatprep.subr.bf16.mxu0 0
    %1123 = vmatpush1.bf16.msra.mxu0 0
    %1124 = vmatprep.subr.bf16.mxu0 0
    %1125 = vmatpush1.bf16.msra.mxu0 0
    %1126 = vmatprep.subr.bf16.mxu0 0
    %1127 = vmatpush1.bf16.msra.mxu0 0
    %1128 = vmatprep.subr.bf16.mxu0 0
    %1129 = vmatpush1.bf16.msra.mxu0 0
    %1130 = vmatprep.subr.bf16.mxu0 0
    %1131 = vmatpush1.bf16.msra.mxu0 0
    %1132 = vmatprep.subr.bf16.mxu0 0
    %1133 = vmatpush1.bf16.msra.mxu0 0
    %1134 = vmatprep.subr.bf16.mxu0 0
    %1135 = vmatpush1.bf16.msra.mxu0 0
    %1136 = vmatprep.subr.bf16.mxu0 0
    %1137 = vmatpush1.bf16.msra.mxu0 0
    %1138 = vmatprep.mubr.bf16.mxu0 0
    %1139 = vmatmul.mubr.bf16.gmra.mrb[0].mxu0 %v550
    %v1140 = vpop.f32.mrb[0].mxu0
    %v1141 = vadd.f32 %v896, %v1140
    %v1142 = vpop.f32.mrb[0].mxu0
    %v1143 = vadd.f32 %v900, %v1142
    %v1144 = vpop.f32.mrb[0].mxu0
    %v1145 = vpop.f32.mrb[0].mxu0
    %1146 = vdwg.mxu0
    %v1147 = vsub.f32 %v55, %v1100
    %v1148 = vsub.f32 %v56, %v1102
    %v1149 = vsub.f32 %v57, %v1141
    %v1150 = vsub.f32 %v58, %v1143
    %v1151 = vmul.f32 %v802, 1.442695
    %v1152 = vpow.pop %v1151
    %v1153 = vmul.f32 %v804, 1.442695
    %v1154 = vpow.pop %v1153
    %v1155 = vmul.f32 %v843, 1.442695
    %v1156 = vpow.pop %v1155
    %v1157 = vmul.f32 %v845, 1.442695
    %v1158 = vpow.pop %v1157
    %v1159 = vmul.f32 %v1147, %v1152
    %v1160 = vmul.f32 %v1148, %v1154
    %v1161 = vmul.f32 %v1149, %v1156
    %v1162 = vmul.f32 %v1150, %v1158
    %v1163 = vpack.c.bf16 %v1159, %v1159
    %v1164 = vpack.c.bf16 %v1160, %v1160
    %v1165 = vpack.c.bf16 %v1161, %v1161
    %v1166 = vpack.c.bf16 %v1162, %v1162
    %s1167 = scalar_lea.vmem %s1, 1024
    %v1168 = vld [vmem:[%s1167] sm:$0xff]
    %v1169 = vld [vmem:[%s1167 + $0x8] sm:$0xff]
    %v1170 = vld [vmem:[%s1167 + $0x10] sm:$0xff]
    %v1171 = vld [vmem:[%s1167 + $0x18] sm:$0xff]
    %v1172 = vld [vmem:[%s1167 + $0x20] sm:$0xff]
    %v1173 = vld [vmem:[%s1167 + $0x28] sm:$0xff]
    %v1174 = vld [vmem:[%s1167 + $0x30] sm:$0xff]
    %v1175 = vld [vmem:[%s1167 + $0x38] sm:$0xff]
    %v1176 = vld [vmem:[%s1167 + $0x40] sm:$0xff]
    %v1177 = vld [vmem:[%s1167 + $0x48] sm:$0xff]
    %v1178 = vld [vmem:[%s1167 + $0x50] sm:$0xff]
    %v1179 = vld [vmem:[%s1167 + $0x58] sm:$0xff]
    %v1180 = vld [vmem:[%s1167 + $0x60] sm:$0xff]
    %v1181 = vld [vmem:[%s1167 + $0x68] sm:$0xff]
    %v1182 = vld [vmem:[%s1167 + $0x70] sm:$0xff]
    %v1183 = vld [vmem:[%s1167 + $0x78] sm:$0xff]
    %v1184 = vld [vmem:[%s1167 + $0x80] sm:$0xff]
    %v1185 = vld [vmem:[%s1167 + $0x88] sm:$0xff]
    %v1186 = vld [vmem:[%s1167 + $0x90] sm:$0xff]
    %v1187 = vld [vmem:[%s1167 + $0x98] sm:$0xff]
    %v1188 = vld [vmem:[%s1167 + $0xa0] sm:$0xff]
    %v1189 = vld [vmem:[%s1167 + $0xa8] sm:$0xff]
    %v1190 = vld [vmem:[%s1167 + $0xb0] sm:$0xff]
    %v1191 = vld [vmem:[%s1167 + $0xb8] sm:$0xff]
    %v1192 = vld [vmem:[%s1167 + $0xc0] sm:$0xff]
    %v1193 = vld [vmem:[%s1167 + $0xc8] sm:$0xff]
    %v1194 = vld [vmem:[%s1167 + $0xd0] sm:$0xff]
    %v1195 = vld [vmem:[%s1167 + $0xd8] sm:$0xff]
    %v1196 = vld [vmem:[%s1167 + $0xe0] sm:$0xff]
    %v1197 = vld [vmem:[%s1167 + $0xe8] sm:$0xff]
    %v1198 = vld [vmem:[%s1167 + $0xf0] sm:$0xff]
    %v1199 = vld [vmem:[%s1167 + $0xf8] sm:$0xff]
    %v1200 = vld [vmem:[%s1167 + $0x100] sm:$0xff]
    %v1201 = vld [vmem:[%s1167 + $0x108] sm:$0xff]
    %v1202 = vld [vmem:[%s1167 + $0x110] sm:$0xff]
    %v1203 = vld [vmem:[%s1167 + $0x118] sm:$0xff]
    %v1204 = vld [vmem:[%s1167 + $0x120] sm:$0xff]
    %v1205 = vld [vmem:[%s1167 + $0x128] sm:$0xff]
    %v1206 = vld [vmem:[%s1167 + $0x130] sm:$0xff]
    %v1207 = vld [vmem:[%s1167 + $0x138] sm:$0xff]
    %v1208 = vld [vmem:[%s1167 + $0x140] sm:$0xff]
    %v1209 = vld [vmem:[%s1167 + $0x148] sm:$0xff]
    %v1210 = vld [vmem:[%s1167 + $0x150] sm:$0xff]
    %v1211 = vld [vmem:[%s1167 + $0x158] sm:$0xff]
    %v1212 = vld [vmem:[%s1167 + $0x160] sm:$0xff]
    %v1213 = vld [vmem:[%s1167 + $0x168] sm:$0xff]
    %v1214 = vld [vmem:[%s1167 + $0x170] sm:$0xff]
    %v1215 = vld [vmem:[%s1167 + $0x178] sm:$0xff]
    %v1216 = vld [vmem:[%s1167 + $0x180] sm:$0xff]
    %v1217 = vld [vmem:[%s1167 + $0x188] sm:$0xff]
    %v1218 = vld [vmem:[%s1167 + $0x190] sm:$0xff]
    %v1219 = vld [vmem:[%s1167 + $0x198] sm:$0xff]
    %v1220 = vld [vmem:[%s1167 + $0x1a0] sm:$0xff]
    %v1221 = vld [vmem:[%s1167 + $0x1a8] sm:$0xff]
    %v1222 = vld [vmem:[%s1167 + $0x1b0] sm:$0xff]
    %v1223 = vld [vmem:[%s1167 + $0x1b8] sm:$0xff]
    %v1224 = vld [vmem:[%s1167 + $0x1c0] sm:$0xff]
    %v1225 = vld [vmem:[%s1167 + $0x1c8] sm:$0xff]
    %v1226 = vld [vmem:[%s1167 + $0x1d0] sm:$0xff]
    %v1227 = vld [vmem:[%s1167 + $0x1d8] sm:$0xff]
    %v1228 = vld [vmem:[%s1167 + $0x1e0] sm:$0xff]
    %v1229 = vld [vmem:[%s1167 + $0x1e8] sm:$0xff]
    %v1230 = vld [vmem:[%s1167 + $0x1f0] sm:$0xff]
    %v1231 = vld [vmem:[%s1167 + $0x1f8] sm:$0xff]
    %s1232 = scalar_lea.vmem %s2, 4
    %v1233 = vld [vmem:[%s1232] sm:$0x3]
    %v1235 = vlaneseq
    %v1236 = vshrl.u32 %v1235, 7
    %v1237 = vsub.s32 0, %v1236
    %v1238 = vrot.slane %v1233, %v1237
    %v1239 = vlaneseq
    %v1240 = vshrl.u32 %v1239, 7
    %v1241 = vsub.s32 1, %v1240
    %v1242 = vrot.slane %v1233, %v1241
    %v1309 = vunpack.c.l.b16 %v1168
    %v1310 = vunpack.c.h.b16 %v1168
    %v1311 = vunpack.c.l.b16 %v1169
    %v1312 = vunpack.c.h.b16 %v1169
    %v1313 = vunpack.c.l.b16 %v1170
    %v1314 = vunpack.c.h.b16 %v1170
    %v1315 = vunpack.c.l.b16 %v1171
    %v1316 = vunpack.c.h.b16 %v1171
    %v1317 = vunpack.c.l.b16 %v1172
    %v1318 = vunpack.c.h.b16 %v1172
    %v1319 = vunpack.c.l.b16 %v1173
    %v1320 = vunpack.c.h.b16 %v1173
    %v1321 = vunpack.c.l.b16 %v1174
    %v1322 = vunpack.c.h.b16 %v1174
    %v1323 = vunpack.c.l.b16 %v1175
    %v1324 = vunpack.c.h.b16 %v1175
    %v1325 = vunpack.c.l.b16 %v1176
    %v1326 = vunpack.c.h.b16 %v1176
    %v1327 = vunpack.c.l.b16 %v1177
    %v1328 = vunpack.c.h.b16 %v1177
    %v1329 = vunpack.c.l.b16 %v1178
    %v1330 = vunpack.c.h.b16 %v1178
    %v1331 = vunpack.c.l.b16 %v1179
    %v1332 = vunpack.c.h.b16 %v1179
    %v1333 = vunpack.c.l.b16 %v1180
    %v1334 = vunpack.c.h.b16 %v1180
    %v1335 = vunpack.c.l.b16 %v1181
    %v1336 = vunpack.c.h.b16 %v1181
    %v1337 = vunpack.c.l.b16 %v1182
    %v1338 = vunpack.c.h.b16 %v1182
    %v1339 = vunpack.c.l.b16 %v1183
    %v1340 = vunpack.c.h.b16 %v1183
    %v1341 = vunpack.c.l.b16 %v1184
    %v1342 = vunpack.c.h.b16 %v1184
    %v1343 = vunpack.c.l.b16 %v1185
    %v1344 = vunpack.c.h.b16 %v1185
    %v1345 = vunpack.c.l.b16 %v1186
    %v1346 = vunpack.c.h.b16 %v1186
    %v1347 = vunpack.c.l.b16 %v1187
    %v1348 = vunpack.c.h.b16 %v1187
    %v1349 = vunpack.c.l.b16 %v1188
    %v1350 = vunpack.c.h.b16 %v1188
    %v1351 = vunpack.c.l.b16 %v1189
    %v1352 = vunpack.c.h.b16 %v1189
    %v1353 = vunpack.c.l.b16 %v1190
    %v1354 = vunpack.c.h.b16 %v1190
    %v1355 = vunpack.c.l.b16 %v1191
    %v1356 = vunpack.c.h.b16 %v1191
    %v1357 = vunpack.c.l.b16 %v1192
    %v1358 = vunpack.c.h.b16 %v1192
    %v1359 = vunpack.c.l.b16 %v1193
    %v1360 = vunpack.c.h.b16 %v1193
    %v1361 = vunpack.c.l.b16 %v1194
    %v1362 = vunpack.c.h.b16 %v1194
    %v1363 = vunpack.c.l.b16 %v1195
    %v1364 = vunpack.c.h.b16 %v1195
    %v1365 = vunpack.c.l.b16 %v1196
    %v1366 = vunpack.c.h.b16 %v1196
    %v1367 = vunpack.c.l.b16 %v1197
    %v1368 = vunpack.c.h.b16 %v1197
    %v1369 = vunpack.c.l.b16 %v1198
    %v1370 = vunpack.c.h.b16 %v1198
    %v1371 = vunpack.c.l.b16 %v1199
    %v1372 = vunpack.c.h.b16 %v1199
    %v1373 = vunpack.c.l.b16 %v1200
    %v1374 = vunpack.c.h.b16 %v1200
    %v1375 = vunpack.c.l.b16 %v1201
    %v1376 = vunpack.c.h.b16 %v1201
    %v1377 = vunpack.c.l.b16 %v1202
    %v1378 = vunpack.c.h.b16 %v1202
    %v1379 = vunpack.c.l.b16 %v1203
    %v1380 = vunpack.c.h.b16 %v1203
    %v1381 = vunpack.c.l.b16 %v1204
    %v1382 = vunpack.c.h.b16 %v1204
    %v1383 = vunpack.c.l.b16 %v1205
    %v1384 = vunpack.c.h.b16 %v1205
    %v1385 = vunpack.c.l.b16 %v1206
    %v1386 = vunpack.c.h.b16 %v1206
    %v1387 = vunpack.c.l.b16 %v1207
    %v1388 = vunpack.c.h.b16 %v1207
    %v1389 = vunpack.c.l.b16 %v1208
    %v1390 = vunpack.c.h.b16 %v1208
    %v1391 = vunpack.c.l.b16 %v1209
    %v1392 = vunpack.c.h.b16 %v1209
    %v1393 = vunpack.c.l.b16 %v1210
    %v1394 = vunpack.c.h.b16 %v1210
    %v1395 = vunpack.c.l.b16 %v1211
    %v1396 = vunpack.c.h.b16 %v1211
    %v1397 = vunpack.c.l.b16 %v1212
    %v1398 = vunpack.c.h.b16 %v1212
    %v1399 = vunpack.c.l.b16 %v1213
    %v1400 = vunpack.c.h.b16 %v1213
    %v1401 = vunpack.c.l.b16 %v1214
    %v1402 = vunpack.c.h.b16 %v1214
    %v1403 = vunpack.c.l.b16 %v1215
    %v1404 = vunpack.c.h.b16 %v1215
    %v1405 = vunpack.c.l.b16 %v1216
    %v1406 = vunpack.c.h.b16 %v1216
    %v1407 = vunpack.c.l.b16 %v1217
    %v1408 = vunpack.c.h.b16 %v1217
    %v1409 = vunpack.c.l.b16 %v1218
    %v1410 = vunpack.c.h.b16 %v1218
    %v1411 = vunpack.c.l.b16 %v1219
    %v1412 = vunpack.c.h.b16 %v1219
    %v1413 = vunpack.c.l.b16 %v1220
    %v1414 = vunpack.c.h.b16 %v1220
    %v1415 = vunpack.c.l.b16 %v1221
    %v1416 = vunpack.c.h.b16 %v1221
    %v1417 = vunpack.c.l.b16 %v1222
    %v1418 = vunpack.c.h.b16 %v1222
    %v1419 = vunpack.c.l.b16 %v1223
    %v1420 = vunpack.c.h.b16 %v1223
    %v1421 = vunpack.c.l.b16 %v1224
    %v1422 = vunpack.c.h.b16 %v1224
    %v1423 = vunpack.c.l.b16 %v1225
    %v1424 = vunpack.c.h.b16 %v1225
    %v1425 = vunpack.c.l.b16 %v1226
    %v1426 = vunpack.c.h.b16 %v1226
    %v1427 = vunpack.c.l.b16 %v1227
    %v1428 = vunpack.c.h.b16 %v1227
    %v1429 = vunpack.c.l.b16 %v1228
    %v1430 = vunpack.c.h.b16 %v1228
    %v1431 = vunpack.c.l.b16 %v1229
    %v1432 = vunpack.c.h.b16 %v1229
    %v1433 = vunpack.c.l.b16 %v1230
    %v1434 = vunpack.c.h.b16 %v1230
    %v1435 = vunpack.c.l.b16 %v1231
    %v1436 = vunpack.c.h.b16 %v1231
    %v1437 = vpack.c.b16 %v1311, %v1309
    %v1438 = vpack.c.b16 %v1312, %v1310
    %v1439 = vpack.c.b16 %v1315, %v1313
    %v1440 = vpack.c.b16 %v1316, %v1314
    %v1441 = vpack.c.b16 %v1319, %v1317
    %v1442 = vpack.c.b16 %v1320, %v1318
    %v1443 = vpack.c.b16 %v1323, %v1321
    %v1444 = vpack.c.b16 %v1324, %v1322
    %v1445 = vpack.c.b16 %v1327, %v1325
    %v1446 = vpack.c.b16 %v1328, %v1326
    %v1447 = vpack.c.b16 %v1331, %v1329
    %v1448 = vpack.c.b16 %v1332, %v1330
    %v1449 = vpack.c.b16 %v1335, %v1333
    %v1450 = vpack.c.b16 %v1336, %v1334
    %v1451 = vpack.c.b16 %v1339, %v1337
    %v1452 = vpack.c.b16 %v1340, %v1338
    %v1453 = vpack.c.b16 %v1343, %v1341
    %v1454 = vpack.c.b16 %v1344, %v1342
    %v1455 = vpack.c.b16 %v1347, %v1345
    %v1456 = vpack.c.b16 %v1348, %v1346
    %v1457 = vpack.c.b16 %v1351, %v1349
    %v1458 = vpack.c.b16 %v1352, %v1350
    %v1459 = vpack.c.b16 %v1355, %v1353
    %v1460 = vpack.c.b16 %v1356, %v1354
    %v1461 = vpack.c.b16 %v1359, %v1357
    %v1462 = vpack.c.b16 %v1360, %v1358
    %v1463 = vpack.c.b16 %v1363, %v1361
    %v1464 = vpack.c.b16 %v1364, %v1362
    %v1465 = vpack.c.b16 %v1367, %v1365
    %v1466 = vpack.c.b16 %v1368, %v1366
    %v1467 = vpack.c.b16 %v1371, %v1369
    %v1468 = vpack.c.b16 %v1372, %v1370
    %v1469 = vpack.c.b16 %v1375, %v1373
    %v1470 = vpack.c.b16 %v1376, %v1374
    %v1471 = vpack.c.b16 %v1379, %v1377
    %v1472 = vpack.c.b16 %v1380, %v1378
    %v1473 = vpack.c.b16 %v1383, %v1381
    %v1474 = vpack.c.b16 %v1384, %v1382
    %v1475 = vpack.c.b16 %v1387, %v1385
    %v1476 = vpack.c.b16 %v1388, %v1386
    %v1477 = vpack.c.b16 %v1391, %v1389
    %v1478 = vpack.c.b16 %v1392, %v1390
    %v1479 = vpack.c.b16 %v1395, %v1393
    %v1480 = vpack.c.b16 %v1396, %v1394
    %v1481 = vpack.c.b16 %v1399, %v1397
    %v1482 = vpack.c.b16 %v1400, %v1398
    %v1483 = vpack.c.b16 %v1403, %v1401
    %v1484 = vpack.c.b16 %v1404, %v1402
    %v1485 = vpack.c.b16 %v1407, %v1405
    %v1486 = vpack.c.b16 %v1408, %v1406
    %v1487 = vpack.c.b16 %v1411, %v1409
    %v1488 = vpack.c.b16 %v1412, %v1410
    %v1489 = vpack.c.b16 %v1415, %v1413
    %v1490 = vpack.c.b16 %v1416, %v1414
    %v1491 = vpack.c.b16 %v1419, %v1417
    %v1492 = vpack.c.b16 %v1420, %v1418
    %v1493 = vpack.c.b16 %v1423, %v1421
    %v1494 = vpack.c.b16 %v1424, %v1422
    %v1495 = vpack.c.b16 %v1427, %v1425
    %v1496 = vpack.c.b16 %v1428, %v1426
    %v1497 = vpack.c.b16 %v1431, %v1429
    %v1498 = vpack.c.b16 %v1432, %v1430
    %v1499 = vpack.c.b16 %v1435, %v1433
    %v1500 = vpack.c.b16 %v1436, %v1434
    %1565 = vmatprep.subr.bf16.mxu0 %v1438
    %1566 = vmatpush1.bf16.msra.mxu0 %v1437
    %1567 = vmatprep.subr.bf16.mxu0 %v1440
    %1568 = vmatpush1.bf16.msra.mxu0 %v1439
    %1569 = vmatprep.subr.bf16.mxu0 %v1442
    %1570 = vmatpush1.bf16.msra.mxu0 %v1441
    %1571 = vmatprep.subr.bf16.mxu0 %v1444
    %1572 = vmatpush1.bf16.msra.mxu0 %v1443
    %1573 = vmatprep.subr.bf16.mxu0 %v1446
    %1574 = vmatpush1.bf16.msra.mxu0 %v1445
    %1575 = vmatprep.subr.bf16.mxu0 %v1448
    %1576 = vmatpush1.bf16.msra.mxu0 %v1447
    %1577 = vmatprep.subr.bf16.mxu0 %v1450
    %1578 = vmatpush1.bf16.msra.mxu0 %v1449
    %1579 = vmatprep.subr.bf16.mxu0 %v1452
    %1580 = vmatpush1.bf16.msra.mxu0 %v1451
    %1581 = vmatprep.subr.bf16.mxu0 %v1454
    %1582 = vmatpush1.bf16.msra.mxu0 %v1453
    %1583 = vmatprep.subr.bf16.mxu0 %v1456
    %1584 = vmatpush1.bf16.msra.mxu0 %v1455
    %1585 = vmatprep.subr.bf16.mxu0 %v1458
    %1586 = vmatpush1.bf16.msra.mxu0 %v1457
    %1587 = vmatprep.subr.bf16.mxu0 %v1460
    %1588 = vmatpush1.bf16.msra.mxu0 %v1459
    %1589 = vmatprep.subr.bf16.mxu0 %v1462
    %1590 = vmatpush1.bf16.msra.mxu0 %v1461
    %1591 = vmatprep.subr.bf16.mxu0 %v1464
    %1592 = vmatpush1.bf16.msra.mxu0 %v1463
    %1593 = vmatprep.subr.bf16.mxu0 %v1466
    %1594 = vmatpush1.bf16.msra.mxu0 %v1465
    %1595 = vmatprep.subr.bf16.mxu0 %v1468
    %1596 = vmatpush1.bf16.msra.mxu0 %v1467
    %1597 = vmatprep.mubr.bf16.mxu0 %v1164
    %1598 = vmatmul.mubr.bf16.gmra.mrb[0].mxu0 %v1163
    %v1599 = vpop.f32.mrb[0].mxu0
    %v1600 = vadd.f32 %v1238, %v1599
    %v1601 = vpop.f32.mrb[0].mxu0
    %v1602 = vadd.f32 %v1242, %v1601
    %v1603 = vpop.f32.mrb[0].mxu0
    %v1604 = vpop.f32.mrb[0].mxu0
    %1605 = vdwg.mxu0
    %1606 = vmatprep.subr.bf16.mxu0 %v1470
    %1607 = vmatpush1.bf16.msra.mxu0 %v1469
    %1608 = vmatprep.subr.bf16.mxu0 %v1472
    %1609 = vmatpush1.bf16.msra.mxu0 %v1471
    %1610 = vmatprep.subr.bf16.mxu0 %v1474
    %1611 = vmatpush1.bf16.msra.mxu0 %v1473
    %1612 = vmatprep.subr.bf16.mxu0 %v1476
    %1613 = vmatpush1.bf16.msra.mxu0 %v1475
    %1614 = vmatprep.subr.bf16.mxu0 %v1478
    %1615 = vmatpush1.bf16.msra.mxu0 %v1477
    %1616 = vmatprep.subr.bf16.mxu0 %v1480
    %1617 = vmatpush1.bf16.msra.mxu0 %v1479
    %1618 = vmatprep.subr.bf16.mxu0 %v1482
    %1619 = vmatpush1.bf16.msra.mxu0 %v1481
    %1620 = vmatprep.subr.bf16.mxu0 %v1484
    %1621 = vmatpush1.bf16.msra.mxu0 %v1483
    %1622 = vmatprep.subr.bf16.mxu0 %v1486
    %1623 = vmatpush1.bf16.msra.mxu0 %v1485
    %1624 = vmatprep.subr.bf16.mxu0 %v1488
    %1625 = vmatpush1.bf16.msra.mxu0 %v1487
    %1626 = vmatprep.subr.bf16.mxu0 %v1490
    %1627 = vmatpush1.bf16.msra.mxu0 %v1489
    %1628 = vmatprep.subr.bf16.mxu0 %v1492
    %1629 = vmatpush1.bf16.msra.mxu0 %v1491
    %1630 = vmatprep.subr.bf16.mxu0 %v1494
    %1631 = vmatpush1.bf16.msra.mxu0 %v1493
    %1632 = vmatprep.subr.bf16.mxu0 %v1496
    %1633 = vmatpush1.bf16.msra.mxu0 %v1495
    %1634 = vmatprep.subr.bf16.mxu0 %v1498
    %1635 = vmatpush1.bf16.msra.mxu0 %v1497
    %1636 = vmatprep.subr.bf16.mxu0 %v1500
    %1637 = vmatpush1.bf16.msra.mxu0 %v1499
    %1638 = vmatprep.mubr.bf16.mxu0 %v1166
    %1639 = vmatmul.mubr.bf16.gmra.mrb[0].mxu0 %v1165
    %v1640 = vpop.f32.mrb[0].mxu0
    %v1641 = vadd.f32 %v1600, %v1640
    %v1642 = vpop.f32.mrb[0].mxu0
    %v1643 = vadd.f32 %v1602, %v1642
    %v1644 = vpop.f32.mrb[0].mxu0
    %v1645 = vpop.f32.mrb[0].mxu0
    %1646 = vdwg.mxu0
    %v1647 = vtanh.pop %v1641
    %v1648 = vtanh.pop %v1643
    %v1649 = vpack.c.bf16 %v1647, %v1647
    %v1650 = vpack.c.bf16 %v1648, %v1648
    %s1651 = scalar_lea.vmem [#allocation2], 512
    %v1652 = vld [vmem:[%s1651] sm:$0xff]
    %v1653 = vld [vmem:[%s1651 + $0x8] sm:$0xff]
    %v1654 = vld [vmem:[%s1651 + $0x10] sm:$0xff]
    %v1655 = vld [vmem:[%s1651 + $0x18] sm:$0xff]
    %v1656 = vld [vmem:[%s1651 + $0x20] sm:$0xff]
    %v1657 = vld [vmem:[%s1651 + $0x28] sm:$0xff]
    %v1658 = vld [vmem:[%s1651 + $0x30] sm:$0xff]
    %v1659 = vld [vmem:[%s1651 + $0x38] sm:$0xff]
    %v1660 = vld [vmem:[%s1651 + $0x40] sm:$0xff]
    %v1661 = vld [vmem:[%s1651 + $0x48] sm:$0xff]
    %v1662 = vld [vmem:[%s1651 + $0x50] sm:$0xff]
    %v1663 = vld [vmem:[%s1651 + $0x58] sm:$0xff]
    %v1664 = vld [vmem:[%s1651 + $0x60] sm:$0xff]
    %v1665 = vld [vmem:[%s1651 + $0x68] sm:$0xff]
    %v1666 = vld [vmem:[%s1651 + $0x70] sm:$0xff]
    %v1667 = vld [vmem:[%s1651 + $0x78] sm:$0xff]
    %v1668 = vld [vmem:[%s1651 + $0x80] sm:$0xff]
    %v1669 = vld [vmem:[%s1651 + $0x88] sm:$0xff]
    %v1670 = vld [vmem:[%s1651 + $0x90] sm:$0xff]
    %v1671 = vld [vmem:[%s1651 + $0x98] sm:$0xff]
    %v1672 = vld [vmem:[%s1651 + $0xa0] sm:$0xff]
    %v1673 = vld [vmem:[%s1651 + $0xa8] sm:$0xff]
    %v1674 = vld [vmem:[%s1651 + $0xb0] sm:$0xff]
    %v1675 = vld [vmem:[%s1651 + $0xb8] sm:$0xff]
    %v1676 = vld [vmem:[%s1651 + $0xc0] sm:$0xff]
    %v1677 = vld [vmem:[%s1651 + $0xc8] sm:$0xff]
    %v1678 = vld [vmem:[%s1651 + $0xd0] sm:$0xff]
    %v1679 = vld [vmem:[%s1651 + $0xd8] sm:$0xff]
    %v1680 = vld [vmem:[%s1651 + $0xe0] sm:$0xff]
    %v1681 = vld [vmem:[%s1651 + $0xe8] sm:$0xff]
    %v1682 = vld [vmem:[%s1651 + $0xf0] sm:$0xff]
    %v1683 = vld [vmem:[%s1651 + $0xf8] sm:$0xff]
    %s1684 = scalar_lea.vmem %s4, 8
    %v1685 = vld [vmem:[%s1684] sm:$0xf]
    %v1687 = vlaneseq
    %v1688 = vshrl.u32 %v1687, 7
    %v1689 = vsub.s32 0, %v1688
    %v1690 = vrot.slane %v1685, %v1689
    %v1691 = vlaneseq
    %v1692 = vshrl.u32 %v1691, 7
    %v1693 = vsub.s32 1, %v1692
    %v1694 = vrot.slane %v1685, %v1693
    %v1695 = vlaneseq
    %v1696 = vshrl.u32 %v1695, 7
    %v1697 = vsub.s32 2, %v1696
    %v1698 = vrot.slane %v1685, %v1697
    %v1699 = vlaneseq
    %v1700 = vshrl.u32 %v1699, 7
    %v1701 = vsub.s32 3, %v1700
    %v1702 = vrot.slane %v1685, %v1701
    %v1739 = vunpack.c.l.b16 %v1652
    %v1740 = vunpack.c.h.b16 %v1652
    %v1741 = vunpack.c.l.b16 %v1653
    %v1742 = vunpack.c.h.b16 %v1653
    %v1743 = vunpack.c.l.b16 %v1654
    %v1744 = vunpack.c.h.b16 %v1654
    %v1745 = vunpack.c.l.b16 %v1655
    %v1746 = vunpack.c.h.b16 %v1655
    %v1747 = vunpack.c.l.b16 %v1656
    %v1748 = vunpack.c.h.b16 %v1656
    %v1749 = vunpack.c.l.b16 %v1657
    %v1750 = vunpack.c.h.b16 %v1657
    %v1751 = vunpack.c.l.b16 %v1658
    %v1752 = vunpack.c.h.b16 %v1658
    %v1753 = vunpack.c.l.b16 %v1659
    %v1754 = vunpack.c.h.b16 %v1659
    %v1755 = vunpack.c.l.b16 %v1660
    %v1756 = vunpack.c.h.b16 %v1660
    %v1757 = vunpack.c.l.b16 %v1661
    %v1758 = vunpack.c.h.b16 %v1661
    %v1759 = vunpack.c.l.b16 %v1662
    %v1760 = vunpack.c.h.b16 %v1662
    %v1761 = vunpack.c.l.b16 %v1663
    %v1762 = vunpack.c.h.b16 %v1663
    %v1763 = vunpack.c.l.b16 %v1664
    %v1764 = vunpack.c.h.b16 %v1664
    %v1765 = vunpack.c.l.b16 %v1665
    %v1766 = vunpack.c.h.b16 %v1665
    %v1767 = vunpack.c.l.b16 %v1666
    %v1768 = vunpack.c.h.b16 %v1666
    %v1769 = vunpack.c.l.b16 %v1667
    %v1770 = vunpack.c.h.b16 %v1667
    %v1771 = vunpack.c.l.b16 %v1668
    %v1772 = vunpack.c.h.b16 %v1668
    %v1773 = vunpack.c.l.b16 %v1669
    %v1774 = vunpack.c.h.b16 %v1669
    %v1775 = vunpack.c.l.b16 %v1670
    %v1776 = vunpack.c.h.b16 %v1670
    %v1777 = vunpack.c.l.b16 %v1671
    %v1778 = vunpack.c.h.b16 %v1671
    %v1779 = vunpack.c.l.b16 %v1672
    %v1780 = vunpack.c.h.b16 %v1672
    %v1781 = vunpack.c.l.b16 %v1673
    %v1782 = vunpack.c.h.b16 %v1673
    %v1783 = vunpack.c.l.b16 %v1674
    %v1784 = vunpack.c.h.b16 %v1674
    %v1785 = vunpack.c.l.b16 %v1675
    %v1786 = vunpack.c.h.b16 %v1675
    %v1787 = vunpack.c.l.b16 %v1676
    %v1788 = vunpack.c.h.b16 %v1676
    %v1789 = vunpack.c.l.b16 %v1677
    %v1790 = vunpack.c.h.b16 %v1677
    %v1791 = vunpack.c.l.b16 %v1678
    %v1792 = vunpack.c.h.b16 %v1678
    %v1793 = vunpack.c.l.b16 %v1679
    %v1794 = vunpack.c.h.b16 %v1679
    %v1795 = vunpack.c.l.b16 %v1680
    %v1796 = vunpack.c.h.b16 %v1680
    %v1797 = vunpack.c.l.b16 %v1681
    %v1798 = vunpack.c.h.b16 %v1681
    %v1799 = vunpack.c.l.b16 %v1682
    %v1800 = vunpack.c.h.b16 %v1682
    %v1801 = vunpack.c.l.b16 %v1683
    %v1802 = vunpack.c.h.b16 %v1683
    %v1803 = vpack.c.b16 %v1743, %v1739
    %v1804 = vpack.c.b16 %v1744, %v1740
    %v1805 = vpack.c.b16 %v1745, %v1741
    %v1806 = vpack.c.b16 %v1746, %v1742
    %v1807 = vpack.c.b16 %v1751, %v1747
    %v1808 = vpack.c.b16 %v1752, %v1748
    %v1809 = vpack.c.b16 %v1753, %v1749
    %v1810 = vpack.c.b16 %v1754, %v1750
    %v1811 = vpack.c.b16 %v1759, %v1755
    %v1812 = vpack.c.b16 %v1760, %v1756
    %v1813 = vpack.c.b16 %v1761, %v1757
    %v1814 = vpack.c.b16 %v1762, %v1758
    %v1815 = vpack.c.b16 %v1767, %v1763
    %v1816 = vpack.c.b16 %v1768, %v1764
    %v1817 = vpack.c.b16 %v1769, %v1765
    %v1818 = vpack.c.b16 %v1770, %v1766
    %v1819 = vpack.c.b16 %v1775, %v1771
    %v1820 = vpack.c.b16 %v1776, %v1772
    %v1821 = vpack.c.b16 %v1777, %v1773
    %v1822 = vpack.c.b16 %v1778, %v1774
    %v1823 = vpack.c.b16 %v1783, %v1779
    %v1824 = vpack.c.b16 %v1784, %v1780
    %v1825 = vpack.c.b16 %v1785, %v1781
    %v1826 = vpack.c.b16 %v1786, %v1782
    %v1827 = vpack.c.b16 %v1791, %v1787
    %v1828 = vpack.c.b16 %v1792, %v1788
    %v1829 = vpack.c.b16 %v1793, %v1789
    %v1830 = vpack.c.b16 %v1794, %v1790
    %v1831 = vpack.c.b16 %v1799, %v1795
    %v1832 = vpack.c.b16 %v1800, %v1796
    %v1833 = vpack.c.b16 %v1801, %v1797
    %v1834 = vpack.c.b16 %v1802, %v1798
    %1867 = vmatprep.subr.bf16.mxu0 %v1804
    %1868 = vmatpush1.bf16.msra.mxu0 %v1803
    %1869 = vmatprep.subr.bf16.mxu0 %v1808
    %1870 = vmatpush1.bf16.msra.mxu0 %v1807
    %1871 = vmatprep.subr.bf16.mxu0 %v1812
    %1872 = vmatpush1.bf16.msra.mxu0 %v1811
    %1873 = vmatprep.subr.bf16.mxu0 %v1816
    %1874 = vmatpush1.bf16.msra.mxu0 %v1815
    %1875 = vmatprep.subr.bf16.mxu0 %v1820
    %1876 = vmatpush1.bf16.msra.mxu0 %v1819
    %1877 = vmatprep.subr.bf16.mxu0 %v1824
    %1878 = vmatpush1.bf16.msra.mxu0 %v1823
    %1879 = vmatprep.subr.bf16.mxu0 %v1828
    %1880 = vmatpush1.bf16.msra.mxu0 %v1827
    %1881 = vmatprep.subr.bf16.mxu0 %v1832
    %1882 = vmatpush1.bf16.msra.mxu0 %v1831
    %1883 = vmatprep.subr.bf16.mxu0 0
    %1884 = vmatpush1.bf16.msra.mxu0 0
    %1885 = vmatprep.subr.bf16.mxu0 0
    %1886 = vmatpush1.bf16.msra.mxu0 0
    %1887 = vmatprep.subr.bf16.mxu0 0
    %1888 = vmatpush1.bf16.msra.mxu0 0
    %1889 = vmatprep.subr.bf16.mxu0 0
    %1890 = vmatpush1.bf16.msra.mxu0 0
    %1891 = vmatprep.subr.bf16.mxu0 0
    %1892 = vmatpush1.bf16.msra.mxu0 0
    %1893 = vmatprep.subr.bf16.mxu0 0
    %1894 = vmatpush1.bf16.msra.mxu0 0
    %1895 = vmatprep.subr.bf16.mxu0 0
    %1896 = vmatpush1.bf16.msra.mxu0 0
    %1897 = vmatprep.subr.bf16.mxu0 0
    %1898 = vmatpush1.bf16.msra.mxu0 0
    %1899 = vmatprep.mubr.bf16.mxu0 0
    %1900 = vmatmul.mubr.bf16.gmra.mrb[0].mxu0 %v1649
    %v1901 = vpop.f32.mrb[0].mxu0
    %v1902 = vadd.f32 %v1690, %v1901
    %v1903 = vpop.f32.mrb[0].mxu0
    %v1904 = vadd.f32 %v1694, %v1903
    %v1905 = vpop.f32.mrb[0].mxu0
    %v1906 = vpop.f32.mrb[0].mxu0
    %1907 = vdwg.mxu0
    %1908 = vmatprep.subr.bf16.mxu0 %v1806
    %1909 = vmatpush1.bf16.msra.mxu0 %v1805
    %1910 = vmatprep.subr.bf16.mxu0 %v1810
    %1911 = vmatpush1.bf16.msra.mxu0 %v1809
    %1912 = vmatprep.subr.bf16.mxu0 %v1814
    %1913 = vmatpush1.bf16.msra.mxu0 %v1813
    %1914 = vmatprep.subr.bf16.mxu0 %v1818
    %1915 = vmatpush1.bf16.msra.mxu0 %v1817
    %1916 = vmatprep.subr.bf16.mxu0 %v1822
    %1917 = vmatpush1.bf16.msra.mxu0 %v1821
    %1918 = vmatprep.subr.bf16.mxu0 %v1826
    %1919 = vmatpush1.bf16.msra.mxu0 %v1825
    %1920 = vmatprep.subr.bf16.mxu0 %v1830
    %1921 = vmatpush1.bf16.msra.mxu0 %v1829
    %1922 = vmatprep.subr.bf16.mxu0 %v1834
    %1923 = vmatpush1.bf16.msra.mxu0 %v1833
    %1924 = vmatprep.subr.bf16.mxu0 0
    %1925 = vmatpush1.bf16.msra.mxu0 0
    %1926 = vmatprep.subr.bf16.mxu0 0
    %1927 = vmatpush1.bf16.msra.mxu0 0
    %1928 = vmatprep.subr.bf16.mxu0 0
    %1929 = vmatpush1.bf16.msra.mxu0 0
    %1930 = vmatprep.subr.bf16.mxu0 0
    %1931 = vmatpush1.bf16.msra.mxu0 0
    %1932 = vmatprep.subr.bf16.mxu0 0
    %1933 = vmatpush1.bf16.msra.mxu0 0
    %1934 = vmatprep.subr.bf16.mxu0 0
    %1935 = vmatpush1.bf16.msra.mxu0 0
    %1936 = vmatprep.subr.bf16.mxu0 0
    %1937 = vmatpush1.bf16.msra.mxu0 0
    %1938 = vmatprep.subr.bf16.mxu0 0
    %1939 = vmatpush1.bf16.msra.mxu0 0
    %1940 = vmatprep.mubr.bf16.mxu0 0
    %1941 = vmatmul.mubr.bf16.gmra.mrb[0].mxu0 %v1649
    %v1942 = vpop.f32.mrb[0].mxu0
    %v1943 = vadd.f32 %v1698, %v1942
    %v1944 = vpop.f32.mrb[0].mxu0
    %v1945 = vadd.f32 %v1702, %v1944
    %v1946 = vpop.f32.mrb[0].mxu0
    %v1947 = vpop.f32.mrb[0].mxu0
    %1948 = vdwg.mxu0
    %s1949 = scalar_lea.vmem [#allocation4], 512
    %v1950 = vld [vmem:[%s1949] sm:$0xff]
    %v1951 = vld [vmem:[%s1949 + $0x8] sm:$0xff]
    %v1952 = vld [vmem:[%s1949 + $0x10] sm:$0xff]
    %v1953 = vld [vmem:[%s1949 + $0x18] sm:$0xff]
    %v1954 = vld [vmem:[%s1949 + $0x20] sm:$0xff]
    %v1955 = vld [vmem:[%s1949 + $0x28] sm:$0xff]
    %v1956 = vld [vmem:[%s1949 + $0x30] sm:$0xff]
    %v1957 = vld [vmem:[%s1949 + $0x38] sm:$0xff]
    %v1958 = vld [vmem:[%s1949 + $0x40] sm:$0xff]
    %v1959 = vld [vmem:[%s1949 + $0x48] sm:$0xff]
    %v1960 = vld [vmem:[%s1949 + $0x50] sm:$0xff]
    %v1961 = vld [vmem:[%s1949 + $0x58] sm:$0xff]
    %v1962 = vld [vmem:[%s1949 + $0x60] sm:$0xff]
    %v1963 = vld [vmem:[%s1949 + $0x68] sm:$0xff]
    %v1964 = vld [vmem:[%s1949 + $0x70] sm:$0xff]
    %v1965 = vld [vmem:[%s1949 + $0x78] sm:$0xff]
    %v1966 = vld [vmem:[%s1949 + $0x80] sm:$0xff]
    %v1967 = vld [vmem:[%s1949 + $0x88] sm:$0xff]
    %v1968 = vld [vmem:[%s1949 + $0x90] sm:$0xff]
    %v1969 = vld [vmem:[%s1949 + $0x98] sm:$0xff]
    %v1970 = vld [vmem:[%s1949 + $0xa0] sm:$0xff]
    %v1971 = vld [vmem:[%s1949 + $0xa8] sm:$0xff]
    %v1972 = vld [vmem:[%s1949 + $0xb0] sm:$0xff]
    %v1973 = vld [vmem:[%s1949 + $0xb8] sm:$0xff]
    %v1974 = vld [vmem:[%s1949 + $0xc0] sm:$0xff]
    %v1975 = vld [vmem:[%s1949 + $0xc8] sm:$0xff]
    %v1976 = vld [vmem:[%s1949 + $0xd0] sm:$0xff]
    %v1977 = vld [vmem:[%s1949 + $0xd8] sm:$0xff]
    %v1978 = vld [vmem:[%s1949 + $0xe0] sm:$0xff]
    %v1979 = vld [vmem:[%s1949 + $0xe8] sm:$0xff]
    %v1980 = vld [vmem:[%s1949 + $0xf0] sm:$0xff]
    %v1981 = vld [vmem:[%s1949 + $0xf8] sm:$0xff]
    %s1982 = scalar_lea.vmem %s6, 8
    %v1983 = vld [vmem:[%s1982] sm:$0xf]
    %v1985 = vlaneseq
    %v1986 = vshrl.u32 %v1985, 7
    %v1987 = vsub.s32 0, %v1986
    %v1988 = vrot.slane %v1983, %v1987
    %v1989 = vlaneseq
    %v1990 = vshrl.u32 %v1989, 7
    %v1991 = vsub.s32 1, %v1990
    %v1992 = vrot.slane %v1983, %v1991
    %v1993 = vlaneseq
    %v1994 = vshrl.u32 %v1993, 7
    %v1995 = vsub.s32 2, %v1994
    %v1996 = vrot.slane %v1983, %v1995
    %v1997 = vlaneseq
    %v1998 = vshrl.u32 %v1997, 7
    %v1999 = vsub.s32 3, %v1998
    %v2000 = vrot.slane %v1983, %v1999
    %v2037 = vunpack.c.l.b16 %v1950
    %v2038 = vunpack.c.h.b16 %v1950
    %v2039 = vunpack.c.l.b16 %v1951
    %v2040 = vunpack.c.h.b16 %v1951
    %v2041 = vunpack.c.l.b16 %v1952
    %v2042 = vunpack.c.h.b16 %v1952
    %v2043 = vunpack.c.l.b16 %v1953
    %v2044 = vunpack.c.h.b16 %v1953
    %v2045 = vunpack.c.l.b16 %v1954
    %v2046 = vunpack.c.h.b16 %v1954
    %v2047 = vunpack.c.l.b16 %v1955
    %v2048 = vunpack.c.h.b16 %v1955
    %v2049 = vunpack.c.l.b16 %v1956
    %v2050 = vunpack.c.h.b16 %v1956
    %v2051 = vunpack.c.l.b16 %v1957
    %v2052 = vunpack.c.h.b16 %v1957
    %v2053 = vunpack.c.l.b16 %v1958
    %v2054 = vunpack.c.h.b16 %v1958
    %v2055 = vunpack.c.l.b16 %v1959
    %v2056 = vunpack.c.h.b16 %v1959
    %v2057 = vunpack.c.l.b16 %v1960
    %v2058 = vunpack.c.h.b16 %v1960
    %v2059 = vunpack.c.l.b16 %v1961
    %v2060 = vunpack.c.h.b16 %v1961
    %v2061 = vunpack.c.l.b16 %v1962
    %v2062 = vunpack.c.h.b16 %v1962
    %v2063 = vunpack.c.l.b16 %v1963
    %v2064 = vunpack.c.h.b16 %v1963
    %v2065 = vunpack.c.l.b16 %v1964
    %v2066 = vunpack.c.h.b16 %v1964
    %v2067 = vunpack.c.l.b16 %v1965
    %v2068 = vunpack.c.h.b16 %v1965
    %v2069 = vunpack.c.l.b16 %v1966
    %v2070 = vunpack.c.h.b16 %v1966
    %v2071 = vunpack.c.l.b16 %v1967
    %v2072 = vunpack.c.h.b16 %v1967
    %v2073 = vunpack.c.l.b16 %v1968
    %v2074 = vunpack.c.h.b16 %v1968
    %v2075 = vunpack.c.l.b16 %v1969
    %v2076 = vunpack.c.h.b16 %v1969
    %v2077 = vunpack.c.l.b16 %v1970
    %v2078 = vunpack.c.h.b16 %v1970
    %v2079 = vunpack.c.l.b16 %v1971
    %v2080 = vunpack.c.h.b16 %v1971
    %v2081 = vunpack.c.l.b16 %v1972
    %v2082 = vunpack.c.h.b16 %v1972
    %v2083 = vunpack.c.l.b16 %v1973
    %v2084 = vunpack.c.h.b16 %v1973
    %v2085 = vunpack.c.l.b16 %v1974
    %v2086 = vunpack.c.h.b16 %v1974
    %v2087 = vunpack.c.l.b16 %v1975
    %v2088 = vunpack.c.h.b16 %v1975
    %v2089 = vunpack.c.l.b16 %v1976
    %v2090 = vunpack.c.h.b16 %v1976
    %v2091 = vunpack.c.l.b16 %v1977
    %v2092 = vunpack.c.h.b16 %v1977
    %v2093 = vunpack.c.l.b16 %v1978
    %v2094 = vunpack.c.h.b16 %v1978
    %v2095 = vunpack.c.l.b16 %v1979
    %v2096 = vunpack.c.h.b16 %v1979
    %v2097 = vunpack.c.l.b16 %v1980
    %v2098 = vunpack.c.h.b16 %v1980
    %v2099 = vunpack.c.l.b16 %v1981
    %v2100 = vunpack.c.h.b16 %v1981
    %v2101 = vpack.c.b16 %v2041, %v2037
    %v2102 = vpack.c.b16 %v2042, %v2038
    %v2103 = vpack.c.b16 %v2043, %v2039
    %v2104 = vpack.c.b16 %v2044, %v2040
    %v2105 = vpack.c.b16 %v2049, %v2045
    %v2106 = vpack.c.b16 %v2050, %v2046
    %v2107 = vpack.c.b16 %v2051, %v2047
    %v2108 = vpack.c.b16 %v2052, %v2048
    %v2109 = vpack.c.b16 %v2057, %v2053
    %v2110 = vpack.c.b16 %v2058, %v2054
    %v2111 = vpack.c.b16 %v2059, %v2055
    %v2112 = vpack.c.b16 %v2060, %v2056
    %v2113 = vpack.c.b16 %v2065, %v2061
    %v2114 = vpack.c.b16 %v2066, %v2062
    %v2115 = vpack.c.b16 %v2067, %v2063
    %v2116 = vpack.c.b16 %v2068, %v2064
    %v2117 = vpack.c.b16 %v2073, %v2069
    %v2118 = vpack.c.b16 %v2074, %v2070
    %v2119 = vpack.c.b16 %v2075, %v2071
    %v2120 = vpack.c.b16 %v2076, %v2072
    %v2121 = vpack.c.b16 %v2081, %v2077
    %v2122 = vpack.c.b16 %v2082, %v2078
    %v2123 = vpack.c.b16 %v2083, %v2079
    %v2124 = vpack.c.b16 %v2084, %v2080
    %v2125 = vpack.c.b16 %v2089, %v2085
    %v2126 = vpack.c.b16 %v2090, %v2086
    %v2127 = vpack.c.b16 %v2091, %v2087
    %v2128 = vpack.c.b16 %v2092, %v2088
    %v2129 = vpack.c.b16 %v2097, %v2093
    %v2130 = vpack.c.b16 %v2098, %v2094
    %v2131 = vpack.c.b16 %v2099, %v2095
    %v2132 = vpack.c.b16 %v2100, %v2096
    %2165 = vmatprep.subr.bf16.mxu0 %v2102
    %2166 = vmatpush1.bf16.msra.mxu0 %v2101
    %2167 = vmatprep.subr.bf16.mxu0 %v2106
    %2168 = vmatpush1.bf16.msra.mxu0 %v2105
    %2169 = vmatprep.subr.bf16.mxu0 %v2110
    %2170 = vmatpush1.bf16.msra.mxu0 %v2109
    %2171 = vmatprep.subr.bf16.mxu0 %v2114
    %2172 = vmatpush1.bf16.msra.mxu0 %v2113
    %2173 = vmatprep.subr.bf16.mxu0 %v2118
    %2174 = vmatpush1.bf16.msra.mxu0 %v2117
    %2175 = vmatprep.subr.bf16.mxu0 %v2122
    %2176 = vmatpush1.bf16.msra.mxu0 %v2121
    %2177 = vmatprep.subr.bf16.mxu0 %v2126
    %2178 = vmatpush1.bf16.msra.mxu0 %v2125
    %2179 = vmatprep.subr.bf16.mxu0 %v2130
    %2180 = vmatpush1.bf16.msra.mxu0 %v2129
    %2181 = vmatprep.subr.bf16.mxu0 0
    %2182 = vmatpush1.bf16.msra.mxu0 0
    %2183 = vmatprep.subr.bf16.mxu0 0
    %2184 = vmatpush1.bf16.msra.mxu0 0
    %2185 = vmatprep.subr.bf16.mxu0 0
    %2186 = vmatpush1.bf16.msra.mxu0 0
    %2187 = vmatprep.subr.bf16.mxu0 0
    %2188 = vmatpush1.bf16.msra.mxu0 0
    %2189 = vmatprep.subr.bf16.mxu0 0
    %2190 = vmatpush1.bf16.msra.mxu0 0
    %2191 = vmatprep.subr.bf16.mxu0 0
    %2192 = vmatpush1.bf16.msra.mxu0 0
    %2193 = vmatprep.subr.bf16.mxu0 0
    %2194 = vmatpush1.bf16.msra.mxu0 0
    %2195 = vmatprep.subr.bf16.mxu0 0
    %2196 = vmatpush1.bf16.msra.mxu0 0
    %2197 = vmatprep.mubr.bf16.mxu0 0
    %2198 = vmatmul.mubr.bf16.gmra.mrb[0].mxu0 %v1650
    %v2199 = vpop.f32.mrb[0].mxu0
    %v2200 = vadd.f32 %v1988, %v2199
    %v2201 = vpop.f32.mrb[0].mxu0
    %v2202 = vadd.f32 %v1992, %v2201
    %v2203 = vpop.f32.mrb[0].mxu0
    %v2204 = vpop.f32.mrb[0].mxu0
    %2205 = vdwg.mxu0
    %2206 = vmatprep.subr.bf16.mxu0 %v2104
    %2207 = vmatpush1.bf16.msra.mxu0 %v2103
    %2208 = vmatprep.subr.bf16.mxu0 %v2108
    %2209 = vmatpush1.bf16.msra.mxu0 %v2107
    %2210 = vmatprep.subr.bf16.mxu0 %v2112
    %2211 = vmatpush1.bf16.msra.mxu0 %v2111
    %2212 = vmatprep.subr.bf16.mxu0 %v2116
    %2213 = vmatpush1.bf16.msra.mxu0 %v2115
    %2214 = vmatprep.subr.bf16.mxu0 %v2120
    %2215 = vmatpush1.bf16.msra.mxu0 %v2119
    %2216 = vmatprep.subr.bf16.mxu0 %v2124
    %2217 = vmatpush1.bf16.msra.mxu0 %v2123
    %2218 = vmatprep.subr.bf16.mxu0 %v2128
    %2219 = vmatpush1.bf16.msra.mxu0 %v2127
    %2220 = vmatprep.subr.bf16.mxu0 %v2132
    %2221 = vmatpush1.bf16.msra.mxu0 %v2131
    %2222 = vmatprep.subr.bf16.mxu0 0
    %2223 = vmatpush1.bf16.msra.mxu0 0
    %2224 = vmatprep.subr.bf16.mxu0 0
    %2225 = vmatpush1.bf16.msra.mxu0 0
    %2226 = vmatprep.subr.bf16.mxu0 0
    %2227 = vmatpush1.bf16.msra.mxu0 0
    %2228 = vmatprep.subr.bf16.mxu0 0
    %2229 = vmatpush1.bf16.msra.mxu0 0
    %2230 = vmatprep.subr.bf16.mxu0 0
    %2231 = vmatpush1.bf16.msra.mxu0 0
    %2232 = vmatprep.subr.bf16.mxu0 0
    %2233 = vmatpush1.bf16.msra.mxu0 0
    %2234 = vmatprep.subr.bf16.mxu0 0
    %2235 = vmatpush1.bf16.msra.mxu0 0
    %2236 = vmatprep.subr.bf16.mxu0 0
    %2237 = vmatpush1.bf16.msra.mxu0 0
    %2238 = vmatprep.mubr.bf16.mxu0 0
    %2239 = vmatmul.mubr.bf16.gmra.mrb[0].mxu0 %v1650
    %v2240 = vpop.f32.mrb[0].mxu0
    %v2241 = vadd.f32 %v1996, %v2240
    %v2242 = vpop.f32.mrb[0].mxu0
    %v2243 = vadd.f32 %v2000, %v2242
    %v2244 = vpop.f32.mrb[0].mxu0
    %v2245 = vpop.f32.mrb[0].mxu0
    %2246 = vdwg.mxu0
    %v2247 = vsub.f32 %v59, %v2200
    %v2248 = vsub.f32 %v60, %v2202
    %v2249 = vsub.f32 %v61, %v2241
    %v2250 = vsub.f32 %v62, %v2243
    %v2251 = vmul.f32 %v1902, 1.442695
    %v2252 = vpow.pop %v2251
    %v2253 = vmul.f32 %v1904, 1.442695
    %v2254 = vpow.pop %v2253
    %v2255 = vmul.f32 %v1943, 1.442695
    %v2256 = vpow.pop %v2255
    %v2257 = vmul.f32 %v1945, 1.442695
    %v2258 = vpow.pop %v2257
    %v2259 = vmul.f32 %v2247, %v2252
    %v2260 = vmul.f32 %v2248, %v2254
    %v2261 = vmul.f32 %v2249, %v2256
    %v2262 = vmul.f32 %v2250, %v2258
    %v2263 = vpack.c.bf16 %v2259, %v2259
    %v2264 = vpack.c.bf16 %v2260, %v2260
    %v2265 = vpack.c.bf16 %v2261, %v2261
    %v2266 = vpack.c.bf16 %v2262, %v2262
    %s2267 = scalar_lea.vmem %s1, 512
    %v2268 = vld [vmem:[%s2267] sm:$0xff]
    %v2269 = vld [vmem:[%s2267 + $0x8] sm:$0xff]
    %v2270 = vld [vmem:[%s2267 + $0x10] sm:$0xff]
    %v2271 = vld [vmem:[%s2267 + $0x18] sm:$0xff]
    %v2272 = vld [vmem:[%s2267 + $0x20] sm:$0xff]
    %v2273 = vld [vmem:[%s2267 + $0x28] sm:$0xff]
    %v2274 = vld [vmem:[%s2267 + $0x30] sm:$0xff]
    %v2275 = vld [vmem:[%s2267 + $0x38] sm:$0xff]
    %v2276 = vld [vmem:[%s2267 + $0x40] sm:$0xff]
    %v2277 = vld [vmem:[%s2267 + $0x48] sm:$0xff]
    %v2278 = vld [vmem:[%s2267 + $0x50] sm:$0xff]
    %v2279 = vld [vmem:[%s2267 + $0x58] sm:$0xff]
    %v2280 = vld [vmem:[%s2267 + $0x60] sm:$0xff]
    %v2281 = vld [vmem:[%s2267 + $0x68] sm:$0xff]
    %v2282 = vld [vmem:[%s2267 + $0x70] sm:$0xff]
    %v2283 = vld [vmem:[%s2267 + $0x78] sm:$0xff]
    %v2284 = vld [vmem:[%s2267 + $0x80] sm:$0xff]
    %v2285 = vld [vmem:[%s2267 + $0x88] sm:$0xff]
    %v2286 = vld [vmem:[%s2267 + $0x90] sm:$0xff]
    %v2287 = vld [vmem:[%s2267 + $0x98] sm:$0xff]
    %v2288 = vld [vmem:[%s2267 + $0xa0] sm:$0xff]
    %v2289 = vld [vmem:[%s2267 + $0xa8] sm:$0xff]
    %v2290 = vld [vmem:[%s2267 + $0xb0] sm:$0xff]
    %v2291 = vld [vmem:[%s2267 + $0xb8] sm:$0xff]
    %v2292 = vld [vmem:[%s2267 + $0xc0] sm:$0xff]
    %v2293 = vld [vmem:[%s2267 + $0xc8] sm:$0xff]
    %v2294 = vld [vmem:[%s2267 + $0xd0] sm:$0xff]
    %v2295 = vld [vmem:[%s2267 + $0xd8] sm:$0xff]
    %v2296 = vld [vmem:[%s2267 + $0xe0] sm:$0xff]
    %v2297 = vld [vmem:[%s2267 + $0xe8] sm:$0xff]
    %v2298 = vld [vmem:[%s2267 + $0xf0] sm:$0xff]
    %v2299 = vld [vmem:[%s2267 + $0xf8] sm:$0xff]
    %v2300 = vld [vmem:[%s2267 + $0x100] sm:$0xff]
    %v2301 = vld [vmem:[%s2267 + $0x108] sm:$0xff]
    %v2302 = vld [vmem:[%s2267 + $0x110] sm:$0xff]
    %v2303 = vld [vmem:[%s2267 + $0x118] sm:$0xff]
    %v2304 = vld [vmem:[%s2267 + $0x120] sm:$0xff]
    %v2305 = vld [vmem:[%s2267 + $0x128] sm:$0xff]
    %v2306 = vld [vmem:[%s2267 + $0x130] sm:$0xff]
    %v2307 = vld [vmem:[%s2267 + $0x138] sm:$0xff]
    %v2308 = vld [vmem:[%s2267 + $0x140] sm:$0xff]
    %v2309 = vld [vmem:[%s2267 + $0x148] sm:$0xff]
    %v2310 = vld [vmem:[%s2267 + $0x150] sm:$0xff]
    %v2311 = vld [vmem:[%s2267 + $0x158] sm:$0xff]
    %v2312 = vld [vmem:[%s2267 + $0x160] sm:$0xff]
    %v2313 = vld [vmem:[%s2267 + $0x168] sm:$0xff]
    %v2314 = vld [vmem:[%s2267 + $0x170] sm:$0xff]
    %v2315 = vld [vmem:[%s2267 + $0x178] sm:$0xff]
    %v2316 = vld [vmem:[%s2267 + $0x180] sm:$0xff]
    %v2317 = vld [vmem:[%s2267 + $0x188] sm:$0xff]
    %v2318 = vld [vmem:[%s2267 + $0x190] sm:$0xff]
    %v2319 = vld [vmem:[%s2267 + $0x198] sm:$0xff]
    %v2320 = vld [vmem:[%s2267 + $0x1a0] sm:$0xff]
    %v2321 = vld [vmem:[%s2267 + $0x1a8] sm:$0xff]
    %v2322 = vld [vmem:[%s2267 + $0x1b0] sm:$0xff]
    %v2323 = vld [vmem:[%s2267 + $0x1b8] sm:$0xff]
    %v2324 = vld [vmem:[%s2267 + $0x1c0] sm:$0xff]
    %v2325 = vld [vmem:[%s2267 + $0x1c8] sm:$0xff]
    %v2326 = vld [vmem:[%s2267 + $0x1d0] sm:$0xff]
    %v2327 = vld [vmem:[%s2267 + $0x1d8] sm:$0xff]
    %v2328 = vld [vmem:[%s2267 + $0x1e0] sm:$0xff]
    %v2329 = vld [vmem:[%s2267 + $0x1e8] sm:$0xff]
    %v2330 = vld [vmem:[%s2267 + $0x1f0] sm:$0xff]
    %v2331 = vld [vmem:[%s2267 + $0x1f8] sm:$0xff]
    %s2332 = scalar_lea.vmem %s2, 2
    %v2333 = vld [vmem:[%s2332] sm:$0x3]
    %v2335 = vlaneseq
    %v2336 = vshrl.u32 %v2335, 7
    %v2337 = vsub.s32 0, %v2336
    %v2338 = vrot.slane %v2333, %v2337
    %v2339 = vlaneseq
    %v2340 = vshrl.u32 %v2339, 7
    %v2341 = vsub.s32 1, %v2340
    %v2342 = vrot.slane %v2333, %v2341
    %v2409 = vunpack.c.l.b16 %v2268
    %v2410 = vunpack.c.h.b16 %v2268
    %v2411 = vunpack.c.l.b16 %v2269
    %v2412 = vunpack.c.h.b16 %v2269
    %v2413 = vunpack.c.l.b16 %v2270
    %v2414 = vunpack.c.h.b16 %v2270
    %v2415 = vunpack.c.l.b16 %v2271
    %v2416 = vunpack.c.h.b16 %v2271
    %v2417 = vunpack.c.l.b16 %v2272
    %v2418 = vunpack.c.h.b16 %v2272
    %v2419 = vunpack.c.l.b16 %v2273
    %v2420 = vunpack.c.h.b16 %v2273
    %v2421 = vunpack.c.l.b16 %v2274
    %v2422 = vunpack.c.h.b16 %v2274
    %v2423 = vunpack.c.l.b16 %v2275
    %v2424 = vunpack.c.h.b16 %v2275
    %v2425 = vunpack.c.l.b16 %v2276
    %v2426 = vunpack.c.h.b16 %v2276
    %v2427 = vunpack.c.l.b16 %v2277
    %v2428 = vunpack.c.h.b16 %v2277
    %v2429 = vunpack.c.l.b16 %v2278
    %v2430 = vunpack.c.h.b16 %v2278
    %v2431 = vunpack.c.l.b16 %v2279
    %v2432 = vunpack.c.h.b16 %v2279
    %v2433 = vunpack.c.l.b16 %v2280
    %v2434 = vunpack.c.h.b16 %v2280
    %v2435 = vunpack.c.l.b16 %v2281
    %v2436 = vunpack.c.h.b16 %v2281
    %v2437 = vunpack.c.l.b16 %v2282
    %v2438 = vunpack.c.h.b16 %v2282
    %v2439 = vunpack.c.l.b16 %v2283
    %v2440 = vunpack.c.h.b16 %v2283
    %v2441 = vunpack.c.l.b16 %v2284
    %v2442 = vunpack.c.h.b16 %v2284
    %v2443 = vunpack.c.l.b16 %v2285
    %v2444 = vunpack.c.h.b16 %v2285
    %v2445 = vunpack.c.l.b16 %v2286
    %v2446 = vunpack.c.h.b16 %v2286
    %v2447 = vunpack.c.l.b16 %v2287
    %v2448 = vunpack.c.h.b16 %v2287
    %v2449 = vunpack.c.l.b16 %v2288
    %v2450 = vunpack.c.h.b16 %v2288
    %v2451 = vunpack.c.l.b16 %v2289
    %v2452 = vunpack.c.h.b16 %v2289
    %v2453 = vunpack.c.l.b16 %v2290
    %v2454 = vunpack.c.h.b16 %v2290
    %v2455 = vunpack.c.l.b16 %v2291
    %v2456 = vunpack.c.h.b16 %v2291
    %v2457 = vunpack.c.l.b16 %v2292
    %v2458 = vunpack.c.h.b16 %v2292
    %v2459 = vunpack.c.l.b16 %v2293
    %v2460 = vunpack.c.h.b16 %v2293
    %v2461 = vunpack.c.l.b16 %v2294
    %v2462 = vunpack.c.h.b16 %v2294
    %v2463 = vunpack.c.l.b16 %v2295
    %v2464 = vunpack.c.h.b16 %v2295
    %v2465 = vunpack.c.l.b16 %v2296
    %v2466 = vunpack.c.h.b16 %v2296
    %v2467 = vunpack.c.l.b16 %v2297
    %v2468 = vunpack.c.h.b16 %v2297
    %v2469 = vunpack.c.l.b16 %v2298
    %v2470 = vunpack.c.h.b16 %v2298
    %v2471 = vunpack.c.l.b16 %v2299
    %v2472 = vunpack.c.h.b16 %v2299
    %v2473 = vunpack.c.l.b16 %v2300
    %v2474 = vunpack.c.h.b16 %v2300
    %v2475 = vunpack.c.l.b16 %v2301
    %v2476 = vunpack.c.h.b16 %v2301
    %v2477 = vunpack.c.l.b16 %v2302
    %v2478 = vunpack.c.h.b16 %v2302
    %v2479 = vunpack.c.l.b16 %v2303
    %v2480 = vunpack.c.h.b16 %v2303
    %v2481 = vunpack.c.l.b16 %v2304
    %v2482 = vunpack.c.h.b16 %v2304
    %v2483 = vunpack.c.l.b16 %v2305
    %v2484 = vunpack.c.h.b16 %v2305
    %v2485 = vunpack.c.l.b16 %v2306
    %v2486 = vunpack.c.h.b16 %v2306
    %v2487 = vunpack.c.l.b16 %v2307
    %v2488 = vunpack.c.h.b16 %v2307
    %v2489 = vunpack.c.l.b16 %v2308
    %v2490 = vunpack.c.h.b16 %v2308
    %v2491 = vunpack.c.l.b16 %v2309
    %v2492 = vunpack.c.h.b16 %v2309
    %v2493 = vunpack.c.l.b16 %v2310
    %v2494 = vunpack.c.h.b16 %v2310
    %v2495 = vunpack.c.l.b16 %v2311
    %v2496 = vunpack.c.h.b16 %v2311
    %v2497 = vunpack.c.l.b16 %v2312
    %v2498 = vunpack.c.h.b16 %v2312
    %v2499 = vunpack.c.l.b16 %v2313
    %v2500 = vunpack.c.h.b16 %v2313
    %v2501 = vunpack.c.l.b16 %v2314
    %v2502 = vunpack.c.h.b16 %v2314
    %v2503 = vunpack.c.l.b16 %v2315
    %v2504 = vunpack.c.h.b16 %v2315
    %v2505 = vunpack.c.l.b16 %v2316
    %v2506 = vunpack.c.h.b16 %v2316
    %v2507 = vunpack.c.l.b16 %v2317
    %v2508 = vunpack.c.h.b16 %v2317
    %v2509 = vunpack.c.l.b16 %v2318
    %v2510 = vunpack.c.h.b16 %v2318
    %v2511 = vunpack.c.l.b16 %v2319
    %v2512 = vunpack.c.h.b16 %v2319
    %v2513 = vunpack.c.l.b16 %v2320
    %v2514 = vunpack.c.h.b16 %v2320
    %v2515 = vunpack.c.l.b16 %v2321
    %v2516 = vunpack.c.h.b16 %v2321
    %v2517 = vunpack.c.l.b16 %v2322
    %v2518 = vunpack.c.h.b16 %v2322
    %v2519 = vunpack.c.l.b16 %v2323
    %v2520 = vunpack.c.h.b16 %v2323
    %v2521 = vunpack.c.l.b16 %v2324
    %v2522 = vunpack.c.h.b16 %v2324
    %v2523 = vunpack.c.l.b16 %v2325
    %v2524 = vunpack.c.h.b16 %v2325
    %v2525 = vunpack.c.l.b16 %v2326
    %v2526 = vunpack.c.h.b16 %v2326
    %v2527 = vunpack.c.l.b16 %v2327
    %v2528 = vunpack.c.h.b16 %v2327
    %v2529 = vunpack.c.l.b16 %v2328
    %v2530 = vunpack.c.h.b16 %v2328
    %v2531 = vunpack.c.l.b16 %v2329
    %v2532 = vunpack.c.h.b16 %v2329
    %v2533 = vunpack.c.l.b16 %v2330
    %v2534 = vunpack.c.h.b16 %v2330
    %v2535 = vunpack.c.l.b16 %v2331
    %v2536 = vunpack.c.h.b16 %v2331
    %v2537 = vpack.c.b16 %v2411, %v2409
    %v2538 = vpack.c.b16 %v2412, %v2410
    %v2539 = vpack.c.b16 %v2415, %v2413
    %v2540 = vpack.c.b16 %v2416, %v2414
    %v2541 = vpack.c.b16 %v2419, %v2417
    %v2542 = vpack.c.b16 %v2420, %v2418
    %v2543 = vpack.c.b16 %v2423, %v2421
    %v2544 = vpack.c.b16 %v2424, %v2422
    %v2545 = vpack.c.b16 %v2427, %v2425
    %v2546 = vpack.c.b16 %v2428, %v2426
    %v2547 = vpack.c.b16 %v2431, %v2429
    %v2548 = vpack.c.b16 %v2432, %v2430
    %v2549 = vpack.c.b16 %v2435, %v2433
    %v2550 = vpack.c.b16 %v2436, %v2434
    %v2551 = vpack.c.b16 %v2439, %v2437
    %v2552 = vpack.c.b16 %v2440, %v2438
    %v2553 = vpack.c.b16 %v2443, %v2441
    %v2554 = vpack.c.b16 %v2444, %v2442
    %v2555 = vpack.c.b16 %v2447, %v2445
    %v2556 = vpack.c.b16 %v2448, %v2446
    %v2557 = vpack.c.b16 %v2451, %v2449
    %v2558 = vpack.c.b16 %v2452, %v2450
    %v2559 = vpack.c.b16 %v2455, %v2453
    %v2560 = vpack.c.b16 %v2456, %v2454
    %v2561 = vpack.c.b16 %v2459, %v2457
    %v2562 = vpack.c.b16 %v2460, %v2458
    %v2563 = vpack.c.b16 %v2463, %v2461
    %v2564 = vpack.c.b16 %v2464, %v2462
    %v2565 = vpack.c.b16 %v2467, %v2465
    %v2566 = vpack.c.b16 %v2468, %v2466
    %v2567 = vpack.c.b16 %v2471, %v2469
    %v2568 = vpack.c.b16 %v2472, %v2470
    %v2569 = vpack.c.b16 %v2475, %v2473
    %v2570 = vpack.c.b16 %v2476, %v2474
    %v2571 = vpack.c.b16 %v2479, %v2477
    %v2572 = vpack.c.b16 %v2480, %v2478
    %v2573 = vpack.c.b16 %v2483, %v2481
    %v2574 = vpack.c.b16 %v2484, %v2482
    %v2575 = vpack.c.b16 %v2487, %v2485
    %v2576 = vpack.c.b16 %v2488, %v2486
    %v2577 = vpack.c.b16 %v2491, %v2489
    %v2578 = vpack.c.b16 %v2492, %v2490
    %v2579 = vpack.c.b16 %v2495, %v2493
    %v2580 = vpack.c.b16 %v2496, %v2494
    %v2581 = vpack.c.b16 %v2499, %v2497
    %v2582 = vpack.c.b16 %v2500, %v2498
    %v2583 = vpack.c.b16 %v2503, %v2501
    %v2584 = vpack.c.b16 %v2504, %v2502
    %v2585 = vpack.c.b16 %v2507, %v2505
    %v2586 = vpack.c.b16 %v2508, %v2506
    %v2587 = vpack.c.b16 %v2511, %v2509
    %v2588 = vpack.c.b16 %v2512, %v2510
    %v2589 = vpack.c.b16 %v2515, %v2513
    %v2590 = vpack.c.b16 %v2516, %v2514
    %v2591 = vpack.c.b16 %v2519, %v2517
    %v2592 = vpack.c.b16 %v2520, %v2518
    %v2593 = vpack.c.b16 %v2523, %v2521
    %v2594 = vpack.c.b16 %v2524, %v2522
    %v2595 = vpack.c.b16 %v2527, %v2525
    %v2596 = vpack.c.b16 %v2528, %v2526
    %v2597 = vpack.c.b16 %v2531, %v2529
    %v2598 = vpack.c.b16 %v2532, %v2530
    %v2599 = vpack.c.b16 %v2535, %v2533
    %v2600 = vpack.c.b16 %v2536, %v2534
    %2665 = vmatprep.subr.bf16.mxu0 %v2538
    %2666 = vmatpush1.bf16.msra.mxu0 %v2537
    %2667 = vmatprep.subr.bf16.mxu0 %v2540
    %2668 = vmatpush1.bf16.msra.mxu0 %v2539
    %2669 = vmatprep.subr.bf16.mxu0 %v2542
    %2670 = vmatpush1.bf16.msra.mxu0 %v2541
    %2671 = vmatprep.subr.bf16.mxu0 %v2544
    %2672 = vmatpush1.bf16.msra.mxu0 %v2543
    %2673 = vmatprep.subr.bf16.mxu0 %v2546
    %2674 = vmatpush1.bf16.msra.mxu0 %v2545
    %2675 = vmatprep.subr.bf16.mxu0 %v2548
    %2676 = vmatpush1.bf16.msra.mxu0 %v2547
    %2677 = vmatprep.subr.bf16.mxu0 %v2550
    %2678 = vmatpush1.bf16.msra.mxu0 %v2549
    %2679 = vmatprep.subr.bf16.mxu0 %v2552
    %2680 = vmatpush1.bf16.msra.mxu0 %v2551
    %2681 = vmatprep.subr.bf16.mxu0 %v2554
    %2682 = vmatpush1.bf16.msra.mxu0 %v2553
    %2683 = vmatprep.subr.bf16.mxu0 %v2556
    %2684 = vmatpush1.bf16.msra.mxu0 %v2555
    %2685 = vmatprep.subr.bf16.mxu0 %v2558
    %2686 = vmatpush1.bf16.msra.mxu0 %v2557
    %2687 = vmatprep.subr.bf16.mxu0 %v2560
    %2688 = vmatpush1.bf16.msra.mxu0 %v2559
    %2689 = vmatprep.subr.bf16.mxu0 %v2562
    %2690 = vmatpush1.bf16.msra.mxu0 %v2561
    %2691 = vmatprep.subr.bf16.mxu0 %v2564
    %2692 = vmatpush1.bf16.msra.mxu0 %v2563
    %2693 = vmatprep.subr.bf16.mxu0 %v2566
    %2694 = vmatpush1.bf16.msra.mxu0 %v2565
    %2695 = vmatprep.subr.bf16.mxu0 %v2568
    %2696 = vmatpush1.bf16.msra.mxu0 %v2567
    %2697 = vmatprep.mubr.bf16.mxu0 %v2264
    %2698 = vmatmul.mubr.bf16.gmra.mrb[0].mxu0 %v2263
    %v2699 = vpop.f32.mrb[0].mxu0
    %v2700 = vadd.f32 %v2338, %v2699
    %v2701 = vpop.f32.mrb[0].mxu0
    %v2702 = vadd.f32 %v2342, %v2701
    %v2703 = vpop.f32.mrb[0].mxu0
    %v2704 = vpop.f32.mrb[0].mxu0
    %2705 = vdwg.mxu0
    %2706 = vmatprep.subr.bf16.mxu0 %v2570
    %2707 = vmatpush1.bf16.msra.mxu0 %v2569
    %2708 = vmatprep.subr.bf16.mxu0 %v2572
    %2709 = vmatpush1.bf16.msra.mxu0 %v2571
    %2710 = vmatprep.subr.bf16.mxu0 %v2574
    %2711 = vmatpush1.bf16.msra.mxu0 %v2573
    %2712 = vmatprep.subr.bf16.mxu0 %v2576
    %2713 = vmatpush1.bf16.msra.mxu0 %v2575
    %2714 = vmatprep.subr.bf16.mxu0 %v2578
    %2715 = vmatpush1.bf16.msra.mxu0 %v2577
    %2716 = vmatprep.subr.bf16.mxu0 %v2580
    %2717 = vmatpush1.bf16.msra.mxu0 %v2579
    %2718 = vmatprep.subr.bf16.mxu0 %v2582
    %2719 = vmatpush1.bf16.msra.mxu0 %v2581
    %2720 = vmatprep.subr.bf16.mxu0 %v2584
    %2721 = vmatpush1.bf16.msra.mxu0 %v2583
    %2722 = vmatprep.subr.bf16.mxu0 %v2586
    %2723 = vmatpush1.bf16.msra.mxu0 %v2585
    %2724 = vmatprep.subr.bf16.mxu0 %v2588
    %2725 = vmatpush1.bf16.msra.mxu0 %v2587
    %2726 = vmatprep.subr.bf16.mxu0 %v2590
    %2727 = vmatpush1.bf16.msra.mxu0 %v2589
    %2728 = vmatprep.subr.bf16.mxu0 %v2592
    %2729 = vmatpush1.bf16.msra.mxu0 %v2591
    %2730 = vmatprep.subr.bf16.mxu0 %v2594
    %2731 = vmatpush1.bf16.msra.mxu0 %v2593
    %2732 = vmatprep.subr.bf16.mxu0 %v2596
    %2733 = vmatpush1.bf16.msra.mxu0 %v2595
    %2734 = vmatprep.subr.bf16.mxu0 %v2598
    %2735 = vmatpush1.bf16.msra.mxu0 %v2597
    %2736 = vmatprep.subr.bf16.mxu0 %v2600
    %2737 = vmatpush1.bf16.msra.mxu0 %v2599
    %2738 = vmatprep.mubr.bf16.mxu0 %v2266
    %2739 = vmatmul.mubr.bf16.gmra.mrb[0].mxu0 %v2265
    %v2740 = vpop.f32.mrb[0].mxu0
    %v2741 = vadd.f32 %v2700, %v2740
    %v2742 = vpop.f32.mrb[0].mxu0
    %v2743 = vadd.f32 %v2702, %v2742
    %v2744 = vpop.f32.mrb[0].mxu0
    %v2745 = vpop.f32.mrb[0].mxu0
    %2746 = vdwg.mxu0
    %v2747 = vtanh.pop %v2741
    %v2748 = vtanh.pop %v2743
    %v2749 = vpack.c.bf16 %v2747, %v2747
    %v2750 = vpack.c.bf16 %v2748, %v2748
    %s2751 = scalar_lea.vmem [#allocation2], 256
    %v2752 = vld [vmem:[%s2751] sm:$0xff]
    %v2753 = vld [vmem:[%s2751 + $0x8] sm:$0xff]
    %v2754 = vld [vmem:[%s2751 + $0x10] sm:$0xff]
    %v2755 = vld [vmem:[%s2751 + $0x18] sm:$0xff]
    %v2756 = vld [vmem:[%s2751 + $0x20] sm:$0xff]
    %v2757 = vld [vmem:[%s2751 + $0x28] sm:$0xff]
    %v2758 = vld [vmem:[%s2751 + $0x30] sm:$0xff]
    %v2759 = vld [vmem:[%s2751 + $0x38] sm:$0xff]
    %v2760 = vld [vmem:[%s2751 + $0x40] sm:$0xff]
    %v2761 = vld [vmem:[%s2751 + $0x48] sm:$0xff]
    %v2762 = vld [vmem:[%s2751 + $0x50] sm:$0xff]
    %v2763 = vld [vmem:[%s2751 + $0x58] sm:$0xff]
    %v2764 = vld [vmem:[%s2751 + $0x60] sm:$0xff]
    %v2765 = vld [vmem:[%s2751 + $0x68] sm:$0xff]
    %v2766 = vld [vmem:[%s2751 + $0x70] sm:$0xff]
    %v2767 = vld [vmem:[%s2751 + $0x78] sm:$0xff]
    %v2768 = vld [vmem:[%s2751 + $0x80] sm:$0xff]
    %v2769 = vld [vmem:[%s2751 + $0x88] sm:$0xff]
    %v2770 = vld [vmem:[%s2751 + $0x90] sm:$0xff]
    %v2771 = vld [vmem:[%s2751 + $0x98] sm:$0xff]
    %v2772 = vld [vmem:[%s2751 + $0xa0] sm:$0xff]
    %v2773 = vld [vmem:[%s2751 + $0xa8] sm:$0xff]
    %v2774 = vld [vmem:[%s2751 + $0xb0] sm:$0xff]
    %v2775 = vld [vmem:[%s2751 + $0xb8] sm:$0xff]
    %v2776 = vld [vmem:[%s2751 + $0xc0] sm:$0xff]
    %v2777 = vld [vmem:[%s2751 + $0xc8] sm:$0xff]
    %v2778 = vld [vmem:[%s2751 + $0xd0] sm:$0xff]
    %v2779 = vld [vmem:[%s2751 + $0xd8] sm:$0xff]
    %v2780 = vld [vmem:[%s2751 + $0xe0] sm:$0xff]
    %v2781 = vld [vmem:[%s2751 + $0xe8] sm:$0xff]
    %v2782 = vld [vmem:[%s2751 + $0xf0] sm:$0xff]
    %v2783 = vld [vmem:[%s2751 + $0xf8] sm:$0xff]
    %s2784 = scalar_lea.vmem %s4, 4
    %v2785 = vld [vmem:[%s2784] sm:$0xf]
    %v2787 = vlaneseq
    %v2788 = vshrl.u32 %v2787, 7
    %v2789 = vsub.s32 0, %v2788
    %v2790 = vrot.slane %v2785, %v2789
    %v2791 = vlaneseq
    %v2792 = vshrl.u32 %v2791, 7
    %v2793 = vsub.s32 1, %v2792
    %v2794 = vrot.slane %v2785, %v2793
    %v2795 = vlaneseq
    %v2796 = vshrl.u32 %v2795, 7
    %v2797 = vsub.s32 2, %v2796
    %v2798 = vrot.slane %v2785, %v2797
    %v2799 = vlaneseq
    %v2800 = vshrl.u32 %v2799, 7
    %v2801 = vsub.s32 3, %v2800
    %v2802 = vrot.slane %v2785, %v2801
    %v2839 = vunpack.c.l.b16 %v2752
    %v2840 = vunpack.c.h.b16 %v2752
    %v2841 = vunpack.c.l.b16 %v2753
    %v2842 = vunpack.c.h.b16 %v2753
    %v2843 = vunpack.c.l.b16 %v2754
    %v2844 = vunpack.c.h.b16 %v2754
    %v2845 = vunpack.c.l.b16 %v2755
    %v2846 = vunpack.c.h.b16 %v2755
    %v2847 = vunpack.c.l.b16 %v2756
    %v2848 = vunpack.c.h.b16 %v2756
    %v2849 = vunpack.c.l.b16 %v2757
    %v2850 = vunpack.c.h.b16 %v2757
    %v2851 = vunpack.c.l.b16 %v2758
    %v2852 = vunpack.c.h.b16 %v2758
    %v2853 = vunpack.c.l.b16 %v2759
    %v2854 = vunpack.c.h.b16 %v2759
    %v2855 = vunpack.c.l.b16 %v2760
    %v2856 = vunpack.c.h.b16 %v2760
    %v2857 = vunpack.c.l.b16 %v2761
    %v2858 = vunpack.c.h.b16 %v2761
    %v2859 = vunpack.c.l.b16 %v2762
    %v2860 = vunpack.c.h.b16 %v2762
    %v2861 = vunpack.c.l.b16 %v2763
    %v2862 = vunpack.c.h.b16 %v2763
    %v2863 = vunpack.c.l.b16 %v2764
    %v2864 = vunpack.c.h.b16 %v2764
    %v2865 = vunpack.c.l.b16 %v2765
    %v2866 = vunpack.c.h.b16 %v2765
    %v2867 = vunpack.c.l.b16 %v2766
    %v2868 = vunpack.c.h.b16 %v2766
    %v2869 = vunpack.c.l.b16 %v2767
    %v2870 = vunpack.c.h.b16 %v2767
    %v2871 = vunpack.c.l.b16 %v2768
    %v2872 = vunpack.c.h.b16 %v2768
    %v2873 = vunpack.c.l.b16 %v2769
    %v2874 = vunpack.c.h.b16 %v2769
    %v2875 = vunpack.c.l.b16 %v2770
    %v2876 = vunpack.c.h.b16 %v2770
    %v2877 = vunpack.c.l.b16 %v2771
    %v2878 = vunpack.c.h.b16 %v2771
    %v2879 = vunpack.c.l.b16 %v2772
    %v2880 = vunpack.c.h.b16 %v2772
    %v2881 = vunpack.c.l.b16 %v2773
    %v2882 = vunpack.c.h.b16 %v2773
    %v2883 = vunpack.c.l.b16 %v2774
    %v2884 = vunpack.c.h.b16 %v2774
    %v2885 = vunpack.c.l.b16 %v2775
    %v2886 = vunpack.c.h.b16 %v2775
    %v2887 = vunpack.c.l.b16 %v2776
    %v2888 = vunpack.c.h.b16 %v2776
    %v2889 = vunpack.c.l.b16 %v2777
    %v2890 = vunpack.c.h.b16 %v2777
    %v2891 = vunpack.c.l.b16 %v2778
    %v2892 = vunpack.c.h.b16 %v2778
    %v2893 = vunpack.c.l.b16 %v2779
    %v2894 = vunpack.c.h.b16 %v2779
    %v2895 = vunpack.c.l.b16 %v2780
    %v2896 = vunpack.c.h.b16 %v2780
    %v2897 = vunpack.c.l.b16 %v2781
    %v2898 = vunpack.c.h.b16 %v2781
    %v2899 = vunpack.c.l.b16 %v2782
    %v2900 = vunpack.c.h.b16 %v2782
    %v2901 = vunpack.c.l.b16 %v2783
    %v2902 = vunpack.c.h.b16 %v2783
    %v2903 = vpack.c.b16 %v2843, %v2839
    %v2904 = vpack.c.b16 %v2844, %v2840
    %v2905 = vpack.c.b16 %v2845, %v2841
    %v2906 = vpack.c.b16 %v2846, %v2842
    %v2907 = vpack.c.b16 %v2851, %v2847
    %v2908 = vpack.c.b16 %v2852, %v2848
    %v2909 = vpack.c.b16 %v2853, %v2849
    %v2910 = vpack.c.b16 %v2854, %v2850
    %v2911 = vpack.c.b16 %v2859, %v2855
    %v2912 = vpack.c.b16 %v2860, %v2856
    %v2913 = vpack.c.b16 %v2861, %v2857
    %v2914 = vpack.c.b16 %v2862, %v2858
    %v2915 = vpack.c.b16 %v2867, %v2863
    %v2916 = vpack.c.b16 %v2868, %v2864
    %v2917 = vpack.c.b16 %v2869, %v2865
    %v2918 = vpack.c.b16 %v2870, %v2866
    %v2919 = vpack.c.b16 %v2875, %v2871
    %v2920 = vpack.c.b16 %v2876, %v2872
    %v2921 = vpack.c.b16 %v2877, %v2873
    %v2922 = vpack.c.b16 %v2878, %v2874
    %v2923 = vpack.c.b16 %v2883, %v2879
    %v2924 = vpack.c.b16 %v2884, %v2880
    %v2925 = vpack.c.b16 %v2885, %v2881
    %v2926 = vpack.c.b16 %v2886, %v2882
    %v2927 = vpack.c.b16 %v2891, %v2887
    %v2928 = vpack.c.b16 %v2892, %v2888
    %v2929 = vpack.c.b16 %v2893, %v2889
    %v2930 = vpack.c.b16 %v2894, %v2890
    %v2931 = vpack.c.b16 %v2899, %v2895
    %v2932 = vpack.c.b16 %v2900, %v2896
    %v2933 = vpack.c.b16 %v2901, %v2897
    %v2934 = vpack.c.b16 %v2902, %v2898
    %2967 = vmatprep.subr.bf16.mxu0 %v2904
    %2968 = vmatpush1.bf16.msra.mxu0 %v2903
    %2969 = vmatprep.subr.bf16.mxu0 %v2908
    %2970 = vmatpush1.bf16.msra.mxu0 %v2907
    %2971 = vmatprep.subr.bf16.mxu0 %v2912
    %2972 = vmatpush1.bf16.msra.mxu0 %v2911
    %2973 = vmatprep.subr.bf16.mxu0 %v2916
    %2974 = vmatpush1.bf16.msra.mxu0 %v2915
    %2975 = vmatprep.subr.bf16.mxu0 %v2920
    %2976 = vmatpush1.bf16.msra.mxu0 %v2919
    %2977 = vmatprep.subr.bf16.mxu0 %v2924
    %2978 = vmatpush1.bf16.msra.mxu0 %v2923
    %2979 = vmatprep.subr.bf16.mxu0 %v2928
    %2980 = vmatpush1.bf16.msra.mxu0 %v2927
    %2981 = vmatprep.subr.bf16.mxu0 %v2932
    %2982 = vmatpush1.bf16.msra.mxu0 %v2931
    %2983 = vmatprep.subr.bf16.mxu0 0
    %2984 = vmatpush1.bf16.msra.mxu0 0
    %2985 = vmatprep.subr.bf16.mxu0 0
    %2986 = vmatpush1.bf16.msra.mxu0 0
    %2987 = vmatprep.subr.bf16.mxu0 0
    %2988 = vmatpush1.bf16.msra.mxu0 0
    %2989 = vmatprep.subr.bf16.mxu0 0
    %2990 = vmatpush1.bf16.msra.mxu0 0
    %2991 = vmatprep.subr.bf16.mxu0 0
    %2992 = vmatpush1.bf16.msra.mxu0 0
    %2993 = vmatprep.subr.bf16.mxu0 0
    %2994 = vmatpush1.bf16.msra.mxu0 0
    %2995 = vmatprep.subr.bf16.mxu0 0
    %2996 = vmatpush1.bf16.msra.mxu0 0
    %2997 = vmatprep.subr.bf16.mxu0 0
    %2998 = vmatpush1.bf16.msra.mxu0 0
    %2999 = vmatprep.mubr.bf16.mxu0 0
    %3000 = vmatmul.mubr.bf16.gmra.mrb[0].mxu0 %v2749
    %v3001 = vpop.f32.mrb[0].mxu0
    %v3002 = vadd.f32 %v2790, %v3001
    %v3003 = vpop.f32.mrb[0].mxu0
    %v3004 = vadd.f32 %v2794, %v3003
    %v3005 = vpop.f32.mrb[0].mxu0
    %v3006 = vpop.f32.mrb[0].mxu0
    %3007 = vdwg.mxu0
    %3008 = vmatprep.subr.bf16.mxu0 %v2906
    %3009 = vmatpush1.bf16.msra.mxu0 %v2905
    %3010 = vmatprep.subr.bf16.mxu0 %v2910
    %3011 = vmatpush1.bf16.msra.mxu0 %v2909
    %3012 = vmatprep.subr.bf16.mxu0 %v2914
    %3013 = vmatpush1.bf16.msra.mxu0 %v2913
    %3014 = vmatprep.subr.bf16.mxu0 %v2918
    %3015 = vmatpush1.bf16.msra.mxu0 %v2917
    %3016 = vmatprep.subr.bf16.mxu0 %v2922
    %3017 = vmatpush1.bf16.msra.mxu0 %v2921
    %3018 = vmatprep.subr.bf16.mxu0 %v2926
    %3019 = vmatpush1.bf16.msra.mxu0 %v2925
    %3020 = vmatprep.subr.bf16.mxu0 %v2930
    %3021 = vmatpush1.bf16.msra.mxu0 %v2929
    %3022 = vmatprep.subr.bf16.mxu0 %v2934
    %3023 = vmatpush1.bf16.msra.mxu0 %v2933
    %3024 = vmatprep.subr.bf16.mxu0 0
    %3025 = vmatpush1.bf16.msra.mxu0 0
    %3026 = vmatprep.subr.bf16.mxu0 0
    %3027 = vmatpush1.bf16.msra.mxu0 0
    %3028 = vmatprep.subr.bf16.mxu0 0
    %3029 = vmatpush1.bf16.msra.mxu0 0
    %3030 = vmatprep.subr.bf16.mxu0 0
    %3031 = vmatpush1.bf16.msra.mxu0 0
    %3032 = vmatprep.subr.bf16.mxu0 0
    %3033 = vmatpush1.bf16.msra.mxu0 0
    %3034 = vmatprep.subr.bf16.mxu0 0
    %3035 = vmatpush1.bf16.msra.mxu0 0
    %3036 = vmatprep.subr.bf16.mxu0 0
    %3037 = vmatpush1.bf16.msra.mxu0 0
    %3038 = vmatprep.subr.bf16.mxu0 0
    %3039 = vmatpush1.bf16.msra.mxu0 0
    %3040 = vmatprep.mubr.bf16.mxu0 0
    %3041 = vmatmul.mubr.bf16.gmra.mrb[0].mxu0 %v2749
    %v3042 = vpop.f32.mrb[0].mxu0
    %v3043 = vadd.f32 %v2798, %v3042
    %v3044 = vpop.f32.mrb[0].mxu0
    %v3045 = vadd.f32 %v2802, %v3044
    %v3046 = vpop.f32.mrb[0].mxu0
    %v3047 = vpop.f32.mrb[0].mxu0
    %3048 = vdwg.mxu0
    %s3049 = scalar_lea.vmem [#allocation4], 256
    %v3050 = vld [vmem:[%s3049] sm:$0xff]
    %v3051 = vld [vmem:[%s3049 + $0x8] sm:$0xff]
    %v3052 = vld [vmem:[%s3049 + $0x10] sm:$0xff]
    %v3053 = vld [vmem:[%s3049 + $0x18] sm:$0xff]
    %v3054 = vld [vmem:[%s3049 + $0x20] sm:$0xff]
    %v3055 = vld [vmem:[%s3049 + $0x28] sm:$0xff]
    %v3056 = vld [vmem:[%s3049 + $0x30] sm:$0xff]
    %v3057 = vld [vmem:[%s3049 + $0x38] sm:$0xff]
    %v3058 = vld [vmem:[%s3049 + $0x40] sm:$0xff]
    %v3059 = vld [vmem:[%s3049 + $0x48] sm:$0xff]
    %v3060 = vld [vmem:[%s3049 + $0x50] sm:$0xff]
    %v3061 = vld [vmem:[%s3049 + $0x58] sm:$0xff]
    %v3062 = vld [vmem:[%s3049 + $0x60] sm:$0xff]
    %v3063 = vld [vmem:[%s3049 + $0x68] sm:$0xff]
    %v3064 = vld [vmem:[%s3049 + $0x70] sm:$0xff]
    %v3065 = vld [vmem:[%s3049 + $0x78] sm:$0xff]
    %v3066 = vld [vmem:[%s3049 + $0x80] sm:$0xff]
    %v3067 = vld [vmem:[%s3049 + $0x88] sm:$0xff]
    %v3068 = vld [vmem:[%s3049 + $0x90] sm:$0xff]
    %v3069 = vld [vmem:[%s3049 + $0x98] sm:$0xff]
    %v3070 = vld [vmem:[%s3049 + $0xa0] sm:$0xff]
    %v3071 = vld [vmem:[%s3049 + $0xa8] sm:$0xff]
    %v3072 = vld [vmem:[%s3049 + $0xb0] sm:$0xff]
    %v3073 = vld [vmem:[%s3049 + $0xb8] sm:$0xff]
    %v3074 = vld [vmem:[%s3049 + $0xc0] sm:$0xff]
    %v3075 = vld [vmem:[%s3049 + $0xc8] sm:$0xff]
    %v3076 = vld [vmem:[%s3049 + $0xd0] sm:$0xff]
    %v3077 = vld [vmem:[%s3049 + $0xd8] sm:$0xff]
    %v3078 = vld [vmem:[%s3049 + $0xe0] sm:$0xff]
    %v3079 = vld [vmem:[%s3049 + $0xe8] sm:$0xff]
    %v3080 = vld [vmem:[%s3049 + $0xf0] sm:$0xff]
    %v3081 = vld [vmem:[%s3049 + $0xf8] sm:$0xff]
    %s3082 = scalar_lea.vmem %s6, 4
    %v3083 = vld [vmem:[%s3082] sm:$0xf]
    %v3085 = vlaneseq
    %v3086 = vshrl.u32 %v3085, 7
    %v3087 = vsub.s32 0, %v3086
    %v3088 = vrot.slane %v3083, %v3087
    %v3089 = vlaneseq
    %v3090 = vshrl.u32 %v3089, 7
    %v3091 = vsub.s32 1, %v3090
    %v3092 = vrot.slane %v3083, %v3091
    %v3093 = vlaneseq
    %v3094 = vshrl.u32 %v3093, 7
    %v3095 = vsub.s32 2, %v3094
    %v3096 = vrot.slane %v3083, %v3095
    %v3097 = vlaneseq
    %v3098 = vshrl.u32 %v3097, 7
    %v3099 = vsub.s32 3, %v3098
    %v3100 = vrot.slane %v3083, %v3099
    %v3137 = vunpack.c.l.b16 %v3050
    %v3138 = vunpack.c.h.b16 %v3050
    %v3139 = vunpack.c.l.b16 %v3051
    %v3140 = vunpack.c.h.b16 %v3051
    %v3141 = vunpack.c.l.b16 %v3052
    %v3142 = vunpack.c.h.b16 %v3052
    %v3143 = vunpack.c.l.b16 %v3053
    %v3144 = vunpack.c.h.b16 %v3053
    %v3145 = vunpack.c.l.b16 %v3054
    %v3146 = vunpack.c.h.b16 %v3054
    %v3147 = vunpack.c.l.b16 %v3055
    %v3148 = vunpack.c.h.b16 %v3055
    %v3149 = vunpack.c.l.b16 %v3056
    %v3150 = vunpack.c.h.b16 %v3056
    %v3151 = vunpack.c.l.b16 %v3057
    %v3152 = vunpack.c.h.b16 %v3057
    %v3153 = vunpack.c.l.b16 %v3058
    %v3154 = vunpack.c.h.b16 %v3058
    %v3155 = vunpack.c.l.b16 %v3059
    %v3156 = vunpack.c.h.b16 %v3059
    %v3157 = vunpack.c.l.b16 %v3060
    %v3158 = vunpack.c.h.b16 %v3060
    %v3159 = vunpack.c.l.b16 %v3061
    %v3160 = vunpack.c.h.b16 %v3061
    %v3161 = vunpack.c.l.b16 %v3062
    %v3162 = vunpack.c.h.b16 %v3062
    %v3163 = vunpack.c.l.b16 %v3063
    %v3164 = vunpack.c.h.b16 %v3063
    %v3165 = vunpack.c.l.b16 %v3064
    %v3166 = vunpack.c.h.b16 %v3064
    %v3167 = vunpack.c.l.b16 %v3065
    %v3168 = vunpack.c.h.b16 %v3065
    %v3169 = vunpack.c.l.b16 %v3066
    %v3170 = vunpack.c.h.b16 %v3066
    %v3171 = vunpack.c.l.b16 %v3067
    %v3172 = vunpack.c.h.b16 %v3067
    %v3173 = vunpack.c.l.b16 %v3068
    %v3174 = vunpack.c.h.b16 %v3068
    %v3175 = vunpack.c.l.b16 %v3069
    %v3176 = vunpack.c.h.b16 %v3069
    %v3177 = vunpack.c.l.b16 %v3070
    %v3178 = vunpack.c.h.b16 %v3070
    %v3179 = vunpack.c.l.b16 %v3071
    %v3180 = vunpack.c.h.b16 %v3071
    %v3181 = vunpack.c.l.b16 %v3072
    %v3182 = vunpack.c.h.b16 %v3072
    %v3183 = vunpack.c.l.b16 %v3073
    %v3184 = vunpack.c.h.b16 %v3073
    %v3185 = vunpack.c.l.b16 %v3074
    %v3186 = vunpack.c.h.b16 %v3074
    %v3187 = vunpack.c.l.b16 %v3075
    %v3188 = vunpack.c.h.b16 %v3075
    %v3189 = vunpack.c.l.b16 %v3076
    %v3190 = vunpack.c.h.b16 %v3076
    %v3191 = vunpack.c.l.b16 %v3077
    %v3192 = vunpack.c.h.b16 %v3077
    %v3193 = vunpack.c.l.b16 %v3078
    %v3194 = vunpack.c.h.b16 %v3078
    %v3195 = vunpack.c.l.b16 %v3079
    %v3196 = vunpack.c.h.b16 %v3079
    %v3197 = vunpack.c.l.b16 %v3080
    %v3198 = vunpack.c.h.b16 %v3080
    %v3199 = vunpack.c.l.b16 %v3081
    %v3200 = vunpack.c.h.b16 %v3081
    %v3201 = vpack.c.b16 %v3141, %v3137
    %v3202 = vpack.c.b16 %v3142, %v3138
    %v3203 = vpack.c.b16 %v3143, %v3139
    %v3204 = vpack.c.b16 %v3144, %v3140
    %v3205 = vpack.c.b16 %v3149, %v3145
    %v3206 = vpack.c.b16 %v3150, %v3146
    %v3207 = vpack.c.b16 %v3151, %v3147
    %v3208 = vpack.c.b16 %v3152, %v3148
    %v3209 = vpack.c.b16 %v3157, %v3153
    %v3210 = vpack.c.b16 %v3158, %v3154
    %v3211 = vpack.c.b16 %v3159, %v3155
    %v3212 = vpack.c.b16 %v3160, %v3156
    %v3213 = vpack.c.b16 %v3165, %v3161
    %v3214 = vpack.c.b16 %v3166, %v3162
    %v3215 = vpack.c.b16 %v3167, %v3163
    %v3216 = vpack.c.b16 %v3168, %v3164
    %v3217 = vpack.c.b16 %v3173, %v3169
    %v3218 = vpack.c.b16 %v3174, %v3170
    %v3219 = vpack.c.b16 %v3175, %v3171
    %v3220 = vpack.c.b16 %v3176, %v3172
    %v3221 = vpack.c.b16 %v3181, %v3177
    %v3222 = vpack.c.b16 %v3182, %v3178
    %v3223 = vpack.c.b16 %v3183, %v3179
    %v3224 = vpack.c.b16 %v3184, %v3180
    %v3225 = vpack.c.b16 %v3189, %v3185
    %v3226 = vpack.c.b16 %v3190, %v3186
    %v3227 = vpack.c.b16 %v3191, %v3187
    %v3228 = vpack.c.b16 %v3192, %v3188
    %v3229 = vpack.c.b16 %v3197, %v3193
    %v3230 = vpack.c.b16 %v3198, %v3194
    %v3231 = vpack.c.b16 %v3199, %v3195
    %v3232 = vpack.c.b16 %v3200, %v3196
    %3265 = vmatprep.subr.bf16.mxu0 %v3202
    %3266 = vmatpush1.bf16.msra.mxu0 %v3201
    %3267 = vmatprep.subr.bf16.mxu0 %v3206
    %3268 = vmatpush1.bf16.msra.mxu0 %v3205
    %3269 = vmatprep.subr.bf16.mxu0 %v3210
    %3270 = vmatpush1.bf16.msra.mxu0 %v3209
    %3271 = vmatprep.subr.bf16.mxu0 %v3214
    %3272 = vmatpush1.bf16.msra.mxu0 %v3213
    %3273 = vmatprep.subr.bf16.mxu0 %v3218
    %3274 = vmatpush1.bf16.msra.mxu0 %v3217
    %3275 = vmatprep.subr.bf16.mxu0 %v3222
    %3276 = vmatpush1.bf16.msra.mxu0 %v3221
    %3277 = vmatprep.subr.bf16.mxu0 %v3226
    %3278 = vmatpush1.bf16.msra.mxu0 %v3225
    %3279 = vmatprep.subr.bf16.mxu0 %v3230
    %3280 = vmatpush1.bf16.msra.mxu0 %v3229
    %3281 = vmatprep.subr.bf16.mxu0 0
    %3282 = vmatpush1.bf16.msra.mxu0 0
    %3283 = vmatprep.subr.bf16.mxu0 0
    %3284 = vmatpush1.bf16.msra.mxu0 0
    %3285 = vmatprep.subr.bf16.mxu0 0
    %3286 = vmatpush1.bf16.msra.mxu0 0
    %3287 = vmatprep.subr.bf16.mxu0 0
    %3288 = vmatpush1.bf16.msra.mxu0 0
    %3289 = vmatprep.subr.bf16.mxu0 0
    %3290 = vmatpush1.bf16.msra.mxu0 0
    %3291 = vmatprep.subr.bf16.mxu0 0
    %3292 = vmatpush1.bf16.msra.mxu0 0
    %3293 = vmatprep.subr.bf16.mxu0 0
    %3294 = vmatpush1.bf16.msra.mxu0 0
    %3295 = vmatprep.subr.bf16.mxu0 0
    %3296 = vmatpush1.bf16.msra.mxu0 0
    %3297 = vmatprep.mubr.bf16.mxu0 0
    %3298 = vmatmul.mubr.bf16.gmra.mrb[0].mxu0 %v2750
    %v3299 = vpop.f32.mrb[0].mxu0
    %v3300 = vadd.f32 %v3088, %v3299
    %v3301 = vpop.f32.mrb[0].mxu0
    %v3302 = vadd.f32 %v3092, %v3301
    %v3303 = vpop.f32.mrb[0].mxu0
    %v3304 = vpop.f32.mrb[0].mxu0
    %3305 = vdwg.mxu0
    %3306 = vmatprep.subr.bf16.mxu0 %v3204
    %3307 = vmatpush1.bf16.msra.mxu0 %v3203
    %3308 = vmatprep.subr.bf16.mxu0 %v3208
    %3309 = vmatpush1.bf16.msra.mxu0 %v3207
    %3310 = vmatprep.subr.bf16.mxu0 %v3212
    %3311 = vmatpush1.bf16.msra.mxu0 %v3211
    %3312 = vmatprep.subr.bf16.mxu0 %v3216
    %3313 = vmatpush1.bf16.msra.mxu0 %v3215
    %3314 = vmatprep.subr.bf16.mxu0 %v3220
    %3315 = vmatpush1.bf16.msra.mxu0 %v3219
    %3316 = vmatprep.subr.bf16.mxu0 %v3224
    %3317 = vmatpush1.bf16.msra.mxu0 %v3223
    %3318 = vmatprep.subr.bf16.mxu0 %v3228
    %3319 = vmatpush1.bf16.msra.mxu0 %v3227
    %3320 = vmatprep.subr.bf16.mxu0 %v3232
    %3321 = vmatpush1.bf16.msra.mxu0 %v3231
    %3322 = vmatprep.subr.bf16.mxu0 0
    %3323 = vmatpush1.bf16.msra.mxu0 0
    %3324 = vmatprep.subr.bf16.mxu0 0
    %3325 = vmatpush1.bf16.msra.mxu0 0
    %3326 = vmatprep.subr.bf16.mxu0 0
    %3327 = vmatpush1.bf16.msra.mxu0 0
    %3328 = vmatprep.subr.bf16.mxu0 0
    %3329 = vmatpush1.bf16.msra.mxu0 0
    %3330 = vmatprep.subr.bf16.mxu0 0
    %3331 = vmatpush1.bf16.msra.mxu0 0
    %3332 = vmatprep.subr.bf16.mxu0 0
    %3333 = vmatpush1.bf16.msra.mxu0 0
    %3334 = vmatprep.subr.bf16.mxu0 0
    %3335 = vmatpush1.bf16.msra.mxu0 0
    %3336 = vmatprep.subr.bf16.mxu0 0
    %3337 = vmatpush1.bf16.msra.mxu0 0
    %3338 = vmatprep.mubr.bf16.mxu0 0
    %3339 = vmatmul.mubr.bf16.gmra.mrb[0].mxu0 %v2750
    %v3340 = vpop.f32.mrb[0].mxu0
    %v3341 = vadd.f32 %v3096, %v3340
    %v3342 = vpop.f32.mrb[0].mxu0
    %v3343 = vadd.f32 %v3100, %v3342
    %v3344 = vpop.f32.mrb[0].mxu0
    %v3345 = vpop.f32.mrb[0].mxu0
    %3346 = vdwg.mxu0
    %v3347 = vsub.f32 %v1159, %v3300
    %v3348 = vsub.f32 %v1160, %v3302
    %v3349 = vsub.f32 %v1161, %v3341
    %v3350 = vsub.f32 %v1162, %v3343
    %v3351 = vmul.f32 %v3002, 1.442695
    %v3352 = vpow.pop %v3351
    %v3353 = vmul.f32 %v3004, 1.442695
    %v3354 = vpow.pop %v3353
    %v3355 = vmul.f32 %v3043, 1.442695
    %v3356 = vpow.pop %v3355
    %v3357 = vmul.f32 %v3045, 1.442695
    %v3358 = vpow.pop %v3357
    %v3359 = vmul.f32 %v3347, %v3352
    %v3360 = vmul.f32 %v3348, %v3354
    %v3361 = vmul.f32 %v3349, %v3356
    %v3362 = vmul.f32 %v3350, %v3358
    %v3363 = vpack.c.bf16 %v3359, %v3359
    %v3364 = vpack.c.bf16 %v3360, %v3360
    %v3365 = vpack.c.bf16 %v3361, %v3361
    %v3366 = vpack.c.bf16 %v3362, %v3362
    %v3367 = vld [vmem:[%s1] sm:$0xff]
    %v3368 = vld [vmem:[%s1 + $0x8] sm:$0xff]
    %v3369 = vld [vmem:[%s1 + $0x10] sm:$0xff]
    %v3370 = vld [vmem:[%s1 + $0x18] sm:$0xff]
    %v3371 = vld [vmem:[%s1 + $0x20] sm:$0xff]
    %v3372 = vld [vmem:[%s1 + $0x28] sm:$0xff]
    %v3373 = vld [vmem:[%s1 + $0x30] sm:$0xff]
    %v3374 = vld [vmem:[%s1 + $0x38] sm:$0xff]
    %v3375 = vld [vmem:[%s1 + $0x40] sm:$0xff]
    %v3376 = vld [vmem:[%s1 + $0x48] sm:$0xff]
    %v3377 = vld [vmem:[%s1 + $0x50] sm:$0xff]
    %v3378 = vld [vmem:[%s1 + $0x58] sm:$0xff]
    %v3379 = vld [vmem:[%s1 + $0x60] sm:$0xff]
    %v3380 = vld [vmem:[%s1 + $0x68] sm:$0xff]
    %v3381 = vld [vmem:[%s1 + $0x70] sm:$0xff]
    %v3382 = vld [vmem:[%s1 + $0x78] sm:$0xff]
    %v3383 = vld [vmem:[%s1 + $0x80] sm:$0xff]
    %v3384 = vld [vmem:[%s1 + $0x88] sm:$0xff]
    %v3385 = vld [vmem:[%s1 + $0x90] sm:$0xff]
    %v3386 = vld [vmem:[%s1 + $0x98] sm:$0xff]
    %v3387 = vld [vmem:[%s1 + $0xa0] sm:$0xff]
    %v3388 = vld [vmem:[%s1 + $0xa8] sm:$0xff]
    %v3389 = vld [vmem:[%s1 + $0xb0] sm:$0xff]
    %v3390 = vld [vmem:[%s1 + $0xb8] sm:$0xff]
    %v3391 = vld [vmem:[%s1 + $0xc0] sm:$0xff]
    %v3392 = vld [vmem:[%s1 + $0xc8] sm:$0xff]
    %v3393 = vld [vmem:[%s1 + $0xd0] sm:$0xff]
    %v3394 = vld [vmem:[%s1 + $0xd8] sm:$0xff]
    %v3395 = vld [vmem:[%s1 + $0xe0] sm:$0xff]
    %v3396 = vld [vmem:[%s1 + $0xe8] sm:$0xff]
    %v3397 = vld [vmem:[%s1 + $0xf0] sm:$0xff]
    %v3398 = vld [vmem:[%s1 + $0xf8] sm:$0xff]
    %v3399 = vld [vmem:[%s1 + $0x100] sm:$0xff]
    %v3400 = vld [vmem:[%s1 + $0x108] sm:$0xff]
    %v3401 = vld [vmem:[%s1 + $0x110] sm:$0xff]
    %v3402 = vld [vmem:[%s1 + $0x118] sm:$0xff]
    %v3403 = vld [vmem:[%s1 + $0x120] sm:$0xff]
    %v3404 = vld [vmem:[%s1 + $0x128] sm:$0xff]
    %v3405 = vld [vmem:[%s1 + $0x130] sm:$0xff]
    %v3406 = vld [vmem:[%s1 + $0x138] sm:$0xff]
    %v3407 = vld [vmem:[%s1 + $0x140] sm:$0xff]
    %v3408 = vld [vmem:[%s1 + $0x148] sm:$0xff]
    %v3409 = vld [vmem:[%s1 + $0x150] sm:$0xff]
    %v3410 = vld [vmem:[%s1 + $0x158] sm:$0xff]
    %v3411 = vld [vmem:[%s1 + $0x160] sm:$0xff]
    %v3412 = vld [vmem:[%s1 + $0x168] sm:$0xff]
    %v3413 = vld [vmem:[%s1 + $0x170] sm:$0xff]
    %v3414 = vld [vmem:[%s1 + $0x178] sm:$0xff]
    %v3415 = vld [vmem:[%s1 + $0x180] sm:$0xff]
    %v3416 = vld [vmem:[%s1 + $0x188] sm:$0xff]
    %v3417 = vld [vmem:[%s1 + $0x190] sm:$0xff]
    %v3418 = vld [vmem:[%s1 + $0x198] sm:$0xff]
    %v3419 = vld [vmem:[%s1 + $0x1a0] sm:$0xff]
    %v3420 = vld [vmem:[%s1 + $0x1a8] sm:$0xff]
    %v3421 = vld [vmem:[%s1 + $0x1b0] sm:$0xff]
    %v3422 = vld [vmem:[%s1 + $0x1b8] sm:$0xff]
    %v3423 = vld [vmem:[%s1 + $0x1c0] sm:$0xff]
    %v3424 = vld [vmem:[%s1 + $0x1c8] sm:$0xff]
    %v3425 = vld [vmem:[%s1 + $0x1d0] sm:$0xff]
    %v3426 = vld [vmem:[%s1 + $0x1d8] sm:$0xff]
    %v3427 = vld [vmem:[%s1 + $0x1e0] sm:$0xff]
    %v3428 = vld [vmem:[%s1 + $0x1e8] sm:$0xff]
    %v3429 = vld [vmem:[%s1 + $0x1f0] sm:$0xff]
    %v3430 = vld [vmem:[%s1 + $0x1f8] sm:$0xff]
    %v3431 = vld [vmem:[%s2] sm:$0x3]
    %v3433 = vlaneseq
    %v3434 = vshrl.u32 %v3433, 7
    %v3435 = vsub.s32 0, %v3434
    %v3436 = vrot.slane %v3431, %v3435
    %v3437 = vlaneseq
    %v3438 = vshrl.u32 %v3437, 7
    %v3439 = vsub.s32 1, %v3438
    %v3440 = vrot.slane %v3431, %v3439
    %v3507 = vunpack.c.l.b16 %v3367
    %v3508 = vunpack.c.h.b16 %v3367
    %v3509 = vunpack.c.l.b16 %v3368
    %v3510 = vunpack.c.h.b16 %v3368
    %v3511 = vunpack.c.l.b16 %v3369
    %v3512 = vunpack.c.h.b16 %v3369
    %v3513 = vunpack.c.l.b16 %v3370
    %v3514 = vunpack.c.h.b16 %v3370
    %v3515 = vunpack.c.l.b16 %v3371
    %v3516 = vunpack.c.h.b16 %v3371
    %v3517 = vunpack.c.l.b16 %v3372
    %v3518 = vunpack.c.h.b16 %v3372
    %v3519 = vunpack.c.l.b16 %v3373
    %v3520 = vunpack.c.h.b16 %v3373
    %v3521 = vunpack.c.l.b16 %v3374
    %v3522 = vunpack.c.h.b16 %v3374
    %v3523 = vunpack.c.l.b16 %v3375
    %v3524 = vunpack.c.h.b16 %v3375
    %v3525 = vunpack.c.l.b16 %v3376
    %v3526 = vunpack.c.h.b16 %v3376
    %v3527 = vunpack.c.l.b16 %v3377
    %v3528 = vunpack.c.h.b16 %v3377
    %v3529 = vunpack.c.l.b16 %v3378
    %v3530 = vunpack.c.h.b16 %v3378
    %v3531 = vunpack.c.l.b16 %v3379
    %v3532 = vunpack.c.h.b16 %v3379
    %v3533 = vunpack.c.l.b16 %v3380
    %v3534 = vunpack.c.h.b16 %v3380
    %v3535 = vunpack.c.l.b16 %v3381
    %v3536 = vunpack.c.h.b16 %v3381
    %v3537 = vunpack.c.l.b16 %v3382
    %v3538 = vunpack.c.h.b16 %v3382
    %v3539 = vunpack.c.l.b16 %v3383
    %v3540 = vunpack.c.h.b16 %v3383
    %v3541 = vunpack.c.l.b16 %v3384
    %v3542 = vunpack.c.h.b16 %v3384
    %v3543 = vunpack.c.l.b16 %v3385
    %v3544 = vunpack.c.h.b16 %v3385
    %v3545 = vunpack.c.l.b16 %v3386
    %v3546 = vunpack.c.h.b16 %v3386
    %v3547 = vunpack.c.l.b16 %v3387
    %v3548 = vunpack.c.h.b16 %v3387
    %v3549 = vunpack.c.l.b16 %v3388
    %v3550 = vunpack.c.h.b16 %v3388
    %v3551 = vunpack.c.l.b16 %v3389
    %v3552 = vunpack.c.h.b16 %v3389
    %v3553 = vunpack.c.l.b16 %v3390
    %v3554 = vunpack.c.h.b16 %v3390
    %v3555 = vunpack.c.l.b16 %v3391
    %v3556 = vunpack.c.h.b16 %v3391
    %v3557 = vunpack.c.l.b16 %v3392
    %v3558 = vunpack.c.h.b16 %v3392
    %v3559 = vunpack.c.l.b16 %v3393
    %v3560 = vunpack.c.h.b16 %v3393
    %v3561 = vunpack.c.l.b16 %v3394
    %v3562 = vunpack.c.h.b16 %v3394
    %v3563 = vunpack.c.l.b16 %v3395
    %v3564 = vunpack.c.h.b16 %v3395
    %v3565 = vunpack.c.l.b16 %v3396
    %v3566 = vunpack.c.h.b16 %v3396
    %v3567 = vunpack.c.l.b16 %v3397
    %v3568 = vunpack.c.h.b16 %v3397
    %v3569 = vunpack.c.l.b16 %v3398
    %v3570 = vunpack.c.h.b16 %v3398
    %v3571 = vunpack.c.l.b16 %v3399
    %v3572 = vunpack.c.h.b16 %v3399
    %v3573 = vunpack.c.l.b16 %v3400
    %v3574 = vunpack.c.h.b16 %v3400
    %v3575 = vunpack.c.l.b16 %v3401
    %v3576 = vunpack.c.h.b16 %v3401
    %v3577 = vunpack.c.l.b16 %v3402
    %v3578 = vunpack.c.h.b16 %v3402
    %v3579 = vunpack.c.l.b16 %v3403
    %v3580 = vunpack.c.h.b16 %v3403
    %v3581 = vunpack.c.l.b16 %v3404
    %v3582 = vunpack.c.h.b16 %v3404
    %v3583 = vunpack.c.l.b16 %v3405
    %v3584 = vunpack.c.h.b16 %v3405
    %v3585 = vunpack.c.l.b16 %v3406
    %v3586 = vunpack.c.h.b16 %v3406
    %v3587 = vunpack.c.l.b16 %v3407
    %v3588 = vunpack.c.h.b16 %v3407
    %v3589 = vunpack.c.l.b16 %v3408
    %v3590 = vunpack.c.h.b16 %v3408
    %v3591 = vunpack.c.l.b16 %v3409
    %v3592 = vunpack.c.h.b16 %v3409
    %v3593 = vunpack.c.l.b16 %v3410
    %v3594 = vunpack.c.h.b16 %v3410
    %v3595 = vunpack.c.l.b16 %v3411
    %v3596 = vunpack.c.h.b16 %v3411
    %v3597 = vunpack.c.l.b16 %v3412
    %v3598 = vunpack.c.h.b16 %v3412
    %v3599 = vunpack.c.l.b16 %v3413
    %v3600 = vunpack.c.h.b16 %v3413
    %v3601 = vunpack.c.l.b16 %v3414
    %v3602 = vunpack.c.h.b16 %v3414
    %v3603 = vunpack.c.l.b16 %v3415
    %v3604 = vunpack.c.h.b16 %v3415
    %v3605 = vunpack.c.l.b16 %v3416
    %v3606 = vunpack.c.h.b16 %v3416
    %v3607 = vunpack.c.l.b16 %v3417
    %v3608 = vunpack.c.h.b16 %v3417
    %v3609 = vunpack.c.l.b16 %v3418
    %v3610 = vunpack.c.h.b16 %v3418
    %v3611 = vunpack.c.l.b16 %v3419
    %v3612 = vunpack.c.h.b16 %v3419
    %v3613 = vunpack.c.l.b16 %v3420
    %v3614 = vunpack.c.h.b16 %v3420
    %v3615 = vunpack.c.l.b16 %v3421
    %v3616 = vunpack.c.h.b16 %v3421
    %v3617 = vunpack.c.l.b16 %v3422
    %v3618 = vunpack.c.h.b16 %v3422
    %v3619 = vunpack.c.l.b16 %v3423
    %v3620 = vunpack.c.h.b16 %v3423
    %v3621 = vunpack.c.l.b16 %v3424
    %v3622 = vunpack.c.h.b16 %v3424
    %v3623 = vunpack.c.l.b16 %v3425
    %v3624 = vunpack.c.h.b16 %v3425
    %v3625 = vunpack.c.l.b16 %v3426
    %v3626 = vunpack.c.h.b16 %v3426
    %v3627 = vunpack.c.l.b16 %v3427
    %v3628 = vunpack.c.h.b16 %v3427
    %v3629 = vunpack.c.l.b16 %v3428
    %v3630 = vunpack.c.h.b16 %v3428
    %v3631 = vunpack.c.l.b16 %v3429
    %v3632 = vunpack.c.h.b16 %v3429
    %v3633 = vunpack.c.l.b16 %v3430
    %v3634 = vunpack.c.h.b16 %v3430
    %v3635 = vpack.c.b16 %v3509, %v3507
    %v3636 = vpack.c.b16 %v3510, %v3508
    %v3637 = vpack.c.b16 %v3513, %v3511
    %v3638 = vpack.c.b16 %v3514, %v3512
    %v3639 = vpack.c.b16 %v3517, %v3515
    %v3640 = vpack.c.b16 %v3518, %v3516
    %v3641 = vpack.c.b16 %v3521, %v3519
    %v3642 = vpack.c.b16 %v3522, %v3520
    %v3643 = vpack.c.b16 %v3525, %v3523
    %v3644 = vpack.c.b16 %v3526, %v3524
    %v3645 = vpack.c.b16 %v3529, %v3527
    %v3646 = vpack.c.b16 %v3530, %v3528
    %v3647 = vpack.c.b16 %v3533, %v3531
    %v3648 = vpack.c.b16 %v3534, %v3532
    %v3649 = vpack.c.b16 %v3537, %v3535
    %v3650 = vpack.c.b16 %v3538, %v3536
    %v3651 = vpack.c.b16 %v3541, %v3539
    %v3652 = vpack.c.b16 %v3542, %v3540
    %v3653 = vpack.c.b16 %v3545, %v3543
    %v3654 = vpack.c.b16 %v3546, %v3544
    %v3655 = vpack.c.b16 %v3549, %v3547
    %v3656 = vpack.c.b16 %v3550, %v3548
    %v3657 = vpack.c.b16 %v3553, %v3551
    %v3658 = vpack.c.b16 %v3554, %v3552
    %v3659 = vpack.c.b16 %v3557, %v3555
    %v3660 = vpack.c.b16 %v3558, %v3556
    %v3661 = vpack.c.b16 %v3561, %v3559
    %v3662 = vpack.c.b16 %v3562, %v3560
    %v3663 = vpack.c.b16 %v3565, %v3563
    %v3664 = vpack.c.b16 %v3566, %v3564
    %v3665 = vpack.c.b16 %v3569, %v3567
    %v3666 = vpack.c.b16 %v3570, %v3568
    %v3667 = vpack.c.b16 %v3573, %v3571
    %v3668 = vpack.c.b16 %v3574, %v3572
    %v3669 = vpack.c.b16 %v3577, %v3575
    %v3670 = vpack.c.b16 %v3578, %v3576
    %v3671 = vpack.c.b16 %v3581, %v3579
    %v3672 = vpack.c.b16 %v3582, %v3580
    %v3673 = vpack.c.b16 %v3585, %v3583
    %v3674 = vpack.c.b16 %v3586, %v3584
    %v3675 = vpack.c.b16 %v3589, %v3587
    %v3676 = vpack.c.b16 %v3590, %v3588
    %v3677 = vpack.c.b16 %v3593, %v3591
    %v3678 = vpack.c.b16 %v3594, %v3592
    %v3679 = vpack.c.b16 %v3597, %v3595
    %v3680 = vpack.c.b16 %v3598, %v3596
    %v3681 = vpack.c.b16 %v3601, %v3599
    %v3682 = vpack.c.b16 %v3602, %v3600
    %v3683 = vpack.c.b16 %v3605, %v3603
    %v3684 = vpack.c.b16 %v3606, %v3604
    %v3685 = vpack.c.b16 %v3609, %v3607
    %v3686 = vpack.c.b16 %v3610, %v3608
    %v3687 = vpack.c.b16 %v3613, %v3611
    %v3688 = vpack.c.b16 %v3614, %v3612
    %v3689 = vpack.c.b16 %v3617, %v3615
    %v3690 = vpack.c.b16 %v3618, %v3616
    %v3691 = vpack.c.b16 %v3621, %v3619
    %v3692 = vpack.c.b16 %v3622, %v3620
    %v3693 = vpack.c.b16 %v3625, %v3623
    %v3694 = vpack.c.b16 %v3626, %v3624
    %v3695 = vpack.c.b16 %v3629, %v3627
    %v3696 = vpack.c.b16 %v3630, %v3628
    %v3697 = vpack.c.b16 %v3633, %v3631
    %v3698 = vpack.c.b16 %v3634, %v3632
    %3763 = vmatprep.subr.bf16.mxu0 %v3636
    %3764 = vmatpush1.bf16.msra.mxu0 %v3635
    %3765 = vmatprep.subr.bf16.mxu0 %v3638
    %3766 = vmatpush1.bf16.msra.mxu0 %v3637
    %3767 = vmatprep.subr.bf16.mxu0 %v3640
    %3768 = vmatpush1.bf16.msra.mxu0 %v3639
    %3769 = vmatprep.subr.bf16.mxu0 %v3642
    %3770 = vmatpush1.bf16.msra.mxu0 %v3641
    %3771 = vmatprep.subr.bf16.mxu0 %v3644
    %3772 = vmatpush1.bf16.msra.mxu0 %v3643
    %3773 = vmatprep.subr.bf16.mxu0 %v3646
    %3774 = vmatpush1.bf16.msra.mxu0 %v3645
    %3775 = vmatprep.subr.bf16.mxu0 %v3648
    %3776 = vmatpush1.bf16.msra.mxu0 %v3647
    %3777 = vmatprep.subr.bf16.mxu0 %v3650
    %3778 = vmatpush1.bf16.msra.mxu0 %v3649
    %3779 = vmatprep.subr.bf16.mxu0 %v3652
    %3780 = vmatpush1.bf16.msra.mxu0 %v3651
    %3781 = vmatprep.subr.bf16.mxu0 %v3654
    %3782 = vmatpush1.bf16.msra.mxu0 %v3653
    %3783 = vmatprep.subr.bf16.mxu0 %v3656
    %3784 = vmatpush1.bf16.msra.mxu0 %v3655
    %3785 = vmatprep.subr.bf16.mxu0 %v3658
    %3786 = vmatpush1.bf16.msra.mxu0 %v3657
    %3787 = vmatprep.subr.bf16.mxu0 %v3660
    %3788 = vmatpush1.bf16.msra.mxu0 %v3659
    %3789 = vmatprep.subr.bf16.mxu0 %v3662
    %3790 = vmatpush1.bf16.msra.mxu0 %v3661
    %3791 = vmatprep.subr.bf16.mxu0 %v3664
    %3792 = vmatpush1.bf16.msra.mxu0 %v3663
    %3793 = vmatprep.subr.bf16.mxu0 %v3666
    %3794 = vmatpush1.bf16.msra.mxu0 %v3665
    %3795 = vmatprep.mubr.bf16.mxu0 %v3364
    %3796 = vmatmul.mubr.bf16.gmra.mrb[0].mxu0 %v3363
    %v3797 = vpop.f32.mrb[0].mxu0
    %v3798 = vadd.f32 %v3436, %v3797
    %v3799 = vpop.f32.mrb[0].mxu0
    %v3800 = vadd.f32 %v3440, %v3799
    %v3801 = vpop.f32.mrb[0].mxu0
    %v3802 = vpop.f32.mrb[0].mxu0
    %3803 = vdwg.mxu0
    %3804 = vmatprep.subr.bf16.mxu0 %v3668
    %3805 = vmatpush1.bf16.msra.mxu0 %v3667
    %3806 = vmatprep.subr.bf16.mxu0 %v3670
    %3807 = vmatpush1.bf16.msra.mxu0 %v3669
    %3808 = vmatprep.subr.bf16.mxu0 %v3672
    %3809 = vmatpush1.bf16.msra.mxu0 %v3671
    %3810 = vmatprep.subr.bf16.mxu0 %v3674
    %3811 = vmatpush1.bf16.msra.mxu0 %v3673
    %3812 = vmatprep.subr.bf16.mxu0 %v3676
    %3813 = vmatpush1.bf16.msra.mxu0 %v3675
    %3814 = vmatprep.subr.bf16.mxu0 %v3678
    %3815 = vmatpush1.bf16.msra.mxu0 %v3677
    %3816 = vmatprep.subr.bf16.mxu0 %v3680
    %3817 = vmatpush1.bf16.msra.mxu0 %v3679
    %3818 = vmatprep.subr.bf16.mxu0 %v3682
    %3819 = vmatpush1.bf16.msra.mxu0 %v3681
    %3820 = vmatprep.subr.bf16.mxu0 %v3684
    %3821 = vmatpush1.bf16.msra.mxu0 %v3683
    %3822 = vmatprep.subr.bf16.mxu0 %v3686
    %3823 = vmatpush1.bf16.msra.mxu0 %v3685
    %3824 = vmatprep.subr.bf16.mxu0 %v3688
    %3825 = vmatpush1.bf16.msra.mxu0 %v3687
    %3826 = vmatprep.subr.bf16.mxu0 %v3690
    %3827 = vmatpush1.bf16.msra.mxu0 %v3689
    %3828 = vmatprep.subr.bf16.mxu0 %v3692
    %3829 = vmatpush1.bf16.msra.mxu0 %v3691
    %3830 = vmatprep.subr.bf16.mxu0 %v3694
    %3831 = vmatpush1.bf16.msra.mxu0 %v3693
    %3832 = vmatprep.subr.bf16.mxu0 %v3696
    %3833 = vmatpush1.bf16.msra.mxu0 %v3695
    %3834 = vmatprep.subr.bf16.mxu0 %v3698
    %3835 = vmatpush1.bf16.msra.mxu0 %v3697
    %3836 = vmatprep.mubr.bf16.mxu0 %v3366
    %3837 = vmatmul.mubr.bf16.gmra.mrb[0].mxu0 %v3365
    %v3838 = vpop.f32.mrb[0].mxu0
    %v3839 = vadd.f32 %v3798, %v3838
    %v3840 = vpop.f32.mrb[0].mxu0
    %v3841 = vadd.f32 %v3800, %v3840
    %v3842 = vpop.f32.mrb[0].mxu0
    %v3843 = vpop.f32.mrb[0].mxu0
    %3844 = vdwg.mxu0
    %v3845 = vtanh.pop %v3839
    %v3846 = vtanh.pop %v3841
    %v3847 = vpack.c.bf16 %v3845, %v3845
    %v3848 = vpack.c.bf16 %v3846, %v3846
    %v3849 = vld [vmem:[#allocation2] sm:$0xff]
    %v3850 = vld [vmem:[#allocation2 + $0x8] sm:$0xff]
    %v3851 = vld [vmem:[#allocation2 + $0x10] sm:$0xff]
    %v3852 = vld [vmem:[#allocation2 + $0x18] sm:$0xff]
    %v3853 = vld [vmem:[#allocation2 + $0x20] sm:$0xff]
    %v3854 = vld [vmem:[#allocation2 + $0x28] sm:$0xff]
    %v3855 = vld [vmem:[#allocation2 + $0x30] sm:$0xff]
    %v3856 = vld [vmem:[#allocation2 + $0x38] sm:$0xff]
    %v3857 = vld [vmem:[#allocation2 + $0x40] sm:$0xff]
    %v3858 = vld [vmem:[#allocation2 + $0x48] sm:$0xff]
    %v3859 = vld [vmem:[#allocation2 + $0x50] sm:$0xff]
    %v3860 = vld [vmem:[#allocation2 + $0x58] sm:$0xff]
    %v3861 = vld [vmem:[#allocation2 + $0x60] sm:$0xff]
    %v3862 = vld [vmem:[#allocation2 + $0x68] sm:$0xff]
    %v3863 = vld [vmem:[#allocation2 + $0x70] sm:$0xff]
    %v3864 = vld [vmem:[#allocation2 + $0x78] sm:$0xff]
    %v3865 = vld [vmem:[#allocation2 + $0x80] sm:$0xff]
    %v3866 = vld [vmem:[#allocation2 + $0x88] sm:$0xff]
    %v3867 = vld [vmem:[#allocation2 + $0x90] sm:$0xff]
    %v3868 = vld [vmem:[#allocation2 + $0x98] sm:$0xff]
    %v3869 = vld [vmem:[#allocation2 + $0xa0] sm:$0xff]
    %v3870 = vld [vmem:[#allocation2 + $0xa8] sm:$0xff]
    %v3871 = vld [vmem:[#allocation2 + $0xb0] sm:$0xff]
    %v3872 = vld [vmem:[#allocation2 + $0xb8] sm:$0xff]
    %v3873 = vld [vmem:[#allocation2 + $0xc0] sm:$0xff]
    %v3874 = vld [vmem:[#allocation2 + $0xc8] sm:$0xff]
    %v3875 = vld [vmem:[#allocation2 + $0xd0] sm:$0xff]
    %v3876 = vld [vmem:[#allocation2 + $0xd8] sm:$0xff]
    %v3877 = vld [vmem:[#allocation2 + $0xe0] sm:$0xff]
    %v3878 = vld [vmem:[#allocation2 + $0xe8] sm:$0xff]
    %v3879 = vld [vmem:[#allocation2 + $0xf0] sm:$0xff]
    %v3880 = vld [vmem:[#allocation2 + $0xf8] sm:$0xff]
    %v3881 = vld [vmem:[%s4] sm:$0xf]
    %v3883 = vlaneseq
    %v3884 = vshrl.u32 %v3883, 7
    %v3885 = vsub.s32 0, %v3884
    %v3886 = vrot.slane %v3881, %v3885
    %v3887 = vlaneseq
    %v3888 = vshrl.u32 %v3887, 7
    %v3889 = vsub.s32 1, %v3888
    %v3890 = vrot.slane %v3881, %v3889
    %v3891 = vlaneseq
    %v3892 = vshrl.u32 %v3891, 7
    %v3893 = vsub.s32 2, %v3892
    %v3894 = vrot.slane %v3881, %v3893
    %v3895 = vlaneseq
    %v3896 = vshrl.u32 %v3895, 7
    %v3897 = vsub.s32 3, %v3896
    %v3898 = vrot.slane %v3881, %v3897
    %v3935 = vunpack.c.l.b16 %v3849
    %v3936 = vunpack.c.h.b16 %v3849
    %v3937 = vunpack.c.l.b16 %v3850
    %v3938 = vunpack.c.h.b16 %v3850
    %v3939 = vunpack.c.l.b16 %v3851
    %v3940 = vunpack.c.h.b16 %v3851
    %v3941 = vunpack.c.l.b16 %v3852
    %v3942 = vunpack.c.h.b16 %v3852
    %v3943 = vunpack.c.l.b16 %v3853
    %v3944 = vunpack.c.h.b16 %v3853
    %v3945 = vunpack.c.l.b16 %v3854
    %v3946 = vunpack.c.h.b16 %v3854
    %v3947 = vunpack.c.l.b16 %v3855
    %v3948 = vunpack.c.h.b16 %v3855
    %v3949 = vunpack.c.l.b16 %v3856
    %v3950 = vunpack.c.h.b16 %v3856
    %v3951 = vunpack.c.l.b16 %v3857
    %v3952 = vunpack.c.h.b16 %v3857
    %v3953 = vunpack.c.l.b16 %v3858
    %v3954 = vunpack.c.h.b16 %v3858
    %v3955 = vunpack.c.l.b16 %v3859
    %v3956 = vunpack.c.h.b16 %v3859
    %v3957 = vunpack.c.l.b16 %v3860
    %v3958 = vunpack.c.h.b16 %v3860
    %v3959 = vunpack.c.l.b16 %v3861
    %v3960 = vunpack.c.h.b16 %v3861
    %v3961 = vunpack.c.l.b16 %v3862
    %v3962 = vunpack.c.h.b16 %v3862
    %v3963 = vunpack.c.l.b16 %v3863
    %v3964 = vunpack.c.h.b16 %v3863
    %v3965 = vunpack.c.l.b16 %v3864
    %v3966 = vunpack.c.h.b16 %v3864
    %v3967 = vunpack.c.l.b16 %v3865
    %v3968 = vunpack.c.h.b16 %v3865
    %v3969 = vunpack.c.l.b16 %v3866
    %v3970 = vunpack.c.h.b16 %v3866
    %v3971 = vunpack.c.l.b16 %v3867
    %v3972 = vunpack.c.h.b16 %v3867
    %v3973 = vunpack.c.l.b16 %v3868
    %v3974 = vunpack.c.h.b16 %v3868
    %v3975 = vunpack.c.l.b16 %v3869
    %v3976 = vunpack.c.h.b16 %v3869
    %v3977 = vunpack.c.l.b16 %v3870
    %v3978 = vunpack.c.h.b16 %v3870
    %v3979 = vunpack.c.l.b16 %v3871
    %v3980 = vunpack.c.h.b16 %v3871
    %v3981 = vunpack.c.l.b16 %v3872
    %v3982 = vunpack.c.h.b16 %v3872
    %v3983 = vunpack.c.l.b16 %v3873
    %v3984 = vunpack.c.h.b16 %v3873
    %v3985 = vunpack.c.l.b16 %v3874
    %v3986 = vunpack.c.h.b16 %v3874
    %v3987 = vunpack.c.l.b16 %v3875
    %v3988 = vunpack.c.h.b16 %v3875
    %v3989 = vunpack.c.l.b16 %v3876
    %v3990 = vunpack.c.h.b16 %v3876
    %v3991 = vunpack.c.l.b16 %v3877
    %v3992 = vunpack.c.h.b16 %v3877
    %v3993 = vunpack.c.l.b16 %v3878
    %v3994 = vunpack.c.h.b16 %v3878
    %v3995 = vunpack.c.l.b16 %v3879
    %v3996 = vunpack.c.h.b16 %v3879
    %v3997 = vunpack.c.l.b16 %v3880
    %v3998 = vunpack.c.h.b16 %v3880
    %v3999 = vpack.c.b16 %v3939, %v3935
    %v4000 = vpack.c.b16 %v3940, %v3936
    %v4001 = vpack.c.b16 %v3941, %v3937
    %v4002 = vpack.c.b16 %v3942, %v3938
    %v4003 = vpack.c.b16 %v3947, %v3943
    %v4004 = vpack.c.b16 %v3948, %v3944
    %v4005 = vpack.c.b16 %v3949, %v3945
    %v4006 = vpack.c.b16 %v3950, %v3946
    %v4007 = vpack.c.b16 %v3955, %v3951
    %v4008 = vpack.c.b16 %v3956, %v3952
    %v4009 = vpack.c.b16 %v3957, %v3953
    %v4010 = vpack.c.b16 %v3958, %v3954
    %v4011 = vpack.c.b16 %v3963, %v3959
    %v4012 = vpack.c.b16 %v3964, %v3960
    %v4013 = vpack.c.b16 %v3965, %v3961
    %v4014 = vpack.c.b16 %v3966, %v3962
    %v4015 = vpack.c.b16 %v3971, %v3967
    %v4016 = vpack.c.b16 %v3972, %v3968
    %v4017 = vpack.c.b16 %v3973, %v3969
    %v4018 = vpack.c.b16 %v3974, %v3970
    %v4019 = vpack.c.b16 %v3979, %v3975
    %v4020 = vpack.c.b16 %v3980, %v3976
    %v4021 = vpack.c.b16 %v3981, %v3977
    %v4022 = vpack.c.b16 %v3982, %v3978
    %v4023 = vpack.c.b16 %v3987, %v3983
    %v4024 = vpack.c.b16 %v3988, %v3984
    %v4025 = vpack.c.b16 %v3989, %v3985
    %v4026 = vpack.c.b16 %v3990, %v3986
    %v4027 = vpack.c.b16 %v3995, %v3991
    %v4028 = vpack.c.b16 %v3996, %v3992
    %v4029 = vpack.c.b16 %v3997, %v3993
    %v4030 = vpack.c.b16 %v3998, %v3994
    %4063 = vmatprep.subr.bf16.mxu0 %v4000
    %4064 = vmatpush1.bf16.msra.mxu0 %v3999
    %4065 = vmatprep.subr.bf16.mxu0 %v4004
    %4066 = vmatpush1.bf16.msra.mxu0 %v4003
    %4067 = vmatprep.subr.bf16.mxu0 %v4008
    %4068 = vmatpush1.bf16.msra.mxu0 %v4007
    %4069 = vmatprep.subr.bf16.mxu0 %v4012
    %4070 = vmatpush1.bf16.msra.mxu0 %v4011
    %4071 = vmatprep.subr.bf16.mxu0 %v4016
    %4072 = vmatpush1.bf16.msra.mxu0 %v4015
    %4073 = vmatprep.subr.bf16.mxu0 %v4020
    %4074 = vmatpush1.bf16.msra.mxu0 %v4019
    %4075 = vmatprep.subr.bf16.mxu0 %v4024
    %4076 = vmatpush1.bf16.msra.mxu0 %v4023
    %4077 = vmatprep.subr.bf16.mxu0 %v4028
    %4078 = vmatpush1.bf16.msra.mxu0 %v4027
    %4079 = vmatprep.subr.bf16.mxu0 0
    %4080 = vmatpush1.bf16.msra.mxu0 0
    %4081 = vmatprep.subr.bf16.mxu0 0
    %4082 = vmatpush1.bf16.msra.mxu0 0
    %4083 = vmatprep.subr.bf16.mxu0 0
    %4084 = vmatpush1.bf16.msra.mxu0 0
    %4085 = vmatprep.subr.bf16.mxu0 0
    %4086 = vmatpush1.bf16.msra.mxu0 0
    %4087 = vmatprep.subr.bf16.mxu0 0
    %4088 = vmatpush1.bf16.msra.mxu0 0
    %4089 = vmatprep.subr.bf16.mxu0 0
    %4090 = vmatpush1.bf16.msra.mxu0 0
    %4091 = vmatprep.subr.bf16.mxu0 0
    %4092 = vmatpush1.bf16.msra.mxu0 0
    %4093 = vmatprep.subr.bf16.mxu0 0
    %4094 = vmatpush1.bf16.msra.mxu0 0
    %4095 = vmatprep.mubr.bf16.mxu0 0
    %4096 = vmatmul.mubr.bf16.gmra.mrb[0].mxu0 %v3847
    %v4097 = vpop.f32.mrb[0].mxu0
    %v4098 = vadd.f32 %v3886, %v4097
    %v4099 = vpop.f32.mrb[0].mxu0
    %v4100 = vadd.f32 %v3890, %v4099
    %v4101 = vpop.f32.mrb[0].mxu0
    %v4102 = vpop.f32.mrb[0].mxu0
    %4103 = vdwg.mxu0
    %4104 = vmatprep.subr.bf16.mxu0 %v4002
    %4105 = vmatpush1.bf16.msra.mxu0 %v4001
    %4106 = vmatprep.subr.bf16.mxu0 %v4006
    %4107 = vmatpush1.bf16.msra.mxu0 %v4005
    %4108 = vmatprep.subr.bf16.mxu0 %v4010
    %4109 = vmatpush1.bf16.msra.mxu0 %v4009
    %4110 = vmatprep.subr.bf16.mxu0 %v4014
    %4111 = vmatpush1.bf16.msra.mxu0 %v4013
    %4112 = vmatprep.subr.bf16.mxu0 %v4018
    %4113 = vmatpush1.bf16.msra.mxu0 %v4017
    %4114 = vmatprep.subr.bf16.mxu0 %v4022
    %4115 = vmatpush1.bf16.msra.mxu0 %v4021
    %4116 = vmatprep.subr.bf16.mxu0 %v4026
    %4117 = vmatpush1.bf16.msra.mxu0 %v4025
    %4118 = vmatprep.subr.bf16.mxu0 %v4030
    %4119 = vmatpush1.bf16.msra.mxu0 %v4029
    %4120 = vmatprep.subr.bf16.mxu0 0
    %4121 = vmatpush1.bf16.msra.mxu0 0
    %4122 = vmatprep.subr.bf16.mxu0 0
    %4123 = vmatpush1.bf16.msra.mxu0 0
    %4124 = vmatprep.subr.bf16.mxu0 0
    %4125 = vmatpush1.bf16.msra.mxu0 0
    %4126 = vmatprep.subr.bf16.mxu0 0
    %4127 = vmatpush1.bf16.msra.mxu0 0
    %4128 = vmatprep.subr.bf16.mxu0 0
    %4129 = vmatpush1.bf16.msra.mxu0 0
    %4130 = vmatprep.subr.bf16.mxu0 0
    %4131 = vmatpush1.bf16.msra.mxu0 0
    %4132 = vmatprep.subr.bf16.mxu0 0
    %4133 = vmatpush1.bf16.msra.mxu0 0
    %4134 = vmatprep.subr.bf16.mxu0 0
    %4135 = vmatpush1.bf16.msra.mxu0 0
    %4136 = vmatprep.mubr.bf16.mxu0 0
    %4137 = vmatmul.mubr.bf16.gmra.mrb[0].mxu0 %v3847
    %v4138 = vpop.f32.mrb[0].mxu0
    %v4139 = vadd.f32 %v3894, %v4138
    %v4140 = vpop.f32.mrb[0].mxu0
    %v4141 = vadd.f32 %v3898, %v4140
    %v4142 = vpop.f32.mrb[0].mxu0
    %v4143 = vpop.f32.mrb[0].mxu0
    %4144 = vdwg.mxu0
    %v4145 = vld [vmem:[#allocation4] sm:$0xff]
    %v4146 = vld [vmem:[#allocation4 + $0x8] sm:$0xff]
    %v4147 = vld [vmem:[#allocation4 + $0x10] sm:$0xff]
    %v4148 = vld [vmem:[#allocation4 + $0x18] sm:$0xff]
    %v4149 = vld [vmem:[#allocation4 + $0x20] sm:$0xff]
    %v4150 = vld [vmem:[#allocation4 + $0x28] sm:$0xff]
    %v4151 = vld [vmem:[#allocation4 + $0x30] sm:$0xff]
    %v4152 = vld [vmem:[#allocation4 + $0x38] sm:$0xff]
    %v4153 = vld [vmem:[#allocation4 + $0x40] sm:$0xff]
    %v4154 = vld [vmem:[#allocation4 + $0x48] sm:$0xff]
    %v4155 = vld [vmem:[#allocation4 + $0x50] sm:$0xff]
    %v4156 = vld [vmem:[#allocation4 + $0x58] sm:$0xff]
    %v4157 = vld [vmem:[#allocation4 + $0x60] sm:$0xff]
    %v4158 = vld [vmem:[#allocation4 + $0x68] sm:$0xff]
    %v4159 = vld [vmem:[#allocation4 + $0x70] sm:$0xff]
    %v4160 = vld [vmem:[#allocation4 + $0x78] sm:$0xff]
    %v4161 = vld [vmem:[#allocation4 + $0x80] sm:$0xff]
    %v4162 = vld [vmem:[#allocation4 + $0x88] sm:$0xff]
    %v4163 = vld [vmem:[#allocation4 + $0x90] sm:$0xff]
    %v4164 = vld [vmem:[#allocation4 + $0x98] sm:$0xff]
    %v4165 = vld [vmem:[#allocation4 + $0xa0] sm:$0xff]
    %v4166 = vld [vmem:[#allocation4 + $0xa8] sm:$0xff]
    %v4167 = vld [vmem:[#allocation4 + $0xb0] sm:$0xff]
    %v4168 = vld [vmem:[#allocation4 + $0xb8] sm:$0xff]
    %v4169 = vld [vmem:[#allocation4 + $0xc0] sm:$0xff]
    %v4170 = vld [vmem:[#allocation4 + $0xc8] sm:$0xff]
    %v4171 = vld [vmem:[#allocation4 + $0xd0] sm:$0xff]
    %v4172 = vld [vmem:[#allocation4 + $0xd8] sm:$0xff]
    %v4173 = vld [vmem:[#allocation4 + $0xe0] sm:$0xff]
    %v4174 = vld [vmem:[#allocation4 + $0xe8] sm:$0xff]
    %v4175 = vld [vmem:[#allocation4 + $0xf0] sm:$0xff]
    %v4176 = vld [vmem:[#allocation4 + $0xf8] sm:$0xff]
    %v4177 = vld [vmem:[%s6] sm:$0xf]
    %v4179 = vlaneseq
    %v4180 = vshrl.u32 %v4179, 7
    %v4181 = vsub.s32 0, %v4180
    %v4182 = vrot.slane %v4177, %v4181
    %v4183 = vlaneseq
    %v4184 = vshrl.u32 %v4183, 7
    %v4185 = vsub.s32 1, %v4184
    %v4186 = vrot.slane %v4177, %v4185
    %v4187 = vlaneseq
    %v4188 = vshrl.u32 %v4187, 7
    %v4189 = vsub.s32 2, %v4188
    %v4190 = vrot.slane %v4177, %v4189
    %v4191 = vlaneseq
    %v4192 = vshrl.u32 %v4191, 7
    %v4193 = vsub.s32 3, %v4192
    %v4194 = vrot.slane %v4177, %v4193
    %v4231 = vunpack.c.l.b16 %v4145
    %v4232 = vunpack.c.h.b16 %v4145
    %v4233 = vunpack.c.l.b16 %v4146
    %v4234 = vunpack.c.h.b16 %v4146
    %v4235 = vunpack.c.l.b16 %v4147
    %v4236 = vunpack.c.h.b16 %v4147
    %v4237 = vunpack.c.l.b16 %v4148
    %v4238 = vunpack.c.h.b16 %v4148
    %v4239 = vunpack.c.l.b16 %v4149
    %v4240 = vunpack.c.h.b16 %v4149
    %v4241 = vunpack.c.l.b16 %v4150
    %v4242 = vunpack.c.h.b16 %v4150
    %v4243 = vunpack.c.l.b16 %v4151
    %v4244 = vunpack.c.h.b16 %v4151
    %v4245 = vunpack.c.l.b16 %v4152
    %v4246 = vunpack.c.h.b16 %v4152
    %v4247 = vunpack.c.l.b16 %v4153
    %v4248 = vunpack.c.h.b16 %v4153
    %v4249 = vunpack.c.l.b16 %v4154
    %v4250 = vunpack.c.h.b16 %v4154
    %v4251 = vunpack.c.l.b16 %v4155
    %v4252 = vunpack.c.h.b16 %v4155
    %v4253 = vunpack.c.l.b16 %v4156
    %v4254 = vunpack.c.h.b16 %v4156
    %v4255 = vunpack.c.l.b16 %v4157
    %v4256 = vunpack.c.h.b16 %v4157
    %v4257 = vunpack.c.l.b16 %v4158
    %v4258 = vunpack.c.h.b16 %v4158
    %v4259 = vunpack.c.l.b16 %v4159
    %v4260 = vunpack.c.h.b16 %v4159
    %v4261 = vunpack.c.l.b16 %v4160
    %v4262 = vunpack.c.h.b16 %v4160
    %v4263 = vunpack.c.l.b16 %v4161
    %v4264 = vunpack.c.h.b16 %v4161
    %v4265 = vunpack.c.l.b16 %v4162
    %v4266 = vunpack.c.h.b16 %v4162
    %v4267 = vunpack.c.l.b16 %v4163
    %v4268 = vunpack.c.h.b16 %v4163
    %v4269 = vunpack.c.l.b16 %v4164
    %v4270 = vunpack.c.h.b16 %v4164
    %v4271 = vunpack.c.l.b16 %v4165
    %v4272 = vunpack.c.h.b16 %v4165
    %v4273 = vunpack.c.l.b16 %v4166
    %v4274 = vunpack.c.h.b16 %v4166
    %v4275 = vunpack.c.l.b16 %v4167
    %v4276 = vunpack.c.h.b16 %v4167
    %v4277 = vunpack.c.l.b16 %v4168
    %v4278 = vunpack.c.h.b16 %v4168
    %v4279 = vunpack.c.l.b16 %v4169
    %v4280 = vunpack.c.h.b16 %v4169
    %v4281 = vunpack.c.l.b16 %v4170
    %v4282 = vunpack.c.h.b16 %v4170
    %v4283 = vunpack.c.l.b16 %v4171
    %v4284 = vunpack.c.h.b16 %v4171
    %v4285 = vunpack.c.l.b16 %v4172
    %v4286 = vunpack.c.h.b16 %v4172
    %v4287 = vunpack.c.l.b16 %v4173
    %v4288 = vunpack.c.h.b16 %v4173
    %v4289 = vunpack.c.l.b16 %v4174
    %v4290 = vunpack.c.h.b16 %v4174
    %v4291 = vunpack.c.l.b16 %v4175
    %v4292 = vunpack.c.h.b16 %v4175
    %v4293 = vunpack.c.l.b16 %v4176
    %v4294 = vunpack.c.h.b16 %v4176
    %v4295 = vpack.c.b16 %v4235, %v4231
    %v4296 = vpack.c.b16 %v4236, %v4232
    %v4297 = vpack.c.b16 %v4237, %v4233
    %v4298 = vpack.c.b16 %v4238, %v4234
    %v4299 = vpack.c.b16 %v4243, %v4239
    %v4300 = vpack.c.b16 %v4244, %v4240
    %v4301 = vpack.c.b16 %v4245, %v4241
    %v4302 = vpack.c.b16 %v4246, %v4242
    %v4303 = vpack.c.b16 %v4251, %v4247
    %v4304 = vpack.c.b16 %v4252, %v4248
    %v4305 = vpack.c.b16 %v4253, %v4249
    %v4306 = vpack.c.b16 %v4254, %v4250
    %v4307 = vpack.c.b16 %v4259, %v4255
    %v4308 = vpack.c.b16 %v4260, %v4256
    %v4309 = vpack.c.b16 %v4261, %v4257
    %v4310 = vpack.c.b16 %v4262, %v4258
    %v4311 = vpack.c.b16 %v4267, %v4263
    %v4312 = vpack.c.b16 %v4268, %v4264
    %v4313 = vpack.c.b16 %v4269, %v4265
    %v4314 = vpack.c.b16 %v4270, %v4266
    %v4315 = vpack.c.b16 %v4275, %v4271
    %v4316 = vpack.c.b16 %v4276, %v4272
    %v4317 = vpack.c.b16 %v4277, %v4273
    %v4318 = vpack.c.b16 %v4278, %v4274
    %v4319 = vpack.c.b16 %v4283, %v4279
    %v4320 = vpack.c.b16 %v4284, %v4280
    %v4321 = vpack.c.b16 %v4285, %v4281
    %v4322 = vpack.c.b16 %v4286, %v4282
    %v4323 = vpack.c.b16 %v4291, %v4287
    %v4324 = vpack.c.b16 %v4292, %v4288
    %v4325 = vpack.c.b16 %v4293, %v4289
    %v4326 = vpack.c.b16 %v4294, %v4290
    %4359 = vmatprep.subr.bf16.mxu0 %v4296
    %4360 = vmatpush1.bf16.msra.mxu0 %v4295
    %4361 = vmatprep.subr.bf16.mxu0 %v4300
    %4362 = vmatpush1.bf16.msra.mxu0 %v4299
    %4363 = vmatprep.subr.bf16.mxu0 %v4304
    %4364 = vmatpush1.bf16.msra.mxu0 %v4303
    %4365 = vmatprep.subr.bf16.mxu0 %v4308
    %4366 = vmatpush1.bf16.msra.mxu0 %v4307
    %4367 = vmatprep.subr.bf16.mxu0 %v4312
    %4368 = vmatpush1.bf16.msra.mxu0 %v4311
    %4369 = vmatprep.subr.bf16.mxu0 %v4316
    %4370 = vmatpush1.bf16.msra.mxu0 %v4315
    %4371 = vmatprep.subr.bf16.mxu0 %v4320
    %4372 = vmatpush1.bf16.msra.mxu0 %v4319
    %4373 = vmatprep.subr.bf16.mxu0 %v4324
    %4374 = vmatpush1.bf16.msra.mxu0 %v4323
    %4375 = vmatprep.subr.bf16.mxu0 0
    %4376 = vmatpush1.bf16.msra.mxu0 0
    %4377 = vmatprep.subr.bf16.mxu0 0
    %4378 = vmatpush1.bf16.msra.mxu0 0
    %4379 = vmatprep.subr.bf16.mxu0 0
    %4380 = vmatpush1.bf16.msra.mxu0 0
    %4381 = vmatprep.subr.bf16.mxu0 0
    %4382 = vmatpush1.bf16.msra.mxu0 0
    %4383 = vmatprep.subr.bf16.mxu0 0
    %4384 = vmatpush1.bf16.msra.mxu0 0
    %4385 = vmatprep.subr.bf16.mxu0 0
    %4386 = vmatpush1.bf16.msra.mxu0 0
    %4387 = vmatprep.subr.bf16.mxu0 0
    %4388 = vmatpush1.bf16.msra.mxu0 0
    %4389 = vmatprep.subr.bf16.mxu0 0
    %4390 = vmatpush1.bf16.msra.mxu0 0
    %4391 = vmatprep.mubr.bf16.mxu0 0
    %4392 = vmatmul.mubr.bf16.gmra.mrb[0].mxu0 %v3848
    %v4393 = vpop.f32.mrb[0].mxu0
    %v4394 = vadd.f32 %v4182, %v4393
    %v4395 = vpop.f32.mrb[0].mxu0
    %v4396 = vadd.f32 %v4186, %v4395
    %v4397 = vpop.f32.mrb[0].mxu0
    %v4398 = vpop.f32.mrb[0].mxu0
    %4399 = vdwg.mxu0
    %4400 = vmatprep.subr.bf16.mxu0 %v4298
    %4401 = vmatpush1.bf16.msra.mxu0 %v4297
    %4402 = vmatprep.subr.bf16.mxu0 %v4302
    %4403 = vmatpush1.bf16.msra.mxu0 %v4301
    %4404 = vmatprep.subr.bf16.mxu0 %v4306
    %4405 = vmatpush1.bf16.msra.mxu0 %v4305
    %4406 = vmatprep.subr.bf16.mxu0 %v4310
    %4407 = vmatpush1.bf16.msra.mxu0 %v4309
    %4408 = vmatprep.subr.bf16.mxu0 %v4314
    %4409 = vmatpush1.bf16.msra.mxu0 %v4313
    %4410 = vmatprep.subr.bf16.mxu0 %v4318
    %4411 = vmatpush1.bf16.msra.mxu0 %v4317
    %4412 = vmatprep.subr.bf16.mxu0 %v4322
    %4413 = vmatpush1.bf16.msra.mxu0 %v4321
    %4414 = vmatprep.subr.bf16.mxu0 %v4326
    %4415 = vmatpush1.bf16.msra.mxu0 %v4325
    %4416 = vmatprep.subr.bf16.mxu0 0
    %4417 = vmatpush1.bf16.msra.mxu0 0
    %4418 = vmatprep.subr.bf16.mxu0 0
    %4419 = vmatpush1.bf16.msra.mxu0 0
    %4420 = vmatprep.subr.bf16.mxu0 0
    %4421 = vmatpush1.bf16.msra.mxu0 0
    %4422 = vmatprep.subr.bf16.mxu0 0
    %4423 = vmatpush1.bf16.msra.mxu0 0
    %4424 = vmatprep.subr.bf16.mxu0 0
    %4425 = vmatpush1.bf16.msra.mxu0 0
    %4426 = vmatprep.subr.bf16.mxu0 0
    %4427 = vmatpush1.bf16.msra.mxu0 0
    %4428 = vmatprep.subr.bf16.mxu0 0
    %4429 = vmatpush1.bf16.msra.mxu0 0
    %4430 = vmatprep.subr.bf16.mxu0 0
    %4431 = vmatpush1.bf16.msra.mxu0 0
    %4432 = vmatprep.mubr.bf16.mxu0 0
    %4433 = vmatmul.mubr.bf16.gmra.mrb[0].mxu0 %v3848
    %v4434 = vpop.f32.mrb[0].mxu0
    %v4435 = vadd.f32 %v4190, %v4434
    %v4436 = vpop.f32.mrb[0].mxu0
    %v4437 = vadd.f32 %v4194, %v4436
    %v4438 = vpop.f32.mrb[0].mxu0
    %v4439 = vpop.f32.mrb[0].mxu0
    %4440 = vdwg.mxu0
    %v4441 = vsub.f32 %v2259, %v4394
    %v4442 = vsub.f32 %v2260, %v4396
    %v4443 = vsub.f32 %v2261, %v4435
    %v4444 = vsub.f32 %v2262, %v4437
    %v4445 = vmul.f32 %v4098, 1.442695
    %v4446 = vpow.pop %v4445
    %v4447 = vmul.f32 %v4100, 1.442695
    %v4448 = vpow.pop %v4447
    %v4449 = vmul.f32 %v4139, 1.442695
    %v4450 = vpow.pop %v4449
    %v4451 = vmul.f32 %v4141, 1.442695
    %v4452 = vpow.pop %v4451
    %v4453 = vmul.f32 %v4441, %v4446
    %v4454 = vmul.f32 %v4442, %v4448
    %v4455 = vmul.f32 %v4443, %v4450
    %v4456 = vmul.f32 %v4444, %v4452
    %4457 = vst [vmem:[%s7] sm:$0xff] %v3359
    %4458 = vst [vmem:[%s7 + $0x8] sm:$0xff] %v3360
    %4459 = vst [vmem:[%s7 + $0x10] sm:$0xff] %v3361
    %4460 = vst [vmem:[%s7 + $0x18] sm:$0xff] %v3362
    %4461 = vst [vmem:[%s7 + $0x20] sm:$0xff] %v4453
    %4462 = vst [vmem:[%s7 + $0x28] sm:$0xff] %v4454
    %4463 = vst [vmem:[%s7 + $0x30] sm:$0xff] %v4455
    %4464 = vst [vmem:[%s7 + $0x38] sm:$0xff] %v4456
    // Predicated region
    $region38: #{_run_compact.1} parent=1 // pred_check
      _
    $region39: #{_run_compact.1} parent=1 // pred_check_branch
      %4466 = sbr.rel (0) target = $region41
    $region40: #{_run_compact.1} parent=1 // pred_region
      _
    $region41: #{_run_compact.1} parent=1 // pred_fallthru
      _
    // Predicated region
    $region42: #{_run_compact.1} parent=1 // pred_check
      _
    $region43: #{_run_compact.1} parent=1 // pred_check_branch
      %4468 = sbr.rel (0) target = $region45
    $region44: #{_run_compact.1} parent=1 // pred_region
      _
    $region45: #{_run_compact.1} parent=1 // pred_fallthru
      _
    %4469 = vsyncpa [#allocation3], 1
    %4470 = vsyncpa [#allocation5], 1

// kernel: _run_compact.1
$region0: #{_run_compact.1}
  #allocation0 [shape = 'u32[]', space=smem, size = 0x4, offset = 0x4, fixed_abs, tag = 'smem constant byte address 0x4 - core index']
  #allocation1 [shape = 'u32[144,128]{1,0:T(1,128)}', space=vmem, size = 0x12000, scoped, tag = 'internal scratch']
  %s0 = inlined_call_operand.vmem [shape: f32[8,1024], index: 0, kind: input, shape index: {}]
  %s1 = inlined_call_operand.vmem [shape: bf16[4,512,256], index: 1, kind: input, shape index: {}]
  %s2 = inlined_call_operand.vmem [shape: f32[4,1,256], index: 2, kind: input, shape index: {}]
  %s3 = inlined_call_operand.hbm [shape: bf16[4,128,512], index: 3, kind: input, shape index: {}]
  %s4 = inlined_call_operand.vmem [shape: f32[4,1,512], index: 4, kind: input, shape index: {}]
  %s5 = inlined_call_operand.hbm [shape: bf16[4,128,512], index: 5, kind: input, shape index: {}]
  %s6 = inlined_call_operand.vmem [shape: f32[4,1,512], index: 6, kind: input, shape index: {}]
  %s7 = inlined_call_operand.vmem [shape: f32[8,1024], index: 7, kind: output, shape index: {}]
  %s8 = sld [smem:[#allocation0]]
  $region46: #{_run_compact.1} parent=0
    _
  %s10 = ssub.s32 1, %s8
  %s11 = scalar_select 0, %s10, %s8
  $region1: #{_run_compact.1} parent=0
    #allocation2 [shape = 'u8[524288]{0}', space=vmem, size = 0x80000, scoped, tag = 'input window, operand 3, single buffered']
    #allocation3 [shape = 's32[1]{0}', space=sflag, size = 0x4, scoped, tag = 'scoped memory for _run_compact.1']
    #allocation4 [shape = 'u8[524288]{0}', space=vmem, size = 0x80000, scoped, tag = 'input window, operand 5, single buffered']
    #allocation5 [shape = 's32[1]{0}', space=sflag, size = 0x4, scoped, tag = 'scoped memory for _run_compact.1']
    %12 = vsyncpa [#allocation3], 0
    %13 = vsyncpa [#allocation5], 0
    // Predicated region
    $region2: #{_run_compact.1} parent=1 // pred_check
      _
    $region3: #{_run_compact.1} parent=1 // pred_check_branch
      %15 = sbr.rel (0) target = $region5
    $region4: #{_run_compact.1} parent=1 // pred_region
      _
    $region5: #{_run_compact.1} parent=1 // pred_fallthru
      _
    // Predicated region
    $region6: #{_run_compact.1} parent=1 // pred_check
      _
    $region7: #{_run_compact.1} parent=1 // pred_check_branch
      %17 = sbr.rel (0) target = $region9
    $region8: #{_run_compact.1} parent=1 // pred_region
      _
    $region9: #{_run_compact.1} parent=1 // pred_fallthru
      _
    // Predicated region
    $region10: #{_run_compact.1} parent=1 // pred_check
      _
    $region11: #{_run_compact.1} parent=1 // pred_check_branch
      %19 = sbr.rel (0) target = $region13
    $region12: #{_run_compact.1} parent=1 // pred_region
      _
    $region13: #{_run_compact.1} parent=1 // pred_fallthru
      _
    // Predicated region
    $region14: #{_run_compact.1} parent=1 // pred_check
      _
    $region15: #{_run_compact.1} parent=1 // pred_check_branch
      %21 = sbr.rel (0) target = $region17
    $region16: #{_run_compact.1} parent=1 // pred_region
      %s23 = ssub.s32 16384, 16384
      %24 = vsyncadd [#allocation3], %s23
      %s25 = sshll.u32 [#allocation2], 4
      %s26 = int_to_ptr.vmem [resolvable:$true] %s25
      %31 = dma.hbm_to_vmem [thread:$0]  %s3, 16384, %s26, [#allocation3], 256, 256, 16
    $region17: #{_run_compact.1} parent=1 // pred_fallthru
      _
    // Predicated region
    $region18: #{_run_compact.1} parent=1 // pred_check
      _
    $region19: #{_run_compact.1} parent=1 // pred_check_branch
      %33 = sbr.rel (0) target = $region21
    $region20: #{_run_compact.1} parent=1 // pred_region
      _
    $region21: #{_run_compact.1} parent=1 // pred_fallthru
      _
    // Predicated region
    $region22: #{_run_compact.1} parent=1 // pred_check
      _
    $region23: #{_run_compact.1} parent=1 // pred_check_branch
      %35 = sbr.rel (0) target = $region25
    $region24: #{_run_compact.1} parent=1 // pred_region
      %s37 = ssub.s32 16384, 16384
      %38 = vsyncadd [#allocation5], %s37
      %s39 = sshll.u32 [#allocation4], 4
      %s40 = int_to_ptr.vmem [resolvable:$true] %s39
      %45 = dma.hbm_to_vmem [thread:$0]  %s5, 16384, %s40, [#allocation5], 256, 256, 16
    $region25: #{_run_compact.1} parent=1 // pred_fallthru
      _
    // Predicated region
    $region26: #{_run_compact.1} parent=1 // pred_check
      _
    $region27: #{_run_compact.1} parent=1 // pred_check_branch
      %47 = sbr.rel (0) target = $region29
    $region28: #{_run_compact.1} parent=1 // pred_region
      _
    $region29: #{_run_compact.1} parent=1 // pred_fallthru
      _
    // Predicated region
    $region30: #{_run_compact.1} parent=1 // pred_check
      _
    $region31: #{_run_compact.1} parent=1 // pred_check_branch
      %49 = sbr.rel (0) target = $region33
    $region32: #{_run_compact.1} parent=1 // pred_region
      %50 = dma.done [#allocation3], 16384
    $region33: #{_run_compact.1} parent=1 // pred_fallthru
      _
    // Predicated region
    $region34: #{_run_compact.1} parent=1 // pred_check
      _
    $region35: #{_run_compact.1} parent=1 // pred_check_branch
      %52 = sbr.rel (0) target = $region37
    $region36: #{_run_compact.1} parent=1 // pred_region
      %53 = dma.done [#allocation5], 16384
    $region37: #{_run_compact.1} parent=1 // pred_fallthru
      _
    %v55 = vld [vmem:[%s0] sm:$0xff]
    %v56 = vld [vmem:[%s0 + $0x8] sm:$0xff]
    %v57 = vld [vmem:[%s0 + $0x10] sm:$0xff]
    %v58 = vld [vmem:[%s0 + $0x18] sm:$0xff]
    %v59 = vld [vmem:[%s0 + $0x20] sm:$0xff]
    %v60 = vld [vmem:[%s0 + $0x28] sm:$0xff]
    %v61 = vld [vmem:[%s0 + $0x30] sm:$0xff]
    %v62 = vld [vmem:[%s0 + $0x38] sm:$0xff]
    %v63 = vpack.c.bf16 %v59, %v59
    %v64 = vpack.c.bf16 %v60, %v60
    %v65 = vpack.c.bf16 %v61, %v61
    %v66 = vpack.c.bf16 %v62, %v62
    %s67 = scalar_lea.vmem %s1, 1536
    %v68 = vld [vmem:[%s67] sm:$0xff]
    %v69 = vld [vmem:[%s67 + $0x8] sm:$0xff]
    %v70 = vld [vmem:[%s67 + $0x10] sm:$0xff]
    %v71 = vld [vmem:[%s67 + $0x18] sm:$0xff]
    %v72 = vld [vmem:[%s67 + $0x20] sm:$0xff]
    %v73 = vld [vmem:[%s67 + $0x28] sm:$0xff]
    %v74 = vld [vmem:[%s67 + $0x30] sm:$0xff]
    %v75 = vld [vmem:[%s67 + $0x38] sm:$0xff]
    %v76 = vld [vmem:[%s67 + $0x40] sm:$0xff]
    %v77 = vld [vmem:[%s67 + $0x48] sm:$0xff]
    %v78 = vld [vmem:[%s67 + $0x50] sm:$0xff]
    %v79 = vld [vmem:[%s67 + $0x58] sm:$0xff]
    %v80 = vld [vmem:[%s67 + $0x60] sm:$0xff]
    %v81 = vld [vmem:[%s67 + $0x68] sm:$0xff]
    %v82 = vld [vmem:[%s67 + $0x70] sm:$0xff]
    %v83 = vld [vmem:[%s67 + $0x78] sm:$0xff]
    %v84 = vld [vmem:[%s67 + $0x80] sm:$0xff]
    %v85 = vld [vmem:[%s67 + $0x88] sm:$0xff]
    %v86 = vld [vmem:[%s67 + $0x90] sm:$0xff]
    %v87 = vld [vmem:[%s67 + $0x98] sm:$0xff]
    %v88 = vld [vmem:[%s67 + $0xa0] sm:$0xff]
    %v89 = vld [vmem:[%s67 + $0xa8] sm:$0xff]
    %v90 = vld [vmem:[%s67 + $0xb0] sm:$0xff]
    %v91 = vld [vmem:[%s67 + $0xb8] sm:$0xff]
    %v92 = vld [vmem:[%s67 + $0xc0] sm:$0xff]
    %v93 = vld [vmem:[%s67 + $0xc8] sm:$0xff]
    %v94 = vld [vmem:[%s67 + $0xd0] sm:$0xff]
    %v95 = vld [vmem:[%s67 + $0xd8] sm:$0xff]
    %v96 = vld [vmem:[%s67 + $0xe0] sm:$0xff]
    %v97 = vld [vmem:[%s67 + $0xe8] sm:$0xff]
    %v98 = vld [vmem:[%s67 + $0xf0] sm:$0xff]
    %v99 = vld [vmem:[%s67 + $0xf8] sm:$0xff]
    %v100 = vld [vmem:[%s67 + $0x100] sm:$0xff]
    %v101 = vld [vmem:[%s67 + $0x108] sm:$0xff]
    %v102 = vld [vmem:[%s67 + $0x110] sm:$0xff]
    %v103 = vld [vmem:[%s67 + $0x118] sm:$0xff]
    %v104 = vld [vmem:[%s67 + $0x120] sm:$0xff]
    %v105 = vld [vmem:[%s67 + $0x128] sm:$0xff]
    %v106 = vld [vmem:[%s67 + $0x130] sm:$0xff]
    %v107 = vld [vmem:[%s67 + $0x138] sm:$0xff]
    %v108 = vld [vmem:[%s67 + $0x140] sm:$0xff]
    %v109 = vld [vmem:[%s67 + $0x148] sm:$0xff]
    %v110 = vld [vmem:[%s67 + $0x150] sm:$0xff]
    %v111 = vld [vmem:[%s67 + $0x158] sm:$0xff]
    %v112 = vld [vmem:[%s67 + $0x160] sm:$0xff]
    %v113 = vld [vmem:[%s67 + $0x168] sm:$0xff]
    %v114 = vld [vmem:[%s67 + $0x170] sm:$0xff]
    %v115 = vld [vmem:[%s67 + $0x178] sm:$0xff]
    %v116 = vld [vmem:[%s67 + $0x180] sm:$0xff]
    %v117 = vld [vmem:[%s67 + $0x188] sm:$0xff]
    %v118 = vld [vmem:[%s67 + $0x190] sm:$0xff]
    %v119 = vld [vmem:[%s67 + $0x198] sm:$0xff]
    %v120 = vld [vmem:[%s67 + $0x1a0] sm:$0xff]
    %v121 = vld [vmem:[%s67 + $0x1a8] sm:$0xff]
    %v122 = vld [vmem:[%s67 + $0x1b0] sm:$0xff]
    %v123 = vld [vmem:[%s67 + $0x1b8] sm:$0xff]
    %v124 = vld [vmem:[%s67 + $0x1c0] sm:$0xff]
    %v125 = vld [vmem:[%s67 + $0x1c8] sm:$0xff]
    %v126 = vld [vmem:[%s67 + $0x1d0] sm:$0xff]
    %v127 = vld [vmem:[%s67 + $0x1d8] sm:$0xff]
    %v128 = vld [vmem:[%s67 + $0x1e0] sm:$0xff]
    %v129 = vld [vmem:[%s67 + $0x1e8] sm:$0xff]
    %v130 = vld [vmem:[%s67 + $0x1f0] sm:$0xff]
    %v131 = vld [vmem:[%s67 + $0x1f8] sm:$0xff]
    %s132 = scalar_lea.vmem %s2, 6
    %v133 = vld [vmem:[%s132] sm:$0x3]
    %v135 = vlaneseq
    %v136 = vshrl.u32 %v135, 7
    %v137 = vsub.s32 0, %v136
    %v138 = vrot.slane %v133, %v137
    %v139 = vlaneseq
    %v140 = vshrl.u32 %v139, 7
    %v141 = vsub.s32 1, %v140
    %v142 = vrot.slane %v133, %v141
    %v209 = vunpack.c.l.b16 %v68
    %v210 = vunpack.c.h.b16 %v68
    %v211 = vunpack.c.l.b16 %v69
    %v212 = vunpack.c.h.b16 %v69
    %v213 = vunpack.c.l.b16 %v70
    %v214 = vunpack.c.h.b16 %v70
    %v215 = vunpack.c.l.b16 %v71
    %v216 = vunpack.c.h.b16 %v71
    %v217 = vunpack.c.l.b16 %v72
    %v218 = vunpack.c.h.b16 %v72
    %v219 = vunpack.c.l.b16 %v73
    %v220 = vunpack.c.h.b16 %v73
    %v221 = vunpack.c.l.b16 %v74
    %v222 = vunpack.c.h.b16 %v74
    %v223 = vunpack.c.l.b16 %v75
    %v224 = vunpack.c.h.b16 %v75
    %v225 = vunpack.c.l.b16 %v76
    %v226 = vunpack.c.h.b16 %v76
    %v227 = vunpack.c.l.b16 %v77
    %v228 = vunpack.c.h.b16 %v77
    %v229 = vunpack.c.l.b16 %v78
    %v230 = vunpack.c.h.b16 %v78
    %v231 = vunpack.c.l.b16 %v79
    %v232 = vunpack.c.h.b16 %v79
    %v233 = vunpack.c.l.b16 %v80
    %v234 = vunpack.c.h.b16 %v80
    %v235 = vunpack.c.l.b16 %v81
    %v236 = vunpack.c.h.b16 %v81
    %v237 = vunpack.c.l.b16 %v82
    %v238 = vunpack.c.h.b16 %v82
    %v239 = vunpack.c.l.b16 %v83
    %v240 = vunpack.c.h.b16 %v83
    %v241 = vunpack.c.l.b16 %v84
    %v242 = vunpack.c.h.b16 %v84
    %v243 = vunpack.c.l.b16 %v85
    %v244 = vunpack.c.h.b16 %v85
    %v245 = vunpack.c.l.b16 %v86
    %v246 = vunpack.c.h.b16 %v86
    %v247 = vunpack.c.l.b16 %v87
    %v248 = vunpack.c.h.b16 %v87
    %v249 = vunpack.c.l.b16 %v88
    %v250 = vunpack.c.h.b16 %v88
    %v251 = vunpack.c.l.b16 %v89
    %v252 = vunpack.c.h.b16 %v89
    %v253 = vunpack.c.l.b16 %v90
    %v254 = vunpack.c.h.b16 %v90
    %v255 = vunpack.c.l.b16 %v91
    %v256 = vunpack.c.h.b16 %v91
    %v257 = vunpack.c.l.b16 %v92
    %v258 = vunpack.c.h.b16 %v92
    %v259 = vunpack.c.l.b16 %v93
    %v260 = vunpack.c.h.b16 %v93
    %v261 = vunpack.c.l.b16 %v94
    %v262 = vunpack.c.h.b16 %v94
    %v263 = vunpack.c.l.b16 %v95
    %v264 = vunpack.c.h.b16 %v95
    %v265 = vunpack.c.l.b16 %v96
    %v266 = vunpack.c.h.b16 %v96
    %v267 = vunpack.c.l.b16 %v97
    %v268 = vunpack.c.h.b16 %v97
    %v269 = vunpack.c.l.b16 %v98
    %v270 = vunpack.c.h.b16 %v98
    %v271 = vunpack.c.l.b16 %v99
    %v272 = vunpack.c.h.b16 %v99
    %v273 = vunpack.c.l.b16 %v100
    %v274 = vunpack.c.h.b16 %v100
    %v275 = vunpack.c.l.b16 %v101
    %v276 = vunpack.c.h.b16 %v101
    %v277 = vunpack.c.l.b16 %v102
    %v278 = vunpack.c.h.b16 %v102
    %v279 = vunpack.c.l.b16 %v103
    %v280 = vunpack.c.h.b16 %v103
    %v281 = vunpack.c.l.b16 %v104
    %v282 = vunpack.c.h.b16 %v104
    %v283 = vunpack.c.l.b16 %v105
    %v284 = vunpack.c.h.b16 %v105
    %v285 = vunpack.c.l.b16 %v106
    %v286 = vunpack.c.h.b16 %v106
    %v287 = vunpack.c.l.b16 %v107
    %v288 = vunpack.c.h.b16 %v107
    %v289 = vunpack.c.l.b16 %v108
    %v290 = vunpack.c.h.b16 %v108
    %v291 = vunpack.c.l.b16 %v109
    %v292 = vunpack.c.h.b16 %v109
    %v293 = vunpack.c.l.b16 %v110
    %v294 = vunpack.c.h.b16 %v110
    %v295 = vunpack.c.l.b16 %v111
    %v296 = vunpack.c.h.b16 %v111
    %v297 = vunpack.c.l.b16 %v112
    %v298 = vunpack.c.h.b16 %v112
    %v299 = vunpack.c.l.b16 %v113
    %v300 = vunpack.c.h.b16 %v113
    %v301 = vunpack.c.l.b16 %v114
    %v302 = vunpack.c.h.b16 %v114
    %v303 = vunpack.c.l.b16 %v115
    %v304 = vunpack.c.h.b16 %v115
    %v305 = vunpack.c.l.b16 %v116
    %v306 = vunpack.c.h.b16 %v116
    %v307 = vunpack.c.l.b16 %v117
    %v308 = vunpack.c.h.b16 %v117
    %v309 = vunpack.c.l.b16 %v118
    %v310 = vunpack.c.h.b16 %v118
    %v311 = vunpack.c.l.b16 %v119
    %v312 = vunpack.c.h.b16 %v119
    %v313 = vunpack.c.l.b16 %v120
    %v314 = vunpack.c.h.b16 %v120
    %v315 = vunpack.c.l.b16 %v121
    %v316 = vunpack.c.h.b16 %v121
    %v317 = vunpack.c.l.b16 %v122
    %v318 = vunpack.c.h.b16 %v122
    %v319 = vunpack.c.l.b16 %v123
    %v320 = vunpack.c.h.b16 %v123
    %v321 = vunpack.c.l.b16 %v124
    %v322 = vunpack.c.h.b16 %v124
    %v323 = vunpack.c.l.b16 %v125
    %v324 = vunpack.c.h.b16 %v125
    %v325 = vunpack.c.l.b16 %v126
    %v326 = vunpack.c.h.b16 %v126
    %v327 = vunpack.c.l.b16 %v127
    %v328 = vunpack.c.h.b16 %v127
    %v329 = vunpack.c.l.b16 %v128
    %v330 = vunpack.c.h.b16 %v128
    %v331 = vunpack.c.l.b16 %v129
    %v332 = vunpack.c.h.b16 %v129
    %v333 = vunpack.c.l.b16 %v130
    %v334 = vunpack.c.h.b16 %v130
    %v335 = vunpack.c.l.b16 %v131
    %v336 = vunpack.c.h.b16 %v131
    %v337 = vpack.c.b16 %v211, %v209
    %v338 = vpack.c.b16 %v212, %v210
    %v339 = vpack.c.b16 %v215, %v213
    %v340 = vpack.c.b16 %v216, %v214
    %v341 = vpack.c.b16 %v219, %v217
    %v342 = vpack.c.b16 %v220, %v218
    %v343 = vpack.c.b16 %v223, %v221
    %v344 = vpack.c.b16 %v224, %v222
    %v345 = vpack.c.b16 %v227, %v225
    %v346 = vpack.c.b16 %v228, %v226
    %v347 = vpack.c.b16 %v231, %v229
    %v348 = vpack.c.b16 %v232, %v230
    %v349 = vpack.c.b16 %v235, %v233
    %v350 = vpack.c.b16 %v236, %v234
    %v351 = vpack.c.b16 %v239, %v237
    %v352 = vpack.c.b16 %v240, %v238
    %v353 = vpack.c.b16 %v243, %v241
    %v354 = vpack.c.b16 %v244, %v242
    %v355 = vpack.c.b16 %v247, %v245
    %v356 = vpack.c.b16 %v248, %v246
    %v357 = vpack.c.b16 %v251, %v249
    %v358 = vpack.c.b16 %v252, %v250
    %v359 = vpack.c.b16 %v255, %v253
    %v360 = vpack.c.b16 %v256, %v254
    %v361 = vpack.c.b16 %v259, %v257
    %v362 = vpack.c.b16 %v260, %v258
    %v363 = vpack.c.b16 %v263, %v261
    %v364 = vpack.c.b16 %v264, %v262
    %v365 = vpack.c.b16 %v267, %v265
    %v366 = vpack.c.b16 %v268, %v266
    %v367 = vpack.c.b16 %v271, %v269
    %v368 = vpack.c.b16 %v272, %v270
    %v369 = vpack.c.b16 %v275, %v273
    %v370 = vpack.c.b16 %v276, %v274
    %v371 = vpack.c.b16 %v279, %v277
    %v372 = vpack.c.b16 %v280, %v278
    %v373 = vpack.c.b16 %v283, %v281
    %v374 = vpack.c.b16 %v284, %v282
    %v375 = vpack.c.b16 %v287, %v285
    %v376 = vpack.c.b16 %v288, %v286
    %v377 = vpack.c.b16 %v291, %v289
    %v378 = vpack.c.b16 %v292, %v290
    %v379 = vpack.c.b16 %v295, %v293
    %v380 = vpack.c.b16 %v296, %v294
    %v381 = vpack.c.b16 %v299, %v297
    %v382 = vpack.c.b16 %v300, %v298
    %v383 = vpack.c.b16 %v303, %v301
    %v384 = vpack.c.b16 %v304, %v302
    %v385 = vpack.c.b16 %v307, %v305
    %v386 = vpack.c.b16 %v308, %v306
    %v387 = vpack.c.b16 %v311, %v309
    %v388 = vpack.c.b16 %v312, %v310
    %v389 = vpack.c.b16 %v315, %v313
    %v390 = vpack.c.b16 %v316, %v314
    %v391 = vpack.c.b16 %v319, %v317
    %v392 = vpack.c.b16 %v320, %v318
    %v393 = vpack.c.b16 %v323, %v321
    %v394 = vpack.c.b16 %v324, %v322
    %v395 = vpack.c.b16 %v327, %v325
    %v396 = vpack.c.b16 %v328, %v326
    %v397 = vpack.c.b16 %v331, %v329
    %v398 = vpack.c.b16 %v332, %v330
    %v399 = vpack.c.b16 %v335, %v333
    %v400 = vpack.c.b16 %v336, %v334
    %465 = vmatprep.subr.bf16.mxu0 %v338
    %466 = vmatpush1.bf16.msra.mxu0 %v337
    %467 = vmatprep.subr.bf16.mxu0 %v340
    %468 = vmatpush1.bf16.msra.mxu0 %v339
    %469 = vmatprep.subr.bf16.mxu0 %v342
    %470 = vmatpush1.bf16.msra.mxu0 %v341
    %471 = vmatprep.subr.bf16.mxu0 %v344
    %472 = vmatpush1.bf16.msra.mxu0 %v343
    %473 = vmatprep.subr.bf16.mxu0 %v346
    %474 = vmatpush1.bf16.msra.mxu0 %v345
    %475 = vmatprep.subr.bf16.mxu0 %v348
    %476 = vmatpush1.bf16.msra.mxu0 %v347
    %477 = vmatprep.subr.bf16.mxu0 %v350
    %478 = vmatpush1.bf16.msra.mxu0 %v349
    %479 = vmatprep.subr.bf16.mxu0 %v352
    %480 = vmatpush1.bf16.msra.mxu0 %v351
    %481 = vmatprep.subr.bf16.mxu0 %v354
    %482 = vmatpush1.bf16.msra.mxu0 %v353
    %483 = vmatprep.subr.bf16.mxu0 %v356
    %484 = vmatpush1.bf16.msra.mxu0 %v355
    %485 = vmatprep.subr.bf16.mxu0 %v358
    %486 = vmatpush1.bf16.msra.mxu0 %v357
    %487 = vmatprep.subr.bf16.mxu0 %v360
    %488 = vmatpush1.bf16.msra.mxu0 %v359
    %489 = vmatprep.subr.bf16.mxu0 %v362
    %490 = vmatpush1.bf16.msra.mxu0 %v361
    %491 = vmatprep.subr.bf16.mxu0 %v364
    %492 = vmatpush1.bf16.msra.mxu0 %v363
    %493 = vmatprep.subr.bf16.mxu0 %v366
    %494 = vmatpush1.bf16.msra.mxu0 %v365
    %495 = vmatprep.subr.bf16.mxu0 %v368
    %496 = vmatpush1.bf16.msra.mxu0 %v367
    %497 = vmatprep.mubr.bf16.mxu0 %v64
    %498 = vmatmul.mubr.bf16.gmra.mrb[0].mxu0 %v63
    %v499 = vpop.f32.mrb[0].mxu0
    %v500 = vadd.f32 %v138, %v499
    %v501 = vpop.f32.mrb[0].mxu0
    %v502 = vadd.f32 %v142, %v501
    %v503 = vpop.f32.mrb[0].mxu0
    %v504 = vpop.f32.mrb[0].mxu0
    %505 = vdwg.mxu0
    %506 = vmatprep.subr.bf16.mxu0 %v370
    %507 = vmatpush1.bf16.msra.mxu0 %v369
    %508 = vmatprep.subr.bf16.mxu0 %v372
    %509 = vmatpush1.bf16.msra.mxu0 %v371
    %510 = vmatprep.subr.bf16.mxu0 %v374
    %511 = vmatpush1.bf16.msra.mxu0 %v373
    %512 = vmatprep.subr.bf16.mxu0 %v376
    %513 = vmatpush1.bf16.msra.mxu0 %v375
    %514 = vmatprep.subr.bf16.mxu0 %v378
    %515 = vmatpush1.bf16.msra.mxu0 %v377
    %516 = vmatprep.subr.bf16.mxu0 %v380
    %517 = vmatpush1.bf16.msra.mxu0 %v379
    %518 = vmatprep.subr.bf16.mxu0 %v382
    %519 = vmatpush1.bf16.msra.mxu0 %v381
    %520 = vmatprep.subr.bf16.mxu0 %v384
    %521 = vmatpush1.bf16.msra.mxu0 %v383
    %522 = vmatprep.subr.bf16.mxu0 %v386
    %523 = vmatpush1.bf16.msra.mxu0 %v385
    %524 = vmatprep.subr.bf16.mxu0 %v388
    %525 = vmatpush1.bf16.msra.mxu0 %v387
    %526 = vmatprep.subr.bf16.mxu0 %v390
    %527 = vmatpush1.bf16.msra.mxu0 %v389
    %528 = vmatprep.subr.bf16.mxu0 %v392
    %529 = vmatpush1.bf16.msra.mxu0 %v391
    %530 = vmatprep.subr.bf16.mxu0 %v394
    %531 = vmatpush1.bf16.msra.mxu0 %v393
    %532 = vmatprep.subr.bf16.mxu0 %v396
    %533 = vmatpush1.bf16.msra.mxu0 %v395
    %534 = vmatprep.subr.bf16.mxu0 %v398
    %535 = vmatpush1.bf16.msra.mxu0 %v397
    %536 = vmatprep.subr.bf16.mxu0 %v400
    %537 = vmatpush1.bf16.msra.mxu0 %v399
    %538 = vmatprep.mubr.bf16.mxu0 %v66
    %539 = vmatmul.mubr.bf16.gmra.mrb[0].mxu0 %v65
    %v540 = vpop.f32.mrb[0].mxu0
    %v541 = vadd.f32 %v500, %v540
    %v542 = vpop.f32.mrb[0].mxu0
    %v543 = vadd.f32 %v502, %v542
    %v544 = vpop.f32.mrb[0].mxu0
    %v545 = vpop.f32.mrb[0].mxu0
    %546 = vdwg.mxu0
    %v547 = vtanh.pop %v541
    %v548 = vtanh.pop %v543
    %v549 = vpack.c.bf16 %v547, %v547
    %v550 = vpack.c.bf16 %v548, %v548
    %s551 = scalar_lea.vmem [#allocation2], 768
    %v552 = vld [vmem:[%s551] sm:$0xff]
    %v553 = vld [vmem:[%s551 + $0x8] sm:$0xff]
    %v554 = vld [vmem:[%s551 + $0x10] sm:$0xff]
    %v555 = vld [vmem:[%s551 + $0x18] sm:$0xff]
    %v556 = vld [vmem:[%s551 + $0x20] sm:$0xff]
    %v557 = vld [vmem:[%s551 + $0x28] sm:$0xff]
    %v558 = vld [vmem:[%s551 + $0x30] sm:$0xff]
    %v559 = vld [vmem:[%s551 + $0x38] sm:$0xff]
    %v560 = vld [vmem:[%s551 + $0x40] sm:$0xff]
    %v561 = vld [vmem:[%s551 + $0x48] sm:$0xff]
    %v562 = vld [vmem:[%s551 + $0x50] sm:$0xff]
    %v563 = vld [vmem:[%s551 + $0x58] sm:$0xff]
    %v564 = vld [vmem:[%s551 + $0x60] sm:$0xff]
    %v565 = vld [vmem:[%s551 + $0x68] sm:$0xff]
    %v566 = vld [vmem:[%s551 + $0x70] sm:$0xff]
    %v567 = vld [vmem:[%s551 + $0x78] sm:$0xff]
    %v568 = vld [vmem:[%s551 + $0x80] sm:$0xff]
    %v569 = vld [vmem:[%s551 + $0x88] sm:$0xff]
    %v570 = vld [vmem:[%s551 + $0x90] sm:$0xff]
    %v571 = vld [vmem:[%s551 + $0x98] sm:$0xff]
    %v572 = vld [vmem:[%s551 + $0xa0] sm:$0xff]
    %v573 = vld [vmem:[%s551 + $0xa8] sm:$0xff]
    %v574 = vld [vmem:[%s551 + $0xb0] sm:$0xff]
    %v575 = vld [vmem:[%s551 + $0xb8] sm:$0xff]
    %v576 = vld [vmem:[%s551 + $0xc0] sm:$0xff]
    %v577 = vld [vmem:[%s551 + $0xc8] sm:$0xff]
    %v578 = vld [vmem:[%s551 + $0xd0] sm:$0xff]
    %v579 = vld [vmem:[%s551 + $0xd8] sm:$0xff]
    %v580 = vld [vmem:[%s551 + $0xe0] sm:$0xff]
    %v581 = vld [vmem:[%s551 + $0xe8] sm:$0xff]
    %v582 = vld [vmem:[%s551 + $0xf0] sm:$0xff]
    %v583 = vld [vmem:[%s551 + $0xf8] sm:$0xff]
    %s584 = scalar_lea.vmem %s4, 12
    %v585 = vld [vmem:[%s584] sm:$0xf]
    %v587 = vlaneseq
    %v588 = vshrl.u32 %v587, 7
    %v589 = vsub.s32 0, %v588
    %v590 = vrot.slane %v585, %v589
    %v591 = vlaneseq
    %v592 = vshrl.u32 %v591, 7
    %v593 = vsub.s32 1, %v592
    %v594 = vrot.slane %v585, %v593
    %v595 = vlaneseq
    %v596 = vshrl.u32 %v595, 7
    %v597 = vsub.s32 2, %v596
    %v598 = vrot.slane %v585, %v597
    %v599 = vlaneseq
    %v600 = vshrl.u32 %v599, 7
    %v601 = vsub.s32 3, %v600
    %v602 = vrot.slane %v585, %v601
    %v639 = vunpack.c.l.b16 %v552
    %v640 = vunpack.c.h.b16 %v552
    %v641 = vunpack.c.l.b16 %v553
    %v642 = vunpack.c.h.b16 %v553
    %v643 = vunpack.c.l.b16 %v554
    %v644 = vunpack.c.h.b16 %v554
    %v645 = vunpack.c.l.b16 %v555
    %v646 = vunpack.c.h.b16 %v555
    %v647 = vunpack.c.l.b16 %v556
    %v648 = vunpack.c.h.b16 %v556
    %v649 = vunpack.c.l.b16 %v557
    %v650 = vunpack.c.h.b16 %v557
    %v651 = vunpack.c.l.b16 %v558
    %v652 = vunpack.c.h.b16 %v558
    %v653 = vunpack.c.l.b16 %v559
    %v654 = vunpack.c.h.b16 %v559
    %v655 = vunpack.c.l.b16 %v560
    %v656 = vunpack.c.h.b16 %v560
    %v657 = vunpack.c.l.b16 %v561
    %v658 = vunpack.c.h.b16 %v561
    %v659 = vunpack.c.l.b16 %v562
    %v660 = vunpack.c.h.b16 %v562
    %v661 = vunpack.c.l.b16 %v563
    %v662 = vunpack.c.h.b16 %v563
    %v663 = vunpack.c.l.b16 %v564
    %v664 = vunpack.c.h.b16 %v564
    %v665 = vunpack.c.l.b16 %v565
    %v666 = vunpack.c.h.b16 %v565
    %v667 = vunpack.c.l.b16 %v566
    %v668 = vunpack.c.h.b16 %v566
    %v669 = vunpack.c.l.b16 %v567
    %v670 = vunpack.c.h.b16 %v567
    %v671 = vunpack.c.l.b16 %v568
    %v672 = vunpack.c.h.b16 %v568
    %v673 = vunpack.c.l.b16 %v569
    %v674 = vunpack.c.h.b16 %v569
    %v675 = vunpack.c.l.b16 %v570
    %v676 = vunpack.c.h.b16 %v570
    %v677 = vunpack.c.l.b16 %v571
    %v678 = vunpack.c.h.b16 %v571
    %v679 = vunpack.c.l.b16 %v572
    %v680 = vunpack.c.h.b16 %v572
    %v681 = vunpack.c.l.b16 %v573
    %v682 = vunpack.c.h.b16 %v573
    %v683 = vunpack.c.l.b16 %v574
    %v684 = vunpack.c.h.b16 %v574
    %v685 = vunpack.c.l.b16 %v575
    %v686 = vunpack.c.h.b16 %v575
    %v687 = vunpack.c.l.b16 %v576
    %v688 = vunpack.c.h.b16 %v576
    %v689 = vunpack.c.l.b16 %v577
    %v690 = vunpack.c.h.b16 %v577
    %v691 = vunpack.c.l.b16 %v578
    %v692 = vunpack.c.h.b16 %v578
    %v693 = vunpack.c.l.b16 %v579
    %v694 = vunpack.c.h.b16 %v579
    %v695 = vunpack.c.l.b16 %v580
    %v696 = vunpack.c.h.b16 %v580
    %v697 = vunpack.c.l.b16 %v581
    %v698 = vunpack.c.h.b16 %v581
    %v699 = vunpack.c.l.b16 %v582
    %v700 = vunpack.c.h.b16 %v582
    %v701 = vunpack.c.l.b16 %v583
    %v702 = vunpack.c.h.b16 %v583
    %v703 = vpack.c.b16 %v643, %v639
    %v704 = vpack.c.b16 %v644, %v640
    %v705 = vpack.c.b16 %v645, %v641
    %v706 = vpack.c.b16 %v646, %v642
    %v707 = vpack.c.b16 %v651, %v647
    %v708 = vpack.c.b16 %v652, %v648
    %v709 = vpack.c.b16 %v653, %v649
    %v710 = vpack.c.b16 %v654, %v650
    %v711 = vpack.c.b16 %v659, %v655
    %v712 = vpack.c.b16 %v660, %v656
    %v713 = vpack.c.b16 %v661, %v657
    %v714 = vpack.c.b16 %v662, %v658
    %v715 = vpack.c.b16 %v667, %v663
    %v716 = vpack.c.b16 %v668, %v664
    %v717 = vpack.c.b16 %v669, %v665
    %v718 = vpack.c.b16 %v670, %v666
    %v719 = vpack.c.b16 %v675, %v671
    %v720 = vpack.c.b16 %v676, %v672
    %v721 = vpack.c.b16 %v677, %v673
    %v722 = vpack.c.b16 %v678, %v674
    %v723 = vpack.c.b16 %v683, %v679
    %v724 = vpack.c.b16 %v684, %v680
    %v725 = vpack.c.b16 %v685, %v681
    %v726 = vpack.c.b16 %v686, %v682
    %v727 = vpack.c.b16 %v691, %v687
    %v728 = vpack.c.b16 %v692, %v688
    %v729 = vpack.c.b16 %v693, %v689
    %v730 = vpack.c.b16 %v694, %v690
    %v731 = vpack.c.b16 %v699, %v695
    %v732 = vpack.c.b16 %v700, %v696
    %v733 = vpack.c.b16 %v701, %v697
    %v734 = vpack.c.b16 %v702, %v698
    %767 = vmatprep.subr.bf16.mxu0 %v704
    %768 = vmatpush1.bf16.msra.mxu0 %v703
    %769 = vmatprep.subr.bf16.mxu0 %v708
    %770 = vmatpush1.bf16.msra.mxu0 %v707
    %771 = vmatprep.subr.bf16.mxu0 %v712
    %772 = vmatpush1.bf16.msra.mxu0 %v711
    %773 = vmatprep.subr.bf16.mxu0 %v716
    %774 = vmatpush1.bf16.msra.mxu0 %v715
    %775 = vmatprep.subr.bf16.mxu0 %v720
    %776 = vmatpush1.bf16.msra.mxu0 %v719
    %777 = vmatprep.subr.bf16.mxu0 %v724
    %778 = vmatpush1.bf16.msra.mxu0 %v723
    %779 = vmatprep.subr.bf16.mxu0 %v728
    %780 = vmatpush1.bf16.msra.mxu0 %v727
    %781 = vmatprep.subr.bf16.mxu0 %v732
    %782 = vmatpush1.bf16.msra.mxu0 %v731
    %783 = vmatprep.subr.bf16.mxu0 0
    %784 = vmatpush1.bf16.msra.mxu0 0
    %785 = vmatprep.subr.bf16.mxu0 0
    %786 = vmatpush1.bf16.msra.mxu0 0
    %787 = vmatprep.subr.bf16.mxu0 0
    %788 = vmatpush1.bf16.msra.mxu0 0
    %789 = vmatprep.subr.bf16.mxu0 0
    %790 = vmatpush1.bf16.msra.mxu0 0
    %791 = vmatprep.subr.bf16.mxu0 0
    %792 = vmatpush1.bf16.msra.mxu0 0
    %793 = vmatprep.subr.bf16.mxu0 0
    %794 = vmatpush1.bf16.msra.mxu0 0
    %795 = vmatprep.subr.bf16.mxu0 0
    %796 = vmatpush1.bf16.msra.mxu0 0
    %797 = vmatprep.subr.bf16.mxu0 0
    %798 = vmatpush1.bf16.msra.mxu0 0
    %799 = vmatprep.mubr.bf16.mxu0 0
    %800 = vmatmul.mubr.bf16.gmra.mrb[0].mxu0 %v549
    %v801 = vpop.f32.mrb[0].mxu0
    %v802 = vadd.f32 %v590, %v801
    %v803 = vpop.f32.mrb[0].mxu0
    %v804 = vadd.f32 %v594, %v803
    %v805 = vpop.f32.mrb[0].mxu0
    %v806 = vpop.f32.mrb[0].mxu0
    %807 = vdwg.mxu0
    %808 = vmatprep.subr.bf16.mxu0 %v706
    %809 = vmatpush1.bf16.msra.mxu0 %v705
    %810 = vmatprep.subr.bf16.mxu0 %v710
    %811 = vmatpush1.bf16.msra.mxu0 %v709
    %812 = vmatprep.subr.bf16.mxu0 %v714
    %813 = vmatpush1.bf16.msra.mxu0 %v713
    %814 = vmatprep.subr.bf16.mxu0 %v718
    %815 = vmatpush1.bf16.msra.mxu0 %v717
    %816 = vmatprep.subr.bf16.mxu0 %v722
    %817 = vmatpush1.bf16.msra.mxu0 %v721
    %818 = vmatprep.subr.bf16.mxu0 %v726
    %819 = vmatpush1.bf16.msra.mxu0 %v725
    %820 = vmatprep.subr.bf16.mxu0 %v730
    %821 = vmatpush1.bf16.msra.mxu0 %v729
    %822 = vmatprep.subr.bf16.mxu0 %v734
    %823 = vmatpush1.bf16.msra.mxu0 %v733
    %824 = vmatprep.subr.bf16.mxu0 0
    %825 = vmatpush1.bf16.msra.mxu0 0
    %826 = vmatprep.subr.bf16.mxu0 0
    %827 = vmatpush1.bf16.msra.mxu0 0
    %828 = vmatprep.subr.bf16.mxu0 0
    %829 = vmatpush1.bf16.msra.mxu0 0
    %830 = vmatprep.subr.bf16.mxu0 0
    %831 = vmatpush1.bf16.msra.mxu0 0
    %832 = vmatprep.subr.bf16.mxu0 0
    %833 = vmatpush1.bf16.msra.mxu0 0
    %834 = vmatprep.subr.bf16.mxu0 0
    %835 = vmatpush1.bf16.msra.mxu0 0
    %836 = vmatprep.subr.bf16.mxu0 0
    %837 = vmatpush1.bf16.msra.mxu0 0
    %838 = vmatprep.subr.bf16.mxu0 0
    %839 = vmatpush1.bf16.msra.mxu0 0
    %840 = vmatprep.mubr.bf16.mxu0 0
    %841 = vmatmul.mubr.bf16.gmra.mrb[0].mxu0 %v549
    %v842 = vpop.f32.mrb[0].mxu0
    %v843 = vadd.f32 %v598, %v842
    %v844 = vpop.f32.mrb[0].mxu0
    %v845 = vadd.f32 %v602, %v844
    %v846 = vpop.f32.mrb[0].mxu0
    %v847 = vpop.f32.mrb[0].mxu0
    %848 = vdwg.mxu0
    %s849 = scalar_lea.vmem [#allocation4], 768
    %v850 = vld [vmem:[%s849] sm:$0xff]
    %v851 = vld [vmem:[%s849 + $0x8] sm:$0xff]
    %v852 = vld [vmem:[%s849 + $0x10] sm:$0xff]
    %v853 = vld [vmem:[%s849 + $0x18] sm:$0xff]
    %v854 = vld [vmem:[%s849 + $0x20] sm:$0xff]
    %v855 = vld [vmem:[%s849 + $0x28] sm:$0xff]
    %v856 = vld [vmem:[%s849 + $0x30] sm:$0xff]
    %v857 = vld [vmem:[%s849 + $0x38] sm:$0xff]
    %v858 = vld [vmem:[%s849 + $0x40] sm:$0xff]
    %v859 = vld [vmem:[%s849 + $0x48] sm:$0xff]
    %v860 = vld [vmem:[%s849 + $0x50] sm:$0xff]
    %v861 = vld [vmem:[%s849 + $0x58] sm:$0xff]
    %v862 = vld [vmem:[%s849 + $0x60] sm:$0xff]
    %v863 = vld [vmem:[%s849 + $0x68] sm:$0xff]
    %v864 = vld [vmem:[%s849 + $0x70] sm:$0xff]
    %v865 = vld [vmem:[%s849 + $0x78] sm:$0xff]
    %v866 = vld [vmem:[%s849 + $0x80] sm:$0xff]
    %v867 = vld [vmem:[%s849 + $0x88] sm:$0xff]
    %v868 = vld [vmem:[%s849 + $0x90] sm:$0xff]
    %v869 = vld [vmem:[%s849 + $0x98] sm:$0xff]
    %v870 = vld [vmem:[%s849 + $0xa0] sm:$0xff]
    %v871 = vld [vmem:[%s849 + $0xa8] sm:$0xff]
    %v872 = vld [vmem:[%s849 + $0xb0] sm:$0xff]
    %v873 = vld [vmem:[%s849 + $0xb8] sm:$0xff]
    %v874 = vld [vmem:[%s849 + $0xc0] sm:$0xff]
    %v875 = vld [vmem:[%s849 + $0xc8] sm:$0xff]
    %v876 = vld [vmem:[%s849 + $0xd0] sm:$0xff]
    %v877 = vld [vmem:[%s849 + $0xd8] sm:$0xff]
    %v878 = vld [vmem:[%s849 + $0xe0] sm:$0xff]
    %v879 = vld [vmem:[%s849 + $0xe8] sm:$0xff]
    %v880 = vld [vmem:[%s849 + $0xf0] sm:$0xff]
    %v881 = vld [vmem:[%s849 + $0xf8] sm:$0xff]
    %s882 = scalar_lea.vmem %s6, 12
    %v883 = vld [vmem:[%s882] sm:$0xf]
    %v885 = vlaneseq
    %v886 = vshrl.u32 %v885, 7
    %v887 = vsub.s32 0, %v886
    %v888 = vrot.slane %v883, %v887
    %v889 = vlaneseq
    %v890 = vshrl.u32 %v889, 7
    %v891 = vsub.s32 1, %v890
    %v892 = vrot.slane %v883, %v891
    %v893 = vlaneseq
    %v894 = vshrl.u32 %v893, 7
    %v895 = vsub.s32 2, %v894
    %v896 = vrot.slane %v883, %v895
    %v897 = vlaneseq
    %v898 = vshrl.u32 %v897, 7
    %v899 = vsub.s32 3, %v898
    %v900 = vrot.slane %v883, %v899
    %v937 = vunpack.c.l.b16 %v850
    %v938 = vunpack.c.h.b16 %v850
    %v939 = vunpack.c.l.b16 %v851
    %v940 = vunpack.c.h.b16 %v851
    %v941 = vunpack.c.l.b16 %v852
    %v942 = vunpack.c.h.b16 %v852
    %v943 = vunpack.c.l.b16 %v853
    %v944 = vunpack.c.h.b16 %v853
    %v945 = vunpack.c.l.b16 %v854
    %v946 = vunpack.c.h.b16 %v854
    %v947 = vunpack.c.l.b16 %v855
    %v948 = vunpack.c.h.b16 %v855
    %v949 = vunpack.c.l.b16 %v856
    %v950 = vunpack.c.h.b16 %v856
    %v951 = vunpack.c.l.b16 %v857
    %v952 = vunpack.c.h.b16 %v857
    %v953 = vunpack.c.l.b16 %v858
    %v954 = vunpack.c.h.b16 %v858
    %v955 = vunpack.c.l.b16 %v859
    %v956 = vunpack.c.h.b16 %v859
    %v957 = vunpack.c.l.b16 %v860
    %v958 = vunpack.c.h.b16 %v860
    %v959 = vunpack.c.l.b16 %v861
    %v960 = vunpack.c.h.b16 %v861
    %v961 = vunpack.c.l.b16 %v862
    %v962 = vunpack.c.h.b16 %v862
    %v963 = vunpack.c.l.b16 %v863
    %v964 = vunpack.c.h.b16 %v863
    %v965 = vunpack.c.l.b16 %v864
    %v966 = vunpack.c.h.b16 %v864
    %v967 = vunpack.c.l.b16 %v865
    %v968 = vunpack.c.h.b16 %v865
    %v969 = vunpack.c.l.b16 %v866
    %v970 = vunpack.c.h.b16 %v866
    %v971 = vunpack.c.l.b16 %v867
    %v972 = vunpack.c.h.b16 %v867
    %v973 = vunpack.c.l.b16 %v868
    %v974 = vunpack.c.h.b16 %v868
    %v975 = vunpack.c.l.b16 %v869
    %v976 = vunpack.c.h.b16 %v869
    %v977 = vunpack.c.l.b16 %v870
    %v978 = vunpack.c.h.b16 %v870
    %v979 = vunpack.c.l.b16 %v871
    %v980 = vunpack.c.h.b16 %v871
    %v981 = vunpack.c.l.b16 %v872
    %v982 = vunpack.c.h.b16 %v872
    %v983 = vunpack.c.l.b16 %v873
    %v984 = vunpack.c.h.b16 %v873
    %v985 = vunpack.c.l.b16 %v874
    %v986 = vunpack.c.h.b16 %v874
    %v987 = vunpack.c.l.b16 %v875
    %v988 = vunpack.c.h.b16 %v875
    %v989 = vunpack.c.l.b16 %v876
    %v990 = vunpack.c.h.b16 %v876
    %v991 = vunpack.c.l.b16 %v877
    %v992 = vunpack.c.h.b16 %v877
    %v993 = vunpack.c.l.b16 %v878
    %v994 = vunpack.c.h.b16 %v878
    %v995 = vunpack.c.l.b16 %v879
    %v996 = vunpack.c.h.b16 %v879
    %v997 = vunpack.c.l.b16 %v880
    %v998 = vunpack.c.h.b16 %v880
    %v999 = vunpack.c.l.b16 %v881
    %v1000 = vunpack.c.h.b16 %v881
    %v1001 = vpack.c.b16 %v941, %v937
    %v1002 = vpack.c.b16 %v942, %v938
    %v1003 = vpack.c.b16 %v943, %v939
    %v1004 = vpack.c.b16 %v944, %v940
    %v1005 = vpack.c.b16 %v949, %v945
    %v1006 = vpack.c.b16 %v950, %v946
    %v1007 = vpack.c.b16 %v951, %v947
    %v1008 = vpack.c.b16 %v952, %v948
    %v1009 = vpack.c.b16 %v957, %v953
    %v1010 = vpack.c.b16 %v958, %v954
    %v1011 = vpack.c.b16 %v959, %v955
    %v1012 = vpack.c.b16 %v960, %v956
    %v1013 = vpack.c.b16 %v965, %v961
    %v1014 = vpack.c.b16 %v966, %v962
    %v1015 = vpack.c.b16 %v967, %v963
    %v1016 = vpack.c.b16 %v968, %v964
    %v1017 = vpack.c.b16 %v973, %v969
    %v1018 = vpack.c.b16 %v974, %v970
    %v1019 = vpack.c.b16 %v975, %v971
    %v1020 = vpack.c.b16 %v976, %v972
    %v1021 = vpack.c.b16 %v981, %v977
    %v1022 = vpack.c.b16 %v982, %v978
    %v1023 = vpack.c.b16 %v983, %v979
    %v1024 = vpack.c.b16 %v984, %v980
    %v1025 = vpack.c.b16 %v989, %v985
    %v1026 = vpack.c.b16 %v990, %v986
    %v1027 = vpack.c.b16 %v991, %v987
    %v1028 = vpack.c.b16 %v992, %v988
    %v1029 = vpack.c.b16 %v997, %v993
    %v1030 = vpack.c.b16 %v998, %v994
    %v1031 = vpack.c.b16 %v999, %v995
    %v1032 = vpack.c.b16 %v1000, %v996
    %1065 = vmatprep.subr.bf16.mxu0 %v1002
    %1066 = vmatpush1.bf16.msra.mxu0 %v1001
    %1067 = vmatprep.subr.bf16.mxu0 %v1006
    %1068 = vmatpush1.bf16.msra.mxu0 %v1005
    %1069 = vmatprep.subr.bf16.mxu0 %v1010
    %1070 = vmatpush1.bf16.msra.mxu0 %v1009
    %1071 = vmatprep.subr.bf16.mxu0 %v1014
    %1072 = vmatpush1.bf16.msra.mxu0 %v1013
    %1073 = vmatprep.subr.bf16.mxu0 %v1018
    %1074 = vmatpush1.bf16.msra.mxu0 %v1017
    %1075 = vmatprep.subr.bf16.mxu0 %v1022
    %1076 = vmatpush1.bf16.msra.mxu0 %v1021
    %1077 = vmatprep.subr.bf16.mxu0 %v1026
    %1078 = vmatpush1.bf16.msra.mxu0 %v1025
    %1079 = vmatprep.subr.bf16.mxu0 %v1030
    %1080 = vmatpush1.bf16.msra.mxu0 %v1029
    %1081 = vmatprep.subr.bf16.mxu0 0
    %1082 = vmatpush1.bf16.msra.mxu0 0
    %1083 = vmatprep.subr.bf16.mxu0 0
    %1084 = vmatpush1.bf16.msra.mxu0 0
    %1085 = vmatprep.subr.bf16.mxu0 0
    %1086 = vmatpush1.bf16.msra.mxu0 0
    %1087 = vmatprep.subr.bf16.mxu0 0
    %1088 = vmatpush1.bf16.msra.mxu0 0
    %1089 = vmatprep.subr.bf16.mxu0 0
    %1090 = vmatpush1.bf16.msra.mxu0 0
    %1091 = vmatprep.subr.bf16.mxu0 0
    %1092 = vmatpush1.bf16.msra.mxu0 0
    %1093 = vmatprep.subr.bf16.mxu0 0
    %1094 = vmatpush1.bf16.msra.mxu0 0
    %1095 = vmatprep.subr.bf16.mxu0 0
    %1096 = vmatpush1.bf16.msra.mxu0 0
    %1097 = vmatprep.mubr.bf16.mxu0 0
    %1098 = vmatmul.mubr.bf16.gmra.mrb[0].mxu0 %v550
    %v1099 = vpop.f32.mrb[0].mxu0
    %v1100 = vadd.f32 %v888, %v1099
    %v1101 = vpop.f32.mrb[0].mxu0
    %v1102 = vadd.f32 %v892, %v1101
    %v1103 = vpop.f32.mrb[0].mxu0
    %v1104 = vpop.f32.mrb[0].mxu0
    %1105 = vdwg.mxu0
    %1106 = vmatprep.subr.bf16.mxu0 %v1004
    %1107 = vmatpush1.bf16.msra.mxu0 %v1003
    %1108 = vmatprep.subr.bf16.mxu0 %v1008
    %1109 = vmatpush1.bf16.msra.mxu0 %v1007
    %1110 = vmatprep.subr.bf16.mxu0 %v1012
    %1111 = vmatpush1.bf16.msra.mxu0 %v1011
    %1112 = vmatprep.subr.bf16.mxu0 %v1016
    %1113 = vmatpush1.bf16.msra.mxu0 %v1015
    %1114 = vmatprep.subr.bf16.mxu0 %v1020
    %1115 = vmatpush1.bf16.msra.mxu0 %v1019
    %1116 = vmatprep.subr.bf16.mxu0 %v1024
    %1117 = vmatpush1.bf16.msra.mxu0 %v1023
    %1118 = vmatprep.subr.bf16.mxu0 %v1028
    %1119 = vmatpush1.bf16.msra.mxu0 %v1027
    %1120 = vmatprep.subr.bf16.mxu0 %v1032
    %1121 = vmatpush1.bf16.msra.mxu0 %v1031
    %1122 = vmatprep.subr.bf16.mxu0 0
    %1123 = vmatpush1.bf16.msra.mxu0 0
    %1124 = vmatprep.subr.bf16.mxu0 0
    %1125 = vmatpush1.bf16.msra.mxu0 0
    %1126 = vmatprep.subr.bf16.mxu0 0
    %1127 = vmatpush1.bf16.msra.mxu0 0
    %1128 = vmatprep.subr.bf16.mxu0 0
    %1129 = vmatpush1.bf16.msra.mxu0 0
    %1130 = vmatprep.subr.bf16.mxu0 0
    %1131 = vmatpush1.bf16.msra.mxu0 0
    %1132 = vmatprep.subr.bf16.mxu0 0
    %1133 = vmatpush1.bf16.msra.mxu0 0
    %1134 = vmatprep.subr.bf16.mxu0 0
    %1135 = vmatpush1.bf16.msra.mxu0 0
    %1136 = vmatprep.subr.bf16.mxu0 0
    %1137 = vmatpush1.bf16.msra.mxu0 0
    %1138 = vmatprep.mubr.bf16.mxu0 0
    %1139 = vmatmul.mubr.bf16.gmra.mrb[0].mxu0 %v550
    %v1140 = vpop.f32.mrb[0].mxu0
    %v1141 = vadd.f32 %v896, %v1140
    %v1142 = vpop.f32.mrb[0].mxu0
    %v1143 = vadd.f32 %v900, %v1142
    %v1144 = vpop.f32.mrb[0].mxu0
    %v1145 = vpop.f32.mrb[0].mxu0
    %1146 = vdwg.mxu0
    %v1147 = vsub.f32 %v55, %v1100
    %v1148 = vsub.f32 %v56, %v1102
    %v1149 = vsub.f32 %v57, %v1141
    %v1150 = vsub.f32 %v58, %v1143
    %v1151 = vmul.f32 %v802, 1.442695
    %v1152 = vpow.pop %v1151
    %v1153 = vmul.f32 %v804, 1.442695
    %v1154 = vpow.pop %v1153
    %v1155 = vmul.f32 %v843, 1.442695
    %v1156 = vpow.pop %v1155
    %v1157 = vmul.f32 %v845, 1.442695
    %v1158 = vpow.pop %v1157
    %v1159 = vmul.f32 %v1147, %v1152
    %v1160 = vmul.f32 %v1148, %v1154
    %v1161 = vmul.f32 %v1149, %v1156
    %v1162 = vmul.f32 %v1150, %v1158
    %v1163 = vpack.c.bf16 %v1159, %v1159
    %v1164 = vpack.c.bf16 %v1160, %v1160
    %v1165 = vpack.c.bf16 %v1161, %v1161
    %v1166 = vpack.c.bf16 %v1162, %v1162
    %s1167 = scalar_lea.vmem %s1, 1024
    %v1168 = vld [vmem:[%s1167] sm:$0xff]
    %v1169 = vld [vmem:[%s1167 + $0x8] sm:$0xff]
    %v1170 = vld [vmem:[%s1167 + $0x10] sm:$0xff]
    %v1171 = vld [vmem:[%s1167 + $0x18] sm:$0xff]
    %v1172 = vld [vmem:[%s1167 + $0x20] sm:$0xff]
    %v1173 = vld [vmem:[%s1167 + $0x28] sm:$0xff]
    %v1174 = vld [vmem:[%s1167 + $0x30] sm:$0xff]
    %v1175 = vld [vmem:[%s1167 + $0x38] sm:$0xff]
    %v1176 = vld [vmem:[%s1167 + $0x40] sm:$0xff]
    %v1177 = vld [vmem:[%s1167 + $0x48] sm:$0xff]
    %v1178 = vld [vmem:[%s1167 + $0x50] sm:$0xff]
    %v1179 = vld [vmem:[%s1167 + $0x58] sm:$0xff]
    %v1180 = vld [vmem:[%s1167 + $0x60] sm:$0xff]
    %v1181 = vld [vmem:[%s1167 + $0x68] sm:$0xff]
    %v1182 = vld [vmem:[%s1167 + $0x70] sm:$0xff]
    %v1183 = vld [vmem:[%s1167 + $0x78] sm:$0xff]
    %v1184 = vld [vmem:[%s1167 + $0x80] sm:$0xff]
    %v1185 = vld [vmem:[%s1167 + $0x88] sm:$0xff]
    %v1186 = vld [vmem:[%s1167 + $0x90] sm:$0xff]
    %v1187 = vld [vmem:[%s1167 + $0x98] sm:$0xff]
    %v1188 = vld [vmem:[%s1167 + $0xa0] sm:$0xff]
    %v1189 = vld [vmem:[%s1167 + $0xa8] sm:$0xff]
    %v1190 = vld [vmem:[%s1167 + $0xb0] sm:$0xff]
    %v1191 = vld [vmem:[%s1167 + $0xb8] sm:$0xff]
    %v1192 = vld [vmem:[%s1167 + $0xc0] sm:$0xff]
    %v1193 = vld [vmem:[%s1167 + $0xc8] sm:$0xff]
    %v1194 = vld [vmem:[%s1167 + $0xd0] sm:$0xff]
    %v1195 = vld [vmem:[%s1167 + $0xd8] sm:$0xff]
    %v1196 = vld [vmem:[%s1167 + $0xe0] sm:$0xff]
    %v1197 = vld [vmem:[%s1167 + $0xe8] sm:$0xff]
    %v1198 = vld [vmem:[%s1167 + $0xf0] sm:$0xff]
    %v1199 = vld [vmem:[%s1167 + $0xf8] sm:$0xff]
    %v1200 = vld [vmem:[%s1167 + $0x100] sm:$0xff]
    %v1201 = vld [vmem:[%s1167 + $0x108] sm:$0xff]
    %v1202 = vld [vmem:[%s1167 + $0x110] sm:$0xff]
    %v1203 = vld [vmem:[%s1167 + $0x118] sm:$0xff]
    %v1204 = vld [vmem:[%s1167 + $0x120] sm:$0xff]
    %v1205 = vld [vmem:[%s1167 + $0x128] sm:$0xff]
    %v1206 = vld [vmem:[%s1167 + $0x130] sm:$0xff]
    %v1207 = vld [vmem:[%s1167 + $0x138] sm:$0xff]
    %v1208 = vld [vmem:[%s1167 + $0x140] sm:$0xff]
    %v1209 = vld [vmem:[%s1167 + $0x148] sm:$0xff]
    %v1210 = vld [vmem:[%s1167 + $0x150] sm:$0xff]
    %v1211 = vld [vmem:[%s1167 + $0x158] sm:$0xff]
    %v1212 = vld [vmem:[%s1167 + $0x160] sm:$0xff]
    %v1213 = vld [vmem:[%s1167 + $0x168] sm:$0xff]
    %v1214 = vld [vmem:[%s1167 + $0x170] sm:$0xff]
    %v1215 = vld [vmem:[%s1167 + $0x178] sm:$0xff]
    %v1216 = vld [vmem:[%s1167 + $0x180] sm:$0xff]
    %v1217 = vld [vmem:[%s1167 + $0x188] sm:$0xff]
    %v1218 = vld [vmem:[%s1167 + $0x190] sm:$0xff]
    %v1219 = vld [vmem:[%s1167 + $0x198] sm:$0xff]
    %v1220 = vld [vmem:[%s1167 + $0x1a0] sm:$0xff]
    %v1221 = vld [vmem:[%s1167 + $0x1a8] sm:$0xff]
    %v1222 = vld [vmem:[%s1167 + $0x1b0] sm:$0xff]
    %v1223 = vld [vmem:[%s1167 + $0x1b8] sm:$0xff]
    %v1224 = vld [vmem:[%s1167 + $0x1c0] sm:$0xff]
    %v1225 = vld [vmem:[%s1167 + $0x1c8] sm:$0xff]
    %v1226 = vld [vmem:[%s1167 + $0x1d0] sm:$0xff]
    %v1227 = vld [vmem:[%s1167 + $0x1d8] sm:$0xff]
    %v1228 = vld [vmem:[%s1167 + $0x1e0] sm:$0xff]
    %v1229 = vld [vmem:[%s1167 + $0x1e8] sm:$0xff]
    %v1230 = vld [vmem:[%s1167 + $0x1f0] sm:$0xff]
    %v1231 = vld [vmem:[%s1167 + $0x1f8] sm:$0xff]
    %s1232 = scalar_lea.vmem %s2, 4
    %v1233 = vld [vmem:[%s1232] sm:$0x3]
    %v1235 = vlaneseq
    %v1236 = vshrl.u32 %v1235, 7
    %v1237 = vsub.s32 0, %v1236
    %v1238 = vrot.slane %v1233, %v1237
    %v1239 = vlaneseq
    %v1240 = vshrl.u32 %v1239, 7
    %v1241 = vsub.s32 1, %v1240
    %v1242 = vrot.slane %v1233, %v1241
    %v1309 = vunpack.c.l.b16 %v1168
    %v1310 = vunpack.c.h.b16 %v1168
    %v1311 = vunpack.c.l.b16 %v1169
    %v1312 = vunpack.c.h.b16 %v1169
    %v1313 = vunpack.c.l.b16 %v1170
    %v1314 = vunpack.c.h.b16 %v1170
    %v1315 = vunpack.c.l.b16 %v1171
    %v1316 = vunpack.c.h.b16 %v1171
    %v1317 = vunpack.c.l.b16 %v1172
    %v1318 = vunpack.c.h.b16 %v1172
    %v1319 = vunpack.c.l.b16 %v1173
    %v1320 = vunpack.c.h.b16 %v1173
    %v1321 = vunpack.c.l.b16 %v1174
    %v1322 = vunpack.c.h.b16 %v1174
    %v1323 = vunpack.c.l.b16 %v1175
    %v1324 = vunpack.c.h.b16 %v1175
    %v1325 = vunpack.c.l.b16 %v1176
    %v1326 = vunpack.c.h.b16 %v1176
    %v1327 = vunpack.c.l.b16 %v1177
    %v1328 = vunpack.c.h.b16 %v1177
    %v1329 = vunpack.c.l.b16 %v1178
    %v1330 = vunpack.c.h.b16 %v1178
    %v1331 = vunpack.c.l.b16 %v1179
    %v1332 = vunpack.c.h.b16 %v1179
    %v1333 = vunpack.c.l.b16 %v1180
    %v1334 = vunpack.c.h.b16 %v1180
    %v1335 = vunpack.c.l.b16 %v1181
    %v1336 = vunpack.c.h.b16 %v1181
    %v1337 = vunpack.c.l.b16 %v1182
    %v1338 = vunpack.c.h.b16 %v1182
    %v1339 = vunpack.c.l.b16 %v1183
    %v1340 = vunpack.c.h.b16 %v1183
    %v1341 = vunpack.c.l.b16 %v1184
    %v1342 = vunpack.c.h.b16 %v1184
    %v1343 = vunpack.c.l.b16 %v1185
    %v1344 = vunpack.c.h.b16 %v1185
    %v1345 = vunpack.c.l.b16 %v1186
    %v1346 = vunpack.c.h.b16 %v1186
    %v1347 = vunpack.c.l.b16 %v1187
    %v1348 = vunpack.c.h.b16 %v1187
    %v1349 = vunpack.c.l.b16 %v1188
    %v1350 = vunpack.c.h.b16 %v1188
    %v1351 = vunpack.c.l.b16 %v1189
    %v1352 = vunpack.c.h.b16 %v1189
    %v1353 = vunpack.c.l.b16 %v1190
    %v1354 = vunpack.c.h.b16 %v1190
    %v1355 = vunpack.c.l.b16 %v1191
    %v1356 = vunpack.c.h.b16 %v1191
    %v1357 = vunpack.c.l.b16 %v1192
    %v1358 = vunpack.c.h.b16 %v1192
    %v1359 = vunpack.c.l.b16 %v1193
    %v1360 = vunpack.c.h.b16 %v1193
    %v1361 = vunpack.c.l.b16 %v1194
    %v1362 = vunpack.c.h.b16 %v1194
    %v1363 = vunpack.c.l.b16 %v1195
    %v1364 = vunpack.c.h.b16 %v1195
    %v1365 = vunpack.c.l.b16 %v1196
    %v1366 = vunpack.c.h.b16 %v1196
    %v1367 = vunpack.c.l.b16 %v1197
    %v1368 = vunpack.c.h.b16 %v1197
    %v1369 = vunpack.c.l.b16 %v1198
    %v1370 = vunpack.c.h.b16 %v1198
    %v1371 = vunpack.c.l.b16 %v1199
    %v1372 = vunpack.c.h.b16 %v1199
    %v1373 = vunpack.c.l.b16 %v1200
    %v1374 = vunpack.c.h.b16 %v1200
    %v1375 = vunpack.c.l.b16 %v1201
    %v1376 = vunpack.c.h.b16 %v1201
    %v1377 = vunpack.c.l.b16 %v1202
    %v1378 = vunpack.c.h.b16 %v1202
    %v1379 = vunpack.c.l.b16 %v1203
    %v1380 = vunpack.c.h.b16 %v1203
    %v1381 = vunpack.c.l.b16 %v1204
    %v1382 = vunpack.c.h.b16 %v1204
    %v1383 = vunpack.c.l.b16 %v1205
    %v1384 = vunpack.c.h.b16 %v1205
    %v1385 = vunpack.c.l.b16 %v1206
    %v1386 = vunpack.c.h.b16 %v1206
    %v1387 = vunpack.c.l.b16 %v1207
    %v1388 = vunpack.c.h.b16 %v1207
    %v1389 = vunpack.c.l.b16 %v1208
    %v1390 = vunpack.c.h.b16 %v1208
    %v1391 = vunpack.c.l.b16 %v1209
    %v1392 = vunpack.c.h.b16 %v1209
    %v1393 = vunpack.c.l.b16 %v1210
    %v1394 = vunpack.c.h.b16 %v1210
    %v1395 = vunpack.c.l.b16 %v1211
    %v1396 = vunpack.c.h.b16 %v1211
    %v1397 = vunpack.c.l.b16 %v1212
    %v1398 = vunpack.c.h.b16 %v1212
    %v1399 = vunpack.c.l.b16 %v1213
    %v1400 = vunpack.c.h.b16 %v1213
    %v1401 = vunpack.c.l.b16 %v1214
    %v1402 = vunpack.c.h.b16 %v1214
    %v1403 = vunpack.c.l.b16 %v1215
    %v1404 = vunpack.c.h.b16 %v1215
    %v1405 = vunpack.c.l.b16 %v1216
    %v1406 = vunpack.c.h.b16 %v1216
    %v1407 = vunpack.c.l.b16 %v1217
    %v1408 = vunpack.c.h.b16 %v1217
    %v1409 = vunpack.c.l.b16 %v1218
    %v1410 = vunpack.c.h.b16 %v1218
    %v1411 = vunpack.c.l.b16 %v1219
    %v1412 = vunpack.c.h.b16 %v1219
    %v1413 = vunpack.c.l.b16 %v1220
    %v1414 = vunpack.c.h.b16 %v1220
    %v1415 = vunpack.c.l.b16 %v1221
    %v1416 = vunpack.c.h.b16 %v1221
    %v1417 = vunpack.c.l.b16 %v1222
    %v1418 = vunpack.c.h.b16 %v1222
    %v1419 = vunpack.c.l.b16 %v1223
    %v1420 = vunpack.c.h.b16 %v1223
    %v1421 = vunpack.c.l.b16 %v1224
    %v1422 = vunpack.c.h.b16 %v1224
    %v1423 = vunpack.c.l.b16 %v1225
    %v1424 = vunpack.c.h.b16 %v1225
    %v1425 = vunpack.c.l.b16 %v1226
    %v1426 = vunpack.c.h.b16 %v1226
    %v1427 = vunpack.c.l.b16 %v1227
    %v1428 = vunpack.c.h.b16 %v1227
    %v1429 = vunpack.c.l.b16 %v1228
    %v1430 = vunpack.c.h.b16 %v1228
    %v1431 = vunpack.c.l.b16 %v1229
    %v1432 = vunpack.c.h.b16 %v1229
    %v1433 = vunpack.c.l.b16 %v1230
    %v1434 = vunpack.c.h.b16 %v1230
    %v1435 = vunpack.c.l.b16 %v1231
    %v1436 = vunpack.c.h.b16 %v1231
    %v1437 = vpack.c.b16 %v1311, %v1309
    %v1438 = vpack.c.b16 %v1312, %v1310
    %v1439 = vpack.c.b16 %v1315, %v1313
    %v1440 = vpack.c.b16 %v1316, %v1314
    %v1441 = vpack.c.b16 %v1319, %v1317
    %v1442 = vpack.c.b16 %v1320, %v1318
    %v1443 = vpack.c.b16 %v1323, %v1321
    %v1444 = vpack.c.b16 %v1324, %v1322
    %v1445 = vpack.c.b16 %v1327, %v1325
    %v1446 = vpack.c.b16 %v1328, %v1326
    %v1447 = vpack.c.b16 %v1331, %v1329
    %v1448 = vpack.c.b16 %v1332, %v1330
    %v1449 = vpack.c.b16 %v1335, %v1333
    %v1450 = vpack.c.b16 %v1336, %v1334
    %v1451 = vpack.c.b16 %v1339, %v1337
    %v1452 = vpack.c.b16 %v1340, %v1338
    %v1453 = vpack.c.b16 %v1343, %v1341
    %v1454 = vpack.c.b16 %v1344, %v1342
    %v1455 = vpack.c.b16 %v1347, %v1345
    %v1456 = vpack.c.b16 %v1348, %v1346
    %v1457 = vpack.c.b16 %v1351, %v1349
    %v1458 = vpack.c.b16 %v1352, %v1350
    %v1459 = vpack.c.b16 %v1355, %v1353
    %v1460 = vpack.c.b16 %v1356, %v1354
    %v1461 = vpack.c.b16 %v1359, %v1357
    %v1462 = vpack.c.b16 %v1360, %v1358
    %v1463 = vpack.c.b16 %v1363, %v1361
    %v1464 = vpack.c.b16 %v1364, %v1362
    %v1465 = vpack.c.b16 %v1367, %v1365
    %v1466 = vpack.c.b16 %v1368, %v1366
    %v1467 = vpack.c.b16 %v1371, %v1369
    %v1468 = vpack.c.b16 %v1372, %v1370
    %v1469 = vpack.c.b16 %v1375, %v1373
    %v1470 = vpack.c.b16 %v1376, %v1374
    %v1471 = vpack.c.b16 %v1379, %v1377
    %v1472 = vpack.c.b16 %v1380, %v1378
    %v1473 = vpack.c.b16 %v1383, %v1381
    %v1474 = vpack.c.b16 %v1384, %v1382
    %v1475 = vpack.c.b16 %v1387, %v1385
    %v1476 = vpack.c.b16 %v1388, %v1386
    %v1477 = vpack.c.b16 %v1391, %v1389
    %v1478 = vpack.c.b16 %v1392, %v1390
    %v1479 = vpack.c.b16 %v1395, %v1393
    %v1480 = vpack.c.b16 %v1396, %v1394
    %v1481 = vpack.c.b16 %v1399, %v1397
    %v1482 = vpack.c.b16 %v1400, %v1398
    %v1483 = vpack.c.b16 %v1403, %v1401
    %v1484 = vpack.c.b16 %v1404, %v1402
    %v1485 = vpack.c.b16 %v1407, %v1405
    %v1486 = vpack.c.b16 %v1408, %v1406
    %v1487 = vpack.c.b16 %v1411, %v1409
    %v1488 = vpack.c.b16 %v1412, %v1410
    %v1489 = vpack.c.b16 %v1415, %v1413
    %v1490 = vpack.c.b16 %v1416, %v1414
    %v1491 = vpack.c.b16 %v1419, %v1417
    %v1492 = vpack.c.b16 %v1420, %v1418
    %v1493 = vpack.c.b16 %v1423, %v1421
    %v1494 = vpack.c.b16 %v1424, %v1422
    %v1495 = vpack.c.b16 %v1427, %v1425
    %v1496 = vpack.c.b16 %v1428, %v1426
    %v1497 = vpack.c.b16 %v1431, %v1429
    %v1498 = vpack.c.b16 %v1432, %v1430
    %v1499 = vpack.c.b16 %v1435, %v1433
    %v1500 = vpack.c.b16 %v1436, %v1434
    %1565 = vmatprep.subr.bf16.mxu0 %v1438
    %1566 = vmatpush1.bf16.msra.mxu0 %v1437
    %1567 = vmatprep.subr.bf16.mxu0 %v1440
    %1568 = vmatpush1.bf16.msra.mxu0 %v1439
    %1569 = vmatprep.subr.bf16.mxu0 %v1442
    %1570 = vmatpush1.bf16.msra.mxu0 %v1441
    %1571 = vmatprep.subr.bf16.mxu0 %v1444
    %1572 = vmatpush1.bf16.msra.mxu0 %v1443
    %1573 = vmatprep.subr.bf16.mxu0 %v1446
    %1574 = vmatpush1.bf16.msra.mxu0 %v1445
    %1575 = vmatprep.subr.bf16.mxu0 %v1448
    %1576 = vmatpush1.bf16.msra.mxu0 %v1447
    %1577 = vmatprep.subr.bf16.mxu0 %v1450
    %1578 = vmatpush1.bf16.msra.mxu0 %v1449
    %1579 = vmatprep.subr.bf16.mxu0 %v1452
    %1580 = vmatpush1.bf16.msra.mxu0 %v1451
    %1581 = vmatprep.subr.bf16.mxu0 %v1454
    %1582 = vmatpush1.bf16.msra.mxu0 %v1453
    %1583 = vmatprep.subr.bf16.mxu0 %v1456
    %1584 = vmatpush1.bf16.msra.mxu0 %v1455
    %1585 = vmatprep.subr.bf16.mxu0 %v1458
    %1586 = vmatpush1.bf16.msra.mxu0 %v1457
    %1587 = vmatprep.subr.bf16.mxu0 %v1460
    %1588 = vmatpush1.bf16.msra.mxu0 %v1459
    %1589 = vmatprep.subr.bf16.mxu0 %v1462
    %1590 = vmatpush1.bf16.msra.mxu0 %v1461
    %1591 = vmatprep.subr.bf16.mxu0 %v1464
    %1592 = vmatpush1.bf16.msra.mxu0 %v1463
    %1593 = vmatprep.subr.bf16.mxu0 %v1466
    %1594 = vmatpush1.bf16.msra.mxu0 %v1465
    %1595 = vmatprep.subr.bf16.mxu0 %v1468
    %1596 = vmatpush1.bf16.msra.mxu0 %v1467
    %1597 = vmatprep.mubr.bf16.mxu0 %v1164
    %1598 = vmatmul.mubr.bf16.gmra.mrb[0].mxu0 %v1163
    %v1599 = vpop.f32.mrb[0].mxu0
    %v1600 = vadd.f32 %v1238, %v1599
    %v1601 = vpop.f32.mrb[0].mxu0
    %v1602 = vadd.f32 %v1242, %v1601
    %v1603 = vpop.f32.mrb[0].mxu0
    %v1604 = vpop.f32.mrb[0].mxu0
    %1605 = vdwg.mxu0
    %1606 = vmatprep.subr.bf16.mxu0 %v1470
    %1607 = vmatpush1.bf16.msra.mxu0 %v1469
    %1608 = vmatprep.subr.bf16.mxu0 %v1472
    %1609 = vmatpush1.bf16.msra.mxu0 %v1471
    %1610 = vmatprep.subr.bf16.mxu0 %v1474
    %1611 = vmatpush1.bf16.msra.mxu0 %v1473
    %1612 = vmatprep.subr.bf16.mxu0 %v1476
    %1613 = vmatpush1.bf16.msra.mxu0 %v1475
    %1614 = vmatprep.subr.bf16.mxu0 %v1478
    %1615 = vmatpush1.bf16.msra.mxu0 %v1477
    %1616 = vmatprep.subr.bf16.mxu0 %v1480
    %1617 = vmatpush1.bf16.msra.mxu0 %v1479
    %1618 = vmatprep.subr.bf16.mxu0 %v1482
    %1619 = vmatpush1.bf16.msra.mxu0 %v1481
    %1620 = vmatprep.subr.bf16.mxu0 %v1484
    %1621 = vmatpush1.bf16.msra.mxu0 %v1483
    %1622 = vmatprep.subr.bf16.mxu0 %v1486
    %1623 = vmatpush1.bf16.msra.mxu0 %v1485
    %1624 = vmatprep.subr.bf16.mxu0 %v1488
    %1625 = vmatpush1.bf16.msra.mxu0 %v1487
    %1626 = vmatprep.subr.bf16.mxu0 %v1490
    %1627 = vmatpush1.bf16.msra.mxu0 %v1489
    %1628 = vmatprep.subr.bf16.mxu0 %v1492
    %1629 = vmatpush1.bf16.msra.mxu0 %v1491
    %1630 = vmatprep.subr.bf16.mxu0 %v1494
    %1631 = vmatpush1.bf16.msra.mxu0 %v1493
    %1632 = vmatprep.subr.bf16.mxu0 %v1496
    %1633 = vmatpush1.bf16.msra.mxu0 %v1495
    %1634 = vmatprep.subr.bf16.mxu0 %v1498
    %1635 = vmatpush1.bf16.msra.mxu0 %v1497
    %1636 = vmatprep.subr.bf16.mxu0 %v1500
    %1637 = vmatpush1.bf16.msra.mxu0 %v1499
    %1638 = vmatprep.mubr.bf16.mxu0 %v1166
    %1639 = vmatmul.mubr.bf16.gmra.mrb[0].mxu0 %v1165
    %v1640 = vpop.f32.mrb[0].mxu0
    %v1641 = vadd.f32 %v1600, %v1640
    %v1642 = vpop.f32.mrb[0].mxu0
    %v1643 = vadd.f32 %v1602, %v1642
    %v1644 = vpop.f32.mrb[0].mxu0
    %v1645 = vpop.f32.mrb[0].mxu0
    %1646 = vdwg.mxu0
    %v1647 = vtanh.pop %v1641
    %v1648 = vtanh.pop %v1643
    %v1649 = vpack.c.bf16 %v1647, %v1647
    %v1650 = vpack.c.bf16 %v1648, %v1648
    %s1651 = scalar_lea.vmem [#allocation2], 512
    %v1652 = vld [vmem:[%s1651] sm:$0xff]
    %v1653 = vld [vmem:[%s1651 + $0x8] sm:$0xff]
    %v1654 = vld [vmem:[%s1651 + $0x10] sm:$0xff]
    %v1655 = vld [vmem:[%s1651 + $0x18] sm:$0xff]
    %v1656 = vld [vmem:[%s1651 + $0x20] sm:$0xff]
    %v1657 = vld [vmem:[%s1651 + $0x28] sm:$0xff]
    %v1658 = vld [vmem:[%s1651 + $0x30] sm:$0xff]
    %v1659 = vld [vmem:[%s1651 + $0x38] sm:$0xff]
    %v1660 = vld [vmem:[%s1651 + $0x40] sm:$0xff]
    %v1661 = vld [vmem:[%s1651 + $0x48] sm:$0xff]
    %v1662 = vld [vmem:[%s1651 + $0x50] sm:$0xff]
    %v1663 = vld [vmem:[%s1651 + $0x58] sm:$0xff]
    %v1664 = vld [vmem:[%s1651 + $0x60] sm:$0xff]
    %v1665 = vld [vmem:[%s1651 + $0x68] sm:$0xff]
    %v1666 = vld [vmem:[%s1651 + $0x70] sm:$0xff]
    %v1667 = vld [vmem:[%s1651 + $0x78] sm:$0xff]
    %v1668 = vld [vmem:[%s1651 + $0x80] sm:$0xff]
    %v1669 = vld [vmem:[%s1651 + $0x88] sm:$0xff]
    %v1670 = vld [vmem:[%s1651 + $0x90] sm:$0xff]
    %v1671 = vld [vmem:[%s1651 + $0x98] sm:$0xff]
    %v1672 = vld [vmem:[%s1651 + $0xa0] sm:$0xff]
    %v1673 = vld [vmem:[%s1651 + $0xa8] sm:$0xff]
    %v1674 = vld [vmem:[%s1651 + $0xb0] sm:$0xff]
    %v1675 = vld [vmem:[%s1651 + $0xb8] sm:$0xff]
    %v1676 = vld [vmem:[%s1651 + $0xc0] sm:$0xff]
    %v1677 = vld [vmem:[%s1651 + $0xc8] sm:$0xff]
    %v1678 = vld [vmem:[%s1651 + $0xd0] sm:$0xff]
    %v1679 = vld [vmem:[%s1651 + $0xd8] sm:$0xff]
    %v1680 = vld [vmem:[%s1651 + $0xe0] sm:$0xff]
    %v1681 = vld [vmem:[%s1651 + $0xe8] sm:$0xff]
    %v1682 = vld [vmem:[%s1651 + $0xf0] sm:$0xff]
    %v1683 = vld [vmem:[%s1651 + $0xf8] sm:$0xff]
    %s1684 = scalar_lea.vmem %s4, 8
    %v1685 = vld [vmem:[%s1684] sm:$0xf]
    %v1687 = vlaneseq
    %v1688 = vshrl.u32 %v1687, 7
    %v1689 = vsub.s32 0, %v1688
    %v1690 = vrot.slane %v1685, %v1689
    %v1691 = vlaneseq
    %v1692 = vshrl.u32 %v1691, 7
    %v1693 = vsub.s32 1, %v1692
    %v1694 = vrot.slane %v1685, %v1693
    %v1695 = vlaneseq
    %v1696 = vshrl.u32 %v1695, 7
    %v1697 = vsub.s32 2, %v1696
    %v1698 = vrot.slane %v1685, %v1697
    %v1699 = vlaneseq
    %v1700 = vshrl.u32 %v1699, 7
    %v1701 = vsub.s32 3, %v1700
    %v1702 = vrot.slane %v1685, %v1701
    %v1739 = vunpack.c.l.b16 %v1652
    %v1740 = vunpack.c.h.b16 %v1652
    %v1741 = vunpack.c.l.b16 %v1653
    %v1742 = vunpack.c.h.b16 %v1653
    %v1743 = vunpack.c.l.b16 %v1654
    %v1744 = vunpack.c.h.b16 %v1654
    %v1745 = vunpack.c.l.b16 %v1655
    %v1746 = vunpack.c.h.b16 %v1655
    %v1747 = vunpack.c.l.b16 %v1656
    %v1748 = vunpack.c.h.b16 %v1656
    %v1749 = vunpack.c.l.b16 %v1657
    %v1750 = vunpack.c.h.b16 %v1657
    %v1751 = vunpack.c.l.b16 %v1658
    %v1752 = vunpack.c.h.b16 %v1658
    %v1753 = vunpack.c.l.b16 %v1659
    %v1754 = vunpack.c.h.b16 %v1659
    %v1755 = vunpack.c.l.b16 %v1660
    %v1756 = vunpack.c.h.b16 %v1660
    %v1757 = vunpack.c.l.b16 %v1661
    %v1758 = vunpack.c.h.b16 %v1661
    %v1759 = vunpack.c.l.b16 %v1662
    %v1760 = vunpack.c.h.b16 %v1662
    %v1761 = vunpack.c.l.b16 %v1663
    %v1762 = vunpack.c.h.b16 %v1663
    %v1763 = vunpack.c.l.b16 %v1664
    %v1764 = vunpack.c.h.b16 %v1664
    %v1765 = vunpack.c.l.b16 %v1665
    %v1766 = vunpack.c.h.b16 %v1665
    %v1767 = vunpack.c.l.b16 %v1666
    %v1768 = vunpack.c.h.b16 %v1666
    %v1769 = vunpack.c.l.b16 %v1667
    %v1770 = vunpack.c.h.b16 %v1667
    %v1771 = vunpack.c.l.b16 %v1668
    %v1772 = vunpack.c.h.b16 %v1668
    %v1773 = vunpack.c.l.b16 %v1669
    %v1774 = vunpack.c.h.b16 %v1669
    %v1775 = vunpack.c.l.b16 %v1670
    %v1776 = vunpack.c.h.b16 %v1670
    %v1777 = vunpack.c.l.b16 %v1671
    %v1778 = vunpack.c.h.b16 %v1671
    %v1779 = vunpack.c.l.b16 %v1672
    %v1780 = vunpack.c.h.b16 %v1672
    %v1781 = vunpack.c.l.b16 %v1673
    %v1782 = vunpack.c.h.b16 %v1673
    %v1783 = vunpack.c.l.b16 %v1674
    %v1784 = vunpack.c.h.b16 %v1674
    %v1785 = vunpack.c.l.b16 %v1675
    %v1786 = vunpack.c.h.b16 %v1675
    %v1787 = vunpack.c.l.b16 %v1676
    %v1788 = vunpack.c.h.b16 %v1676
    %v1789 = vunpack.c.l.b16 %v1677
    %v1790 = vunpack.c.h.b16 %v1677
    %v1791 = vunpack.c.l.b16 %v1678
    %v1792 = vunpack.c.h.b16 %v1678
    %v1793 = vunpack.c.l.b16 %v1679
    %v1794 = vunpack.c.h.b16 %v1679
    %v1795 = vunpack.c.l.b16 %v1680
    %v1796 = vunpack.c.h.b16 %v1680
    %v1797 = vunpack.c.l.b16 %v1681
    %v1798 = vunpack.c.h.b16 %v1681
    %v1799 = vunpack.c.l.b16 %v1682
    %v1800 = vunpack.c.h.b16 %v1682
    %v1801 = vunpack.c.l.b16 %v1683
    %v1802 = vunpack.c.h.b16 %v1683
    %v1803 = vpack.c.b16 %v1743, %v1739
    %v1804 = vpack.c.b16 %v1744, %v1740
    %v1805 = vpack.c.b16 %v1745, %v1741
    %v1806 = vpack.c.b16 %v1746, %v1742
    %v1807 = vpack.c.b16 %v1751, %v1747
    %v1808 = vpack.c.b16 %v1752, %v1748
    %v1809 = vpack.c.b16 %v1753, %v1749
    %v1810 = vpack.c.b16 %v1754, %v1750
    %v1811 = vpack.c.b16 %v1759, %v1755
    %v1812 = vpack.c.b16 %v1760, %v1756
    %v1813 = vpack.c.b16 %v1761, %v1757
    %v1814 = vpack.c.b16 %v1762, %v1758
    %v1815 = vpack.c.b16 %v1767, %v1763
    %v1816 = vpack.c.b16 %v1768, %v1764
    %v1817 = vpack.c.b16 %v1769, %v1765
    %v1818 = vpack.c.b16 %v1770, %v1766
    %v1819 = vpack.c.b16 %v1775, %v1771
    %v1820 = vpack.c.b16 %v1776, %v1772
    %v1821 = vpack.c.b16 %v1777, %v1773
    %v1822 = vpack.c.b16 %v1778, %v1774
    %v1823 = vpack.c.b16 %v1783, %v1779
    %v1824 = vpack.c.b16 %v1784, %v1780
    %v1825 = vpack.c.b16 %v1785, %v1781
    %v1826 = vpack.c.b16 %v1786, %v1782
    %v1827 = vpack.c.b16 %v1791, %v1787
    %v1828 = vpack.c.b16 %v1792, %v1788
    %v1829 = vpack.c.b16 %v1793, %v1789
    %v1830 = vpack.c.b16 %v1794, %v1790
    %v1831 = vpack.c.b16 %v1799, %v1795
    %v1832 = vpack.c.b16 %v1800, %v1796
    %v1833 = vpack.c.b16 %v1801, %v1797
    %v1834 = vpack.c.b16 %v1802, %v1798
    %1867 = vmatprep.subr.bf16.mxu0 %v1804
    %1868 = vmatpush1.bf16.msra.mxu0 %v1803
    %1869 = vmatprep.subr.bf16.mxu0 %v1808
    %1870 = vmatpush1.bf16.msra.mxu0 %v1807
    %1871 = vmatprep.subr.bf16.mxu0 %v1812
    %1872 = vmatpush1.bf16.msra.mxu0 %v1811
    %1873 = vmatprep.subr.bf16.mxu0 %v1816
    %1874 = vmatpush1.bf16.msra.mxu0 %v1815
    %1875 = vmatprep.subr.bf16.mxu0 %v1820
    %1876 = vmatpush1.bf16.msra.mxu0 %v1819
    %1877 = vmatprep.subr.bf16.mxu0 %v1824
    %1878 = vmatpush1.bf16.msra.mxu0 %v1823
    %1879 = vmatprep.subr.bf16.mxu0 %v1828
    %1880 = vmatpush1.bf16.msra.mxu0 %v1827
    %1881 = vmatprep.subr.bf16.mxu0 %v1832
    %1882 = vmatpush1.bf16.msra.mxu0 %v1831
    %1883 = vmatprep.subr.bf16.mxu0 0
    %1884 = vmatpush1.bf16.msra.mxu0 0
    %1885 = vmatprep.subr.bf16.mxu0 0
    %1886 = vmatpush1.bf16.msra.mxu0 0
    %1887 = vmatprep.subr.bf16.mxu0 0
    %1888 = vmatpush1.bf16.msra.mxu0 0
    %1889 = vmatprep.subr.bf16.mxu0 0
    %1890 = vmatpush1.bf16.msra.mxu0 0
    %1891 = vmatprep.subr.bf16.mxu0 0
    %1892 = vmatpush1.bf16.msra.mxu0 0
    %1893 = vmatprep.subr.bf16.mxu0 0
    %1894 = vmatpush1.bf16.msra.mxu0 0
    %1895 = vmatprep.subr.bf16.mxu0 0
    %1896 = vmatpush1.bf16.msra.mxu0 0
    %1897 = vmatprep.subr.bf16.mxu0 0
    %1898 = vmatpush1.bf16.msra.mxu0 0
    %1899 = vmatprep.mubr.bf16.mxu0 0
    %1900 = vmatmul.mubr.bf16.gmra.mrb[0].mxu0 %v1649
    %v1901 = vpop.f32.mrb[0].mxu0
    %v1902 = vadd.f32 %v1690, %v1901
    %v1903 = vpop.f32.mrb[0].mxu0
    %v1904 = vadd.f32 %v1694, %v1903
    %v1905 = vpop.f32.mrb[0].mxu0
    %v1906 = vpop.f32.mrb[0].mxu0
    %1907 = vdwg.mxu0
    %1908 = vmatprep.subr.bf16.mxu0 %v1806
    %1909 = vmatpush1.bf16.msra.mxu0 %v1805
    %1910 = vmatprep.subr.bf16.mxu0 %v1810
    %1911 = vmatpush1.bf16.msra.mxu0 %v1809
    %1912 = vmatprep.subr.bf16.mxu0 %v1814
    %1913 = vmatpush1.bf16.msra.mxu0 %v1813
    %1914 = vmatprep.subr.bf16.mxu0 %v1818
    %1915 = vmatpush1.bf16.msra.mxu0 %v1817
    %1916 = vmatprep.subr.bf16.mxu0 %v1822
    %1917 = vmatpush1.bf16.msra.mxu0 %v1821
    %1918 = vmatprep.subr.bf16.mxu0 %v1826
    %1919 = vmatpush1.bf16.msra.mxu0 %v1825
    %1920 = vmatprep.subr.bf16.mxu0 %v1830
    %1921 = vmatpush1.bf16.msra.mxu0 %v1829
    %1922 = vmatprep.subr.bf16.mxu0 %v1834
    %1923 = vmatpush1.bf16.msra.mxu0 %v1833
    %1924 = vmatprep.subr.bf16.mxu0 0
    %1925 = vmatpush1.bf16.msra.mxu0 0
    %1926 = vmatprep.subr.bf16.mxu0 0
    %1927 = vmatpush1.bf16.msra.mxu0 0
    %1928 = vmatprep.subr.bf16.mxu0 0
    %1929 = vmatpush1.bf16.msra.mxu0 0
    %1930 = vmatprep.subr.bf16.mxu0 0
    %1931 = vmatpush1.bf16.msra.mxu0 0
    %1932 = vmatprep.subr.bf16.mxu0 0
    %1933 = vmatpush1.bf16.msra.mxu0 0
    %1934 = vmatprep.subr.bf16.mxu0 0
    %1935 = vmatpush1.bf16.msra.mxu0 0
    %1936 = vmatprep.subr.bf16.mxu0 0
    %1937 = vmatpush1.bf16.msra.mxu0 0
    %1938 = vmatprep.subr.bf16.mxu0 0
    %1939 = vmatpush1.bf16.msra.mxu0 0
    %1940 = vmatprep.mubr.bf16.mxu0 0
    %1941 = vmatmul.mubr.bf16.gmra.mrb[0].mxu0 %v1649
    %v1942 = vpop.f32.mrb[0].mxu0
    %v1943 = vadd.f32 %v1698, %v1942
    %v1944 = vpop.f32.mrb[0].mxu0
    %v1945 = vadd.f32 %v1702, %v1944
    %v1946 = vpop.f32.mrb[0].mxu0
    %v1947 = vpop.f32.mrb[0].mxu0
    %1948 = vdwg.mxu0
    %s1949 = scalar_lea.vmem [#allocation4], 512
    %v1950 = vld [vmem:[%s1949] sm:$0xff]
    %v1951 = vld [vmem:[%s1949 + $0x8] sm:$0xff]
    %v1952 = vld [vmem:[%s1949 + $0x10] sm:$0xff]
    %v1953 = vld [vmem:[%s1949 + $0x18] sm:$0xff]
    %v1954 = vld [vmem:[%s1949 + $0x20] sm:$0xff]
    %v1955 = vld [vmem:[%s1949 + $0x28] sm:$0xff]
    %v1956 = vld [vmem:[%s1949 + $0x30] sm:$0xff]
    %v1957 = vld [vmem:[%s1949 + $0x38] sm:$0xff]
    %v1958 = vld [vmem:[%s1949 + $0x40] sm:$0xff]
    %v1959 = vld [vmem:[%s1949 + $0x48] sm:$0xff]
    %v1960 = vld [vmem:[%s1949 + $0x50] sm:$0xff]
    %v1961 = vld [vmem:[%s1949 + $0x58] sm:$0xff]
    %v1962 = vld [vmem:[%s1949 + $0x60] sm:$0xff]
    %v1963 = vld [vmem:[%s1949 + $0x68] sm:$0xff]
    %v1964 = vld [vmem:[%s1949 + $0x70] sm:$0xff]
    %v1965 = vld [vmem:[%s1949 + $0x78] sm:$0xff]
    %v1966 = vld [vmem:[%s1949 + $0x80] sm:$0xff]
    %v1967 = vld [vmem:[%s1949 + $0x88] sm:$0xff]
    %v1968 = vld [vmem:[%s1949 + $0x90] sm:$0xff]
    %v1969 = vld [vmem:[%s1949 + $0x98] sm:$0xff]
    %v1970 = vld [vmem:[%s1949 + $0xa0] sm:$0xff]
    %v1971 = vld [vmem:[%s1949 + $0xa8] sm:$0xff]
    %v1972 = vld [vmem:[%s1949 + $0xb0] sm:$0xff]
    %v1973 = vld [vmem:[%s1949 + $0xb8] sm:$0xff]
    %v1974 = vld [vmem:[%s1949 + $0xc0] sm:$0xff]
    %v1975 = vld [vmem:[%s1949 + $0xc8] sm:$0xff]
    %v1976 = vld [vmem:[%s1949 + $0xd0] sm:$0xff]
    %v1977 = vld [vmem:[%s1949 + $0xd8] sm:$0xff]
    %v1978 = vld [vmem:[%s1949 + $0xe0] sm:$0xff]
    %v1979 = vld [vmem:[%s1949 + $0xe8] sm:$0xff]
    %v1980 = vld [vmem:[%s1949 + $0xf0] sm:$0xff]
    %v1981 = vld [vmem:[%s1949 + $0xf8] sm:$0xff]
    %s1982 = scalar_lea.vmem %s6, 8
    %v1983 = vld [vmem:[%s1982] sm:$0xf]
    %v1985 = vlaneseq
    %v1986 = vshrl.u32 %v1985, 7
    %v1987 = vsub.s32 0, %v1986
    %v1988 = vrot.slane %v1983, %v1987
    %v1989 = vlaneseq
    %v1990 = vshrl.u32 %v1989, 7
    %v1991 = vsub.s32 1, %v1990
    %v1992 = vrot.slane %v1983, %v1991
    %v1993 = vlaneseq
    %v1994 = vshrl.u32 %v1993, 7
    %v1995 = vsub.s32 2, %v1994
    %v1996 = vrot.slane %v1983, %v1995
    %v1997 = vlaneseq
    %v1998 = vshrl.u32 %v1997, 7
    %v1999 = vsub.s32 3, %v1998
    %v2000 = vrot.slane %v1983, %v1999
    %v2037 = vunpack.c.l.b16 %v1950
    %v2038 = vunpack.c.h.b16 %v1950
    %v2039 = vunpack.c.l.b16 %v1951
    %v2040 = vunpack.c.h.b16 %v1951
    %v2041 = vunpack.c.l.b16 %v1952
    %v2042 = vunpack.c.h.b16 %v1952
    %v2043 = vunpack.c.l.b16 %v1953
    %v2044 = vunpack.c.h.b16 %v1953
    %v2045 = vunpack.c.l.b16 %v1954
    %v2046 = vunpack.c.h.b16 %v1954
    %v2047 = vunpack.c.l.b16 %v1955
    %v2048 = vunpack.c.h.b16 %v1955
    %v2049 = vunpack.c.l.b16 %v1956
    %v2050 = vunpack.c.h.b16 %v1956
    %v2051 = vunpack.c.l.b16 %v1957
    %v2052 = vunpack.c.h.b16 %v1957
    %v2053 = vunpack.c.l.b16 %v1958
    %v2054 = vunpack.c.h.b16 %v1958
    %v2055 = vunpack.c.l.b16 %v1959
    %v2056 = vunpack.c.h.b16 %v1959
    %v2057 = vunpack.c.l.b16 %v1960
    %v2058 = vunpack.c.h.b16 %v1960
    %v2059 = vunpack.c.l.b16 %v1961
    %v2060 = vunpack.c.h.b16 %v1961
    %v2061 = vunpack.c.l.b16 %v1962
    %v2062 = vunpack.c.h.b16 %v1962
    %v2063 = vunpack.c.l.b16 %v1963
    %v2064 = vunpack.c.h.b16 %v1963
    %v2065 = vunpack.c.l.b16 %v1964
    %v2066 = vunpack.c.h.b16 %v1964
    %v2067 = vunpack.c.l.b16 %v1965
    %v2068 = vunpack.c.h.b16 %v1965
    %v2069 = vunpack.c.l.b16 %v1966
    %v2070 = vunpack.c.h.b16 %v1966
    %v2071 = vunpack.c.l.b16 %v1967
    %v2072 = vunpack.c.h.b16 %v1967
    %v2073 = vunpack.c.l.b16 %v1968
    %v2074 = vunpack.c.h.b16 %v1968
    %v2075 = vunpack.c.l.b16 %v1969
    %v2076 = vunpack.c.h.b16 %v1969
    %v2077 = vunpack.c.l.b16 %v1970
    %v2078 = vunpack.c.h.b16 %v1970
    %v2079 = vunpack.c.l.b16 %v1971
    %v2080 = vunpack.c.h.b16 %v1971
    %v2081 = vunpack.c.l.b16 %v1972
    %v2082 = vunpack.c.h.b16 %v1972
    %v2083 = vunpack.c.l.b16 %v1973
    %v2084 = vunpack.c.h.b16 %v1973
    %v2085 = vunpack.c.l.b16 %v1974
    %v2086 = vunpack.c.h.b16 %v1974
    %v2087 = vunpack.c.l.b16 %v1975
    %v2088 = vunpack.c.h.b16 %v1975
    %v2089 = vunpack.c.l.b16 %v1976
    %v2090 = vunpack.c.h.b16 %v1976
    %v2091 = vunpack.c.l.b16 %v1977
    %v2092 = vunpack.c.h.b16 %v1977
    %v2093 = vunpack.c.l.b16 %v1978
    %v2094 = vunpack.c.h.b16 %v1978
    %v2095 = vunpack.c.l.b16 %v1979
    %v2096 = vunpack.c.h.b16 %v1979
    %v2097 = vunpack.c.l.b16 %v1980
    %v2098 = vunpack.c.h.b16 %v1980
    %v2099 = vunpack.c.l.b16 %v1981
    %v2100 = vunpack.c.h.b16 %v1981
    %v2101 = vpack.c.b16 %v2041, %v2037
    %v2102 = vpack.c.b16 %v2042, %v2038
    %v2103 = vpack.c.b16 %v2043, %v2039
    %v2104 = vpack.c.b16 %v2044, %v2040
    %v2105 = vpack.c.b16 %v2049, %v2045
    %v2106 = vpack.c.b16 %v2050, %v2046
    %v2107 = vpack.c.b16 %v2051, %v2047
    %v2108 = vpack.c.b16 %v2052, %v2048
    %v2109 = vpack.c.b16 %v2057, %v2053
    %v2110 = vpack.c.b16 %v2058, %v2054
    %v2111 = vpack.c.b16 %v2059, %v2055
    %v2112 = vpack.c.b16 %v2060, %v2056
    %v2113 = vpack.c.b16 %v2065, %v2061
    %v2114 = vpack.c.b16 %v2066, %v2062
    %v2115 = vpack.c.b16 %v2067, %v2063
    %v2116 = vpack.c.b16 %v2068, %v2064
    %v2117 = vpack.c.b16 %v2073, %v2069
    %v2118 = vpack.c.b16 %v2074, %v2070
    %v2119 = vpack.c.b16 %v2075, %v2071
    %v2120 = vpack.c.b16 %v2076, %v2072
    %v2121 = vpack.c.b16 %v2081, %v2077
    %v2122 = vpack.c.b16 %v2082, %v2078
    %v2123 = vpack.c.b16 %v2083, %v2079
    %v2124 = vpack.c.b16 %v2084, %v2080
    %v2125 = vpack.c.b16 %v2089, %v2085
    %v2126 = vpack.c.b16 %v2090, %v2086
    %v2127 = vpack.c.b16 %v2091, %v2087
    %v2128 = vpack.c.b16 %v2092, %v2088
    %v2129 = vpack.c.b16 %v2097, %v2093
    %v2130 = vpack.c.b16 %v2098, %v2094
    %v2131 = vpack.c.b16 %v2099, %v2095
    %v2132 = vpack.c.b16 %v2100, %v2096
    %2165 = vmatprep.subr.bf16.mxu0 %v2102
    %2166 = vmatpush1.bf16.msra.mxu0 %v2101
    %2167 = vmatprep.subr.bf16.mxu0 %v2106
    %2168 = vmatpush1.bf16.msra.mxu0 %v2105
    %2169 = vmatprep.subr.bf16.mxu0 %v2110
    %2170 = vmatpush1.bf16.msra.mxu0 %v2109
    %2171 = vmatprep.subr.bf16.mxu0 %v2114
    %2172 = vmatpush1.bf16.msra.mxu0 %v2113
    %2173 = vmatprep.subr.bf16.mxu0 %v2118
    %2174 = vmatpush1.bf16.msra.mxu0 %v2117
    %2175 = vmatprep.subr.bf16.mxu0 %v2122
    %2176 = vmatpush1.bf16.msra.mxu0 %v2121
    %2177 = vmatprep.subr.bf16.mxu0 %v2126
    %2178 = vmatpush1.bf16.msra.mxu0 %v2125
    %2179 = vmatprep.subr.bf16.mxu0 %v2130
    %2180 = vmatpush1.bf16.msra.mxu0 %v2129
    %2181 = vmatprep.subr.bf16.mxu0 0
    %2182 = vmatpush1.bf16.msra.mxu0 0
    %2183 = vmatprep.subr.bf16.mxu0 0
    %2184 = vmatpush1.bf16.msra.mxu0 0
    %2185 = vmatprep.subr.bf16.mxu0 0
    %2186 = vmatpush1.bf16.msra.mxu0 0
    %2187 = vmatprep.subr.bf16.mxu0 0
    %2188 = vmatpush1.bf16.msra.mxu0 0
    %2189 = vmatprep.subr.bf16.mxu0 0
    %2190 = vmatpush1.bf16.msra.mxu0 0
    %2191 = vmatprep.subr.bf16.mxu0 0
    %2192 = vmatpush1.bf16.msra.mxu0 0
    %2193 = vmatprep.subr.bf16.mxu0 0
    %2194 = vmatpush1.bf16.msra.mxu0 0
    %2195 = vmatprep.subr.bf16.mxu0 0
    %2196 = vmatpush1.bf16.msra.mxu0 0
    %2197 = vmatprep.mubr.bf16.mxu0 0
    %2198 = vmatmul.mubr.bf16.gmra.mrb[0].mxu0 %v1650
    %v2199 = vpop.f32.mrb[0].mxu0
    %v2200 = vadd.f32 %v1988, %v2199
    %v2201 = vpop.f32.mrb[0].mxu0
    %v2202 = vadd.f32 %v1992, %v2201
    %v2203 = vpop.f32.mrb[0].mxu0
    %v2204 = vpop.f32.mrb[0].mxu0
    %2205 = vdwg.mxu0
    %2206 = vmatprep.subr.bf16.mxu0 %v2104
    %2207 = vmatpush1.bf16.msra.mxu0 %v2103
    %2208 = vmatprep.subr.bf16.mxu0 %v2108
    %2209 = vmatpush1.bf16.msra.mxu0 %v2107
    %2210 = vmatprep.subr.bf16.mxu0 %v2112
    %2211 = vmatpush1.bf16.msra.mxu0 %v2111
    %2212 = vmatprep.subr.bf16.mxu0 %v2116
    %2213 = vmatpush1.bf16.msra.mxu0 %v2115
    %2214 = vmatprep.subr.bf16.mxu0 %v2120
    %2215 = vmatpush1.bf16.msra.mxu0 %v2119
    %2216 = vmatprep.subr.bf16.mxu0 %v2124
    %2217 = vmatpush1.bf16.msra.mxu0 %v2123
    %2218 = vmatprep.subr.bf16.mxu0 %v2128
    %2219 = vmatpush1.bf16.msra.mxu0 %v2127
    %2220 = vmatprep.subr.bf16.mxu0 %v2132
    %2221 = vmatpush1.bf16.msra.mxu0 %v2131
    %2222 = vmatprep.subr.bf16.mxu0 0
    %2223 = vmatpush1.bf16.msra.mxu0 0
    %2224 = vmatprep.subr.bf16.mxu0 0
    %2225 = vmatpush1.bf16.msra.mxu0 0
    %2226 = vmatprep.subr.bf16.mxu0 0
    %2227 = vmatpush1.bf16.msra.mxu0 0
    %2228 = vmatprep.subr.bf16.mxu0 0
    %2229 = vmatpush1.bf16.msra.mxu0 0
    %2230 = vmatprep.subr.bf16.mxu0 0
    %2231 = vmatpush1.bf16.msra.mxu0 0
    %2232 = vmatprep.subr.bf16.mxu0 0
    %2233 = vmatpush1.bf16.msra.mxu0 0
    %2234 = vmatprep.subr.bf16.mxu0 0
    %2235 = vmatpush1.bf16.msra.mxu0 0
    %2236 = vmatprep.subr.bf16.mxu0 0
    %2237 = vmatpush1.bf16.msra.mxu0 0
    %2238 = vmatprep.mubr.bf16.mxu0 0
    %2239 = vmatmul.mubr.bf16.gmra.mrb[0].mxu0 %v1650
    %v2240 = vpop.f32.mrb[0].mxu0
    %v2241 = vadd.f32 %v1996, %v2240
    %v2242 = vpop.f32.mrb[0].mxu0
    %v2243 = vadd.f32 %v2000, %v2242
    %v2244 = vpop.f32.mrb[0].mxu0
    %v2245 = vpop.f32.mrb[0].mxu0
    %2246 = vdwg.mxu0
    %v2247 = vsub.f32 %v59, %v2200
    %v2248 = vsub.f32 %v60, %v2202
    %v2249 = vsub.f32 %v61, %v2241
    %v2250 = vsub.f32 %v62, %v2243
    %v2251 = vmul.f32 %v1902, 1.442695
    %v2252 = vpow.pop %v2251
    %v2253 = vmul.f32 %v1904, 1.442695
    %v2254 = vpow.pop %v2253
    %v2255 = vmul.f32 %v1943, 1.442695
    %v2256 = vpow.pop %v2255
    %v2257 = vmul.f32 %v1945, 1.442695
    %v2258 = vpow.pop %v2257
    %v2259 = vmul.f32 %v2247, %v2252
    %v2260 = vmul.f32 %v2248, %v2254
    %v2261 = vmul.f32 %v2249, %v2256
    %v2262 = vmul.f32 %v2250, %v2258
    %v2263 = vpack.c.bf16 %v2259, %v2259
    %v2264 = vpack.c.bf16 %v2260, %v2260
    %v2265 = vpack.c.bf16 %v2261, %v2261
    %v2266 = vpack.c.bf16 %v2262, %v2262
    %s2267 = scalar_lea.vmem %s1, 512
    %v2268 = vld [vmem:[%s2267] sm:$0xff]
    %v2269 = vld [vmem:[%s2267 + $0x8] sm:$0xff]
    %v2270 = vld [vmem:[%s2267 + $0x10] sm:$0xff]
    %v2271 = vld [vmem:[%s2267 + $0x18] sm:$0xff]
    %v2272 = vld [vmem:[%s2267 + $0x20] sm:$0xff]
    %v2273 = vld [vmem:[%s2267 + $0x28] sm:$0xff]
    %v2274 = vld [vmem:[%s2267 + $0x30] sm:$0xff]
    %v2275 = vld [vmem:[%s2267 + $0x38] sm:$0xff]
    %v2276 = vld [vmem:[%s2267 + $0x40] sm:$0xff]
    %v2277 = vld [vmem:[%s2267 + $0x48] sm:$0xff]
    %v2278 = vld [vmem:[%s2267 + $0x50] sm:$0xff]
    %v2279 = vld [vmem:[%s2267 + $0x58] sm:$0xff]
    %v2280 = vld [vmem:[%s2267 + $0x60] sm:$0xff]
    %v2281 = vld [vmem:[%s2267 + $0x68] sm:$0xff]
    %v2282 = vld [vmem:[%s2267 + $0x70] sm:$0xff]
    %v2283 = vld [vmem:[%s2267 + $0x78] sm:$0xff]
    %v2284 = vld [vmem:[%s2267 + $0x80] sm:$0xff]
    %v2285 = vld [vmem:[%s2267 + $0x88] sm:$0xff]
    %v2286 = vld [vmem:[%s2267 + $0x90] sm:$0xff]
    %v2287 = vld [vmem:[%s2267 + $0x98] sm:$0xff]
    %v2288 = vld [vmem:[%s2267 + $0xa0] sm:$0xff]
    %v2289 = vld [vmem:[%s2267 + $0xa8] sm:$0xff]
    %v2290 = vld [vmem:[%s2267 + $0xb0] sm:$0xff]
    %v2291 = vld [vmem:[%s2267 + $0xb8] sm:$0xff]
    %v2292 = vld [vmem:[%s2267 + $0xc0] sm:$0xff]
    %v2293 = vld [vmem:[%s2267 + $0xc8] sm:$0xff]
    %v2294 = vld [vmem:[%s2267 + $0xd0] sm:$0xff]
    %v2295 = vld [vmem:[%s2267 + $0xd8] sm:$0xff]
    %v2296 = vld [vmem:[%s2267 + $0xe0] sm:$0xff]
    %v2297 = vld [vmem:[%s2267 + $0xe8] sm:$0xff]
    %v2298 = vld [vmem:[%s2267 + $0xf0] sm:$0xff]
    %v2299 = vld [vmem:[%s2267 + $0xf8] sm:$0xff]
    %v2300 = vld [vmem:[%s2267 + $0x100] sm:$0xff]
    %v2301 = vld [vmem:[%s2267 + $0x108] sm:$0xff]
    %v2302 = vld [vmem:[%s2267 + $0x110] sm:$0xff]
    %v2303 = vld [vmem:[%s2267 + $0x118] sm:$0xff]
    %v2304 = vld [vmem:[%s2267 + $0x120] sm:$0xff]
    %v2305 = vld [vmem:[%s2267 + $0x128] sm:$0xff]
    %v2306 = vld [vmem:[%s2267 + $0x130] sm:$0xff]
    %v2307 = vld [vmem:[%s2267 + $0x138] sm:$0xff]
    %v2308 = vld [vmem:[%s2267 + $0x140] sm:$0xff]
    %v2309 = vld [vmem:[%s2267 + $0x148] sm:$0xff]
    %v2310 = vld [vmem:[%s2267 + $0x150] sm:$0xff]
    %v2311 = vld [vmem:[%s2267 + $0x158] sm:$0xff]
    %v2312 = vld [vmem:[%s2267 + $0x160] sm:$0xff]
    %v2313 = vld [vmem:[%s2267 + $0x168] sm:$0xff]
    %v2314 = vld [vmem:[%s2267 + $0x170] sm:$0xff]
    %v2315 = vld [vmem:[%s2267 + $0x178] sm:$0xff]
    %v2316 = vld [vmem:[%s2267 + $0x180] sm:$0xff]
    %v2317 = vld [vmem:[%s2267 + $0x188] sm:$0xff]
    %v2318 = vld [vmem:[%s2267 + $0x190] sm:$0xff]
    %v2319 = vld [vmem:[%s2267 + $0x198] sm:$0xff]
    %v2320 = vld [vmem:[%s2267 + $0x1a0] sm:$0xff]
    %v2321 = vld [vmem:[%s2267 + $0x1a8] sm:$0xff]
    %v2322 = vld [vmem:[%s2267 + $0x1b0] sm:$0xff]
    %v2323 = vld [vmem:[%s2267 + $0x1b8] sm:$0xff]
    %v2324 = vld [vmem:[%s2267 + $0x1c0] sm:$0xff]
    %v2325 = vld [vmem:[%s2267 + $0x1c8] sm:$0xff]
    %v2326 = vld [vmem:[%s2267 + $0x1d0] sm:$0xff]
    %v2327 = vld [vmem:[%s2267 + $0x1d8] sm:$0xff]
    %v2328 = vld [vmem:[%s2267 + $0x1e0] sm:$0xff]
    %v2329 = vld [vmem:[%s2267 + $0x1e8] sm:$0xff]
    %v2330 = vld [vmem:[%s2267 + $0x1f0] sm:$0xff]
    %v2331 = vld [vmem:[%s2267 + $0x1f8] sm:$0xff]
    %s2332 = scalar_lea.vmem %s2, 2
    %v2333 = vld [vmem:[%s2332] sm:$0x3]
    %v2335 = vlaneseq
    %v2336 = vshrl.u32 %v2335, 7
    %v2337 = vsub.s32 0, %v2336
    %v2338 = vrot.slane %v2333, %v2337
    %v2339 = vlaneseq
    %v2340 = vshrl.u32 %v2339, 7
    %v2341 = vsub.s32 1, %v2340
    %v2342 = vrot.slane %v2333, %v2341
    %v2409 = vunpack.c.l.b16 %v2268
    %v2410 = vunpack.c.h.b16 %v2268
    %v2411 = vunpack.c.l.b16 %v2269
    %v2412 = vunpack.c.h.b16 %v2269
    %v2413 = vunpack.c.l.b16 %v2270
    %v2414 = vunpack.c.h.b16 %v2270
    %v2415 = vunpack.c.l.b16 %v2271
    %v2416 = vunpack.c.h.b16 %v2271
    %v2417 = vunpack.c.l.b16 %v2272
    %v2418 = vunpack.c.h.b16 %v2272
    %v2419 = vunpack.c.l.b16 %v2273
    %v2420 = vunpack.c.h.b16 %v2273
    %v2421 = vunpack.c.l.b16 %v2274
    %v2422 = vunpack.c.h.b16 %v2274
    %v2423 = vunpack.c.l.b16 %v2275
    %v2424 = vunpack.c.h.b16 %v2275
    %v2425 = vunpack.c.l.b16 %v2276
    %v2426 = vunpack.c.h.b16 %v2276
    %v2427 = vunpack.c.l.b16 %v2277
    %v2428 = vunpack.c.h.b16 %v2277
    %v2429 = vunpack.c.l.b16 %v2278
    %v2430 = vunpack.c.h.b16 %v2278
    %v2431 = vunpack.c.l.b16 %v2279
    %v2432 = vunpack.c.h.b16 %v2279
    %v2433 = vunpack.c.l.b16 %v2280
    %v2434 = vunpack.c.h.b16 %v2280
    %v2435 = vunpack.c.l.b16 %v2281
    %v2436 = vunpack.c.h.b16 %v2281
    %v2437 = vunpack.c.l.b16 %v2282
    %v2438 = vunpack.c.h.b16 %v2282
    %v2439 = vunpack.c.l.b16 %v2283
    %v2440 = vunpack.c.h.b16 %v2283
    %v2441 = vunpack.c.l.b16 %v2284
    %v2442 = vunpack.c.h.b16 %v2284
    %v2443 = vunpack.c.l.b16 %v2285
    %v2444 = vunpack.c.h.b16 %v2285
    %v2445 = vunpack.c.l.b16 %v2286
    %v2446 = vunpack.c.h.b16 %v2286
    %v2447 = vunpack.c.l.b16 %v2287
    %v2448 = vunpack.c.h.b16 %v2287
    %v2449 = vunpack.c.l.b16 %v2288
    %v2450 = vunpack.c.h.b16 %v2288
    %v2451 = vunpack.c.l.b16 %v2289
    %v2452 = vunpack.c.h.b16 %v2289
    %v2453 = vunpack.c.l.b16 %v2290
    %v2454 = vunpack.c.h.b16 %v2290
    %v2455 = vunpack.c.l.b16 %v2291
    %v2456 = vunpack.c.h.b16 %v2291
    %v2457 = vunpack.c.l.b16 %v2292
    %v2458 = vunpack.c.h.b16 %v2292
    %v2459 = vunpack.c.l.b16 %v2293
    %v2460 = vunpack.c.h.b16 %v2293
    %v2461 = vunpack.c.l.b16 %v2294
    %v2462 = vunpack.c.h.b16 %v2294
    %v2463 = vunpack.c.l.b16 %v2295
    %v2464 = vunpack.c.h.b16 %v2295
    %v2465 = vunpack.c.l.b16 %v2296
    %v2466 = vunpack.c.h.b16 %v2296
    %v2467 = vunpack.c.l.b16 %v2297
    %v2468 = vunpack.c.h.b16 %v2297
    %v2469 = vunpack.c.l.b16 %v2298
    %v2470 = vunpack.c.h.b16 %v2298
    %v2471 = vunpack.c.l.b16 %v2299
    %v2472 = vunpack.c.h.b16 %v2299
    %v2473 = vunpack.c.l.b16 %v2300
    %v2474 = vunpack.c.h.b16 %v2300
    %v2475 = vunpack.c.l.b16 %v2301
    %v2476 = vunpack.c.h.b16 %v2301
    %v2477 = vunpack.c.l.b16 %v2302
    %v2478 = vunpack.c.h.b16 %v2302
    %v2479 = vunpack.c.l.b16 %v2303
    %v2480 = vunpack.c.h.b16 %v2303
    %v2481 = vunpack.c.l.b16 %v2304
    %v2482 = vunpack.c.h.b16 %v2304
    %v2483 = vunpack.c.l.b16 %v2305
    %v2484 = vunpack.c.h.b16 %v2305
    %v2485 = vunpack.c.l.b16 %v2306
    %v2486 = vunpack.c.h.b16 %v2306
    %v2487 = vunpack.c.l.b16 %v2307
    %v2488 = vunpack.c.h.b16 %v2307
    %v2489 = vunpack.c.l.b16 %v2308
    %v2490 = vunpack.c.h.b16 %v2308
    %v2491 = vunpack.c.l.b16 %v2309
    %v2492 = vunpack.c.h.b16 %v2309
    %v2493 = vunpack.c.l.b16 %v2310
    %v2494 = vunpack.c.h.b16 %v2310
    %v2495 = vunpack.c.l.b16 %v2311
    %v2496 = vunpack.c.h.b16 %v2311
    %v2497 = vunpack.c.l.b16 %v2312
    %v2498 = vunpack.c.h.b16 %v2312
    %v2499 = vunpack.c.l.b16 %v2313
    %v2500 = vunpack.c.h.b16 %v2313
    %v2501 = vunpack.c.l.b16 %v2314
    %v2502 = vunpack.c.h.b16 %v2314
    %v2503 = vunpack.c.l.b16 %v2315
    %v2504 = vunpack.c.h.b16 %v2315
    %v2505 = vunpack.c.l.b16 %v2316
    %v2506 = vunpack.c.h.b16 %v2316
    %v2507 = vunpack.c.l.b16 %v2317
    %v2508 = vunpack.c.h.b16 %v2317
    %v2509 = vunpack.c.l.b16 %v2318
    %v2510 = vunpack.c.h.b16 %v2318
    %v2511 = vunpack.c.l.b16 %v2319
    %v2512 = vunpack.c.h.b16 %v2319
    %v2513 = vunpack.c.l.b16 %v2320
    %v2514 = vunpack.c.h.b16 %v2320
    %v2515 = vunpack.c.l.b16 %v2321
    %v2516 = vunpack.c.h.b16 %v2321
    %v2517 = vunpack.c.l.b16 %v2322
    %v2518 = vunpack.c.h.b16 %v2322
    %v2519 = vunpack.c.l.b16 %v2323
    %v2520 = vunpack.c.h.b16 %v2323
    %v2521 = vunpack.c.l.b16 %v2324
    %v2522 = vunpack.c.h.b16 %v2324
    %v2523 = vunpack.c.l.b16 %v2325
    %v2524 = vunpack.c.h.b16 %v2325
    %v2525 = vunpack.c.l.b16 %v2326
    %v2526 = vunpack.c.h.b16 %v2326
    %v2527 = vunpack.c.l.b16 %v2327
    %v2528 = vunpack.c.h.b16 %v2327
    %v2529 = vunpack.c.l.b16 %v2328
    %v2530 = vunpack.c.h.b16 %v2328
    %v2531 = vunpack.c.l.b16 %v2329
    %v2532 = vunpack.c.h.b16 %v2329
    %v2533 = vunpack.c.l.b16 %v2330
    %v2534 = vunpack.c.h.b16 %v2330
    %v2535 = vunpack.c.l.b16 %v2331
    %v2536 = vunpack.c.h.b16 %v2331
    %v2537 = vpack.c.b16 %v2411, %v2409
    %v2538 = vpack.c.b16 %v2412, %v2410
    %v2539 = vpack.c.b16 %v2415, %v2413
    %v2540 = vpack.c.b16 %v2416, %v2414
    %v2541 = vpack.c.b16 %v2419, %v2417
    %v2542 = vpack.c.b16 %v2420, %v2418
    %v2543 = vpack.c.b16 %v2423, %v2421
    %v2544 = vpack.c.b16 %v2424, %v2422
    %v2545 = vpack.c.b16 %v2427, %v2425
    %v2546 = vpack.c.b16 %v2428, %v2426
    %v2547 = vpack.c.b16 %v2431, %v2429
    %v2548 = vpack.c.b16 %v2432, %v2430
    %v2549 = vpack.c.b16 %v2435, %v2433
    %v2550 = vpack.c.b16 %v2436, %v2434
    %v2551 = vpack.c.b16 %v2439, %v2437
    %v2552 = vpack.c.b16 %v2440, %v2438
    %v2553 = vpack.c.b16 %v2443, %v2441
    %v2554 = vpack.c.b16 %v2444, %v2442
    %v2555 = vpack.c.b16 %v2447, %v2445
    %v2556 = vpack.c.b16 %v2448, %v2446
    %v2557 = vpack.c.b16 %v2451, %v2449
    %v2558 = vpack.c.b16 %v2452, %v2450
    %v2559 = vpack.c.b16 %v2455, %v2453
    %v2560 = vpack.c.b16 %v2456, %v2454
    %v2561 = vpack.c.b16 %v2459, %v2457
    %v2562 = vpack.c.b16 %v2460, %v2458
    %v2563 = vpack.c.b16 %v2463, %v2461
    %v2564 = vpack.c.b16 %v2464, %v2462
    %v2565 = vpack.c.b16 %v2467, %v2465
    %v2566 = vpack.c.b16 %v2468, %v2466
    %v2567 = vpack.c.b16 %v2471, %v2469
    %v2568 = vpack.c.b16 %v2472, %v2470
    %v2569 = vpack.c.b16 %v2475, %v2473
    %v2570 = vpack.c.b16 %v2476, %v2474
    %v2571 = vpack.c.b16 %v2479, %v2477
    %v2572 = vpack.c.b16 %v2480, %v2478
    %v2573 = vpack.c.b16 %v2483, %v2481
    %v2574 = vpack.c.b16 %v2484, %v2482
    %v2575 = vpack.c.b16 %v2487, %v2485
    %v2576 = vpack.c.b16 %v2488, %v2486
    %v2577 = vpack.c.b16 %v2491, %v2489
    %v2578 = vpack.c.b16 %v2492, %v2490
    %v2579 = vpack.c.b16 %v2495, %v2493
    %v2580 = vpack.c.b16 %v2496, %v2494
    %v2581 = vpack.c.b16 %v2499, %v2497
    %v2582 = vpack.c.b16 %v2500, %v2498
    %v2583 = vpack.c.b16 %v2503, %v2501
    %v2584 = vpack.c.b16 %v2504, %v2502
    %v2585 = vpack.c.b16 %v2507, %v2505
    %v2586 = vpack.c.b16 %v2508, %v2506
    %v2587 = vpack.c.b16 %v2511, %v2509
    %v2588 = vpack.c.b16 %v2512, %v2510
    %v2589 = vpack.c.b16 %v2515, %v2513
    %v2590 = vpack.c.b16 %v2516, %v2514
    %v2591 = vpack.c.b16 %v2519, %v2517
    %v2592 = vpack.c.b16 %v2520, %v2518
    %v2593 = vpack.c.b16 %v2523, %v2521
    %v2594 = vpack.c.b16 %v2524, %v2522
    %v2595 = vpack.c.b16 %v2527, %v2525
    %v2596 = vpack.c.b16 %v2528, %v2526
    %v2597 = vpack.c.b16 %v2531, %v2529
    %v2598 = vpack.c.b16 %v2532, %v2530
    %v2599 = vpack.c.b16 %v2535, %v2533
    %v2600 = vpack.c.b16 %v2536, %v2534
    %2665 = vmatprep.subr.bf16.mxu0 %v2538
    %2666 = vmatpush1.bf16.msra.mxu0 %v2537
    %2667 = vmatprep.subr.bf16.mxu0 %v2540
    %2668 = vmatpush1.bf16.msra.mxu0 %v2539
    %2669 = vmatprep.subr.bf16.mxu0 %v2542
    %2670 = vmatpush1.bf16.msra.mxu0 %v2541
    %2671 = vmatprep.subr.bf16.mxu0 %v2544
    %2672 = vmatpush1.bf16.msra.mxu0 %v2543
    %2673 = vmatprep.subr.bf16.mxu0 %v2546
    %2674 = vmatpush1.bf16.msra.mxu0 %v2545
    %2675 = vmatprep.subr.bf16.mxu0 %v2548
    %2676 = vmatpush1.bf16.msra.mxu0 %v2547
    %2677 = vmatprep.subr.bf16.mxu0 %v2550
    %2678 = vmatpush1.bf16.msra.mxu0 %v2549
    %2679 = vmatprep.subr.bf16.mxu0 %v2552
    %2680 = vmatpush1.bf16.msra.mxu0 %v2551
    %2681 = vmatprep.subr.bf16.mxu0 %v2554
    %2682 = vmatpush1.bf16.msra.mxu0 %v2553
    %2683 = vmatprep.subr.bf16.mxu0 %v2556
    %2684 = vmatpush1.bf16.msra.mxu0 %v2555
    %2685 = vmatprep.subr.bf16.mxu0 %v2558
    %2686 = vmatpush1.bf16.msra.mxu0 %v2557
    %2687 = vmatprep.subr.bf16.mxu0 %v2560
    %2688 = vmatpush1.bf16.msra.mxu0 %v2559
    %2689 = vmatprep.subr.bf16.mxu0 %v2562
    %2690 = vmatpush1.bf16.msra.mxu0 %v2561
    %2691 = vmatprep.subr.bf16.mxu0 %v2564
    %2692 = vmatpush1.bf16.msra.mxu0 %v2563
    %2693 = vmatprep.subr.bf16.mxu0 %v2566
    %2694 = vmatpush1.bf16.msra.mxu0 %v2565
    %2695 = vmatprep.subr.bf16.mxu0 %v2568
    %2696 = vmatpush1.bf16.msra.mxu0 %v2567
    %2697 = vmatprep.mubr.bf16.mxu0 %v2264
    %2698 = vmatmul.mubr.bf16.gmra.mrb[0].mxu0 %v2263
    %v2699 = vpop.f32.mrb[0].mxu0
    %v2700 = vadd.f32 %v2338, %v2699
    %v2701 = vpop.f32.mrb[0].mxu0
    %v2702 = vadd.f32 %v2342, %v2701
    %v2703 = vpop.f32.mrb[0].mxu0
    %v2704 = vpop.f32.mrb[0].mxu0
    %2705 = vdwg.mxu0
    %2706 = vmatprep.subr.bf16.mxu0 %v2570
    %2707 = vmatpush1.bf16.msra.mxu0 %v2569
    %2708 = vmatprep.subr.bf16.mxu0 %v2572
    %2709 = vmatpush1.bf16.msra.mxu0 %v2571
    %2710 = vmatprep.subr.bf16.mxu0 %v2574
    %2711 = vmatpush1.bf16.msra.mxu0 %v2573
    %2712 = vmatprep.subr.bf16.mxu0 %v2576
    %2713 = vmatpush1.bf16.msra.mxu0 %v2575
    %2714 = vmatprep.subr.bf16.mxu0 %v2578
    %2715 = vmatpush1.bf16.msra.mxu0 %v2577
    %2716 = vmatprep.subr.bf16.mxu0 %v2580
    %2717 = vmatpush1.bf16.msra.mxu0 %v2579
    %2718 = vmatprep.subr.bf16.mxu0 %v2582
    %2719 = vmatpush1.bf16.msra.mxu0 %v2581
    %2720 = vmatprep.subr.bf16.mxu0 %v2584
    %2721 = vmatpush1.bf16.msra.mxu0 %v2583
    %2722 = vmatprep.subr.bf16.mxu0 %v2586
    %2723 = vmatpush1.bf16.msra.mxu0 %v2585
    %2724 = vmatprep.subr.bf16.mxu0 %v2588
    %2725 = vmatpush1.bf16.msra.mxu0 %v2587
    %2726 = vmatprep.subr.bf16.mxu0 %v2590
    %2727 = vmatpush1.bf16.msra.mxu0 %v2589
    %2728 = vmatprep.subr.bf16.mxu0 %v2592
    %2729 = vmatpush1.bf16.msra.mxu0 %v2591
    %2730 = vmatprep.subr.bf16.mxu0 %v2594
    %2731 = vmatpush1.bf16.msra.mxu0 %v2593
    %2732 = vmatprep.subr.bf16.mxu0 %v2596
    %2733 = vmatpush1.bf16.msra.mxu0 %v2595
    %2734 = vmatprep.subr.bf16.mxu0 %v2598
    %2735 = vmatpush1.bf16.msra.mxu0 %v2597
    %2736 = vmatprep.subr.bf16.mxu0 %v2600
    %2737 = vmatpush1.bf16.msra.mxu0 %v2599
    %2738 = vmatprep.mubr.bf16.mxu0 %v2266
    %2739 = vmatmul.mubr.bf16.gmra.mrb[0].mxu0 %v2265
    %v2740 = vpop.f32.mrb[0].mxu0
    %v2741 = vadd.f32 %v2700, %v2740
    %v2742 = vpop.f32.mrb[0].mxu0
    %v2743 = vadd.f32 %v2702, %v2742
    %v2744 = vpop.f32.mrb[0].mxu0
    %v2745 = vpop.f32.mrb[0].mxu0
    %2746 = vdwg.mxu0
    %v2747 = vtanh.pop %v2741
    %v2748 = vtanh.pop %v2743
    %v2749 = vpack.c.bf16 %v2747, %v2747
    %v2750 = vpack.c.bf16 %v2748, %v2748
    %s2751 = scalar_lea.vmem [#allocation2], 256
    %v2752 = vld [vmem:[%s2751] sm:$0xff]
    %v2753 = vld [vmem:[%s2751 + $0x8] sm:$0xff]
    %v2754 = vld [vmem:[%s2751 + $0x10] sm:$0xff]
    %v2755 = vld [vmem:[%s2751 + $0x18] sm:$0xff]
    %v2756 = vld [vmem:[%s2751 + $0x20] sm:$0xff]
    %v2757 = vld [vmem:[%s2751 + $0x28] sm:$0xff]
    %v2758 = vld [vmem:[%s2751 + $0x30] sm:$0xff]
    %v2759 = vld [vmem:[%s2751 + $0x38] sm:$0xff]
    %v2760 = vld [vmem:[%s2751 + $0x40] sm:$0xff]
    %v2761 = vld [vmem:[%s2751 + $0x48] sm:$0xff]
    %v2762 = vld [vmem:[%s2751 + $0x50] sm:$0xff]
    %v2763 = vld [vmem:[%s2751 + $0x58] sm:$0xff]
    %v2764 = vld [vmem:[%s2751 + $0x60] sm:$0xff]
    %v2765 = vld [vmem:[%s2751 + $0x68] sm:$0xff]
    %v2766 = vld [vmem:[%s2751 + $0x70] sm:$0xff]
    %v2767 = vld [vmem:[%s2751 + $0x78] sm:$0xff]
    %v2768 = vld [vmem:[%s2751 + $0x80] sm:$0xff]
    %v2769 = vld [vmem:[%s2751 + $0x88] sm:$0xff]
    %v2770 = vld [vmem:[%s2751 + $0x90] sm:$0xff]
    %v2771 = vld [vmem:[%s2751 + $0x98] sm:$0xff]
    %v2772 = vld [vmem:[%s2751 + $0xa0] sm:$0xff]
    %v2773 = vld [vmem:[%s2751 + $0xa8] sm:$0xff]
    %v2774 = vld [vmem:[%s2751 + $0xb0] sm:$0xff]
    %v2775 = vld [vmem:[%s2751 + $0xb8] sm:$0xff]
    %v2776 = vld [vmem:[%s2751 + $0xc0] sm:$0xff]
    %v2777 = vld [vmem:[%s2751 + $0xc8] sm:$0xff]
    %v2778 = vld [vmem:[%s2751 + $0xd0] sm:$0xff]
    %v2779 = vld [vmem:[%s2751 + $0xd8] sm:$0xff]
    %v2780 = vld [vmem:[%s2751 + $0xe0] sm:$0xff]
    %v2781 = vld [vmem:[%s2751 + $0xe8] sm:$0xff]
    %v2782 = vld [vmem:[%s2751 + $0xf0] sm:$0xff]
    %v2783 = vld [vmem:[%s2751 + $0xf8] sm:$0xff]
    %s2784 = scalar_lea.vmem %s4, 4
    %v2785 = vld [vmem:[%s2784] sm:$0xf]
    %v2787 = vlaneseq
    %v2788 = vshrl.u32 %v2787, 7
    %v2789 = vsub.s32 0, %v2788
    %v2790 = vrot.slane %v2785, %v2789
    %v2791 = vlaneseq
    %v2792 = vshrl.u32 %v2791, 7
    %v2793 = vsub.s32 1, %v2792
    %v2794 = vrot.slane %v2785, %v2793
    %v2795 = vlaneseq
    %v2796 = vshrl.u32 %v2795, 7
    %v2797 = vsub.s32 2, %v2796
    %v2798 = vrot.slane %v2785, %v2797
    %v2799 = vlaneseq
    %v2800 = vshrl.u32 %v2799, 7
    %v2801 = vsub.s32 3, %v2800
    %v2802 = vrot.slane %v2785, %v2801
    %v2839 = vunpack.c.l.b16 %v2752
    %v2840 = vunpack.c.h.b16 %v2752
    %v2841 = vunpack.c.l.b16 %v2753
    %v2842 = vunpack.c.h.b16 %v2753
    %v2843 = vunpack.c.l.b16 %v2754
    %v2844 = vunpack.c.h.b16 %v2754
    %v2845 = vunpack.c.l.b16 %v2755
    %v2846 = vunpack.c.h.b16 %v2755
    %v2847 = vunpack.c.l.b16 %v2756
    %v2848 = vunpack.c.h.b16 %v2756
    %v2849 = vunpack.c.l.b16 %v2757
    %v2850 = vunpack.c.h.b16 %v2757
    %v2851 = vunpack.c.l.b16 %v2758
    %v2852 = vunpack.c.h.b16 %v2758
    %v2853 = vunpack.c.l.b16 %v2759
    %v2854 = vunpack.c.h.b16 %v2759
    %v2855 = vunpack.c.l.b16 %v2760
    %v2856 = vunpack.c.h.b16 %v2760
    %v2857 = vunpack.c.l.b16 %v2761
    %v2858 = vunpack.c.h.b16 %v2761
    %v2859 = vunpack.c.l.b16 %v2762
    %v2860 = vunpack.c.h.b16 %v2762
    %v2861 = vunpack.c.l.b16 %v2763
    %v2862 = vunpack.c.h.b16 %v2763
    %v2863 = vunpack.c.l.b16 %v2764
    %v2864 = vunpack.c.h.b16 %v2764
    %v2865 = vunpack.c.l.b16 %v2765
    %v2866 = vunpack.c.h.b16 %v2765
    %v2867 = vunpack.c.l.b16 %v2766
    %v2868 = vunpack.c.h.b16 %v2766
    %v2869 = vunpack.c.l.b16 %v2767
    %v2870 = vunpack.c.h.b16 %v2767
    %v2871 = vunpack.c.l.b16 %v2768
    %v2872 = vunpack.c.h.b16 %v2768
    %v2873 = vunpack.c.l.b16 %v2769
    %v2874 = vunpack.c.h.b16 %v2769
    %v2875 = vunpack.c.l.b16 %v2770
    %v2876 = vunpack.c.h.b16 %v2770
    %v2877 = vunpack.c.l.b16 %v2771
    %v2878 = vunpack.c.h.b16 %v2771
    %v2879 = vunpack.c.l.b16 %v2772
    %v2880 = vunpack.c.h.b16 %v2772
    %v2881 = vunpack.c.l.b16 %v2773
    %v2882 = vunpack.c.h.b16 %v2773
    %v2883 = vunpack.c.l.b16 %v2774
    %v2884 = vunpack.c.h.b16 %v2774
    %v2885 = vunpack.c.l.b16 %v2775
    %v2886 = vunpack.c.h.b16 %v2775
    %v2887 = vunpack.c.l.b16 %v2776
    %v2888 = vunpack.c.h.b16 %v2776
    %v2889 = vunpack.c.l.b16 %v2777
    %v2890 = vunpack.c.h.b16 %v2777
    %v2891 = vunpack.c.l.b16 %v2778
    %v2892 = vunpack.c.h.b16 %v2778
    %v2893 = vunpack.c.l.b16 %v2779
    %v2894 = vunpack.c.h.b16 %v2779
    %v2895 = vunpack.c.l.b16 %v2780
    %v2896 = vunpack.c.h.b16 %v2780
    %v2897 = vunpack.c.l.b16 %v2781
    %v2898 = vunpack.c.h.b16 %v2781
    %v2899 = vunpack.c.l.b16 %v2782
    %v2900 = vunpack.c.h.b16 %v2782
    %v2901 = vunpack.c.l.b16 %v2783
    %v2902 = vunpack.c.h.b16 %v2783
    %v2903 = vpack.c.b16 %v2843, %v2839
    %v2904 = vpack.c.b16 %v2844, %v2840
    %v2905 = vpack.c.b16 %v2845, %v2841
    %v2906 = vpack.c.b16 %v2846, %v2842
    %v2907 = vpack.c.b16 %v2851, %v2847
    %v2908 = vpack.c.b16 %v2852, %v2848
    %v2909 = vpack.c.b16 %v2853, %v2849
    %v2910 = vpack.c.b16 %v2854, %v2850
    %v2911 = vpack.c.b16 %v2859, %v2855
    %v2912 = vpack.c.b16 %v2860, %v2856
    %v2913 = vpack.c.b16 %v2861, %v2857
    %v2914 = vpack.c.b16 %v2862, %v2858
    %v2915 = vpack.c.b16 %v2867, %v2863
    %v2916 = vpack.c.b16 %v2868, %v2864
    %v2917 = vpack.c.b16 %v2869, %v2865
    %v2918 = vpack.c.b16 %v2870, %v2866
    %v2919 = vpack.c.b16 %v2875, %v2871
    %v2920 = vpack.c.b16 %v2876, %v2872
    %v2921 = vpack.c.b16 %v2877, %v2873
    %v2922 = vpack.c.b16 %v2878, %v2874
    %v2923 = vpack.c.b16 %v2883, %v2879
    %v2924 = vpack.c.b16 %v2884, %v2880
    %v2925 = vpack.c.b16 %v2885, %v2881
    %v2926 = vpack.c.b16 %v2886, %v2882
    %v2927 = vpack.c.b16 %v2891, %v2887
    %v2928 = vpack.c.b16 %v2892, %v2888
    %v2929 = vpack.c.b16 %v2893, %v2889
    %v2930 = vpack.c.b16 %v2894, %v2890
    %v2931 = vpack.c.b16 %v2899, %v2895
    %v2932 = vpack.c.b16 %v2900, %v2896
    %v2933 = vpack.c.b16 %v2901, %v2897
    %v2934 = vpack.c.b16 %v2902, %v2898
    %2967 = vmatprep.subr.bf16.mxu0 %v2904
    %2968 = vmatpush1.bf16.msra.mxu0 %v2903
    %2969 = vmatprep.subr.bf16.mxu0 %v2908
    %2970 = vmatpush1.bf16.msra.mxu0 %v2907
    %2971 = vmatprep.subr.bf16.mxu0 %v2912
    %2972 = vmatpush1.bf16.msra.mxu0 %v2911
    %2973 = vmatprep.subr.bf16.mxu0 %v2916
    %2974 = vmatpush1.bf16.msra.mxu0 %v2915
    %2975 = vmatprep.subr.bf16.mxu0 %v2920
    %2976 = vmatpush1.bf16.msra.mxu0 %v2919
    %2977 = vmatprep.subr.bf16.mxu0 %v2924
    %2978 = vmatpush1.bf16.msra.mxu0 %v2923
    %2979 = vmatprep.subr.bf16.mxu0 %v2928
    %2980 = vmatpush1.bf16.msra.mxu0 %v2927
    %2981 = vmatprep.subr.bf16.mxu0 %v2932
    %2982 = vmatpush1.bf16.msra.mxu0 %v2931
    %2983 = vmatprep.subr.bf16.mxu0 0
    %2984 = vmatpush1.bf16.msra.mxu0 0
    %2985 = vmatprep.subr.bf16.mxu0 0
    %2986 = vmatpush1.bf16.msra.mxu0 0
    %2987 = vmatprep.subr.bf16.mxu0 0
    %2988 = vmatpush1.bf16.msra.mxu0 0
    %2989 = vmatprep.subr.bf16.mxu0 0
    %2990 = vmatpush1.bf16.msra.mxu0 0
    %2991 = vmatprep.subr.bf16.mxu0 0
    %2992 = vmatpush1.bf16.msra.mxu0 0
    %2993 = vmatprep.subr.bf16.mxu0 0
    %2994 = vmatpush1.bf16.msra.mxu0 0
    %2995 = vmatprep.subr.bf16.mxu0 0
    %2996 = vmatpush1.bf16.msra.mxu0 0
    %2997 = vmatprep.subr.bf16.mxu0 0
    %2998 = vmatpush1.bf16.msra.mxu0 0
    %2999 = vmatprep.mubr.bf16.mxu0 0
    %3000 = vmatmul.mubr.bf16.gmra.mrb[0].mxu0 %v2749
    %v3001 = vpop.f32.mrb[0].mxu0
    %v3002 = vadd.f32 %v2790, %v3001
    %v3003 = vpop.f32.mrb[0].mxu0
    %v3004 = vadd.f32 %v2794, %v3003
    %v3005 = vpop.f32.mrb[0].mxu0
    %v3006 = vpop.f32.mrb[0].mxu0
    %3007 = vdwg.mxu0
    %3008 = vmatprep.subr.bf16.mxu0 %v2906
    %3009 = vmatpush1.bf16.msra.mxu0 %v2905
    %3010 = vmatprep.subr.bf16.mxu0 %v2910
    %3011 = vmatpush1.bf16.msra.mxu0 %v2909
    %3012 = vmatprep.subr.bf16.mxu0 %v2914
    %3013 = vmatpush1.bf16.msra.mxu0 %v2913
    %3014 = vmatprep.subr.bf16.mxu0 %v2918
    %3015 = vmatpush1.bf16.msra.mxu0 %v2917
    %3016 = vmatprep.subr.bf16.mxu0 %v2922
    %3017 = vmatpush1.bf16.msra.mxu0 %v2921
    %3018 = vmatprep.subr.bf16.mxu0 %v2926
    %3019 = vmatpush1.bf16.msra.mxu0 %v2925
    %3020 = vmatprep.subr.bf16.mxu0 %v2930
    %3021 = vmatpush1.bf16.msra.mxu0 %v2929
    %3022 = vmatprep.subr.bf16.mxu0 %v2934
    %3023 = vmatpush1.bf16.msra.mxu0 %v2933
    %3024 = vmatprep.subr.bf16.mxu0 0
    %3025 = vmatpush1.bf16.msra.mxu0 0
    %3026 = vmatprep.subr.bf16.mxu0 0
    %3027 = vmatpush1.bf16.msra.mxu0 0
    %3028 = vmatprep.subr.bf16.mxu0 0
    %3029 = vmatpush1.bf16.msra.mxu0 0
    %3030 = vmatprep.subr.bf16.mxu0 0
    %3031 = vmatpush1.bf16.msra.mxu0 0
    %3032 = vmatprep.subr.bf16.mxu0 0
    %3033 = vmatpush1.bf16.msra.mxu0 0
    %3034 = vmatprep.subr.bf16.mxu0 0
    %3035 = vmatpush1.bf16.msra.mxu0 0
    %3036 = vmatprep.subr.bf16.mxu0 0
    %3037 = vmatpush1.bf16.msra.mxu0 0
    %3038 = vmatprep.subr.bf16.mxu0 0
    %3039 = vmatpush1.bf16.msra.mxu0 0
    %3040 = vmatprep.mubr.bf16.mxu0 0
    %3041 = vmatmul.mubr.bf16.gmra.mrb[0].mxu0 %v2749
    %v3042 = vpop.f32.mrb[0].mxu0
    %v3043 = vadd.f32 %v2798, %v3042
    %v3044 = vpop.f32.mrb[0].mxu0
    %v3045 = vadd.f32 %v2802, %v3044
    %v3046 = vpop.f32.mrb[0].mxu0
    %v3047 = vpop.f32.mrb[0].mxu0
    %3048 = vdwg.mxu0
    %s3049 = scalar_lea.vmem [#allocation4], 256
    %v3050 = vld [vmem:[%s3049] sm:$0xff]
    %v3051 = vld [vmem:[%s3049 + $0x8] sm:$0xff]
    %v3052 = vld [vmem:[%s3049 + $0x10] sm:$0xff]
    %v3053 = vld [vmem:[%s3049 + $0x18] sm:$0xff]
    %v3054 = vld [vmem:[%s3049 + $0x20] sm:$0xff]
    %v3055 = vld [vmem:[%s3049 + $0x28] sm:$0xff]
    %v3056 = vld [vmem:[%s3049 + $0x30] sm:$0xff]
    %v3057 = vld [vmem:[%s3049 + $0x38] sm:$0xff]
    %v3058 = vld [vmem:[%s3049 + $0x40] sm:$0xff]
    %v3059 = vld [vmem:[%s3049 + $0x48] sm:$0xff]
    %v3060 = vld [vmem:[%s3049 + $0x50] sm:$0xff]
    %v3061 = vld [vmem:[%s3049 + $0x58] sm:$0xff]
    %v3062 = vld [vmem:[%s3049 + $0x60] sm:$0xff]
    %v3063 = vld [vmem:[%s3049 + $0x68] sm:$0xff]
    %v3064 = vld [vmem:[%s3049 + $0x70] sm:$0xff]
    %v3065 = vld [vmem:[%s3049 + $0x78] sm:$0xff]
    %v3066 = vld [vmem:[%s3049 + $0x80] sm:$0xff]
    %v3067 = vld [vmem:[%s3049 + $0x88] sm:$0xff]
    %v3068 = vld [vmem:[%s3049 + $0x90] sm:$0xff]
    %v3069 = vld [vmem:[%s3049 + $0x98] sm:$0xff]
    %v3070 = vld [vmem:[%s3049 + $0xa0] sm:$0xff]
    %v3071 = vld [vmem:[%s3049 + $0xa8] sm:$0xff]
    %v3072 = vld [vmem:[%s3049 + $0xb0] sm:$0xff]
    %v3073 = vld [vmem:[%s3049 + $0xb8] sm:$0xff]
    %v3074 = vld [vmem:[%s3049 + $0xc0] sm:$0xff]
    %v3075 = vld [vmem:[%s3049 + $0xc8] sm:$0xff]
    %v3076 = vld [vmem:[%s3049 + $0xd0] sm:$0xff]
    %v3077 = vld [vmem:[%s3049 + $0xd8] sm:$0xff]
    %v3078 = vld [vmem:[%s3049 + $0xe0] sm:$0xff]
    %v3079 = vld [vmem:[%s3049 + $0xe8] sm:$0xff]
    %v3080 = vld [vmem:[%s3049 + $0xf0] sm:$0xff]
    %v3081 = vld [vmem:[%s3049 + $0xf8] sm:$0xff]
    %s3082 = scalar_lea.vmem %s6, 4
    %v3083 = vld [vmem:[%s3082] sm:$0xf]
    %v3085 = vlaneseq
    %v3086 = vshrl.u32 %v3085, 7
    %v3087 = vsub.s32 0, %v3086
    %v3088 = vrot.slane %v3083, %v3087
    %v3089 = vlaneseq
    %v3090 = vshrl.u32 %v3089, 7
    %v3091 = vsub.s32 1, %v3090
    %v3092 = vrot.slane %v3083, %v3091
    %v3093 = vlaneseq
    %v3094 = vshrl.u32 %v3093, 7
    %v3095 = vsub.s32 2, %v3094
    %v3096 = vrot.slane %v3083, %v3095
    %v3097 = vlaneseq
    %v3098 = vshrl.u32 %v3097, 7
    %v3099 = vsub.s32 3, %v3098
    %v3100 = vrot.slane %v3083, %v3099
    %v3137 = vunpack.c.l.b16 %v3050
    %v3138 = vunpack.c.h.b16 %v3050
    %v3139 = vunpack.c.l.b16 %v3051
    %v3140 = vunpack.c.h.b16 %v3051
    %v3141 = vunpack.c.l.b16 %v3052
    %v3142 = vunpack.c.h.b16 %v3052
    %v3143 = vunpack.c.l.b16 %v3053
    %v3144 = vunpack.c.h.b16 %v3053
    %v3145 = vunpack.c.l.b16 %v3054
    %v3146 = vunpack.c.h.b16 %v3054
    %v3147 = vunpack.c.l.b16 %v3055
    %v3148 = vunpack.c.h.b16 %v3055
    %v3149 = vunpack.c.l.b16 %v3056
    %v3150 = vunpack.c.h.b16 %v3056
    %v3151 = vunpack.c.l.b16 %v3057
    %v3152 = vunpack.c.h.b16 %v3057
    %v3153 = vunpack.c.l.b16 %v3058
    %v3154 = vunpack.c.h.b16 %v3058
    %v3155 = vunpack.c.l.b16 %v3059
    %v3156 = vunpack.c.h.b16 %v3059
    %v3157 = vunpack.c.l.b16 %v3060
    %v3158 = vunpack.c.h.b16 %v3060
    %v3159 = vunpack.c.l.b16 %v3061
    %v3160 = vunpack.c.h.b16 %v3061
    %v3161 = vunpack.c.l.b16 %v3062
    %v3162 = vunpack.c.h.b16 %v3062
    %v3163 = vunpack.c.l.b16 %v3063
    %v3164 = vunpack.c.h.b16 %v3063
    %v3165 = vunpack.c.l.b16 %v3064
    %v3166 = vunpack.c.h.b16 %v3064
    %v3167 = vunpack.c.l.b16 %v3065
    %v3168 = vunpack.c.h.b16 %v3065
    %v3169 = vunpack.c.l.b16 %v3066
    %v3170 = vunpack.c.h.b16 %v3066
    %v3171 = vunpack.c.l.b16 %v3067
    %v3172 = vunpack.c.h.b16 %v3067
    %v3173 = vunpack.c.l.b16 %v3068
    %v3174 = vunpack.c.h.b16 %v3068
    %v3175 = vunpack.c.l.b16 %v3069
    %v3176 = vunpack.c.h.b16 %v3069
    %v3177 = vunpack.c.l.b16 %v3070
    %v3178 = vunpack.c.h.b16 %v3070
    %v3179 = vunpack.c.l.b16 %v3071
    %v3180 = vunpack.c.h.b16 %v3071
    %v3181 = vunpack.c.l.b16 %v3072
    %v3182 = vunpack.c.h.b16 %v3072
    %v3183 = vunpack.c.l.b16 %v3073
    %v3184 = vunpack.c.h.b16 %v3073
    %v3185 = vunpack.c.l.b16 %v3074
    %v3186 = vunpack.c.h.b16 %v3074
    %v3187 = vunpack.c.l.b16 %v3075
    %v3188 = vunpack.c.h.b16 %v3075
    %v3189 = vunpack.c.l.b16 %v3076
    %v3190 = vunpack.c.h.b16 %v3076
    %v3191 = vunpack.c.l.b16 %v3077
    %v3192 = vunpack.c.h.b16 %v3077
    %v3193 = vunpack.c.l.b16 %v3078
    %v3194 = vunpack.c.h.b16 %v3078
    %v3195 = vunpack.c.l.b16 %v3079
    %v3196 = vunpack.c.h.b16 %v3079
    %v3197 = vunpack.c.l.b16 %v3080
    %v3198 = vunpack.c.h.b16 %v3080
    %v3199 = vunpack.c.l.b16 %v3081
    %v3200 = vunpack.c.h.b16 %v3081
    %v3201 = vpack.c.b16 %v3141, %v3137
    %v3202 = vpack.c.b16 %v3142, %v3138
    %v3203 = vpack.c.b16 %v3143, %v3139
    %v3204 = vpack.c.b16 %v3144, %v3140
    %v3205 = vpack.c.b16 %v3149, %v3145
    %v3206 = vpack.c.b16 %v3150, %v3146
    %v3207 = vpack.c.b16 %v3151, %v3147
    %v3208 = vpack.c.b16 %v3152, %v3148
    %v3209 = vpack.c.b16 %v3157, %v3153
    %v3210 = vpack.c.b16 %v3158, %v3154
    %v3211 = vpack.c.b16 %v3159, %v3155
    %v3212 = vpack.c.b16 %v3160, %v3156
    %v3213 = vpack.c.b16 %v3165, %v3161
    %v3214 = vpack.c.b16 %v3166, %v3162
    %v3215 = vpack.c.b16 %v3167, %v3163
    %v3216 = vpack.c.b16 %v3168, %v3164
    %v3217 = vpack.c.b16 %v3173, %v3169
    %v3218 = vpack.c.b16 %v3174, %v3170
    %v3219 = vpack.c.b16 %v3175, %v3171
    %v3220 = vpack.c.b16 %v3176, %v3172
    %v3221 = vpack.c.b16 %v3181, %v3177
    %v3222 = vpack.c.b16 %v3182, %v3178
    %v3223 = vpack.c.b16 %v3183, %v3179
    %v3224 = vpack.c.b16 %v3184, %v3180
    %v3225 = vpack.c.b16 %v3189, %v3185
    %v3226 = vpack.c.b16 %v3190, %v3186
    %v3227 = vpack.c.b16 %v3191, %v3187
    %v3228 = vpack.c.b16 %v3192, %v3188
    %v3229 = vpack.c.b16 %v3197, %v3193
    %v3230 = vpack.c.b16 %v3198, %v3194
    %v3231 = vpack.c.b16 %v3199, %v3195
    %v3232 = vpack.c.b16 %v3200, %v3196
    %3265 = vmatprep.subr.bf16.mxu0 %v3202
    %3266 = vmatpush1.bf16.msra.mxu0 %v3201
    %3267 = vmatprep.subr.bf16.mxu0 %v3206
    %3268 = vmatpush1.bf16.msra.mxu0 %v3205
    %3269 = vmatprep.subr.bf16.mxu0 %v3210
    %3270 = vmatpush1.bf16.msra.mxu0 %v3209
    %3271 = vmatprep.subr.bf16.mxu0 %v3214
    %3272 = vmatpush1.bf16.msra.mxu0 %v3213
    %3273 = vmatprep.subr.bf16.mxu0 %v3218
    %3274 = vmatpush1.bf16.msra.mxu0 %v3217
    %3275 = vmatprep.subr.bf16.mxu0 %v3222
    %3276 = vmatpush1.bf16.msra.mxu0 %v3221
    %3277 = vmatprep.subr.bf16.mxu0 %v3226
    %3278 = vmatpush1.bf16.msra.mxu0 %v3225
    %3279 = vmatprep.subr.bf16.mxu0 %v3230
    %3280 = vmatpush1.bf16.msra.mxu0 %v3229
    %3281 = vmatprep.subr.bf16.mxu0 0
    %3282 = vmatpush1.bf16.msra.mxu0 0
    %3283 = vmatprep.subr.bf16.mxu0 0
    %3284 = vmatpush1.bf16.msra.mxu0 0
    %3285 = vmatprep.subr.bf16.mxu0 0
    %3286 = vmatpush1.bf16.msra.mxu0 0
    %3287 = vmatprep.subr.bf16.mxu0 0
    %3288 = vmatpush1.bf16.msra.mxu0 0
    %3289 = vmatprep.subr.bf16.mxu0 0
    %3290 = vmatpush1.bf16.msra.mxu0 0
    %3291 = vmatprep.subr.bf16.mxu0 0
    %3292 = vmatpush1.bf16.msra.mxu0 0
    %3293 = vmatprep.subr.bf16.mxu0 0
    %3294 = vmatpush1.bf16.msra.mxu0 0
    %3295 = vmatprep.subr.bf16.mxu0 0
    %3296 = vmatpush1.bf16.msra.mxu0 0
    %3297 = vmatprep.mubr.bf16.mxu0 0
    %3298 = vmatmul.mubr.bf16.gmra.mrb[0].mxu0 %v2750
    %v3299 = vpop.f32.mrb[0].mxu0
    %v3300 = vadd.f32 %v3088, %v3299
    %v3301 = vpop.f32.mrb[0].mxu0
    %v3302 = vadd.f32 %v3092, %v3301
    %v3303 = vpop.f32.mrb[0].mxu0
    %v3304 = vpop.f32.mrb[0].mxu0
    %3305 = vdwg.mxu0
    %3306 = vmatprep.subr.bf16.mxu0 %v3204
    %3307 = vmatpush1.bf16.msra.mxu0 %v3203
    %3308 = vmatprep.subr.bf16.mxu0 %v3208
    %3309 = vmatpush1.bf16.msra.mxu0 %v3207
    %3310 = vmatprep.subr.bf16.mxu0 %v3212
    %3311 = vmatpush1.bf16.msra.mxu0 %v3211
    %3312 = vmatprep.subr.bf16.mxu0 %v3216
    %3313 = vmatpush1.bf16.msra.mxu0 %v3215
    %3314 = vmatprep.subr.bf16.mxu0 %v3220
    %3315 = vmatpush1.bf16.msra.mxu0 %v3219
    %3316 = vmatprep.subr.bf16.mxu0 %v3224
    %3317 = vmatpush1.bf16.msra.mxu0 %v3223
    %3318 = vmatprep.subr.bf16.mxu0 %v3228
    %3319 = vmatpush1.bf16.msra.mxu0 %v3227
    %3320 = vmatprep.subr.bf16.mxu0 %v3232
    %3321 = vmatpush1.bf16.msra.mxu0 %v3231
    %3322 = vmatprep.subr.bf16.mxu0 0
    %3323 = vmatpush1.bf16.msra.mxu0 0
    %3324 = vmatprep.subr.bf16.mxu0 0
    %3325 = vmatpush1.bf16.msra.mxu0 0
    %3326 = vmatprep.subr.bf16.mxu0 0
    %3327 = vmatpush1.bf16.msra.mxu0 0
    %3328 = vmatprep.subr.bf16.mxu0 0
    %3329 = vmatpush1.bf16.msra.mxu0 0
    %3330 = vmatprep.subr.bf16.mxu0 0
    %3331 = vmatpush1.bf16.msra.mxu0 0
    %3332 = vmatprep.subr.bf16.mxu0 0
    %3333 = vmatpush1.bf16.msra.mxu0 0
    %3334 = vmatprep.subr.bf16.mxu0 0
    %3335 = vmatpush1.bf16.msra.mxu0 0
    %3336 = vmatprep.subr.bf16.mxu0 0
    %3337 = vmatpush1.bf16.msra.mxu0 0
    %3338 = vmatprep.mubr.bf16.mxu0 0
    %3339 = vmatmul.mubr.bf16.gmra.mrb[0].mxu0 %v2750
    %v3340 = vpop.f32.mrb[0].mxu0
    %v3341 = vadd.f32 %v3096, %v3340
    %v3342 = vpop.f32.mrb[0].mxu0
    %v3343 = vadd.f32 %v3100, %v3342
    %v3344 = vpop.f32.mrb[0].mxu0
    %v3345 = vpop.f32.mrb[0].mxu0
    %3346 = vdwg.mxu0
    %v3347 = vsub.f32 %v1159, %v3300
    %v3348 = vsub.f32 %v1160, %v3302
    %v3349 = vsub.f32 %v1161, %v3341
    %v3350 = vsub.f32 %v1162, %v3343
    %v3351 = vmul.f32 %v3002, 1.442695
    %v3352 = vpow.pop %v3351
    %v3353 = vmul.f32 %v3004, 1.442695
    %v3354 = vpow.pop %v3353
    %v3355 = vmul.f32 %v3043, 1.442695
    %v3356 = vpow.pop %v3355
    %v3357 = vmul.f32 %v3045, 1.442695
    %v3358 = vpow.pop %v3357
    %v3359 = vmul.f32 %v3347, %v3352
    %v3360 = vmul.f32 %v3348, %v3354
    %v3361 = vmul.f32 %v3349, %v3356
    %v3362 = vmul.f32 %v3350, %v3358
    %v3363 = vpack.c.bf16 %v3359, %v3359
    %v3364 = vpack.c.bf16 %v3360, %v3360
    %v3365 = vpack.c.bf16 %v3361, %v3361
    %v3366 = vpack.c.bf16 %v3362, %v3362
    %v3367 = vld [vmem:[%s1] sm:$0xff]
    %v3368 = vld [vmem:[%s1 + $0x8] sm:$0xff]
    %v3369 = vld [vmem:[%s1 + $0x10] sm:$0xff]
    %v3370 = vld [vmem:[%s1 + $0x18] sm:$0xff]
    %v3371 = vld [vmem:[%s1 + $0x20] sm:$0xff]
    %v3372 = vld [vmem:[%s1 + $0x28] sm:$0xff]
    %v3373 = vld [vmem:[%s1 + $0x30] sm:$0xff]
    %v3374 = vld [vmem:[%s1 + $0x38] sm:$0xff]
    %v3375 = vld [vmem:[%s1 + $0x40] sm:$0xff]
    %v3376 = vld [vmem:[%s1 + $0x48] sm:$0xff]
    %v3377 = vld [vmem:[%s1 + $0x50] sm:$0xff]
    %v3378 = vld [vmem:[%s1 + $0x58] sm:$0xff]
    %v3379 = vld [vmem:[%s1 + $0x60] sm:$0xff]
    %v3380 = vld [vmem:[%s1 + $0x68] sm:$0xff]
    %v3381 = vld [vmem:[%s1 + $0x70] sm:$0xff]
    %v3382 = vld [vmem:[%s1 + $0x78] sm:$0xff]
    %v3383 = vld [vmem:[%s1 + $0x80] sm:$0xff]
    %v3384 = vld [vmem:[%s1 + $0x88] sm:$0xff]
    %v3385 = vld [vmem:[%s1 + $0x90] sm:$0xff]
    %v3386 = vld [vmem:[%s1 + $0x98] sm:$0xff]
    %v3387 = vld [vmem:[%s1 + $0xa0] sm:$0xff]
    %v3388 = vld [vmem:[%s1 + $0xa8] sm:$0xff]
    %v3389 = vld [vmem:[%s1 + $0xb0] sm:$0xff]
    %v3390 = vld [vmem:[%s1 + $0xb8] sm:$0xff]
    %v3391 = vld [vmem:[%s1 + $0xc0] sm:$0xff]
    %v3392 = vld [vmem:[%s1 + $0xc8] sm:$0xff]
    %v3393 = vld [vmem:[%s1 + $0xd0] sm:$0xff]
    %v3394 = vld [vmem:[%s1 + $0xd8] sm:$0xff]
    %v3395 = vld [vmem:[%s1 + $0xe0] sm:$0xff]
    %v3396 = vld [vmem:[%s1 + $0xe8] sm:$0xff]
    %v3397 = vld [vmem:[%s1 + $0xf0] sm:$0xff]
    %v3398 = vld [vmem:[%s1 + $0xf8] sm:$0xff]
    %v3399 = vld [vmem:[%s1 + $0x100] sm:$0xff]
    %v3400 = vld [vmem:[%s1 + $0x108] sm:$0xff]
    %v3401 = vld [vmem:[%s1 + $0x110] sm:$0xff]
    %v3402 = vld [vmem:[%s1 + $0x118] sm:$0xff]
    %v3403 = vld [vmem:[%s1 + $0x120] sm:$0xff]
    %v3404 = vld [vmem:[%s1 + $0x128] sm:$0xff]
    %v3405 = vld [vmem:[%s1 + $0x130] sm:$0xff]
    %v3406 = vld [vmem:[%s1 + $0x138] sm:$0xff]
    %v3407 = vld [vmem:[%s1 + $0x140] sm:$0xff]
    %v3408 = vld [vmem:[%s1 + $0x148] sm:$0xff]
    %v3409 = vld [vmem:[%s1 + $0x150] sm:$0xff]
    %v3410 = vld [vmem:[%s1 + $0x158] sm:$0xff]
    %v3411 = vld [vmem:[%s1 + $0x160] sm:$0xff]
    %v3412 = vld [vmem:[%s1 + $0x168] sm:$0xff]
    %v3413 = vld [vmem:[%s1 + $0x170] sm:$0xff]
    %v3414 = vld [vmem:[%s1 + $0x178] sm:$0xff]
    %v3415 = vld [vmem:[%s1 + $0x180] sm:$0xff]
    %v3416 = vld [vmem:[%s1 + $0x188] sm:$0xff]
    %v3417 = vld [vmem:[%s1 + $0x190] sm:$0xff]
    %v3418 = vld [vmem:[%s1 + $0x198] sm:$0xff]
    %v3419 = vld [vmem:[%s1 + $0x1a0] sm:$0xff]
    %v3420 = vld [vmem:[%s1 + $0x1a8] sm:$0xff]
    %v3421 = vld [vmem:[%s1 + $0x1b0] sm:$0xff]
    %v3422 = vld [vmem:[%s1 + $0x1b8] sm:$0xff]
    %v3423 = vld [vmem:[%s1 + $0x1c0] sm:$0xff]
    %v3424 = vld [vmem:[%s1 + $0x1c8] sm:$0xff]
    %v3425 = vld [vmem:[%s1 + $0x1d0] sm:$0xff]
    %v3426 = vld [vmem:[%s1 + $0x1d8] sm:$0xff]
    %v3427 = vld [vmem:[%s1 + $0x1e0] sm:$0xff]
    %v3428 = vld [vmem:[%s1 + $0x1e8] sm:$0xff]
    %v3429 = vld [vmem:[%s1 + $0x1f0] sm:$0xff]
    %v3430 = vld [vmem:[%s1 + $0x1f8] sm:$0xff]
    %v3431 = vld [vmem:[%s2] sm:$0x3]
    %v3433 = vlaneseq
    %v3434 = vshrl.u32 %v3433, 7
    %v3435 = vsub.s32 0, %v3434
    %v3436 = vrot.slane %v3431, %v3435
    %v3437 = vlaneseq
    %v3438 = vshrl.u32 %v3437, 7
    %v3439 = vsub.s32 1, %v3438
    %v3440 = vrot.slane %v3431, %v3439
    %v3507 = vunpack.c.l.b16 %v3367
    %v3508 = vunpack.c.h.b16 %v3367
    %v3509 = vunpack.c.l.b16 %v3368
    %v3510 = vunpack.c.h.b16 %v3368
    %v3511 = vunpack.c.l.b16 %v3369
    %v3512 = vunpack.c.h.b16 %v3369
    %v3513 = vunpack.c.l.b16 %v3370
    %v3514 = vunpack.c.h.b16 %v3370
    %v3515 = vunpack.c.l.b16 %v3371
    %v3516 = vunpack.c.h.b16 %v3371
    %v3517 = vunpack.c.l.b16 %v3372
    %v3518 = vunpack.c.h.b16 %v3372
    %v3519 = vunpack.c.l.b16 %v3373
    %v3520 = vunpack.c.h.b16 %v3373
    %v3521 = vunpack.c.l.b16 %v3374
    %v3522 = vunpack.c.h.b16 %v3374
    %v3523 = vunpack.c.l.b16 %v3375
    %v3524 = vunpack.c.h.b16 %v3375
    %v3525 = vunpack.c.l.b16 %v3376
    %v3526 = vunpack.c.h.b16 %v3376
    %v3527 = vunpack.c.l.b16 %v3377
    %v3528 = vunpack.c.h.b16 %v3377
    %v3529 = vunpack.c.l.b16 %v3378
    %v3530 = vunpack.c.h.b16 %v3378
    %v3531 = vunpack.c.l.b16 %v3379
    %v3532 = vunpack.c.h.b16 %v3379
    %v3533 = vunpack.c.l.b16 %v3380
    %v3534 = vunpack.c.h.b16 %v3380
    %v3535 = vunpack.c.l.b16 %v3381
    %v3536 = vunpack.c.h.b16 %v3381
    %v3537 = vunpack.c.l.b16 %v3382
    %v3538 = vunpack.c.h.b16 %v3382
    %v3539 = vunpack.c.l.b16 %v3383
    %v3540 = vunpack.c.h.b16 %v3383
    %v3541 = vunpack.c.l.b16 %v3384
    %v3542 = vunpack.c.h.b16 %v3384
    %v3543 = vunpack.c.l.b16 %v3385
    %v3544 = vunpack.c.h.b16 %v3385
    %v3545 = vunpack.c.l.b16 %v3386
    %v3546 = vunpack.c.h.b16 %v3386
    %v3547 = vunpack.c.l.b16 %v3387
    %v3548 = vunpack.c.h.b16 %v3387
    %v3549 = vunpack.c.l.b16 %v3388
    %v3550 = vunpack.c.h.b16 %v3388
    %v3551 = vunpack.c.l.b16 %v3389
    %v3552 = vunpack.c.h.b16 %v3389
    %v3553 = vunpack.c.l.b16 %v3390
    %v3554 = vunpack.c.h.b16 %v3390
    %v3555 = vunpack.c.l.b16 %v3391
    %v3556 = vunpack.c.h.b16 %v3391
    %v3557 = vunpack.c.l.b16 %v3392
    %v3558 = vunpack.c.h.b16 %v3392
    %v3559 = vunpack.c.l.b16 %v3393
    %v3560 = vunpack.c.h.b16 %v3393
    %v3561 = vunpack.c.l.b16 %v3394
    %v3562 = vunpack.c.h.b16 %v3394
    %v3563 = vunpack.c.l.b16 %v3395
    %v3564 = vunpack.c.h.b16 %v3395
    %v3565 = vunpack.c.l.b16 %v3396
    %v3566 = vunpack.c.h.b16 %v3396
    %v3567 = vunpack.c.l.b16 %v3397
    %v3568 = vunpack.c.h.b16 %v3397
    %v3569 = vunpack.c.l.b16 %v3398
    %v3570 = vunpack.c.h.b16 %v3398
    %v3571 = vunpack.c.l.b16 %v3399
    %v3572 = vunpack.c.h.b16 %v3399
    %v3573 = vunpack.c.l.b16 %v3400
    %v3574 = vunpack.c.h.b16 %v3400
    %v3575 = vunpack.c.l.b16 %v3401
    %v3576 = vunpack.c.h.b16 %v3401
    %v3577 = vunpack.c.l.b16 %v3402
    %v3578 = vunpack.c.h.b16 %v3402
    %v3579 = vunpack.c.l.b16 %v3403
    %v3580 = vunpack.c.h.b16 %v3403
    %v3581 = vunpack.c.l.b16 %v3404
    %v3582 = vunpack.c.h.b16 %v3404
    %v3583 = vunpack.c.l.b16 %v3405
    %v3584 = vunpack.c.h.b16 %v3405
    %v3585 = vunpack.c.l.b16 %v3406
    %v3586 = vunpack.c.h.b16 %v3406
    %v3587 = vunpack.c.l.b16 %v3407
    %v3588 = vunpack.c.h.b16 %v3407
    %v3589 = vunpack.c.l.b16 %v3408
    %v3590 = vunpack.c.h.b16 %v3408
    %v3591 = vunpack.c.l.b16 %v3409
    %v3592 = vunpack.c.h.b16 %v3409
    %v3593 = vunpack.c.l.b16 %v3410
    %v3594 = vunpack.c.h.b16 %v3410
    %v3595 = vunpack.c.l.b16 %v3411
    %v3596 = vunpack.c.h.b16 %v3411
    %v3597 = vunpack.c.l.b16 %v3412
    %v3598 = vunpack.c.h.b16 %v3412
    %v3599 = vunpack.c.l.b16 %v3413
    %v3600 = vunpack.c.h.b16 %v3413
    %v3601 = vunpack.c.l.b16 %v3414
    %v3602 = vunpack.c.h.b16 %v3414
    %v3603 = vunpack.c.l.b16 %v3415
    %v3604 = vunpack.c.h.b16 %v3415
    %v3605 = vunpack.c.l.b16 %v3416
    %v3606 = vunpack.c.h.b16 %v3416
    %v3607 = vunpack.c.l.b16 %v3417
    %v3608 = vunpack.c.h.b16 %v3417
    %v3609 = vunpack.c.l.b16 %v3418
    %v3610 = vunpack.c.h.b16 %v3418
    %v3611 = vunpack.c.l.b16 %v3419
    %v3612 = vunpack.c.h.b16 %v3419
    %v3613 = vunpack.c.l.b16 %v3420
    %v3614 = vunpack.c.h.b16 %v3420
    %v3615 = vunpack.c.l.b16 %v3421
    %v3616 = vunpack.c.h.b16 %v3421
    %v3617 = vunpack.c.l.b16 %v3422
    %v3618 = vunpack.c.h.b16 %v3422
    %v3619 = vunpack.c.l.b16 %v3423
    %v3620 = vunpack.c.h.b16 %v3423
    %v3621 = vunpack.c.l.b16 %v3424
    %v3622 = vunpack.c.h.b16 %v3424
    %v3623 = vunpack.c.l.b16 %v3425
    %v3624 = vunpack.c.h.b16 %v3425
    %v3625 = vunpack.c.l.b16 %v3426
    %v3626 = vunpack.c.h.b16 %v3426
    %v3627 = vunpack.c.l.b16 %v3427
    %v3628 = vunpack.c.h.b16 %v3427
    %v3629 = vunpack.c.l.b16 %v3428
    %v3630 = vunpack.c.h.b16 %v3428
    %v3631 = vunpack.c.l.b16 %v3429
    %v3632 = vunpack.c.h.b16 %v3429
    %v3633 = vunpack.c.l.b16 %v3430
    %v3634 = vunpack.c.h.b16 %v3430
    %v3635 = vpack.c.b16 %v3509, %v3507
    %v3636 = vpack.c.b16 %v3510, %v3508
    %v3637 = vpack.c.b16 %v3513, %v3511
    %v3638 = vpack.c.b16 %v3514, %v3512
    %v3639 = vpack.c.b16 %v3517, %v3515
    %v3640 = vpack.c.b16 %v3518, %v3516
    %v3641 = vpack.c.b16 %v3521, %v3519
    %v3642 = vpack.c.b16 %v3522, %v3520
    %v3643 = vpack.c.b16 %v3525, %v3523
    %v3644 = vpack.c.b16 %v3526, %v3524
    %v3645 = vpack.c.b16 %v3529, %v3527
    %v3646 = vpack.c.b16 %v3530, %v3528
    %v3647 = vpack.c.b16 %v3533, %v3531
    %v3648 = vpack.c.b16 %v3534, %v3532
    %v3649 = vpack.c.b16 %v3537, %v3535
    %v3650 = vpack.c.b16 %v3538, %v3536
    %v3651 = vpack.c.b16 %v3541, %v3539
    %v3652 = vpack.c.b16 %v3542, %v3540
    %v3653 = vpack.c.b16 %v3545, %v3543
    %v3654 = vpack.c.b16 %v3546, %v3544
    %v3655 = vpack.c.b16 %v3549, %v3547
    %v3656 = vpack.c.b16 %v3550, %v3548
    %v3657 = vpack.c.b16 %v3553, %v3551
    %v3658 = vpack.c.b16 %v3554, %v3552
    %v3659 = vpack.c.b16 %v3557, %v3555
    %v3660 = vpack.c.b16 %v3558, %v3556
    %v3661 = vpack.c.b16 %v3561, %v3559
    %v3662 = vpack.c.b16 %v3562, %v3560
    %v3663 = vpack.c.b16 %v3565, %v3563
    %v3664 = vpack.c.b16 %v3566, %v3564
    %v3665 = vpack.c.b16 %v3569, %v3567
    %v3666 = vpack.c.b16 %v3570, %v3568
    %v3667 = vpack.c.b16 %v3573, %v3571
    %v3668 = vpack.c.b16 %v3574, %v3572
    %v3669 = vpack.c.b16 %v3577, %v3575
    %v3670 = vpack.c.b16 %v3578, %v3576
    %v3671 = vpack.c.b16 %v3581, %v3579
    %v3672 = vpack.c.b16 %v3582, %v3580
    %v3673 = vpack.c.b16 %v3585, %v3583
    %v3674 = vpack.c.b16 %v3586, %v3584
    %v3675 = vpack.c.b16 %v3589, %v3587
    %v3676 = vpack.c.b16 %v3590, %v3588
    %v3677 = vpack.c.b16 %v3593, %v3591
    %v3678 = vpack.c.b16 %v3594, %v3592
    %v3679 = vpack.c.b16 %v3597, %v3595
    %v3680 = vpack.c.b16 %v3598, %v3596
    %v3681 = vpack.c.b16 %v3601, %v3599
    %v3682 = vpack.c.b16 %v3602, %v3600
    %v3683 = vpack.c.b16 %v3605, %v3603
    %v3684 = vpack.c.b16 %v3606, %v3604
    %v3685 = vpack.c.b16 %v3609, %v3607
    %v3686 = vpack.c.b16 %v3610, %v3608
    %v3687 = vpack.c.b16 %v3613, %v3611
    %v3688 = vpack.c.b16 %v3614, %v3612
    %v3689 = vpack.c.b16 %v3617, %v3615
    %v3690 = vpack.c.b16 %v3618, %v3616
    %v3691 = vpack.c.b16 %v3621, %v3619
    %v3692 = vpack.c.b16 %v3622, %v3620
    %v3693 = vpack.c.b16 %v3625, %v3623
    %v3694 = vpack.c.b16 %v3626, %v3624
    %v3695 = vpack.c.b16 %v3629, %v3627
    %v3696 = vpack.c.b16 %v3630, %v3628
    %v3697 = vpack.c.b16 %v3633, %v3631
    %v3698 = vpack.c.b16 %v3634, %v3632
    %3763 = vmatprep.subr.bf16.mxu0 %v3636
    %3764 = vmatpush1.bf16.msra.mxu0 %v3635
    %3765 = vmatprep.subr.bf16.mxu0 %v3638
    %3766 = vmatpush1.bf16.msra.mxu0 %v3637
    %3767 = vmatprep.subr.bf16.mxu0 %v3640
    %3768 = vmatpush1.bf16.msra.mxu0 %v3639
    %3769 = vmatprep.subr.bf16.mxu0 %v3642
    %3770 = vmatpush1.bf16.msra.mxu0 %v3641
    %3771 = vmatprep.subr.bf16.mxu0 %v3644
    %3772 = vmatpush1.bf16.msra.mxu0 %v3643
    %3773 = vmatprep.subr.bf16.mxu0 %v3646
    %3774 = vmatpush1.bf16.msra.mxu0 %v3645
    %3775 = vmatprep.subr.bf16.mxu0 %v3648
    %3776 = vmatpush1.bf16.msra.mxu0 %v3647
    %3777 = vmatprep.subr.bf16.mxu0 %v3650
    %3778 = vmatpush1.bf16.msra.mxu0 %v3649
    %3779 = vmatprep.subr.bf16.mxu0 %v3652
    %3780 = vmatpush1.bf16.msra.mxu0 %v3651
    %3781 = vmatprep.subr.bf16.mxu0 %v3654
    %3782 = vmatpush1.bf16.msra.mxu0 %v3653
    %3783 = vmatprep.subr.bf16.mxu0 %v3656
    %3784 = vmatpush1.bf16.msra.mxu0 %v3655
    %3785 = vmatprep.subr.bf16.mxu0 %v3658
    %3786 = vmatpush1.bf16.msra.mxu0 %v3657
    %3787 = vmatprep.subr.bf16.mxu0 %v3660
    %3788 = vmatpush1.bf16.msra.mxu0 %v3659
    %3789 = vmatprep.subr.bf16.mxu0 %v3662
    %3790 = vmatpush1.bf16.msra.mxu0 %v3661
    %3791 = vmatprep.subr.bf16.mxu0 %v3664
    %3792 = vmatpush1.bf16.msra.mxu0 %v3663
    %3793 = vmatprep.subr.bf16.mxu0 %v3666
    %3794 = vmatpush1.bf16.msra.mxu0 %v3665
    %3795 = vmatprep.mubr.bf16.mxu0 %v3364
    %3796 = vmatmul.mubr.bf16.gmra.mrb[0].mxu0 %v3363
    %v3797 = vpop.f32.mrb[0].mxu0
    %v3798 = vadd.f32 %v3436, %v3797
    %v3799 = vpop.f32.mrb[0].mxu0
    %v3800 = vadd.f32 %v3440, %v3799
    %v3801 = vpop.f32.mrb[0].mxu0
    %v3802 = vpop.f32.mrb[0].mxu0
    %3803 = vdwg.mxu0
    %3804 = vmatprep.subr.bf16.mxu0 %v3668
    %3805 = vmatpush1.bf16.msra.mxu0 %v3667
    %3806 = vmatprep.subr.bf16.mxu0 %v3670
    %3807 = vmatpush1.bf16.msra.mxu0 %v3669
    %3808 = vmatprep.subr.bf16.mxu0 %v3672
    %3809 = vmatpush1.bf16.msra.mxu0 %v3671
    %3810 = vmatprep.subr.bf16.mxu0 %v3674
    %3811 = vmatpush1.bf16.msra.mxu0 %v3673
    %3812 = vmatprep.subr.bf16.mxu0 %v3676
    %3813 = vmatpush1.bf16.msra.mxu0 %v3675
    %3814 = vmatprep.subr.bf16.mxu0 %v3678
    %3815 = vmatpush1.bf16.msra.mxu0 %v3677
    %3816 = vmatprep.subr.bf16.mxu0 %v3680
    %3817 = vmatpush1.bf16.msra.mxu0 %v3679
    %3818 = vmatprep.subr.bf16.mxu0 %v3682
    %3819 = vmatpush1.bf16.msra.mxu0 %v3681
    %3820 = vmatprep.subr.bf16.mxu0 %v3684
    %3821 = vmatpush1.bf16.msra.mxu0 %v3683
    %3822 = vmatprep.subr.bf16.mxu0 %v3686
    %3823 = vmatpush1.bf16.msra.mxu0 %v3685
    %3824 = vmatprep.subr.bf16.mxu0 %v3688
    %3825 = vmatpush1.bf16.msra.mxu0 %v3687
    %3826 = vmatprep.subr.bf16.mxu0 %v3690
    %3827 = vmatpush1.bf16.msra.mxu0 %v3689
    %3828 = vmatprep.subr.bf16.mxu0 %v3692
    %3829 = vmatpush1.bf16.msra.mxu0 %v3691
    %3830 = vmatprep.subr.bf16.mxu0 %v3694
    %3831 = vmatpush1.bf16.msra.mxu0 %v3693
    %3832 = vmatprep.subr.bf16.mxu0 %v3696
    %3833 = vmatpush1.bf16.msra.mxu0 %v3695
    %3834 = vmatprep.subr.bf16.mxu0 %v3698
    %3835 = vmatpush1.bf16.msra.mxu0 %v3697
    %3836 = vmatprep.mubr.bf16.mxu0 %v3366
    %3837 = vmatmul.mubr.bf16.gmra.mrb[0].mxu0 %v3365
    %v3838 = vpop.f32.mrb[0].mxu0
    %v3839 = vadd.f32 %v3798, %v3838
    %v3840 = vpop.f32.mrb[0].mxu0
    %v3841 = vadd.f32 %v3800, %v3840
    %v3842 = vpop.f32.mrb[0].mxu0
    %v3843 = vpop.f32.mrb[0].mxu0
    %3844 = vdwg.mxu0
    %v3845 = vtanh.pop %v3839
    %v3846 = vtanh.pop %v3841
    %v3847 = vpack.c.bf16 %v3845, %v3845
    %v3848 = vpack.c.bf16 %v3846, %v3846
    %v3849 = vld [vmem:[#allocation2] sm:$0xff]
    %v3850 = vld [vmem:[#allocation2 + $0x8] sm:$0xff]
    %v3851 = vld [vmem:[#allocation2 + $0x10] sm:$0xff]
    %v3852 = vld [vmem:[#allocation2 + $0x18] sm:$0xff]
    %v3853 = vld [vmem:[#allocation2 + $0x20] sm:$0xff]
    %v3854 = vld [vmem:[#allocation2 + $0x28] sm:$0xff]
    %v3855 = vld [vmem:[#allocation2 + $0x30] sm:$0xff]
    %v3856 = vld [vmem:[#allocation2 + $0x38] sm:$0xff]
    %v3857 = vld [vmem:[#allocation2 + $0x40] sm:$0xff]
    %v3858 = vld [vmem:[#allocation2 + $0x48] sm:$0xff]
    %v3859 = vld [vmem:[#allocation2 + $0x50] sm:$0xff]
    %v3860 = vld [vmem:[#allocation2 + $0x58] sm:$0xff]
    %v3861 = vld [vmem:[#allocation2 + $0x60] sm:$0xff]
    %v3862 = vld [vmem:[#allocation2 + $0x68] sm:$0xff]
    %v3863 = vld [vmem:[#allocation2 + $0x70] sm:$0xff]
    %v3864 = vld [vmem:[#allocation2 + $0x78] sm:$0xff]
    %v3865 = vld [vmem:[#allocation2 + $0x80] sm:$0xff]
    %v3866 = vld [vmem:[#allocation2 + $0x88] sm:$0xff]
    %v3867 = vld [vmem:[#allocation2 + $0x90] sm:$0xff]
    %v3868 = vld [vmem:[#allocation2 + $0x98] sm:$0xff]
    %v3869 = vld [vmem:[#allocation2 + $0xa0] sm:$0xff]
    %v3870 = vld [vmem:[#allocation2 + $0xa8] sm:$0xff]
    %v3871 = vld [vmem:[#allocation2 + $0xb0] sm:$0xff]
    %v3872 = vld [vmem:[#allocation2 + $0xb8] sm:$0xff]
    %v3873 = vld [vmem:[#allocation2 + $0xc0] sm:$0xff]
    %v3874 = vld [vmem:[#allocation2 + $0xc8] sm:$0xff]
    %v3875 = vld [vmem:[#allocation2 + $0xd0] sm:$0xff]
    %v3876 = vld [vmem:[#allocation2 + $0xd8] sm:$0xff]
    %v3877 = vld [vmem:[#allocation2 + $0xe0] sm:$0xff]
    %v3878 = vld [vmem:[#allocation2 + $0xe8] sm:$0xff]
    %v3879 = vld [vmem:[#allocation2 + $0xf0] sm:$0xff]
    %v3880 = vld [vmem:[#allocation2 + $0xf8] sm:$0xff]
    %v3881 = vld [vmem:[%s4] sm:$0xf]
    %v3883 = vlaneseq
    %v3884 = vshrl.u32 %v3883, 7
    %v3885 = vsub.s32 0, %v3884
    %v3886 = vrot.slane %v3881, %v3885
    %v3887 = vlaneseq
    %v3888 = vshrl.u32 %v3887, 7
    %v3889 = vsub.s32 1, %v3888
    %v3890 = vrot.slane %v3881, %v3889
    %v3891 = vlaneseq
    %v3892 = vshrl.u32 %v3891, 7
    %v3893 = vsub.s32 2, %v3892
    %v3894 = vrot.slane %v3881, %v3893
    %v3895 = vlaneseq
    %v3896 = vshrl.u32 %v3895, 7
    %v3897 = vsub.s32 3, %v3896
    %v3898 = vrot.slane %v3881, %v3897
    %v3935 = vunpack.c.l.b16 %v3849
    %v3936 = vunpack.c.h.b16 %v3849
    %v3937 = vunpack.c.l.b16 %v3850
    %v3938 = vunpack.c.h.b16 %v3850
    %v3939 = vunpack.c.l.b16 %v3851
    %v3940 = vunpack.c.h.b16 %v3851
    %v3941 = vunpack.c.l.b16 %v3852
    %v3942 = vunpack.c.h.b16 %v3852
    %v3943 = vunpack.c.l.b16 %v3853
    %v3944 = vunpack.c.h.b16 %v3853
    %v3945 = vunpack.c.l.b16 %v3854
    %v3946 = vunpack.c.h.b16 %v3854
    %v3947 = vunpack.c.l.b16 %v3855
    %v3948 = vunpack.c.h.b16 %v3855
    %v3949 = vunpack.c.l.b16 %v3856
    %v3950 = vunpack.c.h.b16 %v3856
    %v3951 = vunpack.c.l.b16 %v3857
    %v3952 = vunpack.c.h.b16 %v3857
    %v3953 = vunpack.c.l.b16 %v3858
    %v3954 = vunpack.c.h.b16 %v3858
    %v3955 = vunpack.c.l.b16 %v3859
    %v3956 = vunpack.c.h.b16 %v3859
    %v3957 = vunpack.c.l.b16 %v3860
    %v3958 = vunpack.c.h.b16 %v3860
    %v3959 = vunpack.c.l.b16 %v3861
    %v3960 = vunpack.c.h.b16 %v3861
    %v3961 = vunpack.c.l.b16 %v3862
    %v3962 = vunpack.c.h.b16 %v3862
    %v3963 = vunpack.c.l.b16 %v3863
    %v3964 = vunpack.c.h.b16 %v3863
    %v3965 = vunpack.c.l.b16 %v3864
    %v3966 = vunpack.c.h.b16 %v3864
    %v3967 = vunpack.c.l.b16 %v3865
    %v3968 = vunpack.c.h.b16 %v3865
    %v3969 = vunpack.c.l.b16 %v3866
    %v3970 = vunpack.c.h.b16 %v3866
    %v3971 = vunpack.c.l.b16 %v3867
    %v3972 = vunpack.c.h.b16 %v3867
    %v3973 = vunpack.c.l.b16 %v3868
    %v3974 = vunpack.c.h.b16 %v3868
    %v3975 = vunpack.c.l.b16 %v3869
    %v3976 = vunpack.c.h.b16 %v3869
    %v3977 = vunpack.c.l.b16 %v3870
    %v3978 = vunpack.c.h.b16 %v3870
    %v3979 = vunpack.c.l.b16 %v3871
    %v3980 = vunpack.c.h.b16 %v3871
    %v3981 = vunpack.c.l.b16 %v3872
    %v3982 = vunpack.c.h.b16 %v3872
    %v3983 = vunpack.c.l.b16 %v3873
    %v3984 = vunpack.c.h.b16 %v3873
    %v3985 = vunpack.c.l.b16 %v3874
    %v3986 = vunpack.c.h.b16 %v3874
    %v3987 = vunpack.c.l.b16 %v3875
    %v3988 = vunpack.c.h.b16 %v3875
    %v3989 = vunpack.c.l.b16 %v3876
    %v3990 = vunpack.c.h.b16 %v3876
    %v3991 = vunpack.c.l.b16 %v3877
    %v3992 = vunpack.c.h.b16 %v3877
    %v3993 = vunpack.c.l.b16 %v3878
    %v3994 = vunpack.c.h.b16 %v3878
    %v3995 = vunpack.c.l.b16 %v3879
    %v3996 = vunpack.c.h.b16 %v3879
    %v3997 = vunpack.c.l.b16 %v3880
    %v3998 = vunpack.c.h.b16 %v3880
    %v3999 = vpack.c.b16 %v3939, %v3935
    %v4000 = vpack.c.b16 %v3940, %v3936
    %v4001 = vpack.c.b16 %v3941, %v3937
    %v4002 = vpack.c.b16 %v3942, %v3938
    %v4003 = vpack.c.b16 %v3947, %v3943
    %v4004 = vpack.c.b16 %v3948, %v3944
    %v4005 = vpack.c.b16 %v3949, %v3945
    %v4006 = vpack.c.b16 %v3950, %v3946
    %v4007 = vpack.c.b16 %v3955, %v3951
    %v4008 = vpack.c.b16 %v3956, %v3952
    %v4009 = vpack.c.b16 %v3957, %v3953
    %v4010 = vpack.c.b16 %v3958, %v3954
    %v4011 = vpack.c.b16 %v3963, %v3959
    %v4012 = vpack.c.b16 %v3964, %v3960
    %v4013 = vpack.c.b16 %v3965, %v3961
    %v4014 = vpack.c.b16 %v3966, %v3962
    %v4015 = vpack.c.b16 %v3971, %v3967
    %v4016 = vpack.c.b16 %v3972, %v3968
    %v4017 = vpack.c.b16 %v3973, %v3969
    %v4018 = vpack.c.b16 %v3974, %v3970
    %v4019 = vpack.c.b16 %v3979, %v3975
    %v4020 = vpack.c.b16 %v3980, %v3976
    %v4021 = vpack.c.b16 %v3981, %v3977
    %v4022 = vpack.c.b16 %v3982, %v3978
    %v4023 = vpack.c.b16 %v3987, %v3983
    %v4024 = vpack.c.b16 %v3988, %v3984
    %v4025 = vpack.c.b16 %v3989, %v3985
    %v4026 = vpack.c.b16 %v3990, %v3986
    %v4027 = vpack.c.b16 %v3995, %v3991
    %v4028 = vpack.c.b16 %v3996, %v3992
    %v4029 = vpack.c.b16 %v3997, %v3993
    %v4030 = vpack.c.b16 %v3998, %v3994
    %4063 = vmatprep.subr.bf16.mxu0 %v4000
    %4064 = vmatpush1.bf16.msra.mxu0 %v3999
    %4065 = vmatprep.subr.bf16.mxu0 %v4004
    %4066 = vmatpush1.bf16.msra.mxu0 %v4003
    %4067 = vmatprep.subr.bf16.mxu0 %v4008
    %4068 = vmatpush1.bf16.msra.mxu0 %v4007
    %4069 = vmatprep.subr.bf16.mxu0 %v4012
    %4070 = vmatpush1.bf16.msra.mxu0 %v4011
    %4071 = vmatprep.subr.bf16.mxu0 %v4016
    %4072 = vmatpush1.bf16.msra.mxu0 %v4015
    %4073 = vmatprep.subr.bf16.mxu0 %v4020
    %4074 = vmatpush1.bf16.msra.mxu0 %v4019
    %4075 = vmatprep.subr.bf16.mxu0 %v4024
    %4076 = vmatpush1.bf16.msra.mxu0 %v4023
    %4077 = vmatprep.subr.bf16.mxu0 %v4028
    %4078 = vmatpush1.bf16.msra.mxu0 %v4027
    %4079 = vmatprep.subr.bf16.mxu0 0
    %4080 = vmatpush1.bf16.msra.mxu0 0
    %4081 = vmatprep.subr.bf16.mxu0 0
    %4082 = vmatpush1.bf16.msra.mxu0 0
    %4083 = vmatprep.subr.bf16.mxu0 0
    %4084 = vmatpush1.bf16.msra.mxu0 0
    %4085 = vmatprep.subr.bf16.mxu0 0
    %4086 = vmatpush1.bf16.msra.mxu0 0
    %4087 = vmatprep.subr.bf16.mxu0 0
    %4088 = vmatpush1.bf16.msra.mxu0 0
    %4089 = vmatprep.subr.bf16.mxu0 0
    %4090 = vmatpush1.bf16.msra.mxu0 0
    %4091 = vmatprep.subr.bf16.mxu0 0
    %4092 = vmatpush1.bf16.msra.mxu0 0
    %4093 = vmatprep.subr.bf16.mxu0 0
    %4094 = vmatpush1.bf16.msra.mxu0 0
    %4095 = vmatprep.mubr.bf16.mxu0 0
    %4096 = vmatmul.mubr.bf16.gmra.mrb[0].mxu0 %v3847
    %v4097 = vpop.f32.mrb[0].mxu0
    %v4098 = vadd.f32 %v3886, %v4097
    %v4099 = vpop.f32.mrb[0].mxu0
    %v4100 = vadd.f32 %v3890, %v4099
    %v4101 = vpop.f32.mrb[0].mxu0
    %v4102 = vpop.f32.mrb[0].mxu0
    %4103 = vdwg.mxu0
    %4104 = vmatprep.subr.bf16.mxu0 %v4002
    %4105 = vmatpush1.bf16.msra.mxu0 %v4001
    %4106 = vmatprep.subr.bf16.mxu0 %v4006
    %4107 = vmatpush1.bf16.msra.mxu0 %v4005
    %4108 = vmatprep.subr.bf16.mxu0 %v4010
    %4109 = vmatpush1.bf16.msra.mxu0 %v4009
    %4110 = vmatprep.subr.bf16.mxu0 %v4014
    %4111 = vmatpush1.bf16.msra.mxu0 %v4013
    %4112 = vmatprep.subr.bf16.mxu0 %v4018
    %4113 = vmatpush1.bf16.msra.mxu0 %v4017
    %4114 = vmatprep.subr.bf16.mxu0 %v4022
    %4115 = vmatpush1.bf16.msra.mxu0 %v4021
    %4116 = vmatprep.subr.bf16.mxu0 %v4026
    %4117 = vmatpush1.bf16.msra.mxu0 %v4025
    %4118 = vmatprep.subr.bf16.mxu0 %v4030
    %4119 = vmatpush1.bf16.msra.mxu0 %v4029
    %4120 = vmatprep.subr.bf16.mxu0 0
    %4121 = vmatpush1.bf16.msra.mxu0 0
    %4122 = vmatprep.subr.bf16.mxu0 0
    %4123 = vmatpush1.bf16.msra.mxu0 0
    %4124 = vmatprep.subr.bf16.mxu0 0
    %4125 = vmatpush1.bf16.msra.mxu0 0
    %4126 = vmatprep.subr.bf16.mxu0 0
    %4127 = vmatpush1.bf16.msra.mxu0 0
    %4128 = vmatprep.subr.bf16.mxu0 0
    %4129 = vmatpush1.bf16.msra.mxu0 0
    %4130 = vmatprep.subr.bf16.mxu0 0
    %4131 = vmatpush1.bf16.msra.mxu0 0
    %4132 = vmatprep.subr.bf16.mxu0 0
    %4133 = vmatpush1.bf16.msra.mxu0 0
    %4134 = vmatprep.subr.bf16.mxu0 0
    %4135 = vmatpush1.bf16.msra.mxu0 0
    %4136 = vmatprep.mubr.bf16.mxu0 0
    %4137 = vmatmul.mubr.bf16.gmra.mrb[0].mxu0 %v3847
    %v4138 = vpop.f32.mrb[0].mxu0
    %v4139 = vadd.f32 %v3894, %v4138
    %v4140 = vpop.f32.mrb[0].mxu0
    %v4141 = vadd.f32 %v3898, %v4140
    %v4142 = vpop.f32.mrb[0].mxu0
    %v4143 = vpop.f32.mrb[0].mxu0
    %4144 = vdwg.mxu0
    %v4145 = vld [vmem:[#allocation4] sm:$0xff]
    %v4146 = vld [vmem:[#allocation4 + $0x8] sm:$0xff]
    %v4147 = vld [vmem:[#allocation4 + $0x10] sm:$0xff]
    %v4148 = vld [vmem:[#allocation4 + $0x18] sm:$0xff]
    %v4149 = vld [vmem:[#allocation4 + $0x20] sm:$0xff]
    %v4150 = vld [vmem:[#allocation4 + $0x28] sm:$0xff]
    %v4151 = vld [vmem:[#allocation4 + $0x30] sm:$0xff]
    %v4152 = vld [vmem:[#allocation4 + $0x38] sm:$0xff]
    %v4153 = vld [vmem:[#allocation4 + $0x40] sm:$0xff]
    %v4154 = vld [vmem:[#allocation4 + $0x48] sm:$0xff]
    %v4155 = vld [vmem:[#allocation4 + $0x50] sm:$0xff]
    %v4156 = vld [vmem:[#allocation4 + $0x58] sm:$0xff]
    %v4157 = vld [vmem:[#allocation4 + $0x60] sm:$0xff]
    %v4158 = vld [vmem:[#allocation4 + $0x68] sm:$0xff]
    %v4159 = vld [vmem:[#allocation4 + $0x70] sm:$0xff]
    %v4160 = vld [vmem:[#allocation4 + $0x78] sm:$0xff]
    %v4161 = vld [vmem:[#allocation4 + $0x80] sm:$0xff]
    %v4162 = vld [vmem:[#allocation4 + $0x88] sm:$0xff]
    %v4163 = vld [vmem:[#allocation4 + $0x90] sm:$0xff]
    %v4164 = vld [vmem:[#allocation4 + $0x98] sm:$0xff]
    %v4165 = vld [vmem:[#allocation4 + $0xa0] sm:$0xff]
    %v4166 = vld [vmem:[#allocation4 + $0xa8] sm:$0xff]
    %v4167 = vld [vmem:[#allocation4 + $0xb0] sm:$0xff]
    %v4168 = vld [vmem:[#allocation4 + $0xb8] sm:$0xff]
    %v4169 = vld [vmem:[#allocation4 + $0xc0] sm:$0xff]
    %v4170 = vld [vmem:[#allocation4 + $0xc8] sm:$0xff]
    %v4171 = vld [vmem:[#allocation4 + $0xd0] sm:$0xff]
    %v4172 = vld [vmem:[#allocation4 + $0xd8] sm:$0xff]
    %v4173 = vld [vmem:[#allocation4 + $0xe0] sm:$0xff]
    %v4174 = vld [vmem:[#allocation4 + $0xe8] sm:$0xff]
    %v4175 = vld [vmem:[#allocation4 + $0xf0] sm:$0xff]
    %v4176 = vld [vmem:[#allocation4 + $0xf8] sm:$0xff]
    %v4177 = vld [vmem:[%s6] sm:$0xf]
    %v4179 = vlaneseq
    %v4180 = vshrl.u32 %v4179, 7
    %v4181 = vsub.s32 0, %v4180
    %v4182 = vrot.slane %v4177, %v4181
    %v4183 = vlaneseq
    %v4184 = vshrl.u32 %v4183, 7
    %v4185 = vsub.s32 1, %v4184
    %v4186 = vrot.slane %v4177, %v4185
    %v4187 = vlaneseq
    %v4188 = vshrl.u32 %v4187, 7
    %v4189 = vsub.s32 2, %v4188
    %v4190 = vrot.slane %v4177, %v4189
    %v4191 = vlaneseq
    %v4192 = vshrl.u32 %v4191, 7
    %v4193 = vsub.s32 3, %v4192
    %v4194 = vrot.slane %v4177, %v4193
    %v4231 = vunpack.c.l.b16 %v4145
    %v4232 = vunpack.c.h.b16 %v4145
    %v4233 = vunpack.c.l.b16 %v4146
    %v4234 = vunpack.c.h.b16 %v4146
    %v4235 = vunpack.c.l.b16 %v4147
    %v4236 = vunpack.c.h.b16 %v4147
    %v4237 = vunpack.c.l.b16 %v4148
    %v4238 = vunpack.c.h.b16 %v4148
    %v4239 = vunpack.c.l.b16 %v4149
    %v4240 = vunpack.c.h.b16 %v4149
    %v4241 = vunpack.c.l.b16 %v4150
    %v4242 = vunpack.c.h.b16 %v4150
    %v4243 = vunpack.c.l.b16 %v4151
    %v4244 = vunpack.c.h.b16 %v4151
    %v4245 = vunpack.c.l.b16 %v4152
    %v4246 = vunpack.c.h.b16 %v4152
    %v4247 = vunpack.c.l.b16 %v4153
    %v4248 = vunpack.c.h.b16 %v4153
    %v4249 = vunpack.c.l.b16 %v4154
    %v4250 = vunpack.c.h.b16 %v4154
    %v4251 = vunpack.c.l.b16 %v4155
    %v4252 = vunpack.c.h.b16 %v4155
    %v4253 = vunpack.c.l.b16 %v4156
    %v4254 = vunpack.c.h.b16 %v4156
    %v4255 = vunpack.c.l.b16 %v4157
    %v4256 = vunpack.c.h.b16 %v4157
    %v4257 = vunpack.c.l.b16 %v4158
    %v4258 = vunpack.c.h.b16 %v4158
    %v4259 = vunpack.c.l.b16 %v4159
    %v4260 = vunpack.c.h.b16 %v4159
    %v4261 = vunpack.c.l.b16 %v4160
    %v4262 = vunpack.c.h.b16 %v4160
    %v4263 = vunpack.c.l.b16 %v4161
    %v4264 = vunpack.c.h.b16 %v4161
    %v4265 = vunpack.c.l.b16 %v4162
    %v4266 = vunpack.c.h.b16 %v4162
    %v4267 = vunpack.c.l.b16 %v4163
    %v4268 = vunpack.c.h.b16 %v4163
    %v4269 = vunpack.c.l.b16 %v4164
    %v4270 = vunpack.c.h.b16 %v4164
    %v4271 = vunpack.c.l.b16 %v4165
    %v4272 = vunpack.c.h.b16 %v4165
    %v4273 = vunpack.c.l.b16 %v4166
    %v4274 = vunpack.c.h.b16 %v4166
    %v4275 = vunpack.c.l.b16 %v4167
    %v4276 = vunpack.c.h.b16 %v4167
    %v4277 = vunpack.c.l.b16 %v4168
    %v4278 = vunpack.c.h.b16 %v4168
    %v4279 = vunpack.c.l.b16 %v4169
    %v4280 = vunpack.c.h.b16 %v4169
    %v4281 = vunpack.c.l.b16 %v4170
    %v4282 = vunpack.c.h.b16 %v4170
    %v4283 = vunpack.c.l.b16 %v4171
    %v4284 = vunpack.c.h.b16 %v4171
    %v4285 = vunpack.c.l.b16 %v4172
    %v4286 = vunpack.c.h.b16 %v4172
    %v4287 = vunpack.c.l.b16 %v4173
    %v4288 = vunpack.c.h.b16 %v4173
    %v4289 = vunpack.c.l.b16 %v4174
    %v4290 = vunpack.c.h.b16 %v4174
    %v4291 = vunpack.c.l.b16 %v4175
    %v4292 = vunpack.c.h.b16 %v4175
    %v4293 = vunpack.c.l.b16 %v4176
    %v4294 = vunpack.c.h.b16 %v4176
    %v4295 = vpack.c.b16 %v4235, %v4231
    %v4296 = vpack.c.b16 %v4236, %v4232
    %v4297 = vpack.c.b16 %v4237, %v4233
    %v4298 = vpack.c.b16 %v4238, %v4234
    %v4299 = vpack.c.b16 %v4243, %v4239
    %v4300 = vpack.c.b16 %v4244, %v4240
    %v4301 = vpack.c.b16 %v4245, %v4241
    %v4302 = vpack.c.b16 %v4246, %v4242
    %v4303 = vpack.c.b16 %v4251, %v4247
    %v4304 = vpack.c.b16 %v4252, %v4248
    %v4305 = vpack.c.b16 %v4253, %v4249
    %v4306 = vpack.c.b16 %v4254, %v4250
    %v4307 = vpack.c.b16 %v4259, %v4255
    %v4308 = vpack.c.b16 %v4260, %v4256
    %v4309 = vpack.c.b16 %v4261, %v4257
    %v4310 = vpack.c.b16 %v4262, %v4258
    %v4311 = vpack.c.b16 %v4267, %v4263
    %v4312 = vpack.c.b16 %v4268, %v4264
    %v4313 = vpack.c.b16 %v4269, %v4265
    %v4314 = vpack.c.b16 %v4270, %v4266
    %v4315 = vpack.c.b16 %v4275, %v4271
    %v4316 = vpack.c.b16 %v4276, %v4272
    %v4317 = vpack.c.b16 %v4277, %v4273
    %v4318 = vpack.c.b16 %v4278, %v4274
    %v4319 = vpack.c.b16 %v4283, %v4279
    %v4320 = vpack.c.b16 %v4284, %v4280
    %v4321 = vpack.c.b16 %v4285, %v4281
    %v4322 = vpack.c.b16 %v4286, %v4282
    %v4323 = vpack.c.b16 %v4291, %v4287
    %v4324 = vpack.c.b16 %v4292, %v4288
    %v4325 = vpack.c.b16 %v4293, %v4289
    %v4326 = vpack.c.b16 %v4294, %v4290
    %4359 = vmatprep.subr.bf16.mxu0 %v4296
    %4360 = vmatpush1.bf16.msra.mxu0 %v4295
    %4361 = vmatprep.subr.bf16.mxu0 %v4300
    %4362 = vmatpush1.bf16.msra.mxu0 %v4299
    %4363 = vmatprep.subr.bf16.mxu0 %v4304
    %4364 = vmatpush1.bf16.msra.mxu0 %v4303
    %4365 = vmatprep.subr.bf16.mxu0 %v4308
    %4366 = vmatpush1.bf16.msra.mxu0 %v4307
    %4367 = vmatprep.subr.bf16.mxu0 %v4312
    %4368 = vmatpush1.bf16.msra.mxu0 %v4311
    %4369 = vmatprep.subr.bf16.mxu0 %v4316
    %4370 = vmatpush1.bf16.msra.mxu0 %v4315
    %4371 = vmatprep.subr.bf16.mxu0 %v4320
    %4372 = vmatpush1.bf16.msra.mxu0 %v4319
    %4373 = vmatprep.subr.bf16.mxu0 %v4324
    %4374 = vmatpush1.bf16.msra.mxu0 %v4323
    %4375 = vmatprep.subr.bf16.mxu0 0
    %4376 = vmatpush1.bf16.msra.mxu0 0
    %4377 = vmatprep.subr.bf16.mxu0 0
    %4378 = vmatpush1.bf16.msra.mxu0 0
    %4379 = vmatprep.subr.bf16.mxu0 0
    %4380 = vmatpush1.bf16.msra.mxu0 0
    %4381 = vmatprep.subr.bf16.mxu0 0
    %4382 = vmatpush1.bf16.msra.mxu0 0
    %4383 = vmatprep.subr.bf16.mxu0 0
    %4384 = vmatpush1.bf16.msra.mxu0 0
    %4385 = vmatprep.subr.bf16.mxu0 0
    %4386 = vmatpush1.bf16.msra.mxu0 0
    %4387 = vmatprep.subr.bf16.mxu0 0
    %4388 = vmatpush1.bf16.msra.mxu0 0
    %4389 = vmatprep.subr.bf16.mxu0 0
    %4390 = vmatpush1.bf16.msra.mxu0 0
    %4391 = vmatprep.mubr.bf16.mxu0 0
    %4392 = vmatmul.mubr.bf16.gmra.mrb[0].mxu0 %v3848
    %v4393 = vpop.f32.mrb[0].mxu0
    %v4394 = vadd.f32 %v4182, %v4393
    %v4395 = vpop.f32.mrb[0].mxu0
    %v4396 = vadd.f32 %v4186, %v4395
    %v4397 = vpop.f32.mrb[0].mxu0
    %v4398 = vpop.f32.mrb[0].mxu0
    %4399 = vdwg.mxu0
    %4400 = vmatprep.subr.bf16.mxu0 %v4298
    %4401 = vmatpush1.bf16.msra.mxu0 %v4297
    %4402 = vmatprep.subr.bf16.mxu0 %v4302
    %4403 = vmatpush1.bf16.msra.mxu0 %v4301
    %4404 = vmatprep.subr.bf16.mxu0 %v4306
    %4405 = vmatpush1.bf16.msra.mxu0 %v4305
    %4406 = vmatprep.subr.bf16.mxu0 %v4310
    %4407 = vmatpush1.bf16.msra.mxu0 %v4309
    %4408 = vmatprep.subr.bf16.mxu0 %v4314
    %4409 = vmatpush1.bf16.msra.mxu0 %v4313
    %4410 = vmatprep.subr.bf16.mxu0 %v4318
    %4411 = vmatpush1.bf16.msra.mxu0 %v4317
    %4412 = vmatprep.subr.bf16.mxu0 %v4322
    %4413 = vmatpush1.bf16.msra.mxu0 %v4321
    %4414 = vmatprep.subr.bf16.mxu0 %v4326
    %4415 = vmatpush1.bf16.msra.mxu0 %v4325
    %4416 = vmatprep.subr.bf16.mxu0 0
    %4417 = vmatpush1.bf16.msra.mxu0 0
    %4418 = vmatprep.subr.bf16.mxu0 0
    %4419 = vmatpush1.bf16.msra.mxu0 0
    %4420 = vmatprep.subr.bf16.mxu0 0
    %4421 = vmatpush1.bf16.msra.mxu0 0
    %4422 = vmatprep.subr.bf16.mxu0 0
    %4423 = vmatpush1.bf16.msra.mxu0 0
    %4424 = vmatprep.subr.bf16.mxu0 0
    %4425 = vmatpush1.bf16.msra.mxu0 0
    %4426 = vmatprep.subr.bf16.mxu0 0
    %4427 = vmatpush1.bf16.msra.mxu0 0
    %4428 = vmatprep.subr.bf16.mxu0 0
    %4429 = vmatpush1.bf16.msra.mxu0 0
    %4430 = vmatprep.subr.bf16.mxu0 0
    %4431 = vmatpush1.bf16.msra.mxu0 0
    %4432 = vmatprep.mubr.bf16.mxu0 0
    %4433 = vmatmul.mubr.bf16.gmra.mrb[0].mxu0 %v3848
    %v4434 = vpop.f32.mrb[0].mxu0
    %v4435 = vadd.f32 %v4190, %v4434
    %v4436 = vpop.f32.mrb[0].mxu0
    %v4437 = vadd.f32 %v4194, %v4436
    %v4438 = vpop.f32.mrb[0].mxu0
    %v4439 = vpop.f32.mrb[0].mxu0
    %4440 = vdwg.mxu0
    %v4441 = vsub.f32 %v2259, %v4394
    %v4442 = vsub.f32 %v2260, %v4396
    %v4443 = vsub.f32 %v2261, %v4435
    %v4444 = vsub.f32 %v2262, %v4437
    %v4445 = vmul.f32 %v4098, 1.442695
    %v4446 = vpow.pop %v4445
    %v4447 = vmul.f32 %v4100, 1.442695
    %v4448 = vpow.pop %v4447
    %v4449 = vmul.f32 %v4139, 1.442695
    %v4450 = vpow.pop %v4449
    %v4451 = vmul.f32 %v4141, 1.442695
    %v4452 = vpow.pop %v4451
    %v4453 = vmul.f32 %v4441, %v4446
    %v4454 = vmul.f32 %v4442, %v4448
    %v4455 = vmul.f32 %v4443, %v4450
    %v4456 = vmul.f32 %v4444, %v4452
    %4457 = vst [vmem:[%s7] sm:$0xff] %v3359
    %4458 = vst [vmem:[%s7 + $0x8] sm:$0xff] %v3360
    %4459 = vst [vmem:[%s7 + $0x10] sm:$0xff] %v3361
    %4460 = vst [vmem:[%s7 + $0x18] sm:$0xff] %v3362
    %4461 = vst [vmem:[%s7 + $0x20] sm:$0xff] %v4453
    %4462 = vst [vmem:[%s7 + $0x28] sm:$0xff] %v4454
    %4463 = vst [vmem:[%s7 + $0x30] sm:$0xff] %v4455
    %4464 = vst [vmem:[%s7 + $0x38] sm:$0xff] %v4456
    // Predicated region
    $region38: #{_run_compact.1} parent=1 // pred_check
      _
    $region39: #{_run_compact.1} parent=1 // pred_check_branch
      %4466 = sbr.rel (0) target = $region41
    $region40: #{_run_compact.1} parent=1 // pred_region
      _
    $region41: #{_run_compact.1} parent=1 // pred_fallthru
      _
    // Predicated region
    $region42: #{_run_compact.1} parent=1 // pred_check
      _
    $region43: #{_run_compact.1} parent=1 // pred_check_branch
      %4468 = sbr.rel (0) target = $region45
    $region44: #{_run_compact.1} parent=1 // pred_region
      _
    $region45: #{_run_compact.1} parent=1 // pred_fallthru
      _
    %4469 = vsyncpa [#allocation3], 1
    %4470 = vsyncpa [#allocation5], 1

</llo_original>
